<compile_context>
chip_gen: v5e
topology: v5e:2x2
jax: 0.10.0
libtpu: 0.0.40
codegen_flags: <defaults>
</compile_context>

<pallas_src>
import jax
import jax.numpy as jnp
from jax import lax
from jax.experimental import pallas as pl
from jax.experimental.pallas import tpu as pltpu

# ----------------------- synthetic small config ----------------------------
B_G = 2            # structures (graphs) per call -> "parallel" grid axis
N = 16             # atoms per structure
E = 32             # directed edges per structure
TE = 16            # edge-tile size (reduction grid axis); E % TE == 0
S = 4              # num_chem_elements
B_E = 8            # num_edge_rbf (Bessel basis size)
B_V = 8            # num_vel_rbf (gaussian basis size for |v|)
K_V = 8            # element-based velocity-norm embedding width
H = 8              # num_hidden_channels
HC = H // 4        # compression channels
M_MLP = 16         # edge MLP hidden width
R_CUT = 5.0        # edge_cutoff
P_CUT = 6          # num_edge_poly_cutoff
VEL_MAX = 1.0      # vel_max
AVG_NUM_NEIGHBORS = 10.0
NUM_MP_LAYERS = 1
RMS_DISP, RMS_VEL = 0.5, 0.2     # rms_targets
MEAN_DISP, MEAN_VEL = 0.0, 0.0   # mean_targets

SQRT3 = 3.0 ** 0.5
INV_S3 = 1.0 / SQRT3
INV_NN = 1.0 / (AVG_NUM_NEIGHBORS ** 0.5)
INV_H = 1.0 / (H ** 0.5)
INV_FAN_S = 1.0 / ((S + K_V) ** 0.5)
INV_SIGMA = (B_V - 1) / VEL_MAX
EPS = 1e-9


def trajcast_kernel(
    # scalar-prefetch (SMEM)
    src_ref, dst_ref,
    # per-structure data (VMEM, batch dim squeezed)
    pos_ref, vel_ref, onehot_ref, ohexp_ref,
    # weights / constants (VMEM, resident)
    bessel_ref, gaussc_ref, w_velemb_ref, blocksum_ref,
    w_s1_ref, w_s2_ref, w_iv_ref,
    w_mlp1_ref, b_mlp1_ref, w_mlp2_ref, b_mlp2_ref,
    w_lin_s_ref, w_lin_v_ref, w_skip_s_ref, w_skip_v_ref,
    w_crd_ref, w_crv_ref,
    # output
    out_ref,
    # scratch
    h_scr, acc_scr, fsrc_scr, m_scr, r_scr,
):
    f32 = jnp.float32
    b = pl.program_id(0)           # structure index ("parallel")
    t = pl.program_id(1)           # edge tile index ("arbitrary" reduction)
    n_tiles = pl.num_programs(1)
    off = t * TE

    def fdot(a, w):
        return jnp.dot(a, w, preferred_element_type=f32)

    def silu(x):
        # EUP exp + approx reciprocal keeps this off the VALU divide path.
        return x * pl.reciprocal(1.0 + jnp.exp(-x), approx=True)

    # ------------- edge-tile 0: node encoding + accumulator init -----------
    @pl.when(t == 0)
    def _():
        acc_scr[...] = jnp.zeros((4 * N, H), f32)

        vel = vel_ref[...]                       # (N, 3)
        onehot = onehot_ref[...]                 # (N, S)

        v2 = jnp.sum(vel * vel, axis=1, keepdims=True) + EPS
        inv_v = lax.rsqrt(v2)
        v_len = v2 * inv_v                       # (N, 1)

        # ElementBasedNormEncoding of |v|: gaussian basis, species-conditioned
        # linear via "matmul then mask" (no per-species lane concat loop).
        dg = (v_len - gaussc_ref[...]) * INV_SIGMA
        gauss = jnp.exp(-0.5 * dg * dg)                              # (N, B_V)
        e_all = fdot(gauss, w_velemb_ref[...])                       # (N, S*K_V)
        velemb = fdot(ohexp_ref[...] * e_all, blocksum_ref[...])     # (N, K_V)

        # NODE_FEATURES + LinearInit (scalar channels, fan-in normalized)
        h_s = (fdot(onehot, w_s1_ref[...]) +
               fdot(velemb, w_s2_ref[...])) * INV_FAN_S              # (N, H)

        # SphericalHarmonicProjection of velocities (l=1, unit sphere,
        # 'component' normalization); l=0 channel is constant and dropped.
        yv = SQRT3 * vel * inv_v                                     # (N, 3)
        w_iv = w_iv_ref[...]                                         # (1, H)

        # component-major node slab: rows [scalars | vx | vy | vz], H on lanes
        h_scr[0:N, :] = h_s
        h_scr[N:2 * N, :] = yv[:, 0:1] * w_iv
        h_scr[2 * N:3 * N, :] = yv[:, 1:2] * w_iv
        h_scr[3 * N:4 * N, :] = yv[:, 2:3] * w_iv

    # ------------- every edge tile: gather -> messages -> scatter ----------
    # index-based gather of edge vectors + sender features (no one-hots)
    def gather_body(e, carry):
        idx = off + e
        s = src_ref[b, idx]
        d = dst_ref[b, idx]
        r_scr[pl.ds(e, 1), :] = pos_ref[pl.ds(d, 1), :] - pos_ref[pl.ds(s, 1), :]
        fsrc_scr[pl.ds(e, 1), :] = h_scr[pl.ds(s, 1), :]
        fsrc_scr[pl.ds(TE + e, 1), :] = h_scr[pl.ds(N + s, 1), :]
        fsrc_scr[pl.ds(2 * TE + e, 1), :] = h_scr[pl.ds(2 * N + s, 1), :]
        fsrc_scr[pl.ds(3 * TE + e, 1), :] = h_scr[pl.ds(3 * N + s, 1), :]
        return carry

    lax.fori_loop(0, TE, gather_body, 0, unroll=True)

    r3 = r_scr[...]                                   # (TE, 3)
    r2 = jnp.sum(r3 * r3, axis=1, keepdims=True) + EPS
    inv_r = lax.rsqrt(r2)
    r_len = r2 * inv_r                                # (TE, 1)

    # EdgeLengthEncoding: Bessel basis * polynomial cutoff
    x = r_len * (1.0 / R_CUT)
    bessel = ((2.0 / R_CUT) ** 0.5) * jnp.sin(bessel_ref[...] * x) * inv_r
    p = float(P_CUT)
    x2 = x * x
    x3 = x2 * x
    x6 = x3 * x3
    x7 = x6 * x
    x8 = x7 * x
    cut = (1.0
           - (p + 1.0) * (p + 2.0) / 2.0 * x6
           + p * (p + 2.0) * x7
           - p * (p + 1.0) / 2.0 * x8)
    cut = jnp.where(x < 1.0, cut, 0.0)
    edge_emb = bessel * cut                           # (TE, B_E)

    # edge MLP -> tensor-product path weights
    hmid = silu(fdot(edge_emb, w_mlp1_ref[...]) + b_mlp1_ref[...])   # (TE, M_MLP)
    w_all = fdot(hmid, w_mlp2_ref[...]) + b_mlp2_ref[...]            # (TE, 4H)
    # NOTE: at production size H is a multiple of 128, so these lane slices
    # are vreg-aligned and free.
    w1 = w_all[:, 0:H]            # 0e x Y0 -> 0e
    w2 = w_all[:, H:2 * H]        # 0e x Y1 -> 1o
    w3 = w_all[:, 2 * H:3 * H]    # 1o x Y0 -> 1o
    w4 = w_all[:, 3 * H:4 * H]    # 1o x Y1 -> 0e

    # spherical harmonics of edge vectors (l=1)
    ye = SQRT3 * r3 * inv_r                           # (TE, 3)
    ex = ye[:, 0:1]
    ey = ye[:, 1:2]
    ez = ye[:, 2:3]

    f_all = fsrc_scr[...]                             # (4TE, H) component-major
    fs = f_all[0:TE, :]
    fvx = f_all[TE:2 * TE, :]
    fvy = f_all[2 * TE:3 * TE, :]
    fvz = f_all[3 * TE:4 * TE, :]

    # conditioned tensor product (0e / 1o paths); stored component-major
    w2fs = w2 * fs
    m_scr[0:TE, :] = w1 * fs + (w4 * INV_S3) * (fvx * ex + fvy * ey + fvz * ez)
    m_scr[TE:2 * TE, :] = w3 * fvx + w2fs * ex
    m_scr[2 * TE:3 * TE, :] = w3 * fvy + w2fs * ey
    m_scr[3 * TE:4 * TE, :] = w3 * fvz + w2fs * ez

    # index-based scatter-add to the receiver accumulator
    def scatter_body(e, carry):
        idx = off + e
        d = dst_ref[b, idx]
        for c in range(4):
            row = pl.ds(c * N + d, 1)
            acc_scr[row, :] = acc_scr[row, :] + m_scr[pl.ds(c * TE + e, 1), :]
        return carry

    lax.fori_loop(0, TE, scatter_body, 0, unroll=True)

    # ------------- last edge tile: node update + readout + conservation ----
    @pl.when(t == n_tiles - 1)
    def _():
        agg = acc_scr[...] * INV_NN               # (4N, H)
        agg_s = agg[0:N, :]
        agg_v = agg[N:4 * N, :]                   # stacked (3N, H) vectors
        h_cur = h_scr[...]
        h_s_cur = h_cur[0:N, :]
        h_v_cur = h_cur[N:4 * N, :]

        # dense sub-matmuls (block-diagonal "w_big" removed)
        fg = fdot(agg_s, w_lin_s_ref[...]) * INV_H        # (N, 2H): feat | gate
        feat = fg[:, 0:H]
        gate = silu(fg[:, H:2 * H])
        lv = fdot(agg_v, w_lin_v_ref[...]) * INV_H        # (3N, H)
        sks = fdot(h_s_cur, w_skip_s_ref[...]) * INV_H    # (N, H)
        skv = fdot(h_v_cur, w_skip_v_ref[...]) * INV_H    # (3N, H)

        hn_s = silu(feat) + sks
        gate3 = jnp.concatenate([gate, gate, gate], axis=0)   # sublane tile
        hn_v = lv * gate3 + skv                                # (3N, H)

        # keep the updated slab resident (multi-layer models would loop here)
        h_scr[0:N, :] = hn_s
        h_scr[N:4 * N, :] = hn_v

        # LinearCompression + LinearReadOut folded into two (1, H) vectors,
        # computed as VPU lane reductions (avoids a 2-lane-wide MXU pass).
        d_all = jnp.sum(hn_v * w_crd_ref[...], axis=1, keepdims=True)  # (3N, 1)
        v_all = jnp.sum(hn_v * w_crv_ref[...], axis=1, keepdims=True)  # (3N, 1)
        d_all = d_all * RMS_DISP + MEAN_DISP
        v_all = v_all * RMS_VEL + MEAN_VEL

        dvec = jnp.concatenate(
            [d_all[0:N], d_all[N:2 * N], d_all[2 * N:3 * N]], axis=1)  # (N, 3)
        vvec = jnp.concatenate(
            [v_all[0:N], v_all[N:2 * N], v_all[2 * N:3 * N]], axis=1)  # (N, 3)

        # ConservationLayer: unit masses, remove net drift / net linear momentum
        inv_n = 1.0 / N
        dvec = dvec - jnp.sum(dvec, axis=0, keepdims=True) * inv_n
        vvec = vvec - jnp.sum(vvec, axis=0, keepdims=True) * inv_n

        # fused, single-store output: [disp_xyz | new_vel_xyz]
        out_ref[...] = jnp.concatenate([dvec, vvec], axis=1)          # (N, 6)


def build_params(key):
    ks = jax.random.split(key, 12)

    def nrm(k, shape, fan=1.0):
        return jax.random.normal(k, shape, jnp.float32) / (fan ** 0.5)

    # TODO(synk): Bessel frequencies are trainable in the original model; fixed
    # at the standard n*pi initialization here.
    return dict(
        bessel_f=(jnp.arange(1, B_E + 1, dtype=jnp.float32) * jnp.pi).reshape(1, B_E),
        gauss_c=jnp.linspace(0.0, VEL_MAX, B_V, dtype=jnp.float32).reshape(1, B_V),
        w_velemb=nrm(ks[0], (S * B_V, K_V)),   # rows s*B_V+b: per-species linear
        w_init_s1=nrm(ks[1], (S, H)),
        w_init_s2=nrm(ks[2], (K_V, H)),
        w_init_v=nrm(ks[3], (1, H)),
        w_mlp1=nrm(ks[4], (B_E, M_MLP), fan=B_E),
        b_mlp1=jnp.zeros((1, M_MLP), jnp.float32),
        w_mlp2=nrm(ks[5], (M_MLP, 4 * H), fan=M_MLP),
        b_mlp2=jnp.zeros((1, 4 * H), jnp.float32),
        w_lin_s=nrm(ks[6], (H, 2 * H)),
        w_lin_v=nrm(ks[7], (H, H)),
        w_skip_s=nrm(ks[8], (H, H)),
        w_skip_v=nrm(ks[9], (H, H)),
        w_comp=nrm(ks[10], (H, HC)),
        w_out=nrm(ks[11], (HC, 2)),
    )


@jax.jit
def efficient_trajcast_forward(pos, vel, atom_types, edge_src, edge_dst, params):
    """pos/vel: (B_G, N, 3) f32; atom_types: (B_G, N) i32; edge_src/dst: (B_G, E) i32."""
    f32 = jnp.float32
    onehot = jax.nn.one_hot(atom_types, S, dtype=f32)          # (B, N, S)
    ohexp = jnp.repeat(onehot, K_V, axis=-1)                   # (B, N, S*K_V)

    # species-conditioned velocity-embedding weight laid out for matmul-then-mask
    w_velemb = (params['w_velemb']
                .reshape(S, B_V, K_V).transpose(1, 0, 2).reshape(B_V, S * K_V))
    # constant 0/1 block-sum matrix collapsing the S masked blocks back to K_V
    blocksum = jnp.tile(jnp.eye(K_V, dtype=f32), (S, 1))       # (S*K_V, K_V)

    # compression + readout folded into two (1, H) vectors (exact re-association)
    w_cr = (params['w_comp'] @ params['w_out']) * (1.0 / (H ** 0.5)) * (1.0 / (HC ** 0.5))
    w_crd = w_cr[:, 0].reshape(1, H)
    w_crv = w_cr[:, 1].reshape(1, H)

    grid = (B_G, E // TE)

    def batched(shape_tail):
        return pl.BlockSpec((None,) + shape_tail,
                            lambda bb, tt, *_: (bb,) + (0,) * len(shape_tail))

    def resident(shape):
        return pl.BlockSpec(shape, lambda bb, tt, *_: (0,) * len(shape))

    in_specs = [
        batched((N, 3)),             # pos
        batched((N, 3)),             # vel
        batched((N, S)),             # onehot
        batched((N, S * K_V)),       # onehot expanded per K_V block
        resident((1, B_E)),          # bessel freqs
        resident((1, B_V)),          # gaussian centers
        resident((B_V, S * K_V)),    # w_velemb (all species)
        resident((S * K_V, K_V)),    # blocksum
        resident((S, H)),            # w_init_s1
        resident((K_V, H)),          # w_init_s2
        resident((1, H)),            # w_init_v
        resident((B_E, M_MLP)),      # w_mlp1
        resident((1, M_MLP)),        # b_mlp1
        resident((M_MLP, 4 * H)),    # w_mlp2
        resident((1, 4 * H)),        # b_mlp2
        resident((H, 2 * H)),        # w_lin_s
        resident((H, H)),            # w_lin_v
        resident((H, H)),            # w_skip_s
        resident((H, H)),            # w_skip_v
        resident((1, H)),            # w_crd
        resident((1, H)),            # w_crv
    ]
    out_spec = pl.BlockSpec((None, N, 6), lambda bb, tt, *_: (bb, 0, 0))

    scratch = [
        pltpu.VMEM((4 * N, H), f32),    # node-feature slab h (component-major)
        pltpu.VMEM((4 * N, H), f32),    # message accumulator
        pltpu.VMEM((4 * TE, H), f32),   # gathered sender features per edge tile
        pltpu.VMEM((4 * TE, H), f32),   # messages per edge tile
        pltpu.VMEM((TE, 3), f32),       # edge vectors per edge tile
    ]

    out = pl.pallas_call(
        trajcast_kernel,
        out_shape=jax.ShapeDtypeStruct((B_G, N, 6), f32),
        grid_spec=pltpu.PrefetchScalarGridSpec(
            num_scalar_prefetch=2,
            grid=grid,
            in_specs=in_specs,
            out_specs=out_spec,
            scratch_shapes=scratch,
        ),
        compiler_params=pltpu.CompilerParams(
            dimension_semantics=("parallel", "arbitrary"),
            vmem_limit_bytes=64 * 1024 * 1024,
        ),
    )(
        edge_src.astype(jnp.int32), edge_dst.astype(jnp.int32),
        pos, vel, onehot, ohexp,
        params['bessel_f'], params['gauss_c'], w_velemb, blocksum,
        params['w_init_s1'], params['w_init_s2'], params['w_init_v'],
        params['w_mlp1'], params['b_mlp1'], params['w_mlp2'], params['b_mlp2'],
        params['w_lin_s'], params['w_lin_v'], params['w_skip_s'], params['w_skip_v'],
        w_crd, w_crv,
    )
    disp = out[..., 0:3]
    new_vel = out[..., 3:6]
    return disp, new_vel


if __name__ == "__main__":
    key = jax.random.PRNGKey(0)
    kp, kv, kt, kw = jax.random.split(key, 4)

    pos = jax.random.uniform(kp, (B_G, N, 3), jnp.float32, 0.0, 4.0)
    vel = jax.random.normal(kv, (B_G, N, 3), jnp.float32) * 0.3
    atom_types = jax.random.randint(kt, (B_G, N), 0, S)

    # ring graph per structure: each atom receives messages from its two
    # preceding neighbors
    base = jnp.arange(N, dtype=jnp.int32)
    src_one = jnp.concatenate([base, base])                        # (E,)
    dst_one = jnp.concatenate([(base + 1) % N, (base + 2) % N])    # (E,)
    edge_src = jnp.tile(src_one[None, :], (B_G, 1))                # (B_G, E)
    edge_dst = jnp.tile(dst_one[None, :], (B_G, 1))                # (B_G, E)

    params = build_params(kw)

    disp, new_vel = efficient_trajcast_forward(pos, vel, atom_types,
                                               edge_src, edge_dst, params)
    jax.block_until_ready((disp, new_vel))

    assert disp.shape == (B_G, N, 3) and new_vel.shape == (B_G, N, 3)
    assert bool(jnp.all(jnp.isfinite(disp))) and bool(jnp.all(jnp.isfinite(new_vel)))
    # ConservationLayer invariant: zero net displacement / linear momentum
    assert float(jnp.max(jnp.abs(jnp.sum(disp, axis=1)))) < 1e-3
    assert float(jnp.max(jnp.abs(jnp.sum(new_vel, axis=1)))) < 1e-3
    print("KERNEL_OK")
</pallas_src>

<mosaic_0001>
module attributes {stable_mosaic.version = 11 : i64} {
  func.func @trajcast_kernel(%arg0: i32, %arg1: i32, %arg2: memref<2x32xi32, #tpu.memory_space<smem>>, %arg3: memref<2x32xi32, #tpu.memory_space<smem>>, %arg4: memref<1x16x3xf32, #tpu.memory_space<vmem>>, %arg5: memref<1x16x3xf32, #tpu.memory_space<vmem>>, %arg6: memref<1x16x4xf32, #tpu.memory_space<vmem>>, %arg7: memref<1x16x32xf32, #tpu.memory_space<vmem>>, %arg8: memref<1x8xf32, #tpu.memory_space<vmem>>, %arg9: memref<1x8xf32, #tpu.memory_space<vmem>>, %arg10: memref<8x32xf32, #tpu.memory_space<vmem>>, %arg11: memref<32x8xf32, #tpu.memory_space<vmem>>, %arg12: memref<4x8xf32, #tpu.memory_space<vmem>>, %arg13: memref<8x8xf32, #tpu.memory_space<vmem>>, %arg14: memref<1x8xf32, #tpu.memory_space<vmem>>, %arg15: memref<8x16xf32, #tpu.memory_space<vmem>>, %arg16: memref<1x16xf32, #tpu.memory_space<vmem>>, %arg17: memref<16x32xf32, #tpu.memory_space<vmem>>, %arg18: memref<1x32xf32, #tpu.memory_space<vmem>>, %arg19: memref<8x16xf32, #tpu.memory_space<vmem>>, %arg20: memref<8x8xf32, #tpu.memory_space<vmem>>, %arg21: memref<8x8xf32, #tpu.memory_space<vmem>>, %arg22: memref<8x8xf32, #tpu.memory_space<vmem>>, %arg23: memref<1x8xf32, #tpu.memory_space<vmem>>, %arg24: memref<1x8xf32, #tpu.memory_space<vmem>>, %arg25: memref<1x16x6xf32, #tpu.memory_space<vmem>>, %arg26: memref<64x8xf32, #tpu.memory_space<vmem>>, %arg27: memref<64x8xf32, #tpu.memory_space<vmem>>, %arg28: memref<64x8xf32, #tpu.memory_space<vmem>>, %arg29: memref<64x8xf32, #tpu.memory_space<vmem>>, %arg30: memref<16x3xf32, #tpu.memory_space<vmem>>) attributes {dimension_semantics = [#tpu.dimension_semantics<parallel>, #tpu.dimension_semantics<arbitrary>], iteration_bounds = array<i64: 2, 2>, scalar_prefetch = 2 : i64, scratch_operands = 5 : i64, tpu.core_type = #tpu.core_type<tc>, window_params = [{transform_indices = @transform_0, window_bounds = array<i64: 1, 16, 3>}, {transform_indices = @transform_1, window_bounds = array<i64: 1, 16, 3>}, {transform_indices = @transform_2, window_bounds = array<i64: 1, 16, 4>}, {transform_indices = @transform_3, window_bounds = array<i64: 1, 16, 32>}, {pipeline_mode = #tpu.pipeline_mode<synchronous>, transform_indices = @transform_4, window_bounds = array<i64: 1, 8>}, {pipeline_mode = #tpu.pipeline_mode<synchronous>, transform_indices = @transform_5, window_bounds = array<i64: 1, 8>}, {pipeline_mode = #tpu.pipeline_mode<synchronous>, transform_indices = @transform_6, window_bounds = array<i64: 8, 32>}, {pipeline_mode = #tpu.pipeline_mode<synchronous>, transform_indices = @transform_7, window_bounds = array<i64: 32, 8>}, {pipeline_mode = #tpu.pipeline_mode<synchronous>, transform_indices = @transform_8, window_bounds = array<i64: 4, 8>}, {pipeline_mode = #tpu.pipeline_mode<synchronous>, transform_indices = @transform_9, window_bounds = array<i64: 8, 8>}, {pipeline_mode = #tpu.pipeline_mode<synchronous>, transform_indices = @transform_10, window_bounds = array<i64: 1, 8>}, {pipeline_mode = #tpu.pipeline_mode<synchronous>, transform_indices = @transform_11, window_bounds = array<i64: 8, 16>}, {pipeline_mode = #tpu.pipeline_mode<synchronous>, transform_indices = @transform_12, window_bounds = array<i64: 1, 16>}, {pipeline_mode = #tpu.pipeline_mode<synchronous>, transform_indices = @transform_13, window_bounds = array<i64: 16, 32>}, {pipeline_mode = #tpu.pipeline_mode<synchronous>, transform_indices = @transform_14, window_bounds = array<i64: 1, 32>}, {pipeline_mode = #tpu.pipeline_mode<synchronous>, transform_indices = @transform_15, window_bounds = array<i64: 8, 16>}, {pipeline_mode = #tpu.pipeline_mode<synchronous>, transform_indices = @transform_16, window_bounds = array<i64: 8, 8>}, {pipeline_mode = #tpu.pipeline_mode<synchronous>, transform_indices = @transform_17, window_bounds = array<i64: 8, 8>}, {pipeline_mode = #tpu.pipeline_mode<synchronous>, transform_indices = @transform_18, window_bounds = array<i64: 8, 8>}, {pipeline_mode = #tpu.pipeline_mode<synchronous>, transform_indices = @transform_19, window_bounds = array<i64: 1, 8>}, {pipeline_mode = #tpu.pipeline_mode<synchronous>, transform_indices = @transform_20, window_bounds = array<i64: 1, 8>}, {transform_indices = @transform_21, window_bounds = array<i64: 1, 16, 6>}]} {
    %c16_i32 = arith.constant 16 : i32
    %0 = arith.muli %arg1, %c16_i32 : i32
    %c0_i32 = arith.constant 0 : i32
    %1 = arith.cmpi eq, %arg1, %c0_i32 : i32
    %2 = arith.extui %1 : i1 to i32
    %c0_i32_0 = arith.constant 0 : i32
    %3 = arith.cmpi ne, %2, %c0_i32_0 : i32
    scf.if %3 {
      %cst_677 = arith.constant 0.000000e+00 : f32
      %1358 = vector.broadcast %cst_677 : f32 to vector<64x8xf32>
      %c0_678 = arith.constant 0 : index
      %c0_679 = arith.constant 0 : index
      %1359 = vector.load %arg27[%c0_678, %c0_679] : memref<64x8xf32, #tpu.memory_space<vmem>>, vector<64x8xf32>
      tpu.vector_store %arg27[%c0_678, %c0_679], %1358 {strides = array<i32>} : memref<64x8xf32, #tpu.memory_space<vmem>>, vector<64x8xf32>,
      %c0_680 = arith.constant 0 : index
      %c0_681 = arith.constant 0 : index
      %c0_682 = arith.constant 0 : index
      %1360 = vector.load %arg5[%c0_680, %c0_681, %c0_682] : memref<1x16x3xf32, #tpu.memory_space<vmem>>, vector<1x16x3xf32>
      %1361 = vector.shape_cast %1360 : vector<1x16x3xf32> to vector<16x3xf32>
      %c0_683 = arith.constant 0 : index
      %c0_684 = arith.constant 0 : index
      %c0_685 = arith.constant 0 : index
      %1362 = vector.load %arg6[%c0_683, %c0_684, %c0_685] : memref<1x16x4xf32, #tpu.memory_space<vmem>>, vector<1x16x4xf32>
      %1363 = vector.shape_cast %1362 : vector<1x16x4xf32> to vector<16x4xf32>
      %1364 = arith.mulf %1361, %1361 : vector<16x3xf32>
      %cst_686 = arith.constant dense<0.000000e+00> : vector<16xf32>
      %1365 = vector.multi_reduction <add>, %1364, %cst_686 [1] : vector<16x3xf32> to vector<16xf32>
      %1366 = vector.shape_cast %1365 : vector<16xf32> to vector<16x1xf32>
      %cst_687 = arith.constant 9.99999971E-10 : f32
      %1367 = vector.broadcast %cst_687 : f32 to vector<16x1xf32>
      %1368 = arith.addf %1366, %1367 : vector<16x1xf32>
      %1369 = math.rsqrt %1368 : vector<16x1xf32>
      %1370 = arith.mulf %1368, %1369 : vector<16x1xf32>
      %c0_688 = arith.constant 0 : index
      %c0_689 = arith.constant 0 : index
      %1371 = vector.load %arg9[%c0_688, %c0_689] : memref<1x8xf32, #tpu.memory_space<vmem>>, vector<1x8xf32>
      %1372 = vector.broadcast %1370 : vector<16x1xf32> to vector<16x8xf32>
      %1373 = vector.broadcast %1371 : vector<1x8xf32> to vector<16x8xf32>
      %1374 = arith.subf %1372, %1373 : vector<16x8xf32>
      %cst_690 = arith.constant 7.000000e+00 : f32
      %1375 = vector.broadcast %cst_690 : f32 to vector<16x8xf32>
      %1376 = arith.mulf %1374, %1375 : vector<16x8xf32>
      %cst_691 = arith.constant -5.000000e-01 : f32
      %1377 = vector.broadcast %cst_691 : f32 to vector<16x8xf32>
      %1378 = arith.mulf %1377, %1376 : vector<16x8xf32>
      %1379 = arith.mulf %1378, %1376 : vector<16x8xf32>
      %1380 = math.exp %1379 : vector<16x8xf32>
      %c0_692 = arith.constant 0 : index
      %c0_693 = arith.constant 0 : index
      %1381 = vector.load %arg10[%c0_692, %c0_693] : memref<8x32xf32, #tpu.memory_space<vmem>>, vector<8x32xf32>
      %cst_694 = arith.constant dense<0.000000e+00> : vector<16x32xf32>
      %1382 = tpu.matmul %1380, %1381, %cst_694 {dimension_numbers = #tpu.dot_dimension_numbers<[1], [0], [0], [1], [0, 0, 1, 1], [], []>} : vector<16x8xf32>, vector<8x32xf32>, vector<16x32xf32> -> vector<16x32xf32>
      %c0_695 = arith.constant 0 : index
      %c0_696 = arith.constant 0 : index
      %c0_697 = arith.constant 0 : index
      %1383 = vector.load %arg7[%c0_695, %c0_696, %c0_697] : memref<1x16x32xf32, #tpu.memory_space<vmem>>, vector<1x16x32xf32>
      %1384 = vector.shape_cast %1383 : vector<1x16x32xf32> to vector<16x32xf32>
      %1385 = arith.mulf %1384, %1382 : vector<16x32xf32>
      %c0_698 = arith.constant 0 : index
      %c0_699 = arith.constant 0 : index
      %1386 = vector.load %arg11[%c0_698, %c0_699] : memref<32x8xf32, #tpu.memory_space<vmem>>, vector<32x8xf32>
      %cst_700 = arith.constant dense<0.000000e+00> : vector<16x8xf32>
      %1387 = tpu.matmul %1385, %1386, %cst_700 {dimension_numbers = #tpu.dot_dimension_numbers<[1], [0], [0], [1], [0, 0, 1, 1], [], []>} : vector<16x32xf32>, vector<32x8xf32>, vector<16x8xf32> -> vector<16x8xf32>
      %c0_701 = arith.constant 0 : index
      %c0_702 = arith.constant 0 : index
      %1388 = vector.load %arg12[%c0_701, %c0_702] : memref<4x8xf32, #tpu.memory_space<vmem>>, vector<4x8xf32>
      %cst_703 = arith.constant dense<0.000000e+00> : vector<16x8xf32>
      %1389 = tpu.matmul %1363, %1388, %cst_703 {dimension_numbers = #tpu.dot_dimension_numbers<[1], [0], [0], [1], [0, 0, 1, 1], [], []>} : vector<16x4xf32>, vector<4x8xf32>, vector<16x8xf32> -> vector<16x8xf32>
      %c0_704 = arith.constant 0 : index
      %c0_705 = arith.constant 0 : index
      %1390 = vector.load %arg13[%c0_704, %c0_705] : memref<8x8xf32, #tpu.memory_space<vmem>>, vector<8x8xf32>
      %cst_706 = arith.constant dense<0.000000e+00> : vector<16x8xf32>
      %1391 = tpu.matmul %1387, %1390, %cst_706 {dimension_numbers = #tpu.dot_dimension_numbers<[1], [0], [0], [1], [0, 0, 1, 1], [], []>} : vector<16x8xf32>, vector<8x8xf32>, vector<16x8xf32> -> vector<16x8xf32>
      %1392 = arith.addf %1389, %1391 : vector<16x8xf32>
      %cst_707 = arith.constant 0.288675129 : f32
      %1393 = vector.broadcast %cst_707 : f32 to vector<16x8xf32>
      %1394 = arith.mulf %1392, %1393 : vector<16x8xf32>
      %cst_708 = arith.constant 1.73205078 : f32
      %1395 = vector.broadcast %cst_708 : f32 to vector<16x3xf32>
      %1396 = arith.mulf %1395, %1361 : vector<16x3xf32>
      %1397 = vector.broadcast %1369 : vector<16x1xf32> to vector<16x3xf32>
      %1398 = arith.mulf %1396, %1397 : vector<16x3xf32>
      %c0_709 = arith.constant 0 : index
      %c0_710 = arith.constant 0 : index
      %1399 = vector.load %arg14[%c0_709, %c0_710] : memref<1x8xf32, #tpu.memory_space<vmem>>, vector<1x8xf32>
      %c0_711 = arith.constant 0 : index
      %c0_712 = arith.constant 0 : index
      %1400 = vector.load %arg26[%c0_711, %c0_712] : memref<64x8xf32, #tpu.memory_space<vmem>>, vector<16x8xf32>
      tpu.vector_store %arg26[%c0_711, %c0_712], %1394 {strides = array<i32>} : memref<64x8xf32, #tpu.memory_space<vmem>>, vector<16x8xf32>,
      %1401 = vector.extract_strided_slice %1398 {offsets = [0, 0], sizes = [16, 1], strides = [1, 1]} : vector<16x3xf32> to vector<16x1xf32>
      %1402 = vector.broadcast %1401 : vector<16x1xf32> to vector<16x8xf32>
      %1403 = vector.broadcast %1399 : vector<1x8xf32> to vector<16x8xf32>
      %1404 = arith.mulf %1402, %1403 : vector<16x8xf32>
      %c16_713 = arith.constant 16 : index
      %c0_714 = arith.constant 0 : index
      %1405 = vector.load %arg26[%c16_713, %c0_714] : memref<64x8xf32, #tpu.memory_space<vmem>>, vector<16x8xf32>
      tpu.vector_store %arg26[%c16_713, %c0_714], %1404 {strides = array<i32>} : memref<64x8xf32, #tpu.memory_space<vmem>>, vector<16x8xf32>,
      %1406 = vector.extract_strided_slice %1398 {offsets = [0, 1], sizes = [16, 1], strides = [1, 1]} : vector<16x3xf32> to vector<16x1xf32>
      %1407 = vector.broadcast %1406 : vector<16x1xf32> to vector<16x8xf32>
      %1408 = vector.broadcast %1399 : vector<1x8xf32> to vector<16x8xf32>
      %1409 = arith.mulf %1407, %1408 : vector<16x8xf32>
      %c32_715 = arith.constant 32 : index
      %c0_716 = arith.constant 0 : index
      %1410 = vector.load %arg26[%c32_715, %c0_716] : memref<64x8xf32, #tpu.memory_space<vmem>>, vector<16x8xf32>
      tpu.vector_store %arg26[%c32_715, %c0_716], %1409 {strides = array<i32>} : memref<64x8xf32, #tpu.memory_space<vmem>>, vector<16x8xf32>,
      %1411 = vector.extract_strided_slice %1398 {offsets = [0, 2], sizes = [16, 1], strides = [1, 1]} : vector<16x3xf32> to vector<16x1xf32>
      %1412 = vector.broadcast %1411 : vector<16x1xf32> to vector<16x8xf32>
      %1413 = vector.broadcast %1399 : vector<1x8xf32> to vector<16x8xf32>
      %1414 = arith.mulf %1412, %1413 : vector<16x8xf32>
      %c48_717 = arith.constant 48 : index
      %c0_718 = arith.constant 0 : index
      %1415 = vector.load %arg26[%c48_717, %c0_718] : memref<64x8xf32, #tpu.memory_space<vmem>>, vector<16x8xf32>
      tpu.vector_store %arg26[%c48_717, %c0_718], %1414 {strides = array<i32>} : memref<64x8xf32, #tpu.memory_space<vmem>>, vector<16x8xf32>,
    } else {
    }
    %c0_i32_1 = arith.constant 0 : i32
    %4 = arith.addi %0, %c0_i32_1 : i32
    %5 = arith.index_cast %arg0 : i32 to index
    %6 = arith.index_cast %4 : i32 to index
    %7 = memref.load %arg2[%5, %6] : memref<2x32xi32, #tpu.memory_space<smem>>
    %8 = arith.index_cast %arg0 : i32 to index
    %9 = arith.index_cast %4 : i32 to index
    %10 = memref.load %arg3[%8, %9] : memref<2x32xi32, #tpu.memory_space<smem>>
    %c0 = arith.constant 0 : index
    %11 = arith.index_cast %10 : i32 to index
    %c0_2 = arith.constant 0 : index
    %12 = vector.load %arg4[%c0, %11, %c0_2] : memref<1x16x3xf32, #tpu.memory_space<vmem>>, vector<1x1x3xf32>
    %13 = vector.shape_cast %12 : vector<1x1x3xf32> to vector<1x3xf32>
    %c0_3 = arith.constant 0 : index
    %14 = arith.index_cast %7 : i32 to index
    %c0_4 = arith.constant 0 : index
    %15 = vector.load %arg4[%c0_3, %14, %c0_4] : memref<1x16x3xf32, #tpu.memory_space<vmem>>, vector<1x1x3xf32>
    %16 = vector.shape_cast %15 : vector<1x1x3xf32> to vector<1x3xf32>
    %17 = arith.subf %13, %16 : vector<1x3xf32>
    %18 = arith.index_cast %c0_i32_1 : i32 to index
    %c0_5 = arith.constant 0 : index
    %19 = vector.load %arg30[%18, %c0_5] : memref<16x3xf32, #tpu.memory_space<vmem>>, vector<1x3xf32>
    tpu.vector_store %arg30[%18, %c0_5], %17 {strides = array<i32>} : memref<16x3xf32, #tpu.memory_space<vmem>>, vector<1x3xf32>,
    %20 = arith.index_cast %7 : i32 to index
    %c0_6 = arith.constant 0 : index
    %21 = vector.load %arg26[%20, %c0_6] : memref<64x8xf32, #tpu.memory_space<vmem>>, vector<1x8xf32>
    %22 = arith.index_cast %c0_i32_1 : i32 to index
    %c0_7 = arith.constant 0 : index
    %23 = vector.load %arg28[%22, %c0_7] : memref<64x8xf32, #tpu.memory_space<vmem>>, vector<1x8xf32>
    tpu.vector_store %arg28[%22, %c0_7], %21 {strides = array<i32>} : memref<64x8xf32, #tpu.memory_space<vmem>>, vector<1x8xf32>,
    %c16_i32_8 = arith.constant 16 : i32
    %24 = arith.addi %c16_i32_8, %7 : i32
    %25 = arith.index_cast %24 : i32 to index
    %c0_9 = arith.constant 0 : index
    %26 = vector.load %arg26[%25, %c0_9] : memref<64x8xf32, #tpu.memory_space<vmem>>, vector<1x8xf32>
    %c16_i32_10 = arith.constant 16 : i32
    %27 = arith.addi %c16_i32_10, %c0_i32_1 : i32
    %28 = arith.index_cast %27 : i32 to index
    %c0_11 = arith.constant 0 : index
    %29 = vector.load %arg28[%28, %c0_11] : memref<64x8xf32, #tpu.memory_space<vmem>>, vector<1x8xf32>
    tpu.vector_store %arg28[%28, %c0_11], %26 {strides = array<i32>} : memref<64x8xf32, #tpu.memory_space<vmem>>, vector<1x8xf32>,
    %c32_i32 = arith.constant 32 : i32
    %30 = arith.addi %c32_i32, %7 : i32
    %31 = arith.index_cast %30 : i32 to index
    %c0_12 = arith.constant 0 : index
    %32 = vector.load %arg26[%31, %c0_12] : memref<64x8xf32, #tpu.memory_space<vmem>>, vector<1x8xf32>
    %c32_i32_13 = arith.constant 32 : i32
    %33 = arith.addi %c32_i32_13, %c0_i32_1 : i32
    %34 = arith.index_cast %33 : i32 to index
    %c0_14 = arith.constant 0 : index
    %35 = vector.load %arg28[%34, %c0_14] : memref<64x8xf32, #tpu.memory_space<vmem>>, vector<1x8xf32>
    tpu.vector_store %arg28[%34, %c0_14], %32 {strides = array<i32>} : memref<64x8xf32, #tpu.memory_space<vmem>>, vector<1x8xf32>,
    %c48_i32 = arith.constant 48 : i32
    %36 = arith.addi %c48_i32, %7 : i32
    %37 = arith.index_cast %36 : i32 to index
    %c0_15 = arith.constant 0 : index
    %38 = vector.load %arg26[%37, %c0_15] : memref<64x8xf32, #tpu.memory_space<vmem>>, vector<1x8xf32>
    %c48_i32_16 = arith.constant 48 : i32
    %39 = arith.addi %c48_i32_16, %c0_i32_1 : i32
    %40 = arith.index_cast %39 : i32 to index
    %c0_17 = arith.constant 0 : index
    %41 = vector.load %arg28[%40, %c0_17] : memref<64x8xf32, #tpu.memory_space<vmem>>, vector<1x8xf32>
    tpu.vector_store %arg28[%40, %c0_17], %38 {strides = array<i32>} : memref<64x8xf32, #tpu.memory_space<vmem>>, vector<1x8xf32>,
    %c1_i32 = arith.constant 1 : i32
    %42 = arith.addi %0, %c1_i32 : i32
    %43 = arith.index_cast %arg0 : i32 to index
    %44 = arith.index_cast %42 : i32 to index
    %45 = memref.load %arg2[%43, %44] : memref<2x32xi32, #tpu.memory_space<smem>>
    %46 = arith.index_cast %arg0 : i32 to index
    %47 = arith.index_cast %42 : i32 to index
    %48 = memref.load %arg3[%46, %47] : memref<2x32xi32, #tpu.memory_space<smem>>
    %c0_18 = arith.constant 0 : index
    %49 = arith.index_cast %48 : i32 to index
    %c0_19 = arith.constant 0 : index
    %50 = vector.load %arg4[%c0_18, %49, %c0_19] : memref<1x16x3xf32, #tpu.memory_space<vmem>>, vector<1x1x3xf32>
    %51 = vector.shape_cast %50 : vector<1x1x3xf32> to vector<1x3xf32>
    %c0_20 = arith.constant 0 : index
    %52 = arith.index_cast %45 : i32 to index
    %c0_21 = arith.constant 0 : index
    %53 = vector.load %arg4[%c0_20, %52, %c0_21] : memref<1x16x3xf32, #tpu.memory_space<vmem>>, vector<1x1x3xf32>
    %54 = vector.shape_cast %53 : vector<1x1x3xf32> to vector<1x3xf32>
    %55 = arith.subf %51, %54 : vector<1x3xf32>
    %56 = arith.index_cast %c1_i32 : i32 to index
    %c0_22 = arith.constant 0 : index
    %57 = vector.load %arg30[%56, %c0_22] : memref<16x3xf32, #tpu.memory_space<vmem>>, vector<1x3xf32>
    tpu.vector_store %arg30[%56, %c0_22], %55 {strides = array<i32>} : memref<16x3xf32, #tpu.memory_space<vmem>>, vector<1x3xf32>,
    %58 = arith.index_cast %45 : i32 to index
    %c0_23 = arith.constant 0 : index
    %59 = vector.load %arg26[%58, %c0_23] : memref<64x8xf32, #tpu.memory_space<vmem>>, vector<1x8xf32>
    %60 = arith.index_cast %c1_i32 : i32 to index
    %c0_24 = arith.constant 0 : index
    %61 = vector.load %arg28[%60, %c0_24] : memref<64x8xf32, #tpu.memory_space<vmem>>, vector<1x8xf32>
    tpu.vector_store %arg28[%60, %c0_24], %59 {strides = array<i32>} : memref<64x8xf32, #tpu.memory_space<vmem>>, vector<1x8xf32>,
    %c16_i32_25 = arith.constant 16 : i32
    %62 = arith.addi %c16_i32_25, %45 : i32
    %63 = arith.index_cast %62 : i32 to index
    %c0_26 = arith.constant 0 : index
    %64 = vector.load %arg26[%63, %c0_26] : memref<64x8xf32, #tpu.memory_space<vmem>>, vector<1x8xf32>
    %c16_i32_27 = arith.constant 16 : i32
    %65 = arith.addi %c16_i32_27, %c1_i32 : i32
    %66 = arith.index_cast %65 : i32 to index
    %c0_28 = arith.constant 0 : index
    %67 = vector.load %arg28[%66, %c0_28] : memref<64x8xf32, #tpu.memory_space<vmem>>, vector<1x8xf32>
    tpu.vector_store %arg28[%66, %c0_28], %64 {strides = array<i32>} : memref<64x8xf32, #tpu.memory_space<vmem>>, vector<1x8xf32>,
    %c32_i32_29 = arith.constant 32 : i32
    %68 = arith.addi %c32_i32_29, %45 : i32
    %69 = arith.index_cast %68 : i32 to index
    %c0_30 = arith.constant 0 : index
    %70 = vector.load %arg26[%69, %c0_30] : memref<64x8xf32, #tpu.memory_space<vmem>>, vector<1x8xf32>
    %c32_i32_31 = arith.constant 32 : i32
    %71 = arith.addi %c32_i32_31, %c1_i32 : i32
    %72 = arith.index_cast %71 : i32 to index
    %c0_32 = arith.constant 0 : index
    %73 = vector.load %arg28[%72, %c0_32] : memref<64x8xf32, #tpu.memory_space<vmem>>, vector<1x8xf32>
    tpu.vector_store %arg28[%72, %c0_32], %70 {strides = array<i32>} : memref<64x8xf32, #tpu.memory_space<vmem>>, vector<1x8xf32>,
    %c48_i32_33 = arith.constant 48 : i32
    %74 = arith.addi %c48_i32_33, %45 : i32
    %75 = arith.index_cast %74 : i32 to index
    %c0_34 = arith.constant 0 : index
    %76 = vector.load %arg26[%75, %c0_34] : memref<64x8xf32, #tpu.memory_space<vmem>>, vector<1x8xf32>
    %c48_i32_35 = arith.constant 48 : i32
    %77 = arith.addi %c48_i32_35, %c1_i32 : i32
    %78 = arith.index_cast %77 : i32 to index
    %c0_36 = arith.constant 0 : index
    %79 = vector.load %arg28[%78, %c0_36] : memref<64x8xf32, #tpu.memory_space<vmem>>, vector<1x8xf32>
    tpu.vector_store %arg28[%78, %c0_36], %76 {strides = array<i32>} : memref<64x8xf32, #tpu.memory_space<vmem>>, vector<1x8xf32>,
    %c2_i32 = arith.constant 2 : i32
    %80 = arith.addi %0, %c2_i32 : i32
    %81 = arith.index_cast %arg0 : i32 to index
    %82 = arith.index_cast %80 : i32 to index
    %83 = memref.load %arg2[%81, %82] : memref<2x32xi32, #tpu.memory_space<smem>>
    %84 = arith.index_cast %arg0 : i32 to index
    %85 = arith.index_cast %80 : i32 to index
    %86 = memref.load %arg3[%84, %85] : memref<2x32xi32, #tpu.memory_space<smem>>
    %c0_37 = arith.constant 0 : index
    %87 = arith.index_cast %86 : i32 to index
    %c0_38 = arith.constant 0 : index
    %88 = vector.load %arg4[%c0_37, %87, %c0_38] : memref<1x16x3xf32, #tpu.memory_space<vmem>>, vector<1x1x3xf32>
    %89 = vector.shape_cast %88 : vector<1x1x3xf32> to vector<1x3xf32>
    %c0_39 = arith.constant 0 : index
    %90 = arith.index_cast %83 : i32 to index
    %c0_40 = arith.constant 0 : index
    %91 = vector.load %arg4[%c0_39, %90, %c0_40] : memref<1x16x3xf32, #tpu.memory_space<vmem>>, vector<1x1x3xf32>
    %92 = vector.shape_cast %91 : vector<1x1x3xf32> to vector<1x3xf32>
    %93 = arith.subf %89, %92 : vector<1x3xf32>
    %94 = arith.index_cast %c2_i32 : i32 to index
    %c0_41 = arith.constant 0 : index
    %95 = vector.load %arg30[%94, %c0_41] : memref<16x3xf32, #tpu.memory_space<vmem>>, vector<1x3xf32>
    tpu.vector_store %arg30[%94, %c0_41], %93 {strides = array<i32>} : memref<16x3xf32, #tpu.memory_space<vmem>>, vector<1x3xf32>,
    %96 = arith.index_cast %83 : i32 to index
    %c0_42 = arith.constant 0 : index
    %97 = vector.load %arg26[%96, %c0_42] : memref<64x8xf32, #tpu.memory_space<vmem>>, vector<1x8xf32>
    %98 = arith.index_cast %c2_i32 : i32 to index
    %c0_43 = arith.constant 0 : index
    %99 = vector.load %arg28[%98, %c0_43] : memref<64x8xf32, #tpu.memory_space<vmem>>, vector<1x8xf32>
    tpu.vector_store %arg28[%98, %c0_43], %97 {strides = array<i32>} : memref<64x8xf32, #tpu.memory_space<vmem>>, vector<1x8xf32>,
    %c16_i32_44 = arith.constant 16 : i32
    %100 = arith.addi %c16_i32_44, %83 : i32
    %101 = arith.index_cast %100 : i32 to index
    %c0_45 = arith.constant 0 : index
    %102 = vector.load %arg26[%101, %c0_45] : memref<64x8xf32, #tpu.memory_space<vmem>>, vector<1x8xf32>
    %c16_i32_46 = arith.constant 16 : i32
    %103 = arith.addi %c16_i32_46, %c2_i32 : i32
    %104 = arith.index_cast %103 : i32 to index
    %c0_47 = arith.constant 0 : index
    %105 = vector.load %arg28[%104, %c0_47] : memref<64x8xf32, #tpu.memory_space<vmem>>, vector<1x8xf32>
    tpu.vector_store %arg28[%104, %c0_47], %102 {strides = array<i32>} : memref<64x8xf32, #tpu.memory_space<vmem>>, vector<1x8xf32>,
    %c32_i32_48 = arith.constant 32 : i32
    %106 = arith.addi %c32_i32_48, %83 : i32
    %107 = arith.index_cast %106 : i32 to index
    %c0_49 = arith.constant 0 : index
    %108 = vector.load %arg26[%107, %c0_49] : memref<64x8xf32, #tpu.memory_space<vmem>>, vector<1x8xf32>
    %c32_i32_50 = arith.constant 32 : i32
    %109 = arith.addi %c32_i32_50, %c2_i32 : i32
    %110 = arith.index_cast %109 : i32 to index
    %c0_51 = arith.constant 0 : index
    %111 = vector.load %arg28[%110, %c0_51] : memref<64x8xf32, #tpu.memory_space<vmem>>, vector<1x8xf32>
    tpu.vector_store %arg28[%110, %c0_51], %108 {strides = array<i32>} : memref<64x8xf32, #tpu.memory_space<vmem>>, vector<1x8xf32>,
    %c48_i32_52 = arith.constant 48 : i32
    %112 = arith.addi %c48_i32_52, %83 : i32
    %113 = arith.index_cast %112 : i32 to index
    %c0_53 = arith.constant 0 : index
    %114 = vector.load %arg26[%113, %c0_53] : memref<64x8xf32, #tpu.memory_space<vmem>>, vector<1x8xf32>
    %c48_i32_54 = arith.constant 48 : i32
    %115 = arith.addi %c48_i32_54, %c2_i32 : i32
    %116 = arith.index_cast %115 : i32 to index
    %c0_55 = arith.constant 0 : index
    %117 = vector.load %arg28[%116, %c0_55] : memref<64x8xf32, #tpu.memory_space<vmem>>, vector<1x8xf32>
    tpu.vector_store %arg28[%116, %c0_55], %114 {strides = array<i32>} : memref<64x8xf32, #tpu.memory_space<vmem>>, vector<1x8xf32>,
    %c3_i32 = arith.constant 3 : i32
    %118 = arith.addi %0, %c3_i32 : i32
    %119 = arith.index_cast %arg0 : i32 to index
    %120 = arith.index_cast %118 : i32 to index
    %121 = memref.load %arg2[%119, %120] : memref<2x32xi32, #tpu.memory_space<smem>>
    %122 = arith.index_cast %arg0 : i32 to index
    %123 = arith.index_cast %118 : i32 to index
    %124 = memref.load %arg3[%122, %123] : memref<2x32xi32, #tpu.memory_space<smem>>
    %c0_56 = arith.constant 0 : index
    %125 = arith.index_cast %124 : i32 to index
    %c0_57 = arith.constant 0 : index
    %126 = vector.load %arg4[%c0_56, %125, %c0_57] : memref<1x16x3xf32, #tpu.memory_space<vmem>>, vector<1x1x3xf32>
    %127 = vector.shape_cast %126 : vector<1x1x3xf32> to vector<1x3xf32>
    %c0_58 = arith.constant 0 : index
    %128 = arith.index_cast %121 : i32 to index
    %c0_59 = arith.constant 0 : index
    %129 = vector.load %arg4[%c0_58, %128, %c0_59] : memref<1x16x3xf32, #tpu.memory_space<vmem>>, vector<1x1x3xf32>
    %130 = vector.shape_cast %129 : vector<1x1x3xf32> to vector<1x3xf32>
    %131 = arith.subf %127, %130 : vector<1x3xf32>
    %132 = arith.index_cast %c3_i32 : i32 to index
    %c0_60 = arith.constant 0 : index
    %133 = vector.load %arg30[%132, %c0_60] : memref<16x3xf32, #tpu.memory_space<vmem>>, vector<1x3xf32>
    tpu.vector_store %arg30[%132, %c0_60], %131 {strides = array<i32>} : memref<16x3xf32, #tpu.memory_space<vmem>>, vector<1x3xf32>,
    %134 = arith.index_cast %121 : i32 to index
    %c0_61 = arith.constant 0 : index
    %135 = vector.load %arg26[%134, %c0_61] : memref<64x8xf32, #tpu.memory_space<vmem>>, vector<1x8xf32>
    %136 = arith.index_cast %c3_i32 : i32 to index
    %c0_62 = arith.constant 0 : index
    %137 = vector.load %arg28[%136, %c0_62] : memref<64x8xf32, #tpu.memory_space<vmem>>, vector<1x8xf32>
    tpu.vector_store %arg28[%136, %c0_62], %135 {strides = array<i32>} : memref<64x8xf32, #tpu.memory_space<vmem>>, vector<1x8xf32>,
    %c16_i32_63 = arith.constant 16 : i32
    %138 = arith.addi %c16_i32_63, %121 : i32
    %139 = arith.index_cast %138 : i32 to index
    %c0_64 = arith.constant 0 : index
    %140 = vector.load %arg26[%139, %c0_64] : memref<64x8xf32, #tpu.memory_space<vmem>>, vector<1x8xf32>
    %c16_i32_65 = arith.constant 16 : i32
    %141 = arith.addi %c16_i32_65, %c3_i32 : i32
    %142 = arith.index_cast %141 : i32 to index
    %c0_66 = arith.constant 0 : index
    %143 = vector.load %arg28[%142, %c0_66] : memref<64x8xf32, #tpu.memory_space<vmem>>, vector<1x8xf32>
    tpu.vector_store %arg28[%142, %c0_66], %140 {strides = array<i32>} : memref<64x8xf32, #tpu.memory_space<vmem>>, vector<1x8xf32>,
    %c32_i32_67 = arith.constant 32 : i32
    %144 = arith.addi %c32_i32_67, %121 : i32
    %145 = arith.index_cast %144 : i32 to index
    %c0_68 = arith.constant 0 : index
    %146 = vector.load %arg26[%145, %c0_68] : memref<64x8xf32, #tpu.memory_space<vmem>>, vector<1x8xf32>
    %c32_i32_69 = arith.constant 32 : i32
    %147 = arith.addi %c32_i32_69, %c3_i32 : i32
    %148 = arith.index_cast %147 : i32 to index
    %c0_70 = arith.constant 0 : index
    %149 = vector.load %arg28[%148, %c0_70] : memref<64x8xf32, #tpu.memory_space<vmem>>, vector<1x8xf32>
    tpu.vector_store %arg28[%148, %c0_70], %146 {strides = array<i32>} : memref<64x8xf32, #tpu.memory_space<vmem>>, vector<1x8xf32>,
    %c48_i32_71 = arith.constant 48 : i32
    %150 = arith.addi %c48_i32_71, %121 : i32
    %151 = arith.index_cast %150 : i32 to index
    %c0_72 = arith.constant 0 : index
    %152 = vector.load %arg26[%151, %c0_72] : memref<64x8xf32, #tpu.memory_space<vmem>>, vector<1x8xf32>
    %c48_i32_73 = arith.constant 48 : i32
    %153 = arith.addi %c48_i32_73, %c3_i32 : i32
    %154 = arith.index_cast %153 : i32 to index
    %c0_74 = arith.constant 0 : index
    %155 = vector.load %arg28[%154, %c0_74] : memref<64x8xf32, #tpu.memory_space<vmem>>, vector<1x8xf32>
    tpu.vector_store %arg28[%154, %c0_74], %152 {strides = array<i32>} : memref<64x8xf32, #tpu.memory_space<vmem>>, vector<1x8xf32>,
    %c4_i32 = arith.constant 4 : i32
    %156 = arith.addi %0, %c4_i32 : i32
    %157 = arith.index_cast %arg0 : i32 to index
    %158 = arith.index_cast %156 : i32 to index
    %159 = memref.load %arg2[%157, %158] : memref<2x32xi32, #tpu.memory_space<smem>>
    %160 = arith.index_cast %arg0 : i32 to index
    %161 = arith.index_cast %156 : i32 to index
    %162 = memref.load %arg3[%160, %161] : memref<2x32xi32, #tpu.memory_space<smem>>
    %c0_75 = arith.constant 0 : index
    %163 = arith.index_cast %162 : i32 to index
    %c0_76 = arith.constant 0 : index
    %164 = vector.load %arg4[%c0_75, %163, %c0_76] : memref<1x16x3xf32, #tpu.memory_space<vmem>>, vector<1x1x3xf32>
    %165 = vector.shape_cast %164 : vector<1x1x3xf32> to vector<1x3xf32>
    %c0_77 = arith.constant 0 : index
    %166 = arith.index_cast %159 : i32 to index
    %c0_78 = arith.constant 0 : index
    %167 = vector.load %arg4[%c0_77, %166, %c0_78] : memref<1x16x3xf32, #tpu.memory_space<vmem>>, vector<1x1x3xf32>
    %168 = vector.shape_cast %167 : vector<1x1x3xf32> to vector<1x3xf32>
    %169 = arith.subf %165, %168 : vector<1x3xf32>
    %170 = arith.index_cast %c4_i32 : i32 to index
    %c0_79 = arith.constant 0 : index
    %171 = vector.load %arg30[%170, %c0_79] : memref<16x3xf32, #tpu.memory_space<vmem>>, vector<1x3xf32>
    tpu.vector_store %arg30[%170, %c0_79], %169 {strides = array<i32>} : memref<16x3xf32, #tpu.memory_space<vmem>>, vector<1x3xf32>,
    %172 = arith.index_cast %159 : i32 to index
    %c0_80 = arith.constant 0 : index
    %173 = vector.load %arg26[%172, %c0_80] : memref<64x8xf32, #tpu.memory_space<vmem>>, vector<1x8xf32>
    %174 = arith.index_cast %c4_i32 : i32 to index
    %c0_81 = arith.constant 0 : index
    %175 = vector.load %arg28[%174, %c0_81] : memref<64x8xf32, #tpu.memory_space<vmem>>, vector<1x8xf32>
    tpu.vector_store %arg28[%174, %c0_81], %173 {strides = array<i32>} : memref<64x8xf32, #tpu.memory_space<vmem>>, vector<1x8xf32>,
    %c16_i32_82 = arith.constant 16 : i32
    %176 = arith.addi %c16_i32_82, %159 : i32
    %177 = arith.index_cast %176 : i32 to index
    %c0_83 = arith.constant 0 : index
    %178 = vector.load %arg26[%177, %c0_83] : memref<64x8xf32, #tpu.memory_space<vmem>>, vector<1x8xf32>
    %c16_i32_84 = arith.constant 16 : i32
    %179 = arith.addi %c16_i32_84, %c4_i32 : i32
    %180 = arith.index_cast %179 : i32 to index
    %c0_85 = arith.constant 0 : index
    %181 = vector.load %arg28[%180, %c0_85] : memref<64x8xf32, #tpu.memory_space<vmem>>, vector<1x8xf32>
    tpu.vector_store %arg28[%180, %c0_85], %178 {strides = array<i32>} : memref<64x8xf32, #tpu.memory_space<vmem>>, vector<1x8xf32>,
    %c32_i32_86 = arith.constant 32 : i32
    %182 = arith.addi %c32_i32_86, %159 : i32
    %183 = arith.index_cast %182 : i32 to index
    %c0_87 = arith.constant 0 : index
    %184 = vector.load %arg26[%183, %c0_87] : memref<64x8xf32, #tpu.memory_space<vmem>>, vector<1x8xf32>
    %c32_i32_88 = arith.constant 32 : i32
    %185 = arith.addi %c32_i32_88, %c4_i32 : i32
    %186 = arith.index_cast %185 : i32 to index
    %c0_89 = arith.constant 0 : index
    %187 = vector.load %arg28[%186, %c0_89] : memref<64x8xf32, #tpu.memory_space<vmem>>, vector<1x8xf32>
    tpu.vector_store %arg28[%186, %c0_89], %184 {strides = array<i32>} : memref<64x8xf32, #tpu.memory_space<vmem>>, vector<1x8xf32>,
    %c48_i32_90 = arith.constant 48 : i32
    %188 = arith.addi %c48_i32_90, %159 : i32
    %189 = arith.index_cast %188 : i32 to index
    %c0_91 = arith.constant 0 : index
    %190 = vector.load %arg26[%189, %c0_91] : memref<64x8xf32, #tpu.memory_space<vmem>>, vector<1x8xf32>
    %c48_i32_92 = arith.constant 48 : i32
    %191 = arith.addi %c48_i32_92, %c4_i32 : i32
    %192 = arith.index_cast %191 : i32 to index
    %c0_93 = arith.constant 0 : index
    %193 = vector.load %arg28[%192, %c0_93] : memref<64x8xf32, #tpu.memory_space<vmem>>, vector<1x8xf32>
    tpu.vector_store %arg28[%192, %c0_93], %190 {strides = array<i32>} : memref<64x8xf32, #tpu.memory_space<vmem>>, vector<1x8xf32>,
    %c5_i32 = arith.constant 5 : i32
    %194 = arith.addi %0, %c5_i32 : i32
    %195 = arith.index_cast %arg0 : i32 to index
    %196 = arith.index_cast %194 : i32 to index
    %197 = memref.load %arg2[%195, %196] : memref<2x32xi32, #tpu.memory_space<smem>>
    %198 = arith.index_cast %arg0 : i32 to index
    %199 = arith.index_cast %194 : i32 to index
    %200 = memref.load %arg3[%198, %199] : memref<2x32xi32, #tpu.memory_space<smem>>
    %c0_94 = arith.constant 0 : index
    %201 = arith.index_cast %200 : i32 to index
    %c0_95 = arith.constant 0 : index
    %202 = vector.load %arg4[%c0_94, %201, %c0_95] : memref<1x16x3xf32, #tpu.memory_space<vmem>>, vector<1x1x3xf32>
    %203 = vector.shape_cast %202 : vector<1x1x3xf32> to vector<1x3xf32>
    %c0_96 = arith.constant 0 : index
    %204 = arith.index_cast %197 : i32 to index
    %c0_97 = arith.constant 0 : index
    %205 = vector.load %arg4[%c0_96, %204, %c0_97] : memref<1x16x3xf32, #tpu.memory_space<vmem>>, vector<1x1x3xf32>
    %206 = vector.shape_cast %205 : vector<1x1x3xf32> to vector<1x3xf32>
    %207 = arith.subf %203, %206 : vector<1x3xf32>
    %208 = arith.index_cast %c5_i32 : i32 to index
    %c0_98 = arith.constant 0 : index
    %209 = vector.load %arg30[%208, %c0_98] : memref<16x3xf32, #tpu.memory_space<vmem>>, vector<1x3xf32>
    tpu.vector_store %arg30[%208, %c0_98], %207 {strides = array<i32>} : memref<16x3xf32, #tpu.memory_space<vmem>>, vector<1x3xf32>,
    %210 = arith.index_cast %197 : i32 to index
    %c0_99 = arith.constant 0 : index
    %211 = vector.load %arg26[%210, %c0_99] : memref<64x8xf32, #tpu.memory_space<vmem>>, vector<1x8xf32>
    %212 = arith.index_cast %c5_i32 : i32 to index
    %c0_100 = arith.constant 0 : index
    %213 = vector.load %arg28[%212, %c0_100] : memref<64x8xf32, #tpu.memory_space<vmem>>, vector<1x8xf32>
    tpu.vector_store %arg28[%212, %c0_100], %211 {strides = array<i32>} : memref<64x8xf32, #tpu.memory_space<vmem>>, vector<1x8xf32>,
    %c16_i32_101 = arith.constant 16 : i32
    %214 = arith.addi %c16_i32_101, %197 : i32
    %215 = arith.index_cast %214 : i32 to index
    %c0_102 = arith.constant 0 : index
    %216 = vector.load %arg26[%215, %c0_102] : memref<64x8xf32, #tpu.memory_space<vmem>>, vector<1x8xf32>
    %c16_i32_103 = arith.constant 16 : i32
    %217 = arith.addi %c16_i32_103, %c5_i32 : i32
    %218 = arith.index_cast %217 : i32 to index
    %c0_104 = arith.constant 0 : index
    %219 = vector.load %arg28[%218, %c0_104] : memref<64x8xf32, #tpu.memory_space<vmem>>, vector<1x8xf32>
    tpu.vector_store %arg28[%218, %c0_104], %216 {strides = array<i32>} : memref<64x8xf32, #tpu.memory_space<vmem>>, vector<1x8xf32>,
    %c32_i32_105 = arith.constant 32 : i32
    %220 = arith.addi %c32_i32_105, %197 : i32
    %221 = arith.index_cast %220 : i32 to index
    %c0_106 = arith.constant 0 : index
    %222 = vector.load %arg26[%221, %c0_106] : memref<64x8xf32, #tpu.memory_space<vmem>>, vector<1x8xf32>
    %c32_i32_107 = arith.constant 32 : i32
    %223 = arith.addi %c32_i32_107, %c5_i32 : i32
    %224 = arith.index_cast %223 : i32 to index
    %c0_108 = arith.constant 0 : index
    %225 = vector.load %arg28[%224, %c0_108] : memref<64x8xf32, #tpu.memory_space<vmem>>, vector<1x8xf32>
    tpu.vector_store %arg28[%224, %c0_108], %222 {strides = array<i32>} : memref<64x8xf32, #tpu.memory_space<vmem>>, vector<1x8xf32>,
    %c48_i32_109 = arith.constant 48 : i32
    %226 = arith.addi %c48_i32_109, %197 : i32
    %227 = arith.index_cast %226 : i32 to index
    %c0_110 = arith.constant 0 : index
    %228 = vector.load %arg26[%227, %c0_110] : memref<64x8xf32, #tpu.memory_space<vmem>>, vector<1x8xf32>
    %c48_i32_111 = arith.constant 48 : i32
    %229 = arith.addi %c48_i32_111, %c5_i32 : i32
    %230 = arith.index_cast %229 : i32 to index
    %c0_112 = arith.constant 0 : index
    %231 = vector.load %arg28[%230, %c0_112] : memref<64x8xf32, #tpu.memory_space<vmem>>, vector<1x8xf32>
    tpu.vector_store %arg28[%230, %c0_112], %228 {strides = array<i32>} : memref<64x8xf32, #tpu.memory_space<vmem>>, vector<1x8xf32>,
    %c6_i32 = arith.constant 6 : i32
    %232 = arith.addi %0, %c6_i32 : i32
    %233 = arith.index_cast %arg0 : i32 to index
    %234 = arith.index_cast %232 : i32 to index
    %235 = memref.load %arg2[%233, %234] : memref<2x32xi32, #tpu.memory_space<smem>>
    %236 = arith.index_cast %arg0 : i32 to index
    %237 = arith.index_cast %232 : i32 to index
    %238 = memref.load %arg3[%236, %237] : memref<2x32xi32, #tpu.memory_space<smem>>
    %c0_113 = arith.constant 0 : index
    %239 = arith.index_cast %238 : i32 to index
    %c0_114 = arith.constant 0 : index
    %240 = vector.load %arg4[%c0_113, %239, %c0_114] : memref<1x16x3xf32, #tpu.memory_space<vmem>>, vector<1x1x3xf32>
    %241 = vector.shape_cast %240 : vector<1x1x3xf32> to vector<1x3xf32>
    %c0_115 = arith.constant 0 : index
    %242 = arith.index_cast %235 : i32 to index
    %c0_116 = arith.constant 0 : index
    %243 = vector.load %arg4[%c0_115, %242, %c0_116] : memref<1x16x3xf32, #tpu.memory_space<vmem>>, vector<1x1x3xf32>
    %244 = vector.shape_cast %243 : vector<1x1x3xf32> to vector<1x3xf32>
    %245 = arith.subf %241, %244 : vector<1x3xf32>
    %246 = arith.index_cast %c6_i32 : i32 to index
    %c0_117 = arith.constant 0 : index
    %247 = vector.load %arg30[%246, %c0_117] : memref<16x3xf32, #tpu.memory_space<vmem>>, vector<1x3xf32>
    tpu.vector_store %arg30[%246, %c0_117], %245 {strides = array<i32>} : memref<16x3xf32, #tpu.memory_space<vmem>>, vector<1x3xf32>,
    %248 = arith.index_cast %235 : i32 to index
    %c0_118 = arith.constant 0 : index
    %249 = vector.load %arg26[%248, %c0_118] : memref<64x8xf32, #tpu.memory_space<vmem>>, vector<1x8xf32>
    %250 = arith.index_cast %c6_i32 : i32 to index
    %c0_119 = arith.constant 0 : index
    %251 = vector.load %arg28[%250, %c0_119] : memref<64x8xf32, #tpu.memory_space<vmem>>, vector<1x8xf32>
    tpu.vector_store %arg28[%250, %c0_119], %249 {strides = array<i32>} : memref<64x8xf32, #tpu.memory_space<vmem>>, vector<1x8xf32>,
    %c16_i32_120 = arith.constant 16 : i32
    %252 = arith.addi %c16_i32_120, %235 : i32
    %253 = arith.index_cast %252 : i32 to index
    %c0_121 = arith.constant 0 : index
    %254 = vector.load %arg26[%253, %c0_121] : memref<64x8xf32, #tpu.memory_space<vmem>>, vector<1x8xf32>
    %c16_i32_122 = arith.constant 16 : i32
    %255 = arith.addi %c16_i32_122, %c6_i32 : i32
    %256 = arith.index_cast %255 : i32 to index
    %c0_123 = arith.constant 0 : index
    %257 = vector.load %arg28[%256, %c0_123] : memref<64x8xf32, #tpu.memory_space<vmem>>, vector<1x8xf32>
    tpu.vector_store %arg28[%256, %c0_123], %254 {strides = array<i32>} : memref<64x8xf32, #tpu.memory_space<vmem>>, vector<1x8xf32>,
    %c32_i32_124 = arith.constant 32 : i32
    %258 = arith.addi %c32_i32_124, %235 : i32
    %259 = arith.index_cast %258 : i32 to index
    %c0_125 = arith.constant 0 : index
    %260 = vector.load %arg26[%259, %c0_125] : memref<64x8xf32, #tpu.memory_space<vmem>>, vector<1x8xf32>
    %c32_i32_126 = arith.constant 32 : i32
    %261 = arith.addi %c32_i32_126, %c6_i32 : i32
    %262 = arith.index_cast %261 : i32 to index
    %c0_127 = arith.constant 0 : index
    %263 = vector.load %arg28[%262, %c0_127] : memref<64x8xf32, #tpu.memory_space<vmem>>, vector<1x8xf32>
    tpu.vector_store %arg28[%262, %c0_127], %260 {strides = array<i32>} : memref<64x8xf32, #tpu.memory_space<vmem>>, vector<1x8xf32>,
    %c48_i32_128 = arith.constant 48 : i32
    %264 = arith.addi %c48_i32_128, %235 : i32
    %265 = arith.index_cast %264 : i32 to index
    %c0_129 = arith.constant 0 : index
    %266 = vector.load %arg26[%265, %c0_129] : memref<64x8xf32, #tpu.memory_space<vmem>>, vector<1x8xf32>
    %c48_i32_130 = arith.constant 48 : i32
    %267 = arith.addi %c48_i32_130, %c6_i32 : i32
    %268 = arith.index_cast %267 : i32 to index
    %c0_131 = arith.constant 0 : index
    %269 = vector.load %arg28[%268, %c0_131] : memref<64x8xf32, #tpu.memory_space<vmem>>, vector<1x8xf32>
    tpu.vector_store %arg28[%268, %c0_131], %266 {strides = array<i32>} : memref<64x8xf32, #tpu.memory_space<vmem>>, vector<1x8xf32>,
    %c7_i32 = arith.constant 7 : i32
    %270 = arith.addi %0, %c7_i32 : i32
    %271 = arith.index_cast %arg0 : i32 to index
    %272 = arith.index_cast %270 : i32 to index
    %273 = memref.load %arg2[%271, %272] : memref<2x32xi32, #tpu.memory_space<smem>>
    %274 = arith.index_cast %arg0 : i32 to index
    %275 = arith.index_cast %270 : i32 to index
    %276 = memref.load %arg3[%274, %275] : memref<2x32xi32, #tpu.memory_space<smem>>
    %c0_132 = arith.constant 0 : index
    %277 = arith.index_cast %276 : i32 to index
    %c0_133 = arith.constant 0 : index
    %278 = vector.load %arg4[%c0_132, %277, %c0_133] : memref<1x16x3xf32, #tpu.memory_space<vmem>>, vector<1x1x3xf32>
    %279 = vector.shape_cast %278 : vector<1x1x3xf32> to vector<1x3xf32>
    %c0_134 = arith.constant 0 : index
    %280 = arith.index_cast %273 : i32 to index
    %c0_135 = arith.constant 0 : index
    %281 = vector.load %arg4[%c0_134, %280, %c0_135] : memref<1x16x3xf32, #tpu.memory_space<vmem>>, vector<1x1x3xf32>
    %282 = vector.shape_cast %281 : vector<1x1x3xf32> to vector<1x3xf32>
    %283 = arith.subf %279, %282 : vector<1x3xf32>
    %284 = arith.index_cast %c7_i32 : i32 to index
    %c0_136 = arith.constant 0 : index
    %285 = vector.load %arg30[%284, %c0_136] : memref<16x3xf32, #tpu.memory_space<vmem>>, vector<1x3xf32>
    tpu.vector_store %arg30[%284, %c0_136], %283 {strides = array<i32>} : memref<16x3xf32, #tpu.memory_space<vmem>>, vector<1x3xf32>,
    %286 = arith.index_cast %273 : i32 to index
    %c0_137 = arith.constant 0 : index
    %287 = vector.load %arg26[%286, %c0_137] : memref<64x8xf32, #tpu.memory_space<vmem>>, vector<1x8xf32>
    %288 = arith.index_cast %c7_i32 : i32 to index
    %c0_138 = arith.constant 0 : index
    %289 = vector.load %arg28[%288, %c0_138] : memref<64x8xf32, #tpu.memory_space<vmem>>, vector<1x8xf32>
    tpu.vector_store %arg28[%288, %c0_138], %287 {strides = array<i32>} : memref<64x8xf32, #tpu.memory_space<vmem>>, vector<1x8xf32>,
    %c16_i32_139 = arith.constant 16 : i32
    %290 = arith.addi %c16_i32_139, %273 : i32
    %291 = arith.index_cast %290 : i32 to index
    %c0_140 = arith.constant 0 : index
    %292 = vector.load %arg26[%291, %c0_140] : memref<64x8xf32, #tpu.memory_space<vmem>>, vector<1x8xf32>
    %c16_i32_141 = arith.constant 16 : i32
    %293 = arith.addi %c16_i32_141, %c7_i32 : i32
    %294 = arith.index_cast %293 : i32 to index
    %c0_142 = arith.constant 0 : index
    %295 = vector.load %arg28[%294, %c0_142] : memref<64x8xf32, #tpu.memory_space<vmem>>, vector<1x8xf32>
    tpu.vector_store %arg28[%294, %c0_142], %292 {strides = array<i32>} : memref<64x8xf32, #tpu.memory_space<vmem>>, vector<1x8xf32>,
    %c32_i32_143 = arith.constant 32 : i32
    %296 = arith.addi %c32_i32_143, %273 : i32
    %297 = arith.index_cast %296 : i32 to index
    %c0_144 = arith.constant 0 : index
    %298 = vector.load %arg26[%297, %c0_144] : memref<64x8xf32, #tpu.memory_space<vmem>>, vector<1x8xf32>
    %c32_i32_145 = arith.constant 32 : i32
    %299 = arith.addi %c32_i32_145, %c7_i32 : i32
    %300 = arith.index_cast %299 : i32 to index
    %c0_146 = arith.constant 0 : index
    %301 = vector.load %arg28[%300, %c0_146] : memref<64x8xf32, #tpu.memory_space<vmem>>, vector<1x8xf32>
    tpu.vector_store %arg28[%300, %c0_146], %298 {strides = array<i32>} : memref<64x8xf32, #tpu.memory_space<vmem>>, vector<1x8xf32>,
    %c48_i32_147 = arith.constant 48 : i32
    %302 = arith.addi %c48_i32_147, %273 : i32
    %303 = arith.index_cast %302 : i32 to index
    %c0_148 = arith.constant 0 : index
    %304 = vector.load %arg26[%303, %c0_148] : memref<64x8xf32, #tpu.memory_space<vmem>>, vector<1x8xf32>
    %c48_i32_149 = arith.constant 48 : i32
    %305 = arith.addi %c48_i32_149, %c7_i32 : i32
    %306 = arith.index_cast %305 : i32 to index
    %c0_150 = arith.constant 0 : index
    %307 = vector.load %arg28[%306, %c0_150] : memref<64x8xf32, #tpu.memory_space<vmem>>, vector<1x8xf32>
    tpu.vector_store %arg28[%306, %c0_150], %304 {strides = array<i32>} : memref<64x8xf32, #tpu.memory_space<vmem>>, vector<1x8xf32>,
    %c8_i32 = arith.constant 8 : i32
    %308 = arith.addi %0, %c8_i32 : i32
    %309 = arith.index_cast %arg0 : i32 to index
    %310 = arith.index_cast %308 : i32 to index
    %311 = memref.load %arg2[%309, %310] : memref<2x32xi32, #tpu.memory_space<smem>>
    %312 = arith.index_cast %arg0 : i32 to index
    %313 = arith.index_cast %308 : i32 to index
    %314 = memref.load %arg3[%312, %313] : memref<2x32xi32, #tpu.memory_space<smem>>
    %c0_151 = arith.constant 0 : index
    %315 = arith.index_cast %314 : i32 to index
    %c0_152 = arith.constant 0 : index
    %316 = vector.load %arg4[%c0_151, %315, %c0_152] : memref<1x16x3xf32, #tpu.memory_space<vmem>>, vector<1x1x3xf32>
    %317 = vector.shape_cast %316 : vector<1x1x3xf32> to vector<1x3xf32>
    %c0_153 = arith.constant 0 : index
    %318 = arith.index_cast %311 : i32 to index
    %c0_154 = arith.constant 0 : index
    %319 = vector.load %arg4[%c0_153, %318, %c0_154] : memref<1x16x3xf32, #tpu.memory_space<vmem>>, vector<1x1x3xf32>
    %320 = vector.shape_cast %319 : vector<1x1x3xf32> to vector<1x3xf32>
    %321 = arith.subf %317, %320 : vector<1x3xf32>
    %322 = arith.index_cast %c8_i32 : i32 to index
    %c0_155 = arith.constant 0 : index
    %323 = vector.load %arg30[%322, %c0_155] : memref<16x3xf32, #tpu.memory_space<vmem>>, vector<1x3xf32>
    tpu.vector_store %arg30[%322, %c0_155], %321 {strides = array<i32>} : memref<16x3xf32, #tpu.memory_space<vmem>>, vector<1x3xf32>,
    %324 = arith.index_cast %311 : i32 to index
    %c0_156 = arith.constant 0 : index
    %325 = vector.load %arg26[%324, %c0_156] : memref<64x8xf32, #tpu.memory_space<vmem>>, vector<1x8xf32>
    %326 = arith.index_cast %c8_i32 : i32 to index
    %c0_157 = arith.constant 0 : index
    %327 = vector.load %arg28[%326, %c0_157] : memref<64x8xf32, #tpu.memory_space<vmem>>, vector<1x8xf32>
    tpu.vector_store %arg28[%326, %c0_157], %325 {strides = array<i32>} : memref<64x8xf32, #tpu.memory_space<vmem>>, vector<1x8xf32>,
    %c16_i32_158 = arith.constant 16 : i32
    %328 = arith.addi %c16_i32_158, %311 : i32
    %329 = arith.index_cast %328 : i32 to index
    %c0_159 = arith.constant 0 : index
    %330 = vector.load %arg26[%329, %c0_159] : memref<64x8xf32, #tpu.memory_space<vmem>>, vector<1x8xf32>
    %c16_i32_160 = arith.constant 16 : i32
    %331 = arith.addi %c16_i32_160, %c8_i32 : i32
    %332 = arith.index_cast %331 : i32 to index
    %c0_161 = arith.constant 0 : index
    %333 = vector.load %arg28[%332, %c0_161] : memref<64x8xf32, #tpu.memory_space<vmem>>, vector<1x8xf32>
    tpu.vector_store %arg28[%332, %c0_161], %330 {strides = array<i32>} : memref<64x8xf32, #tpu.memory_space<vmem>>, vector<1x8xf32>,
    %c32_i32_162 = arith.constant 32 : i32
    %334 = arith.addi %c32_i32_162, %311 : i32
    %335 = arith.index_cast %334 : i32 to index
    %c0_163 = arith.constant 0 : index
    %336 = vector.load %arg26[%335, %c0_163] : memref<64x8xf32, #tpu.memory_space<vmem>>, vector<1x8xf32>
    %c32_i32_164 = arith.constant 32 : i32
    %337 = arith.addi %c32_i32_164, %c8_i32 : i32
    %338 = arith.index_cast %337 : i32 to index
    %c0_165 = arith.constant 0 : index
    %339 = vector.load %arg28[%338, %c0_165] : memref<64x8xf32, #tpu.memory_space<vmem>>, vector<1x8xf32>
    tpu.vector_store %arg28[%338, %c0_165], %336 {strides = array<i32>} : memref<64x8xf32, #tpu.memory_space<vmem>>, vector<1x8xf32>,
    %c48_i32_166 = arith.constant 48 : i32
    %340 = arith.addi %c48_i32_166, %311 : i32
    %341 = arith.index_cast %340 : i32 to index
    %c0_167 = arith.constant 0 : index
    %342 = vector.load %arg26[%341, %c0_167] : memref<64x8xf32, #tpu.memory_space<vmem>>, vector<1x8xf32>
    %c48_i32_168 = arith.constant 48 : i32
    %343 = arith.addi %c48_i32_168, %c8_i32 : i32
    %344 = arith.index_cast %343 : i32 to index
    %c0_169 = arith.constant 0 : index
    %345 = vector.load %arg28[%344, %c0_169] : memref<64x8xf32, #tpu.memory_space<vmem>>, vector<1x8xf32>
    tpu.vector_store %arg28[%344, %c0_169], %342 {strides = array<i32>} : memref<64x8xf32, #tpu.memory_space<vmem>>, vector<1x8xf32>,
    %c9_i32 = arith.constant 9 : i32
    %346 = arith.addi %0, %c9_i32 : i32
    %347 = arith.index_cast %arg0 : i32 to index
    %348 = arith.index_cast %346 : i32 to index
    %349 = memref.load %arg2[%347, %348] : memref<2x32xi32, #tpu.memory_space<smem>>
    %350 = arith.index_cast %arg0 : i32 to index
    %351 = arith.index_cast %346 : i32 to index
    %352 = memref.load %arg3[%350, %351] : memref<2x32xi32, #tpu.memory_space<smem>>
    %c0_170 = arith.constant 0 : index
    %353 = arith.index_cast %352 : i32 to index
    %c0_171 = arith.constant 0 : index
    %354 = vector.load %arg4[%c0_170, %353, %c0_171] : memref<1x16x3xf32, #tpu.memory_space<vmem>>, vector<1x1x3xf32>
    %355 = vector.shape_cast %354 : vector<1x1x3xf32> to vector<1x3xf32>
    %c0_172 = arith.constant 0 : index
    %356 = arith.index_cast %349 : i32 to index
    %c0_173 = arith.constant 0 : index
    %357 = vector.load %arg4[%c0_172, %356, %c0_173] : memref<1x16x3xf32, #tpu.memory_space<vmem>>, vector<1x1x3xf32>
    %358 = vector.shape_cast %357 : vector<1x1x3xf32> to vector<1x3xf32>
    %359 = arith.subf %355, %358 : vector<1x3xf32>
    %360 = arith.index_cast %c9_i32 : i32 to index
    %c0_174 = arith.constant 0 : index
    %361 = vector.load %arg30[%360, %c0_174] : memref<16x3xf32, #tpu.memory_space<vmem>>, vector<1x3xf32>
    tpu.vector_store %arg30[%360, %c0_174], %359 {strides = array<i32>} : memref<16x3xf32, #tpu.memory_space<vmem>>, vector<1x3xf32>,
    %362 = arith.index_cast %349 : i32 to index
    %c0_175 = arith.constant 0 : index
    %363 = vector.load %arg26[%362, %c0_175] : memref<64x8xf32, #tpu.memory_space<vmem>>, vector<1x8xf32>
    %364 = arith.index_cast %c9_i32 : i32 to index
    %c0_176 = arith.constant 0 : index
    %365 = vector.load %arg28[%364, %c0_176] : memref<64x8xf32, #tpu.memory_space<vmem>>, vector<1x8xf32>
    tpu.vector_store %arg28[%364, %c0_176], %363 {strides = array<i32>} : memref<64x8xf32, #tpu.memory_space<vmem>>, vector<1x8xf32>,
    %c16_i32_177 = arith.constant 16 : i32
    %366 = arith.addi %c16_i32_177, %349 : i32
    %367 = arith.index_cast %366 : i32 to index
    %c0_178 = arith.constant 0 : index
    %368 = vector.load %arg26[%367, %c0_178] : memref<64x8xf32, #tpu.memory_space<vmem>>, vector<1x8xf32>
    %c16_i32_179 = arith.constant 16 : i32
    %369 = arith.addi %c16_i32_179, %c9_i32 : i32
    %370 = arith.index_cast %369 : i32 to index
    %c0_180 = arith.constant 0 : index
    %371 = vector.load %arg28[%370, %c0_180] : memref<64x8xf32, #tpu.memory_space<vmem>>, vector<1x8xf32>
    tpu.vector_store %arg28[%370, %c0_180], %368 {strides = array<i32>} : memref<64x8xf32, #tpu.memory_space<vmem>>, vector<1x8xf32>,
    %c32_i32_181 = arith.constant 32 : i32
    %372 = arith.addi %c32_i32_181, %349 : i32
    %373 = arith.index_cast %372 : i32 to index
    %c0_182 = arith.constant 0 : index
    %374 = vector.load %arg26[%373, %c0_182] : memref<64x8xf32, #tpu.memory_space<vmem>>, vector<1x8xf32>
    %c32_i32_183 = arith.constant 32 : i32
    %375 = arith.addi %c32_i32_183, %c9_i32 : i32
    %376 = arith.index_cast %375 : i32 to index
    %c0_184 = arith.constant 0 : index
    %377 = vector.load %arg28[%376, %c0_184] : memref<64x8xf32, #tpu.memory_space<vmem>>, vector<1x8xf32>
    tpu.vector_store %arg28[%376, %c0_184], %374 {strides = array<i32>} : memref<64x8xf32, #tpu.memory_space<vmem>>, vector<1x8xf32>,
    %c48_i32_185 = arith.constant 48 : i32
    %378 = arith.addi %c48_i32_185, %349 : i32
    %379 = arith.index_cast %378 : i32 to index
    %c0_186 = arith.constant 0 : index
    %380 = vector.load %arg26[%379, %c0_186] : memref<64x8xf32, #tpu.memory_space<vmem>>, vector<1x8xf32>
    %c48_i32_187 = arith.constant 48 : i32
    %381 = arith.addi %c48_i32_187, %c9_i32 : i32
    %382 = arith.index_cast %381 : i32 to index
    %c0_188 = arith.constant 0 : index
    %383 = vector.load %arg28[%382, %c0_188] : memref<64x8xf32, #tpu.memory_space<vmem>>, vector<1x8xf32>
    tpu.vector_store %arg28[%382, %c0_188], %380 {strides = array<i32>} : memref<64x8xf32, #tpu.memory_space<vmem>>, vector<1x8xf32>,
    %c10_i32 = arith.constant 10 : i32
    %384 = arith.addi %0, %c10_i32 : i32
    %385 = arith.index_cast %arg0 : i32 to index
    %386 = arith.index_cast %384 : i32 to index
    %387 = memref.load %arg2[%385, %386] : memref<2x32xi32, #tpu.memory_space<smem>>
    %388 = arith.index_cast %arg0 : i32 to index
    %389 = arith.index_cast %384 : i32 to index
    %390 = memref.load %arg3[%388, %389] : memref<2x32xi32, #tpu.memory_space<smem>>
    %c0_189 = arith.constant 0 : index
    %391 = arith.index_cast %390 : i32 to index
    %c0_190 = arith.constant 0 : index
    %392 = vector.load %arg4[%c0_189, %391, %c0_190] : memref<1x16x3xf32, #tpu.memory_space<vmem>>, vector<1x1x3xf32>
    %393 = vector.shape_cast %392 : vector<1x1x3xf32> to vector<1x3xf32>
    %c0_191 = arith.constant 0 : index
    %394 = arith.index_cast %387 : i32 to index
    %c0_192 = arith.constant 0 : index
    %395 = vector.load %arg4[%c0_191, %394, %c0_192] : memref<1x16x3xf32, #tpu.memory_space<vmem>>, vector<1x1x3xf32>
    %396 = vector.shape_cast %395 : vector<1x1x3xf32> to vector<1x3xf32>
    %397 = arith.subf %393, %396 : vector<1x3xf32>
    %398 = arith.index_cast %c10_i32 : i32 to index
    %c0_193 = arith.constant 0 : index
    %399 = vector.load %arg30[%398, %c0_193] : memref<16x3xf32, #tpu.memory_space<vmem>>, vector<1x3xf32>
    tpu.vector_store %arg30[%398, %c0_193], %397 {strides = array<i32>} : memref<16x3xf32, #tpu.memory_space<vmem>>, vector<1x3xf32>,
    %400 = arith.index_cast %387 : i32 to index
    %c0_194 = arith.constant 0 : index
    %401 = vector.load %arg26[%400, %c0_194] : memref<64x8xf32, #tpu.memory_space<vmem>>, vector<1x8xf32>
    %402 = arith.index_cast %c10_i32 : i32 to index
    %c0_195 = arith.constant 0 : index
    %403 = vector.load %arg28[%402, %c0_195] : memref<64x8xf32, #tpu.memory_space<vmem>>, vector<1x8xf32>
    tpu.vector_store %arg28[%402, %c0_195], %401 {strides = array<i32>} : memref<64x8xf32, #tpu.memory_space<vmem>>, vector<1x8xf32>,
    %c16_i32_196 = arith.constant 16 : i32
    %404 = arith.addi %c16_i32_196, %387 : i32
    %405 = arith.index_cast %404 : i32 to index
    %c0_197 = arith.constant 0 : index
    %406 = vector.load %arg26[%405, %c0_197] : memref<64x8xf32, #tpu.memory_space<vmem>>, vector<1x8xf32>
    %c16_i32_198 = arith.constant 16 : i32
    %407 = arith.addi %c16_i32_198, %c10_i32 : i32
    %408 = arith.index_cast %407 : i32 to index
    %c0_199 = arith.constant 0 : index
    %409 = vector.load %arg28[%408, %c0_199] : memref<64x8xf32, #tpu.memory_space<vmem>>, vector<1x8xf32>
    tpu.vector_store %arg28[%408, %c0_199], %406 {strides = array<i32>} : memref<64x8xf32, #tpu.memory_space<vmem>>, vector<1x8xf32>,
    %c32_i32_200 = arith.constant 32 : i32
    %410 = arith.addi %c32_i32_200, %387 : i32
    %411 = arith.index_cast %410 : i32 to index
    %c0_201 = arith.constant 0 : index
    %412 = vector.load %arg26[%411, %c0_201] : memref<64x8xf32, #tpu.memory_space<vmem>>, vector<1x8xf32>
    %c32_i32_202 = arith.constant 32 : i32
    %413 = arith.addi %c32_i32_202, %c10_i32 : i32
    %414 = arith.index_cast %413 : i32 to index
    %c0_203 = arith.constant 0 : index
    %415 = vector.load %arg28[%414, %c0_203] : memref<64x8xf32, #tpu.memory_space<vmem>>, vector<1x8xf32>
    tpu.vector_store %arg28[%414, %c0_203], %412 {strides = array<i32>} : memref<64x8xf32, #tpu.memory_space<vmem>>, vector<1x8xf32>,
    %c48_i32_204 = arith.constant 48 : i32
    %416 = arith.addi %c48_i32_204, %387 : i32
    %417 = arith.index_cast %416 : i32 to index
    %c0_205 = arith.constant 0 : index
    %418 = vector.load %arg26[%417, %c0_205] : memref<64x8xf32, #tpu.memory_space<vmem>>, vector<1x8xf32>
    %c48_i32_206 = arith.constant 48 : i32
    %419 = arith.addi %c48_i32_206, %c10_i32 : i32
    %420 = arith.index_cast %419 : i32 to index
    %c0_207 = arith.constant 0 : index
    %421 = vector.load %arg28[%420, %c0_207] : memref<64x8xf32, #tpu.memory_space<vmem>>, vector<1x8xf32>
    tpu.vector_store %arg28[%420, %c0_207], %418 {strides = array<i32>} : memref<64x8xf32, #tpu.memory_space<vmem>>, vector<1x8xf32>,
    %c11_i32 = arith.constant 11 : i32
    %422 = arith.addi %0, %c11_i32 : i32
    %423 = arith.index_cast %arg0 : i32 to index
    %424 = arith.index_cast %422 : i32 to index
    %425 = memref.load %arg2[%423, %424] : memref<2x32xi32, #tpu.memory_space<smem>>
    %426 = arith.index_cast %arg0 : i32 to index
    %427 = arith.index_cast %422 : i32 to index
    %428 = memref.load %arg3[%426, %427] : memref<2x32xi32, #tpu.memory_space<smem>>
    %c0_208 = arith.constant 0 : index
    %429 = arith.index_cast %428 : i32 to index
    %c0_209 = arith.constant 0 : index
    %430 = vector.load %arg4[%c0_208, %429, %c0_209] : memref<1x16x3xf32, #tpu.memory_space<vmem>>, vector<1x1x3xf32>
    %431 = vector.shape_cast %430 : vector<1x1x3xf32> to vector<1x3xf32>
    %c0_210 = arith.constant 0 : index
    %432 = arith.index_cast %425 : i32 to index
    %c0_211 = arith.constant 0 : index
    %433 = vector.load %arg4[%c0_210, %432, %c0_211] : memref<1x16x3xf32, #tpu.memory_space<vmem>>, vector<1x1x3xf32>
    %434 = vector.shape_cast %433 : vector<1x1x3xf32> to vector<1x3xf32>
    %435 = arith.subf %431, %434 : vector<1x3xf32>
    %436 = arith.index_cast %c11_i32 : i32 to index
    %c0_212 = arith.constant 0 : index
    %437 = vector.load %arg30[%436, %c0_212] : memref<16x3xf32, #tpu.memory_space<vmem>>, vector<1x3xf32>
    tpu.vector_store %arg30[%436, %c0_212], %435 {strides = array<i32>} : memref<16x3xf32, #tpu.memory_space<vmem>>, vector<1x3xf32>,
    %438 = arith.index_cast %425 : i32 to index
    %c0_213 = arith.constant 0 : index
    %439 = vector.load %arg26[%438, %c0_213] : memref<64x8xf32, #tpu.memory_space<vmem>>, vector<1x8xf32>
    %440 = arith.index_cast %c11_i32 : i32 to index
    %c0_214 = arith.constant 0 : index
    %441 = vector.load %arg28[%440, %c0_214] : memref<64x8xf32, #tpu.memory_space<vmem>>, vector<1x8xf32>
    tpu.vector_store %arg28[%440, %c0_214], %439 {strides = array<i32>} : memref<64x8xf32, #tpu.memory_space<vmem>>, vector<1x8xf32>,
    %c16_i32_215 = arith.constant 16 : i32
    %442 = arith.addi %c16_i32_215, %425 : i32
    %443 = arith.index_cast %442 : i32 to index
    %c0_216 = arith.constant 0 : index
    %444 = vector.load %arg26[%443, %c0_216] : memref<64x8xf32, #tpu.memory_space<vmem>>, vector<1x8xf32>
    %c16_i32_217 = arith.constant 16 : i32
    %445 = arith.addi %c16_i32_217, %c11_i32 : i32
    %446 = arith.index_cast %445 : i32 to index
    %c0_218 = arith.constant 0 : index
    %447 = vector.load %arg28[%446, %c0_218] : memref<64x8xf32, #tpu.memory_space<vmem>>, vector<1x8xf32>
    tpu.vector_store %arg28[%446, %c0_218], %444 {strides = array<i32>} : memref<64x8xf32, #tpu.memory_space<vmem>>, vector<1x8xf32>,
    %c32_i32_219 = arith.constant 32 : i32
    %448 = arith.addi %c32_i32_219, %425 : i32
    %449 = arith.index_cast %448 : i32 to index
    %c0_220 = arith.constant 0 : index
    %450 = vector.load %arg26[%449, %c0_220] : memref<64x8xf32, #tpu.memory_space<vmem>>, vector<1x8xf32>
    %c32_i32_221 = arith.constant 32 : i32
    %451 = arith.addi %c32_i32_221, %c11_i32 : i32
    %452 = arith.index_cast %451 : i32 to index
    %c0_222 = arith.constant 0 : index
    %453 = vector.load %arg28[%452, %c0_222] : memref<64x8xf32, #tpu.memory_space<vmem>>, vector<1x8xf32>
    tpu.vector_store %arg28[%452, %c0_222], %450 {strides = array<i32>} : memref<64x8xf32, #tpu.memory_space<vmem>>, vector<1x8xf32>,
    %c48_i32_223 = arith.constant 48 : i32
    %454 = arith.addi %c48_i32_223, %425 : i32
    %455 = arith.index_cast %454 : i32 to index
    %c0_224 = arith.constant 0 : index
    %456 = vector.load %arg26[%455, %c0_224] : memref<64x8xf32, #tpu.memory_space<vmem>>, vector<1x8xf32>
    %c48_i32_225 = arith.constant 48 : i32
    %457 = arith.addi %c48_i32_225, %c11_i32 : i32
    %458 = arith.index_cast %457 : i32 to index
    %c0_226 = arith.constant 0 : index
    %459 = vector.load %arg28[%458, %c0_226] : memref<64x8xf32, #tpu.memory_space<vmem>>, vector<1x8xf32>
    tpu.vector_store %arg28[%458, %c0_226], %456 {strides = array<i32>} : memref<64x8xf32, #tpu.memory_space<vmem>>, vector<1x8xf32>,
    %c12_i32 = arith.constant 12 : i32
    %460 = arith.addi %0, %c12_i32 : i32
    %461 = arith.index_cast %arg0 : i32 to index
    %462 = arith.index_cast %460 : i32 to index
    %463 = memref.load %arg2[%461, %462] : memref<2x32xi32, #tpu.memory_space<smem>>
    %464 = arith.index_cast %arg0 : i32 to index
    %465 = arith.index_cast %460 : i32 to index
    %466 = memref.load %arg3[%464, %465] : memref<2x32xi32, #tpu.memory_space<smem>>
    %c0_227 = arith.constant 0 : index
    %467 = arith.index_cast %466 : i32 to index
    %c0_228 = arith.constant 0 : index
    %468 = vector.load %arg4[%c0_227, %467, %c0_228] : memref<1x16x3xf32, #tpu.memory_space<vmem>>, vector<1x1x3xf32>
    %469 = vector.shape_cast %468 : vector<1x1x3xf32> to vector<1x3xf32>
    %c0_229 = arith.constant 0 : index
    %470 = arith.index_cast %463 : i32 to index
    %c0_230 = arith.constant 0 : index
    %471 = vector.load %arg4[%c0_229, %470, %c0_230] : memref<1x16x3xf32, #tpu.memory_space<vmem>>, vector<1x1x3xf32>
    %472 = vector.shape_cast %471 : vector<1x1x3xf32> to vector<1x3xf32>
    %473 = arith.subf %469, %472 : vector<1x3xf32>
    %474 = arith.index_cast %c12_i32 : i32 to index
    %c0_231 = arith.constant 0 : index
    %475 = vector.load %arg30[%474, %c0_231] : memref<16x3xf32, #tpu.memory_space<vmem>>, vector<1x3xf32>
    tpu.vector_store %arg30[%474, %c0_231], %473 {strides = array<i32>} : memref<16x3xf32, #tpu.memory_space<vmem>>, vector<1x3xf32>,
    %476 = arith.index_cast %463 : i32 to index
    %c0_232 = arith.constant 0 : index
    %477 = vector.load %arg26[%476, %c0_232] : memref<64x8xf32, #tpu.memory_space<vmem>>, vector<1x8xf32>
    %478 = arith.index_cast %c12_i32 : i32 to index
    %c0_233 = arith.constant 0 : index
    %479 = vector.load %arg28[%478, %c0_233] : memref<64x8xf32, #tpu.memory_space<vmem>>, vector<1x8xf32>
    tpu.vector_store %arg28[%478, %c0_233], %477 {strides = array<i32>} : memref<64x8xf32, #tpu.memory_space<vmem>>, vector<1x8xf32>,
    %c16_i32_234 = arith.constant 16 : i32
    %480 = arith.addi %c16_i32_234, %463 : i32
    %481 = arith.index_cast %480 : i32 to index
    %c0_235 = arith.constant 0 : index
    %482 = vector.load %arg26[%481, %c0_235] : memref<64x8xf32, #tpu.memory_space<vmem>>, vector<1x8xf32>
    %c16_i32_236 = arith.constant 16 : i32
    %483 = arith.addi %c16_i32_236, %c12_i32 : i32
    %484 = arith.index_cast %483 : i32 to index
    %c0_237 = arith.constant 0 : index
    %485 = vector.load %arg28[%484, %c0_237] : memref<64x8xf32, #tpu.memory_space<vmem>>, vector<1x8xf32>
    tpu.vector_store %arg28[%484, %c0_237], %482 {strides = array<i32>} : memref<64x8xf32, #tpu.memory_space<vmem>>, vector<1x8xf32>,
    %c32_i32_238 = arith.constant 32 : i32
    %486 = arith.addi %c32_i32_238, %463 : i32
    %487 = arith.index_cast %486 : i32 to index
    %c0_239 = arith.constant 0 : index
    %488 = vector.load %arg26[%487, %c0_239] : memref<64x8xf32, #tpu.memory_space<vmem>>, vector<1x8xf32>
    %c32_i32_240 = arith.constant 32 : i32
    %489 = arith.addi %c32_i32_240, %c12_i32 : i32
    %490 = arith.index_cast %489 : i32 to index
    %c0_241 = arith.constant 0 : index
    %491 = vector.load %arg28[%490, %c0_241] : memref<64x8xf32, #tpu.memory_space<vmem>>, vector<1x8xf32>
    tpu.vector_store %arg28[%490, %c0_241], %488 {strides = array<i32>} : memref<64x8xf32, #tpu.memory_space<vmem>>, vector<1x8xf32>,
    %c48_i32_242 = arith.constant 48 : i32
    %492 = arith.addi %c48_i32_242, %463 : i32
    %493 = arith.index_cast %492 : i32 to index
    %c0_243 = arith.constant 0 : index
    %494 = vector.load %arg26[%493, %c0_243] : memref<64x8xf32, #tpu.memory_space<vmem>>, vector<1x8xf32>
    %c48_i32_244 = arith.constant 48 : i32
    %495 = arith.addi %c48_i32_244, %c12_i32 : i32
    %496 = arith.index_cast %495 : i32 to index
    %c0_245 = arith.constant 0 : index
    %497 = vector.load %arg28[%496, %c0_245] : memref<64x8xf32, #tpu.memory_space<vmem>>, vector<1x8xf32>
    tpu.vector_store %arg28[%496, %c0_245], %494 {strides = array<i32>} : memref<64x8xf32, #tpu.memory_space<vmem>>, vector<1x8xf32>,
    %c13_i32 = arith.constant 13 : i32
    %498 = arith.addi %0, %c13_i32 : i32
    %499 = arith.index_cast %arg0 : i32 to index
    %500 = arith.index_cast %498 : i32 to index
    %501 = memref.load %arg2[%499, %500] : memref<2x32xi32, #tpu.memory_space<smem>>
    %502 = arith.index_cast %arg0 : i32 to index
    %503 = arith.index_cast %498 : i32 to index
    %504 = memref.load %arg3[%502, %503] : memref<2x32xi32, #tpu.memory_space<smem>>
    %c0_246 = arith.constant 0 : index
    %505 = arith.index_cast %504 : i32 to index
    %c0_247 = arith.constant 0 : index
    %506 = vector.load %arg4[%c0_246, %505, %c0_247] : memref<1x16x3xf32, #tpu.memory_space<vmem>>, vector<1x1x3xf32>
    %507 = vector.shape_cast %506 : vector<1x1x3xf32> to vector<1x3xf32>
    %c0_248 = arith.constant 0 : index
    %508 = arith.index_cast %501 : i32 to index
    %c0_249 = arith.constant 0 : index
    %509 = vector.load %arg4[%c0_248, %508, %c0_249] : memref<1x16x3xf32, #tpu.memory_space<vmem>>, vector<1x1x3xf32>
    %510 = vector.shape_cast %509 : vector<1x1x3xf32> to vector<1x3xf32>
    %511 = arith.subf %507, %510 : vector<1x3xf32>
    %512 = arith.index_cast %c13_i32 : i32 to index
    %c0_250 = arith.constant 0 : index
    %513 = vector.load %arg30[%512, %c0_250] : memref<16x3xf32, #tpu.memory_space<vmem>>, vector<1x3xf32>
    tpu.vector_store %arg30[%512, %c0_250], %511 {strides = array<i32>} : memref<16x3xf32, #tpu.memory_space<vmem>>, vector<1x3xf32>,
    %514 = arith.index_cast %501 : i32 to index
    %c0_251 = arith.constant 0 : index
    %515 = vector.load %arg26[%514, %c0_251] : memref<64x8xf32, #tpu.memory_space<vmem>>, vector<1x8xf32>
    %516 = arith.index_cast %c13_i32 : i32 to index
    %c0_252 = arith.constant 0 : index
    %517 = vector.load %arg28[%516, %c0_252] : memref<64x8xf32, #tpu.memory_space<vmem>>, vector<1x8xf32>
    tpu.vector_store %arg28[%516, %c0_252], %515 {strides = array<i32>} : memref<64x8xf32, #tpu.memory_space<vmem>>, vector<1x8xf32>,
    %c16_i32_253 = arith.constant 16 : i32
    %518 = arith.addi %c16_i32_253, %501 : i32
    %519 = arith.index_cast %518 : i32 to index
    %c0_254 = arith.constant 0 : index
    %520 = vector.load %arg26[%519, %c0_254] : memref<64x8xf32, #tpu.memory_space<vmem>>, vector<1x8xf32>
    %c16_i32_255 = arith.constant 16 : i32
    %521 = arith.addi %c16_i32_255, %c13_i32 : i32
    %522 = arith.index_cast %521 : i32 to index
    %c0_256 = arith.constant 0 : index
    %523 = vector.load %arg28[%522, %c0_256] : memref<64x8xf32, #tpu.memory_space<vmem>>, vector<1x8xf32>
    tpu.vector_store %arg28[%522, %c0_256], %520 {strides = array<i32>} : memref<64x8xf32, #tpu.memory_space<vmem>>, vector<1x8xf32>,
    %c32_i32_257 = arith.constant 32 : i32
    %524 = arith.addi %c32_i32_257, %501 : i32
    %525 = arith.index_cast %524 : i32 to index
    %c0_258 = arith.constant 0 : index
    %526 = vector.load %arg26[%525, %c0_258] : memref<64x8xf32, #tpu.memory_space<vmem>>, vector<1x8xf32>
    %c32_i32_259 = arith.constant 32 : i32
    %527 = arith.addi %c32_i32_259, %c13_i32 : i32
    %528 = arith.index_cast %527 : i32 to index
    %c0_260 = arith.constant 0 : index
    %529 = vector.load %arg28[%528, %c0_260] : memref<64x8xf32, #tpu.memory_space<vmem>>, vector<1x8xf32>
    tpu.vector_store %arg28[%528, %c0_260], %526 {strides = array<i32>} : memref<64x8xf32, #tpu.memory_space<vmem>>, vector<1x8xf32>,
    %c48_i32_261 = arith.constant 48 : i32
    %530 = arith.addi %c48_i32_261, %501 : i32
    %531 = arith.index_cast %530 : i32 to index
    %c0_262 = arith.constant 0 : index
    %532 = vector.load %arg26[%531, %c0_262] : memref<64x8xf32, #tpu.memory_space<vmem>>, vector<1x8xf32>
    %c48_i32_263 = arith.constant 48 : i32
    %533 = arith.addi %c48_i32_263, %c13_i32 : i32
    %534 = arith.index_cast %533 : i32 to index
    %c0_264 = arith.constant 0 : index
    %535 = vector.load %arg28[%534, %c0_264] : memref<64x8xf32, #tpu.memory_space<vmem>>, vector<1x8xf32>
    tpu.vector_store %arg28[%534, %c0_264], %532 {strides = array<i32>} : memref<64x8xf32, #tpu.memory_space<vmem>>, vector<1x8xf32>,
    %c14_i32 = arith.constant 14 : i32
    %536 = arith.addi %0, %c14_i32 : i32
    %537 = arith.index_cast %arg0 : i32 to index
    %538 = arith.index_cast %536 : i32 to index
    %539 = memref.load %arg2[%537, %538] : memref<2x32xi32, #tpu.memory_space<smem>>
    %540 = arith.index_cast %arg0 : i32 to index
    %541 = arith.index_cast %536 : i32 to index
    %542 = memref.load %arg3[%540, %541] : memref<2x32xi32, #tpu.memory_space<smem>>
    %c0_265 = arith.constant 0 : index
    %543 = arith.index_cast %542 : i32 to index
    %c0_266 = arith.constant 0 : index
    %544 = vector.load %arg4[%c0_265, %543, %c0_266] : memref<1x16x3xf32, #tpu.memory_space<vmem>>, vector<1x1x3xf32>
    %545 = vector.shape_cast %544 : vector<1x1x3xf32> to vector<1x3xf32>
    %c0_267 = arith.constant 0 : index
    %546 = arith.index_cast %539 : i32 to index
    %c0_268 = arith.constant 0 : index
    %547 = vector.load %arg4[%c0_267, %546, %c0_268] : memref<1x16x3xf32, #tpu.memory_space<vmem>>, vector<1x1x3xf32>
    %548 = vector.shape_cast %547 : vector<1x1x3xf32> to vector<1x3xf32>
    %549 = arith.subf %545, %548 : vector<1x3xf32>
    %550 = arith.index_cast %c14_i32 : i32 to index
    %c0_269 = arith.constant 0 : index
    %551 = vector.load %arg30[%550, %c0_269] : memref<16x3xf32, #tpu.memory_space<vmem>>, vector<1x3xf32>
    tpu.vector_store %arg30[%550, %c0_269], %549 {strides = array<i32>} : memref<16x3xf32, #tpu.memory_space<vmem>>, vector<1x3xf32>,
    %552 = arith.index_cast %539 : i32 to index
    %c0_270 = arith.constant 0 : index
    %553 = vector.load %arg26[%552, %c0_270] : memref<64x8xf32, #tpu.memory_space<vmem>>, vector<1x8xf32>
    %554 = arith.index_cast %c14_i32 : i32 to index
    %c0_271 = arith.constant 0 : index
    %555 = vector.load %arg28[%554, %c0_271] : memref<64x8xf32, #tpu.memory_space<vmem>>, vector<1x8xf32>
    tpu.vector_store %arg28[%554, %c0_271], %553 {strides = array<i32>} : memref<64x8xf32, #tpu.memory_space<vmem>>, vector<1x8xf32>,
    %c16_i32_272 = arith.constant 16 : i32
    %556 = arith.addi %c16_i32_272, %539 : i32
    %557 = arith.index_cast %556 : i32 to index
    %c0_273 = arith.constant 0 : index
    %558 = vector.load %arg26[%557, %c0_273] : memref<64x8xf32, #tpu.memory_space<vmem>>, vector<1x8xf32>
    %c16_i32_274 = arith.constant 16 : i32
    %559 = arith.addi %c16_i32_274, %c14_i32 : i32
    %560 = arith.index_cast %559 : i32 to index
    %c0_275 = arith.constant 0 : index
    %561 = vector.load %arg28[%560, %c0_275] : memref<64x8xf32, #tpu.memory_space<vmem>>, vector<1x8xf32>
    tpu.vector_store %arg28[%560, %c0_275], %558 {strides = array<i32>} : memref<64x8xf32, #tpu.memory_space<vmem>>, vector<1x8xf32>,
    %c32_i32_276 = arith.constant 32 : i32
    %562 = arith.addi %c32_i32_276, %539 : i32
    %563 = arith.index_cast %562 : i32 to index
    %c0_277 = arith.constant 0 : index
    %564 = vector.load %arg26[%563, %c0_277] : memref<64x8xf32, #tpu.memory_space<vmem>>, vector<1x8xf32>
    %c32_i32_278 = arith.constant 32 : i32
    %565 = arith.addi %c32_i32_278, %c14_i32 : i32
    %566 = arith.index_cast %565 : i32 to index
    %c0_279 = arith.constant 0 : index
    %567 = vector.load %arg28[%566, %c0_279] : memref<64x8xf32, #tpu.memory_space<vmem>>, vector<1x8xf32>
    tpu.vector_store %arg28[%566, %c0_279], %564 {strides = array<i32>} : memref<64x8xf32, #tpu.memory_space<vmem>>, vector<1x8xf32>,
    %c48_i32_280 = arith.constant 48 : i32
    %568 = arith.addi %c48_i32_280, %539 : i32
    %569 = arith.index_cast %568 : i32 to index
    %c0_281 = arith.constant 0 : index
    %570 = vector.load %arg26[%569, %c0_281] : memref<64x8xf32, #tpu.memory_space<vmem>>, vector<1x8xf32>
    %c48_i32_282 = arith.constant 48 : i32
    %571 = arith.addi %c48_i32_282, %c14_i32 : i32
    %572 = arith.index_cast %571 : i32 to index
    %c0_283 = arith.constant 0 : index
    %573 = vector.load %arg28[%572, %c0_283] : memref<64x8xf32, #tpu.memory_space<vmem>>, vector<1x8xf32>
    tpu.vector_store %arg28[%572, %c0_283], %570 {strides = array<i32>} : memref<64x8xf32, #tpu.memory_space<vmem>>, vector<1x8xf32>,
    %c15_i32 = arith.constant 15 : i32
    %574 = arith.addi %0, %c15_i32 : i32
    %575 = arith.index_cast %arg0 : i32 to index
    %576 = arith.index_cast %574 : i32 to index
    %577 = memref.load %arg2[%575, %576] : memref<2x32xi32, #tpu.memory_space<smem>>
    %578 = arith.index_cast %arg0 : i32 to index
    %579 = arith.index_cast %574 : i32 to index
    %580 = memref.load %arg3[%578, %579] : memref<2x32xi32, #tpu.memory_space<smem>>
    %c0_284 = arith.constant 0 : index
    %581 = arith.index_cast %580 : i32 to index
    %c0_285 = arith.constant 0 : index
    %582 = vector.load %arg4[%c0_284, %581, %c0_285] : memref<1x16x3xf32, #tpu.memory_space<vmem>>, vector<1x1x3xf32>
    %583 = vector.shape_cast %582 : vector<1x1x3xf32> to vector<1x3xf32>
    %c0_286 = arith.constant 0 : index
    %584 = arith.index_cast %577 : i32 to index
    %c0_287 = arith.constant 0 : index
    %585 = vector.load %arg4[%c0_286, %584, %c0_287] : memref<1x16x3xf32, #tpu.memory_space<vmem>>, vector<1x1x3xf32>
    %586 = vector.shape_cast %585 : vector<1x1x3xf32> to vector<1x3xf32>
    %587 = arith.subf %583, %586 : vector<1x3xf32>
    %588 = arith.index_cast %c15_i32 : i32 to index
    %c0_288 = arith.constant 0 : index
    %589 = vector.load %arg30[%588, %c0_288] : memref<16x3xf32, #tpu.memory_space<vmem>>, vector<1x3xf32>
    tpu.vector_store %arg30[%588, %c0_288], %587 {strides = array<i32>} : memref<16x3xf32, #tpu.memory_space<vmem>>, vector<1x3xf32>,
    %590 = arith.index_cast %577 : i32 to index
    %c0_289 = arith.constant 0 : index
    %591 = vector.load %arg26[%590, %c0_289] : memref<64x8xf32, #tpu.memory_space<vmem>>, vector<1x8xf32>
    %592 = arith.index_cast %c15_i32 : i32 to index
    %c0_290 = arith.constant 0 : index
    %593 = vector.load %arg28[%592, %c0_290] : memref<64x8xf32, #tpu.memory_space<vmem>>, vector<1x8xf32>
    tpu.vector_store %arg28[%592, %c0_290], %591 {strides = array<i32>} : memref<64x8xf32, #tpu.memory_space<vmem>>, vector<1x8xf32>,
    %c16_i32_291 = arith.constant 16 : i32
    %594 = arith.addi %c16_i32_291, %577 : i32
    %595 = arith.index_cast %594 : i32 to index
    %c0_292 = arith.constant 0 : index
    %596 = vector.load %arg26[%595, %c0_292] : memref<64x8xf32, #tpu.memory_space<vmem>>, vector<1x8xf32>
    %c16_i32_293 = arith.constant 16 : i32
    %597 = arith.addi %c16_i32_293, %c15_i32 : i32
    %598 = arith.index_cast %597 : i32 to index
    %c0_294 = arith.constant 0 : index
    %599 = vector.load %arg28[%598, %c0_294] : memref<64x8xf32, #tpu.memory_space<vmem>>, vector<1x8xf32>
    tpu.vector_store %arg28[%598, %c0_294], %596 {strides = array<i32>} : memref<64x8xf32, #tpu.memory_space<vmem>>, vector<1x8xf32>,
    %c32_i32_295 = arith.constant 32 : i32
    %600 = arith.addi %c32_i32_295, %577 : i32
    %601 = arith.index_cast %600 : i32 to index
    %c0_296 = arith.constant 0 : index
    %602 = vector.load %arg26[%601, %c0_296] : memref<64x8xf32, #tpu.memory_space<vmem>>, vector<1x8xf32>
    %c32_i32_297 = arith.constant 32 : i32
    %603 = arith.addi %c32_i32_297, %c15_i32 : i32
    %604 = arith.index_cast %603 : i32 to index
    %c0_298 = arith.constant 0 : index
    %605 = vector.load %arg28[%604, %c0_298] : memref<64x8xf32, #tpu.memory_space<vmem>>, vector<1x8xf32>
    tpu.vector_store %arg28[%604, %c0_298], %602 {strides = array<i32>} : memref<64x8xf32, #tpu.memory_space<vmem>>, vector<1x8xf32>,
    %c48_i32_299 = arith.constant 48 : i32
    %606 = arith.addi %c48_i32_299, %577 : i32
    %607 = arith.index_cast %606 : i32 to index
    %c0_300 = arith.constant 0 : index
    %608 = vector.load %arg26[%607, %c0_300] : memref<64x8xf32, #tpu.memory_space<vmem>>, vector<1x8xf32>
    %c48_i32_301 = arith.constant 48 : i32
    %609 = arith.addi %c48_i32_301, %c15_i32 : i32
    %610 = arith.index_cast %609 : i32 to index
    %c0_302 = arith.constant 0 : index
    %611 = vector.load %arg28[%610, %c0_302] : memref<64x8xf32, #tpu.memory_space<vmem>>, vector<1x8xf32>
    tpu.vector_store %arg28[%610, %c0_302], %608 {strides = array<i32>} : memref<64x8xf32, #tpu.memory_space<vmem>>, vector<1x8xf32>,
    %c16_i32_303 = arith.constant 16 : i32
    %c0_304 = arith.constant 0 : index
    %c0_305 = arith.constant 0 : index
    %612 = vector.load %arg30[%c0_304, %c0_305] : memref<16x3xf32, #tpu.memory_space<vmem>>, vector<16x3xf32>
    %613 = arith.mulf %612, %612 : vector<16x3xf32>
    %cst = arith.constant dense<0.000000e+00> : vector<16xf32>
    %614 = vector.multi_reduction <add>, %613, %cst [1] : vector<16x3xf32> to vector<16xf32>
    %615 = vector.shape_cast %614 : vector<16xf32> to vector<16x1xf32>
    %cst_306 = arith.constant 9.99999971E-10 : f32
    %616 = vector.broadcast %cst_306 : f32 to vector<16x1xf32>
    %617 = arith.addf %615, %616 : vector<16x1xf32>
    %618 = math.rsqrt %617 : vector<16x1xf32>
    %619 = arith.mulf %617, %618 : vector<16x1xf32>
    %cst_307 = arith.constant 2.000000e-01 : f32
    %620 = vector.broadcast %cst_307 : f32 to vector<16x1xf32>
    %621 = arith.mulf %619, %620 : vector<16x1xf32>
    %c0_308 = arith.constant 0 : index
    %c0_309 = arith.constant 0 : index
    %622 = vector.load %arg8[%c0_308, %c0_309] : memref<1x8xf32, #tpu.memory_space<vmem>>, vector<1x8xf32>
    %623 = vector.broadcast %622 : vector<1x8xf32> to vector<16x8xf32>
    %624 = vector.broadcast %621 : vector<16x1xf32> to vector<16x8xf32>
    %625 = arith.mulf %623, %624 : vector<16x8xf32>
    %626 = math.sin %625 : vector<16x8xf32>
    %cst_310 = arith.constant 0.632455527 : f32
    %627 = vector.broadcast %cst_310 : f32 to vector<16x8xf32>
    %628 = arith.mulf %627, %626 : vector<16x8xf32>
    %629 = vector.broadcast %618 : vector<16x1xf32> to vector<16x8xf32>
    %630 = arith.mulf %628, %629 : vector<16x8xf32>
    %631 = arith.mulf %621, %621 : vector<16x1xf32>
    %632 = arith.mulf %631, %621 : vector<16x1xf32>
    %633 = arith.mulf %632, %632 : vector<16x1xf32>
    %634 = arith.mulf %633, %621 : vector<16x1xf32>
    %635 = arith.mulf %634, %621 : vector<16x1xf32>
    %cst_311 = arith.constant 2.800000e+01 : f32
    %636 = vector.broadcast %cst_311 : f32 to vector<16x1xf32>
    %637 = arith.mulf %636, %633 : vector<16x1xf32>
    %cst_312 = arith.constant 1.000000e+00 : f32
    %638 = vector.broadcast %cst_312 : f32 to vector<16x1xf32>
    %639 = arith.subf %638, %637 : vector<16x1xf32>
    %cst_313 = arith.constant 4.800000e+01 : f32
    %640 = vector.broadcast %cst_313 : f32 to vector<16x1xf32>
    %641 = arith.mulf %640, %634 : vector<16x1xf32>
    %642 = arith.addf %639, %641 : vector<16x1xf32>
    %cst_314 = arith.constant 2.100000e+01 : f32
    %643 = vector.broadcast %cst_314 : f32 to vector<16x1xf32>
    %644 = arith.mulf %643, %635 : vector<16x1xf32>
    %645 = arith.subf %642, %644 : vector<16x1xf32>
    %cst_315 = arith.constant 1.000000e+00 : f32
    %646 = vector.broadcast %cst_315 : f32 to vector<16x1xf32>
    %647 = arith.cmpf olt, %621, %646 : vector<16x1xf32>
    %cst_316 = arith.constant 0.000000e+00 : f32
    %648 = vector.broadcast %cst_316 : f32 to vector<16x1xf32>
    %649 = arith.select %647, %645, %648 : vector<16x1xi1>, vector<16x1xf32>
    %650 = vector.broadcast %649 : vector<16x1xf32> to vector<16x8xf32>
    %651 = arith.mulf %630, %650 : vector<16x8xf32>
    %c0_317 = arith.constant 0 : index
    %c0_318 = arith.constant 0 : index
    %652 = vector.load %arg15[%c0_317, %c0_318] : memref<8x16xf32, #tpu.memory_space<vmem>>, vector<8x16xf32>
    %cst_319 = arith.constant dense<0.000000e+00> : vector<16x16xf32>
    %653 = tpu.matmul %651, %652, %cst_319 {dimension_numbers = #tpu.dot_dimension_numbers<[1], [0], [0], [1], [0, 0, 1, 1], [], []>} : vector<16x8xf32>, vector<8x16xf32>, vector<16x16xf32> -> vector<16x16xf32>
    %c0_320 = arith.constant 0 : index
    %c0_321 = arith.constant 0 : index
    %654 = vector.load %arg16[%c0_320, %c0_321] : memref<1x16xf32, #tpu.memory_space<vmem>>, vector<1x16xf32>
    %655 = vector.broadcast %654 : vector<1x16xf32> to vector<16x16xf32>
    %656 = arith.addf %653, %655 : vector<16x16xf32>
    %cst_322 = arith.constant 0.000000e+00 : f32
    %657 = vector.broadcast %cst_322 : f32 to vector<16x16xf32>
    %658 = arith.subf %657, %656 : vector<16x16xf32>
    %659 = math.exp %658 : vector<16x16xf32>
    %cst_323 = arith.constant 1.000000e+00 : f32
    %660 = vector.broadcast %cst_323 : f32 to vector<16x16xf32>
    %661 = arith.addf %660, %659 : vector<16x16xf32>
    %662 = tpu.reciprocal %661 {approx = true} : vector<16x16xf32> -> vector<16x16xf32>
    %663 = arith.mulf %656, %662 : vector<16x16xf32>
    %c0_324 = arith.constant 0 : index
    %c0_325 = arith.constant 0 : index
    %664 = vector.load %arg17[%c0_324, %c0_325] : memref<16x32xf32, #tpu.memory_space<vmem>>, vector<16x32xf32>
    %cst_326 = arith.constant dense<0.000000e+00> : vector<16x32xf32>
    %665 = tpu.matmul %663, %664, %cst_326 {dimension_numbers = #tpu.dot_dimension_numbers<[1], [0], [0], [1], [0, 0, 1, 1], [], []>} : vector<16x16xf32>, vector<16x32xf32>, vector<16x32xf32> -> vector<16x32xf32>
    %c0_327 = arith.constant 0 : index
    %c0_328 = arith.constant 0 : index
    %666 = vector.load %arg18[%c0_327, %c0_328] : memref<1x32xf32, #tpu.memory_space<vmem>>, vector<1x32xf32>
    %667 = vector.broadcast %666 : vector<1x32xf32> to vector<16x32xf32>
    %668 = arith.addf %665, %667 : vector<16x32xf32>
    %669 = vector.extract_strided_slice %668 {offsets = [0, 0], sizes = [16, 8], strides = [1, 1]} : vector<16x32xf32> to vector<16x8xf32>
    %670 = vector.extract_strided_slice %668 {offsets = [0, 8], sizes = [16, 8], strides = [1, 1]} : vector<16x32xf32> to vector<16x8xf32>
    %671 = vector.extract_strided_slice %668 {offsets = [0, 16], sizes = [16, 8], strides = [1, 1]} : vector<16x32xf32> to vector<16x8xf32>
    %672 = vector.extract_strided_slice %668 {offsets = [0, 24], sizes = [16, 8], strides = [1, 1]} : vector<16x32xf32> to vector<16x8xf32>
    %cst_329 = arith.constant 1.73205078 : f32
    %673 = vector.broadcast %cst_329 : f32 to vector<16x3xf32>
    %674 = arith.mulf %673, %612 : vector<16x3xf32>
    %675 = vector.broadcast %618 : vector<16x1xf32> to vector<16x3xf32>
    %676 = arith.mulf %674, %675 : vector<16x3xf32>
    %677 = vector.extract_strided_slice %676 {offsets = [0, 0], sizes = [16, 1], strides = [1, 1]} : vector<16x3xf32> to vector<16x1xf32>
    %678 = vector.extract_strided_slice %676 {offsets = [0, 1], sizes = [16, 1], strides = [1, 1]} : vector<16x3xf32> to vector<16x1xf32>
    %679 = vector.extract_strided_slice %676 {offsets = [0, 2], sizes = [16, 1], strides = [1, 1]} : vector<16x3xf32> to vector<16x1xf32>
    %c0_330 = arith.constant 0 : index
    %c0_331 = arith.constant 0 : index
    %680 = vector.load %arg28[%c0_330, %c0_331] : memref<64x8xf32, #tpu.memory_space<vmem>>, vector<64x8xf32>
    %681 = vector.extract_strided_slice %680 {offsets = [0, 0], sizes = [16, 8], strides = [1, 1]} : vector<64x8xf32> to vector<16x8xf32>
    %682 = vector.extract_strided_slice %680 {offsets = [16, 0], sizes = [16, 8], strides = [1, 1]} : vector<64x8xf32> to vector<16x8xf32>
    %683 = vector.extract_strided_slice %680 {offsets = [32, 0], sizes = [16, 8], strides = [1, 1]} : vector<64x8xf32> to vector<16x8xf32>
    %684 = vector.extract_strided_slice %680 {offsets = [48, 0], sizes = [16, 8], strides = [1, 1]} : vector<64x8xf32> to vector<16x8xf32>
    %685 = arith.mulf %670, %681 : vector<16x8xf32>
    %686 = arith.mulf %669, %681 : vector<16x8xf32>
    %cst_332 = arith.constant 0.577350259 : f32
    %687 = vector.broadcast %cst_332 : f32 to vector<16x8xf32>
    %688 = arith.mulf %672, %687 : vector<16x8xf32>
    %689 = vector.broadcast %677 : vector<16x1xf32> to vector<16x8xf32>
    %690 = arith.mulf %682, %689 : vector<16x8xf32>
    %691 = vector.broadcast %678 : vector<16x1xf32> to vector<16x8xf32>
    %692 = arith.mulf %683, %691 : vector<16x8xf32>
    %693 = arith.addf %690, %692 : vector<16x8xf32>
    %694 = vector.broadcast %679 : vector<16x1xf32> to vector<16x8xf32>
    %695 = arith.mulf %684, %694 : vector<16x8xf32>
    %696 = arith.addf %693, %695 : vector<16x8xf32>
    %697 = arith.mulf %688, %696 : vector<16x8xf32>
    %698 = arith.addf %686, %697 : vector<16x8xf32>
    %c0_333 = arith.constant 0 : index
    %c0_334 = arith.constant 0 : index
    %699 = vector.load %arg29[%c0_333, %c0_334] : memref<64x8xf32, #tpu.memory_space<vmem>>, vector<16x8xf32>
    tpu.vector_store %arg29[%c0_333, %c0_334], %698 {strides = array<i32>} : memref<64x8xf32, #tpu.memory_space<vmem>>, vector<16x8xf32>,
    %700 = arith.mulf %671, %682 : vector<16x8xf32>
    %701 = vector.broadcast %677 : vector<16x1xf32> to vector<16x8xf32>
    %702 = arith.mulf %685, %701 : vector<16x8xf32>
    %703 = arith.addf %700, %702 : vector<16x8xf32>
    %c16 = arith.constant 16 : index
    %c0_335 = arith.constant 0 : index
    %704 = vector.load %arg29[%c16, %c0_335] : memref<64x8xf32, #tpu.memory_space<vmem>>, vector<16x8xf32>
    tpu.vector_store %arg29[%c16, %c0_335], %703 {strides = array<i32>} : memref<64x8xf32, #tpu.memory_space<vmem>>, vector<16x8xf32>,
    %705 = arith.mulf %671, %683 : vector<16x8xf32>
    %706 = vector.broadcast %678 : vector<16x1xf32> to vector<16x8xf32>
    %707 = arith.mulf %685, %706 : vector<16x8xf32>
    %708 = arith.addf %705, %707 : vector<16x8xf32>
    %c32 = arith.constant 32 : index
    %c0_336 = arith.constant 0 : index
    %709 = vector.load %arg29[%c32, %c0_336] : memref<64x8xf32, #tpu.memory_space<vmem>>, vector<16x8xf32>
    tpu.vector_store %arg29[%c32, %c0_336], %708 {strides = array<i32>} : memref<64x8xf32, #tpu.memory_space<vmem>>, vector<16x8xf32>,
    %710 = arith.mulf %671, %684 : vector<16x8xf32>
    %711 = vector.broadcast %679 : vector<16x1xf32> to vector<16x8xf32>
    %712 = arith.mulf %685, %711 : vector<16x8xf32>
    %713 = arith.addf %710, %712 : vector<16x8xf32>
    %c48 = arith.constant 48 : index
    %c0_337 = arith.constant 0 : index
    %714 = vector.load %arg29[%c48, %c0_337] : memref<64x8xf32, #tpu.memory_space<vmem>>, vector<16x8xf32>
    tpu.vector_store %arg29[%c48, %c0_337], %713 {strides = array<i32>} : memref<64x8xf32, #tpu.memory_space<vmem>>, vector<16x8xf32>,
    %c0_i32_338 = arith.constant 0 : i32
    %715 = arith.addi %0, %c0_i32_338 : i32
    %716 = arith.index_cast %arg0 : i32 to index
    %717 = arith.index_cast %715 : i32 to index
    %718 = memref.load %arg3[%716, %717] : memref<2x32xi32, #tpu.memory_space<smem>>
    %c0_i32_339 = arith.constant 0 : i32
    %719 = arith.addi %c0_i32_339, %718 : i32
    %720 = arith.index_cast %719 : i32 to index
    %c0_340 = arith.constant 0 : index
    %721 = vector.load %arg27[%720, %c0_340] : memref<64x8xf32, #tpu.memory_space<vmem>>, vector<1x8xf32>
    %c0_i32_341 = arith.constant 0 : i32
    %722 = arith.addi %c0_i32_341, %c0_i32_338 : i32
    %723 = arith.index_cast %722 : i32 to index
    %c0_342 = arith.constant 0 : index
    %724 = vector.load %arg29[%723, %c0_342] : memref<64x8xf32, #tpu.memory_space<vmem>>, vector<1x8xf32>
    %725 = arith.addf %721, %724 : vector<1x8xf32>
    %726 = arith.index_cast %719 : i32 to index
    %c0_343 = arith.constant 0 : index
    %727 = vector.load %arg27[%726, %c0_343] : memref<64x8xf32, #tpu.memory_space<vmem>>, vector<1x8xf32>
    tpu.vector_store %arg27[%726, %c0_343], %725 {strides = array<i32>} : memref<64x8xf32, #tpu.memory_space<vmem>>, vector<1x8xf32>,
    %c16_i32_344 = arith.constant 16 : i32
    %728 = arith.addi %c16_i32_344, %718 : i32
    %729 = arith.index_cast %728 : i32 to index
    %c0_345 = arith.constant 0 : index
    %730 = vector.load %arg27[%729, %c0_345] : memref<64x8xf32, #tpu.memory_space<vmem>>, vector<1x8xf32>
    %c16_i32_346 = arith.constant 16 : i32
    %731 = arith.addi %c16_i32_346, %c0_i32_338 : i32
    %732 = arith.index_cast %731 : i32 to index
    %c0_347 = arith.constant 0 : index
    %733 = vector.load %arg29[%732, %c0_347] : memref<64x8xf32, #tpu.memory_space<vmem>>, vector<1x8xf32>
    %734 = arith.addf %730, %733 : vector<1x8xf32>
    %735 = arith.index_cast %728 : i32 to index
    %c0_348 = arith.constant 0 : index
    %736 = vector.load %arg27[%735, %c0_348] : memref<64x8xf32, #tpu.memory_space<vmem>>, vector<1x8xf32>
    tpu.vector_store %arg27[%735, %c0_348], %734 {strides = array<i32>} : memref<64x8xf32, #tpu.memory_space<vmem>>, vector<1x8xf32>,
    %c32_i32_349 = arith.constant 32 : i32
    %737 = arith.addi %c32_i32_349, %718 : i32
    %738 = arith.index_cast %737 : i32 to index
    %c0_350 = arith.constant 0 : index
    %739 = vector.load %arg27[%738, %c0_350] : memref<64x8xf32, #tpu.memory_space<vmem>>, vector<1x8xf32>
    %c32_i32_351 = arith.constant 32 : i32
    %740 = arith.addi %c32_i32_351, %c0_i32_338 : i32
    %741 = arith.index_cast %740 : i32 to index
    %c0_352 = arith.constant 0 : index
    %742 = vector.load %arg29[%741, %c0_352] : memref<64x8xf32, #tpu.memory_space<vmem>>, vector<1x8xf32>
    %743 = arith.addf %739, %742 : vector<1x8xf32>
    %744 = arith.index_cast %737 : i32 to index
    %c0_353 = arith.constant 0 : index
    %745 = vector.load %arg27[%744, %c0_353] : memref<64x8xf32, #tpu.memory_space<vmem>>, vector<1x8xf32>
    tpu.vector_store %arg27[%744, %c0_353], %743 {strides = array<i32>} : memref<64x8xf32, #tpu.memory_space<vmem>>, vector<1x8xf32>,
    %c48_i32_354 = arith.constant 48 : i32
    %746 = arith.addi %c48_i32_354, %718 : i32
    %747 = arith.index_cast %746 : i32 to index
    %c0_355 = arith.constant 0 : index
    %748 = vector.load %arg27[%747, %c0_355] : memref<64x8xf32, #tpu.memory_space<vmem>>, vector<1x8xf32>
    %c48_i32_356 = arith.constant 48 : i32
    %749 = arith.addi %c48_i32_356, %c0_i32_338 : i32
    %750 = arith.index_cast %749 : i32 to index
    %c0_357 = arith.constant 0 : index
    %751 = vector.load %arg29[%750, %c0_357] : memref<64x8xf32, #tpu.memory_space<vmem>>, vector<1x8xf32>
    %752 = arith.addf %748, %751 : vector<1x8xf32>
    %753 = arith.index_cast %746 : i32 to index
    %c0_358 = arith.constant 0 : index
    %754 = vector.load %arg27[%753, %c0_358] : memref<64x8xf32, #tpu.memory_space<vmem>>, vector<1x8xf32>
    tpu.vector_store %arg27[%753, %c0_358], %752 {strides = array<i32>} : memref<64x8xf32, #tpu.memory_space<vmem>>, vector<1x8xf32>,
    %c1_i32_359 = arith.constant 1 : i32
    %755 = arith.addi %0, %c1_i32_359 : i32
    %756 = arith.index_cast %arg0 : i32 to index
    %757 = arith.index_cast %755 : i32 to index
    %758 = memref.load %arg3[%756, %757] : memref<2x32xi32, #tpu.memory_space<smem>>
    %c0_i32_360 = arith.constant 0 : i32
    %759 = arith.addi %c0_i32_360, %758 : i32
    %760 = arith.index_cast %759 : i32 to index
    %c0_361 = arith.constant 0 : index
    %761 = vector.load %arg27[%760, %c0_361] : memref<64x8xf32, #tpu.memory_space<vmem>>, vector<1x8xf32>
    %c0_i32_362 = arith.constant 0 : i32
    %762 = arith.addi %c0_i32_362, %c1_i32_359 : i32
    %763 = arith.index_cast %762 : i32 to index
    %c0_363 = arith.constant 0 : index
    %764 = vector.load %arg29[%763, %c0_363] : memref<64x8xf32, #tpu.memory_space<vmem>>, vector<1x8xf32>
    %765 = arith.addf %761, %764 : vector<1x8xf32>
    %766 = arith.index_cast %759 : i32 to index
    %c0_364 = arith.constant 0 : index
    %767 = vector.load %arg27[%766, %c0_364] : memref<64x8xf32, #tpu.memory_space<vmem>>, vector<1x8xf32>
    tpu.vector_store %arg27[%766, %c0_364], %765 {strides = array<i32>} : memref<64x8xf32, #tpu.memory_space<vmem>>, vector<1x8xf32>,
    %c16_i32_365 = arith.constant 16 : i32
    %768 = arith.addi %c16_i32_365, %758 : i32
    %769 = arith.index_cast %768 : i32 to index
    %c0_366 = arith.constant 0 : index
    %770 = vector.load %arg27[%769, %c0_366] : memref<64x8xf32, #tpu.memory_space<vmem>>, vector<1x8xf32>
    %c16_i32_367 = arith.constant 16 : i32
    %771 = arith.addi %c16_i32_367, %c1_i32_359 : i32
    %772 = arith.index_cast %771 : i32 to index
    %c0_368 = arith.constant 0 : index
    %773 = vector.load %arg29[%772, %c0_368] : memref<64x8xf32, #tpu.memory_space<vmem>>, vector<1x8xf32>
    %774 = arith.addf %770, %773 : vector<1x8xf32>
    %775 = arith.index_cast %768 : i32 to index
    %c0_369 = arith.constant 0 : index
    %776 = vector.load %arg27[%775, %c0_369] : memref<64x8xf32, #tpu.memory_space<vmem>>, vector<1x8xf32>
    tpu.vector_store %arg27[%775, %c0_369], %774 {strides = array<i32>} : memref<64x8xf32, #tpu.memory_space<vmem>>, vector<1x8xf32>,
    %c32_i32_370 = arith.constant 32 : i32
    %777 = arith.addi %c32_i32_370, %758 : i32
    %778 = arith.index_cast %777 : i32 to index
    %c0_371 = arith.constant 0 : index
    %779 = vector.load %arg27[%778, %c0_371] : memref<64x8xf32, #tpu.memory_space<vmem>>, vector<1x8xf32>
    %c32_i32_372 = arith.constant 32 : i32
    %780 = arith.addi %c32_i32_372, %c1_i32_359 : i32
    %781 = arith.index_cast %780 : i32 to index
    %c0_373 = arith.constant 0 : index
    %782 = vector.load %arg29[%781, %c0_373] : memref<64x8xf32, #tpu.memory_space<vmem>>, vector<1x8xf32>
    %783 = arith.addf %779, %782 : vector<1x8xf32>
    %784 = arith.index_cast %777 : i32 to index
    %c0_374 = arith.constant 0 : index
    %785 = vector.load %arg27[%784, %c0_374] : memref<64x8xf32, #tpu.memory_space<vmem>>, vector<1x8xf32>
    tpu.vector_store %arg27[%784, %c0_374], %783 {strides = array<i32>} : memref<64x8xf32, #tpu.memory_space<vmem>>, vector<1x8xf32>,
    %c48_i32_375 = arith.constant 48 : i32
    %786 = arith.addi %c48_i32_375, %758 : i32
    %787 = arith.index_cast %786 : i32 to index
    %c0_376 = arith.constant 0 : index
    %788 = vector.load %arg27[%787, %c0_376] : memref<64x8xf32, #tpu.memory_space<vmem>>, vector<1x8xf32>
    %c48_i32_377 = arith.constant 48 : i32
    %789 = arith.addi %c48_i32_377, %c1_i32_359 : i32
    %790 = arith.index_cast %789 : i32 to index
    %c0_378 = arith.constant 0 : index
    %791 = vector.load %arg29[%790, %c0_378] : memref<64x8xf32, #tpu.memory_space<vmem>>, vector<1x8xf32>
    %792 = arith.addf %788, %791 : vector<1x8xf32>
    %793 = arith.index_cast %786 : i32 to index
    %c0_379 = arith.constant 0 : index
    %794 = vector.load %arg27[%793, %c0_379] : memref<64x8xf32, #tpu.memory_space<vmem>>, vector<1x8xf32>
    tpu.vector_store %arg27[%793, %c0_379], %792 {strides = array<i32>} : memref<64x8xf32, #tpu.memory_space<vmem>>, vector<1x8xf32>,
    %c2_i32_380 = arith.constant 2 : i32
    %795 = arith.addi %0, %c2_i32_380 : i32
    %796 = arith.index_cast %arg0 : i32 to index
    %797 = arith.index_cast %795 : i32 to index
    %798 = memref.load %arg3[%796, %797] : memref<2x32xi32, #tpu.memory_space<smem>>
    %c0_i32_381 = arith.constant 0 : i32
    %799 = arith.addi %c0_i32_381, %798 : i32
    %800 = arith.index_cast %799 : i32 to index
    %c0_382 = arith.constant 0 : index
    %801 = vector.load %arg27[%800, %c0_382] : memref<64x8xf32, #tpu.memory_space<vmem>>, vector<1x8xf32>
    %c0_i32_383 = arith.constant 0 : i32
    %802 = arith.addi %c0_i32_383, %c2_i32_380 : i32
    %803 = arith.index_cast %802 : i32 to index
    %c0_384 = arith.constant 0 : index
    %804 = vector.load %arg29[%803, %c0_384] : memref<64x8xf32, #tpu.memory_space<vmem>>, vector<1x8xf32>
    %805 = arith.addf %801, %804 : vector<1x8xf32>
    %806 = arith.index_cast %799 : i32 to index
    %c0_385 = arith.constant 0 : index
    %807 = vector.load %arg27[%806, %c0_385] : memref<64x8xf32, #tpu.memory_space<vmem>>, vector<1x8xf32>
    tpu.vector_store %arg27[%806, %c0_385], %805 {strides = array<i32>} : memref<64x8xf32, #tpu.memory_space<vmem>>, vector<1x8xf32>,
    %c16_i32_386 = arith.constant 16 : i32
    %808 = arith.addi %c16_i32_386, %798 : i32
    %809 = arith.index_cast %808 : i32 to index
    %c0_387 = arith.constant 0 : index
    %810 = vector.load %arg27[%809, %c0_387] : memref<64x8xf32, #tpu.memory_space<vmem>>, vector<1x8xf32>
    %c16_i32_388 = arith.constant 16 : i32
    %811 = arith.addi %c16_i32_388, %c2_i32_380 : i32
    %812 = arith.index_cast %811 : i32 to index
    %c0_389 = arith.constant 0 : index
    %813 = vector.load %arg29[%812, %c0_389] : memref<64x8xf32, #tpu.memory_space<vmem>>, vector<1x8xf32>
    %814 = arith.addf %810, %813 : vector<1x8xf32>
    %815 = arith.index_cast %808 : i32 to index
    %c0_390 = arith.constant 0 : index
    %816 = vector.load %arg27[%815, %c0_390] : memref<64x8xf32, #tpu.memory_space<vmem>>, vector<1x8xf32>
    tpu.vector_store %arg27[%815, %c0_390], %814 {strides = array<i32>} : memref<64x8xf32, #tpu.memory_space<vmem>>, vector<1x8xf32>,
    %c32_i32_391 = arith.constant 32 : i32
    %817 = arith.addi %c32_i32_391, %798 : i32
    %818 = arith.index_cast %817 : i32 to index
    %c0_392 = arith.constant 0 : index
    %819 = vector.load %arg27[%818, %c0_392] : memref<64x8xf32, #tpu.memory_space<vmem>>, vector<1x8xf32>
    %c32_i32_393 = arith.constant 32 : i32
    %820 = arith.addi %c32_i32_393, %c2_i32_380 : i32
    %821 = arith.index_cast %820 : i32 to index
    %c0_394 = arith.constant 0 : index
    %822 = vector.load %arg29[%821, %c0_394] : memref<64x8xf32, #tpu.memory_space<vmem>>, vector<1x8xf32>
    %823 = arith.addf %819, %822 : vector<1x8xf32>
    %824 = arith.index_cast %817 : i32 to index
    %c0_395 = arith.constant 0 : index
    %825 = vector.load %arg27[%824, %c0_395] : memref<64x8xf32, #tpu.memory_space<vmem>>, vector<1x8xf32>
    tpu.vector_store %arg27[%824, %c0_395], %823 {strides = array<i32>} : memref<64x8xf32, #tpu.memory_space<vmem>>, vector<1x8xf32>,
    %c48_i32_396 = arith.constant 48 : i32
    %826 = arith.addi %c48_i32_396, %798 : i32
    %827 = arith.index_cast %826 : i32 to index
    %c0_397 = arith.constant 0 : index
    %828 = vector.load %arg27[%827, %c0_397] : memref<64x8xf32, #tpu.memory_space<vmem>>, vector<1x8xf32>
    %c48_i32_398 = arith.constant 48 : i32
    %829 = arith.addi %c48_i32_398, %c2_i32_380 : i32
    %830 = arith.index_cast %829 : i32 to index
    %c0_399 = arith.constant 0 : index
    %831 = vector.load %arg29[%830, %c0_399] : memref<64x8xf32, #tpu.memory_space<vmem>>, vector<1x8xf32>
    %832 = arith.addf %828, %831 : vector<1x8xf32>
    %833 = arith.index_cast %826 : i32 to index
    %c0_400 = arith.constant 0 : index
    %834 = vector.load %arg27[%833, %c0_400] : memref<64x8xf32, #tpu.memory_space<vmem>>, vector<1x8xf32>
    tpu.vector_store %arg27[%833, %c0_400], %832 {strides = array<i32>} : memref<64x8xf32, #tpu.memory_space<vmem>>, vector<1x8xf32>,
    %c3_i32_401 = arith.constant 3 : i32
    %835 = arith.addi %0, %c3_i32_401 : i32
    %836 = arith.index_cast %arg0 : i32 to index
    %837 = arith.index_cast %835 : i32 to index
    %838 = memref.load %arg3[%836, %837] : memref<2x32xi32, #tpu.memory_space<smem>>
    %c0_i32_402 = arith.constant 0 : i32
    %839 = arith.addi %c0_i32_402, %838 : i32
    %840 = arith.index_cast %839 : i32 to index
    %c0_403 = arith.constant 0 : index
    %841 = vector.load %arg27[%840, %c0_403] : memref<64x8xf32, #tpu.memory_space<vmem>>, vector<1x8xf32>
    %c0_i32_404 = arith.constant 0 : i32
    %842 = arith.addi %c0_i32_404, %c3_i32_401 : i32
    %843 = arith.index_cast %842 : i32 to index
    %c0_405 = arith.constant 0 : index
    %844 = vector.load %arg29[%843, %c0_405] : memref<64x8xf32, #tpu.memory_space<vmem>>, vector<1x8xf32>
    %845 = arith.addf %841, %844 : vector<1x8xf32>
    %846 = arith.index_cast %839 : i32 to index
    %c0_406 = arith.constant 0 : index
    %847 = vector.load %arg27[%846, %c0_406] : memref<64x8xf32, #tpu.memory_space<vmem>>, vector<1x8xf32>
    tpu.vector_store %arg27[%846, %c0_406], %845 {strides = array<i32>} : memref<64x8xf32, #tpu.memory_space<vmem>>, vector<1x8xf32>,
    %c16_i32_407 = arith.constant 16 : i32
    %848 = arith.addi %c16_i32_407, %838 : i32
    %849 = arith.index_cast %848 : i32 to index
    %c0_408 = arith.constant 0 : index
    %850 = vector.load %arg27[%849, %c0_408] : memref<64x8xf32, #tpu.memory_space<vmem>>, vector<1x8xf32>
    %c16_i32_409 = arith.constant 16 : i32
    %851 = arith.addi %c16_i32_409, %c3_i32_401 : i32
    %852 = arith.index_cast %851 : i32 to index
    %c0_410 = arith.constant 0 : index
    %853 = vector.load %arg29[%852, %c0_410] : memref<64x8xf32, #tpu.memory_space<vmem>>, vector<1x8xf32>
    %854 = arith.addf %850, %853 : vector<1x8xf32>
    %855 = arith.index_cast %848 : i32 to index
    %c0_411 = arith.constant 0 : index
    %856 = vector.load %arg27[%855, %c0_411] : memref<64x8xf32, #tpu.memory_space<vmem>>, vector<1x8xf32>
    tpu.vector_store %arg27[%855, %c0_411], %854 {strides = array<i32>} : memref<64x8xf32, #tpu.memory_space<vmem>>, vector<1x8xf32>,
    %c32_i32_412 = arith.constant 32 : i32
    %857 = arith.addi %c32_i32_412, %838 : i32
    %858 = arith.index_cast %857 : i32 to index
    %c0_413 = arith.constant 0 : index
    %859 = vector.load %arg27[%858, %c0_413] : memref<64x8xf32, #tpu.memory_space<vmem>>, vector<1x8xf32>
    %c32_i32_414 = arith.constant 32 : i32
    %860 = arith.addi %c32_i32_414, %c3_i32_401 : i32
    %861 = arith.index_cast %860 : i32 to index
    %c0_415 = arith.constant 0 : index
    %862 = vector.load %arg29[%861, %c0_415] : memref<64x8xf32, #tpu.memory_space<vmem>>, vector<1x8xf32>
    %863 = arith.addf %859, %862 : vector<1x8xf32>
    %864 = arith.index_cast %857 : i32 to index
    %c0_416 = arith.constant 0 : index
    %865 = vector.load %arg27[%864, %c0_416] : memref<64x8xf32, #tpu.memory_space<vmem>>, vector<1x8xf32>
    tpu.vector_store %arg27[%864, %c0_416], %863 {strides = array<i32>} : memref<64x8xf32, #tpu.memory_space<vmem>>, vector<1x8xf32>,
    %c48_i32_417 = arith.constant 48 : i32
    %866 = arith.addi %c48_i32_417, %838 : i32
    %867 = arith.index_cast %866 : i32 to index
    %c0_418 = arith.constant 0 : index
    %868 = vector.load %arg27[%867, %c0_418] : memref<64x8xf32, #tpu.memory_space<vmem>>, vector<1x8xf32>
    %c48_i32_419 = arith.constant 48 : i32
    %869 = arith.addi %c48_i32_419, %c3_i32_401 : i32
    %870 = arith.index_cast %869 : i32 to index
    %c0_420 = arith.constant 0 : index
    %871 = vector.load %arg29[%870, %c0_420] : memref<64x8xf32, #tpu.memory_space<vmem>>, vector<1x8xf32>
    %872 = arith.addf %868, %871 : vector<1x8xf32>
    %873 = arith.index_cast %866 : i32 to index
    %c0_421 = arith.constant 0 : index
    %874 = vector.load %arg27[%873, %c0_421] : memref<64x8xf32, #tpu.memory_space<vmem>>, vector<1x8xf32>
    tpu.vector_store %arg27[%873, %c0_421], %872 {strides = array<i32>} : memref<64x8xf32, #tpu.memory_space<vmem>>, vector<1x8xf32>,
    %c4_i32_422 = arith.constant 4 : i32
    %875 = arith.addi %0, %c4_i32_422 : i32
    %876 = arith.index_cast %arg0 : i32 to index
    %877 = arith.index_cast %875 : i32 to index
    %878 = memref.load %arg3[%876, %877] : memref<2x32xi32, #tpu.memory_space<smem>>
    %c0_i32_423 = arith.constant 0 : i32
    %879 = arith.addi %c0_i32_423, %878 : i32
    %880 = arith.index_cast %879 : i32 to index
    %c0_424 = arith.constant 0 : index
    %881 = vector.load %arg27[%880, %c0_424] : memref<64x8xf32, #tpu.memory_space<vmem>>, vector<1x8xf32>
    %c0_i32_425 = arith.constant 0 : i32
    %882 = arith.addi %c0_i32_425, %c4_i32_422 : i32
    %883 = arith.index_cast %882 : i32 to index
    %c0_426 = arith.constant 0 : index
    %884 = vector.load %arg29[%883, %c0_426] : memref<64x8xf32, #tpu.memory_space<vmem>>, vector<1x8xf32>
    %885 = arith.addf %881, %884 : vector<1x8xf32>
    %886 = arith.index_cast %879 : i32 to index
    %c0_427 = arith.constant 0 : index
    %887 = vector.load %arg27[%886, %c0_427] : memref<64x8xf32, #tpu.memory_space<vmem>>, vector<1x8xf32>
    tpu.vector_store %arg27[%886, %c0_427], %885 {strides = array<i32>} : memref<64x8xf32, #tpu.memory_space<vmem>>, vector<1x8xf32>,
    %c16_i32_428 = arith.constant 16 : i32
    %888 = arith.addi %c16_i32_428, %878 : i32
    %889 = arith.index_cast %888 : i32 to index
    %c0_429 = arith.constant 0 : index
    %890 = vector.load %arg27[%889, %c0_429] : memref<64x8xf32, #tpu.memory_space<vmem>>, vector<1x8xf32>
    %c16_i32_430 = arith.constant 16 : i32
    %891 = arith.addi %c16_i32_430, %c4_i32_422 : i32
    %892 = arith.index_cast %891 : i32 to index
    %c0_431 = arith.constant 0 : index
    %893 = vector.load %arg29[%892, %c0_431] : memref<64x8xf32, #tpu.memory_space<vmem>>, vector<1x8xf32>
    %894 = arith.addf %890, %893 : vector<1x8xf32>
    %895 = arith.index_cast %888 : i32 to index
    %c0_432 = arith.constant 0 : index
    %896 = vector.load %arg27[%895, %c0_432] : memref<64x8xf32, #tpu.memory_space<vmem>>, vector<1x8xf32>
    tpu.vector_store %arg27[%895, %c0_432], %894 {strides = array<i32>} : memref<64x8xf32, #tpu.memory_space<vmem>>, vector<1x8xf32>,
    %c32_i32_433 = arith.constant 32 : i32
    %897 = arith.addi %c32_i32_433, %878 : i32
    %898 = arith.index_cast %897 : i32 to index
    %c0_434 = arith.constant 0 : index
    %899 = vector.load %arg27[%898, %c0_434] : memref<64x8xf32, #tpu.memory_space<vmem>>, vector<1x8xf32>
    %c32_i32_435 = arith.constant 32 : i32
    %900 = arith.addi %c32_i32_435, %c4_i32_422 : i32
    %901 = arith.index_cast %900 : i32 to index
    %c0_436 = arith.constant 0 : index
    %902 = vector.load %arg29[%901, %c0_436] : memref<64x8xf32, #tpu.memory_space<vmem>>, vector<1x8xf32>
    %903 = arith.addf %899, %902 : vector<1x8xf32>
    %904 = arith.index_cast %897 : i32 to index
    %c0_437 = arith.constant 0 : index
    %905 = vector.load %arg27[%904, %c0_437] : memref<64x8xf32, #tpu.memory_space<vmem>>, vector<1x8xf32>
    tpu.vector_store %arg27[%904, %c0_437], %903 {strides = array<i32>} : memref<64x8xf32, #tpu.memory_space<vmem>>, vector<1x8xf32>,
    %c48_i32_438 = arith.constant 48 : i32
    %906 = arith.addi %c48_i32_438, %878 : i32
    %907 = arith.index_cast %906 : i32 to index
    %c0_439 = arith.constant 0 : index
    %908 = vector.load %arg27[%907, %c0_439] : memref<64x8xf32, #tpu.memory_space<vmem>>, vector<1x8xf32>
    %c48_i32_440 = arith.constant 48 : i32
    %909 = arith.addi %c48_i32_440, %c4_i32_422 : i32
    %910 = arith.index_cast %909 : i32 to index
    %c0_441 = arith.constant 0 : index
    %911 = vector.load %arg29[%910, %c0_441] : memref<64x8xf32, #tpu.memory_space<vmem>>, vector<1x8xf32>
    %912 = arith.addf %908, %911 : vector<1x8xf32>
    %913 = arith.index_cast %906 : i32 to index
    %c0_442 = arith.constant 0 : index
    %914 = vector.load %arg27[%913, %c0_442] : memref<64x8xf32, #tpu.memory_space<vmem>>, vector<1x8xf32>
    tpu.vector_store %arg27[%913, %c0_442], %912 {strides = array<i32>} : memref<64x8xf32, #tpu.memory_space<vmem>>, vector<1x8xf32>,
    %c5_i32_443 = arith.constant 5 : i32
    %915 = arith.addi %0, %c5_i32_443 : i32
    %916 = arith.index_cast %arg0 : i32 to index
    %917 = arith.index_cast %915 : i32 to index
    %918 = memref.load %arg3[%916, %917] : memref<2x32xi32, #tpu.memory_space<smem>>
    %c0_i32_444 = arith.constant 0 : i32
    %919 = arith.addi %c0_i32_444, %918 : i32
    %920 = arith.index_cast %919 : i32 to index
    %c0_445 = arith.constant 0 : index
    %921 = vector.load %arg27[%920, %c0_445] : memref<64x8xf32, #tpu.memory_space<vmem>>, vector<1x8xf32>
    %c0_i32_446 = arith.constant 0 : i32
    %922 = arith.addi %c0_i32_446, %c5_i32_443 : i32
    %923 = arith.index_cast %922 : i32 to index
    %c0_447 = arith.constant 0 : index
    %924 = vector.load %arg29[%923, %c0_447] : memref<64x8xf32, #tpu.memory_space<vmem>>, vector<1x8xf32>
    %925 = arith.addf %921, %924 : vector<1x8xf32>
    %926 = arith.index_cast %919 : i32 to index
    %c0_448 = arith.constant 0 : index
    %927 = vector.load %arg27[%926, %c0_448] : memref<64x8xf32, #tpu.memory_space<vmem>>, vector<1x8xf32>
    tpu.vector_store %arg27[%926, %c0_448], %925 {strides = array<i32>} : memref<64x8xf32, #tpu.memory_space<vmem>>, vector<1x8xf32>,
    %c16_i32_449 = arith.constant 16 : i32
    %928 = arith.addi %c16_i32_449, %918 : i32
    %929 = arith.index_cast %928 : i32 to index
    %c0_450 = arith.constant 0 : index
    %930 = vector.load %arg27[%929, %c0_450] : memref<64x8xf32, #tpu.memory_space<vmem>>, vector<1x8xf32>
    %c16_i32_451 = arith.constant 16 : i32
    %931 = arith.addi %c16_i32_451, %c5_i32_443 : i32
    %932 = arith.index_cast %931 : i32 to index
    %c0_452 = arith.constant 0 : index
    %933 = vector.load %arg29[%932, %c0_452] : memref<64x8xf32, #tpu.memory_space<vmem>>, vector<1x8xf32>
    %934 = arith.addf %930, %933 : vector<1x8xf32>
    %935 = arith.index_cast %928 : i32 to index
    %c0_453 = arith.constant 0 : index
    %936 = vector.load %arg27[%935, %c0_453] : memref<64x8xf32, #tpu.memory_space<vmem>>, vector<1x8xf32>
    tpu.vector_store %arg27[%935, %c0_453], %934 {strides = array<i32>} : memref<64x8xf32, #tpu.memory_space<vmem>>, vector<1x8xf32>,
    %c32_i32_454 = arith.constant 32 : i32
    %937 = arith.addi %c32_i32_454, %918 : i32
    %938 = arith.index_cast %937 : i32 to index
    %c0_455 = arith.constant 0 : index
    %939 = vector.load %arg27[%938, %c0_455] : memref<64x8xf32, #tpu.memory_space<vmem>>, vector<1x8xf32>
    %c32_i32_456 = arith.constant 32 : i32
    %940 = arith.addi %c32_i32_456, %c5_i32_443 : i32
    %941 = arith.index_cast %940 : i32 to index
    %c0_457 = arith.constant 0 : index
    %942 = vector.load %arg29[%941, %c0_457] : memref<64x8xf32, #tpu.memory_space<vmem>>, vector<1x8xf32>
    %943 = arith.addf %939, %942 : vector<1x8xf32>
    %944 = arith.index_cast %937 : i32 to index
    %c0_458 = arith.constant 0 : index
    %945 = vector.load %arg27[%944, %c0_458] : memref<64x8xf32, #tpu.memory_space<vmem>>, vector<1x8xf32>
    tpu.vector_store %arg27[%944, %c0_458], %943 {strides = array<i32>} : memref<64x8xf32, #tpu.memory_space<vmem>>, vector<1x8xf32>,
    %c48_i32_459 = arith.constant 48 : i32
    %946 = arith.addi %c48_i32_459, %918 : i32
    %947 = arith.index_cast %946 : i32 to index
    %c0_460 = arith.constant 0 : index
    %948 = vector.load %arg27[%947, %c0_460] : memref<64x8xf32, #tpu.memory_space<vmem>>, vector<1x8xf32>
    %c48_i32_461 = arith.constant 48 : i32
    %949 = arith.addi %c48_i32_461, %c5_i32_443 : i32
    %950 = arith.index_cast %949 : i32 to index
    %c0_462 = arith.constant 0 : index
    %951 = vector.load %arg29[%950, %c0_462] : memref<64x8xf32, #tpu.memory_space<vmem>>, vector<1x8xf32>
    %952 = arith.addf %948, %951 : vector<1x8xf32>
    %953 = arith.index_cast %946 : i32 to index
    %c0_463 = arith.constant 0 : index
    %954 = vector.load %arg27[%953, %c0_463] : memref<64x8xf32, #tpu.memory_space<vmem>>, vector<1x8xf32>
    tpu.vector_store %arg27[%953, %c0_463], %952 {strides = array<i32>} : memref<64x8xf32, #tpu.memory_space<vmem>>, vector<1x8xf32>,
    %c6_i32_464 = arith.constant 6 : i32
    %955 = arith.addi %0, %c6_i32_464 : i32
    %956 = arith.index_cast %arg0 : i32 to index
    %957 = arith.index_cast %955 : i32 to index
    %958 = memref.load %arg3[%956, %957] : memref<2x32xi32, #tpu.memory_space<smem>>
    %c0_i32_465 = arith.constant 0 : i32
    %959 = arith.addi %c0_i32_465, %958 : i32
    %960 = arith.index_cast %959 : i32 to index
    %c0_466 = arith.constant 0 : index
    %961 = vector.load %arg27[%960, %c0_466] : memref<64x8xf32, #tpu.memory_space<vmem>>, vector<1x8xf32>
    %c0_i32_467 = arith.constant 0 : i32
    %962 = arith.addi %c0_i32_467, %c6_i32_464 : i32
    %963 = arith.index_cast %962 : i32 to index
    %c0_468 = arith.constant 0 : index
    %964 = vector.load %arg29[%963, %c0_468] : memref<64x8xf32, #tpu.memory_space<vmem>>, vector<1x8xf32>
    %965 = arith.addf %961, %964 : vector<1x8xf32>
    %966 = arith.index_cast %959 : i32 to index
    %c0_469 = arith.constant 0 : index
    %967 = vector.load %arg27[%966, %c0_469] : memref<64x8xf32, #tpu.memory_space<vmem>>, vector<1x8xf32>
    tpu.vector_store %arg27[%966, %c0_469], %965 {strides = array<i32>} : memref<64x8xf32, #tpu.memory_space<vmem>>, vector<1x8xf32>,
    %c16_i32_470 = arith.constant 16 : i32
    %968 = arith.addi %c16_i32_470, %958 : i32
    %969 = arith.index_cast %968 : i32 to index
    %c0_471 = arith.constant 0 : index
    %970 = vector.load %arg27[%969, %c0_471] : memref<64x8xf32, #tpu.memory_space<vmem>>, vector<1x8xf32>
    %c16_i32_472 = arith.constant 16 : i32
    %971 = arith.addi %c16_i32_472, %c6_i32_464 : i32
    %972 = arith.index_cast %971 : i32 to index
    %c0_473 = arith.constant 0 : index
    %973 = vector.load %arg29[%972, %c0_473] : memref<64x8xf32, #tpu.memory_space<vmem>>, vector<1x8xf32>
    %974 = arith.addf %970, %973 : vector<1x8xf32>
    %975 = arith.index_cast %968 : i32 to index
    %c0_474 = arith.constant 0 : index
    %976 = vector.load %arg27[%975, %c0_474] : memref<64x8xf32, #tpu.memory_space<vmem>>, vector<1x8xf32>
    tpu.vector_store %arg27[%975, %c0_474], %974 {strides = array<i32>} : memref<64x8xf32, #tpu.memory_space<vmem>>, vector<1x8xf32>,
    %c32_i32_475 = arith.constant 32 : i32
    %977 = arith.addi %c32_i32_475, %958 : i32
    %978 = arith.index_cast %977 : i32 to index
    %c0_476 = arith.constant 0 : index
    %979 = vector.load %arg27[%978, %c0_476] : memref<64x8xf32, #tpu.memory_space<vmem>>, vector<1x8xf32>
    %c32_i32_477 = arith.constant 32 : i32
    %980 = arith.addi %c32_i32_477, %c6_i32_464 : i32
    %981 = arith.index_cast %980 : i32 to index
    %c0_478 = arith.constant 0 : index
    %982 = vector.load %arg29[%981, %c0_478] : memref<64x8xf32, #tpu.memory_space<vmem>>, vector<1x8xf32>
    %983 = arith.addf %979, %982 : vector<1x8xf32>
    %984 = arith.index_cast %977 : i32 to index
    %c0_479 = arith.constant 0 : index
    %985 = vector.load %arg27[%984, %c0_479] : memref<64x8xf32, #tpu.memory_space<vmem>>, vector<1x8xf32>
    tpu.vector_store %arg27[%984, %c0_479], %983 {strides = array<i32>} : memref<64x8xf32, #tpu.memory_space<vmem>>, vector<1x8xf32>,
    %c48_i32_480 = arith.constant 48 : i32
    %986 = arith.addi %c48_i32_480, %958 : i32
    %987 = arith.index_cast %986 : i32 to index
    %c0_481 = arith.constant 0 : index
    %988 = vector.load %arg27[%987, %c0_481] : memref<64x8xf32, #tpu.memory_space<vmem>>, vector<1x8xf32>
    %c48_i32_482 = arith.constant 48 : i32
    %989 = arith.addi %c48_i32_482, %c6_i32_464 : i32
    %990 = arith.index_cast %989 : i32 to index
    %c0_483 = arith.constant 0 : index
    %991 = vector.load %arg29[%990, %c0_483] : memref<64x8xf32, #tpu.memory_space<vmem>>, vector<1x8xf32>
    %992 = arith.addf %988, %991 : vector<1x8xf32>
    %993 = arith.index_cast %986 : i32 to index
    %c0_484 = arith.constant 0 : index
    %994 = vector.load %arg27[%993, %c0_484] : memref<64x8xf32, #tpu.memory_space<vmem>>, vector<1x8xf32>
    tpu.vector_store %arg27[%993, %c0_484], %992 {strides = array<i32>} : memref<64x8xf32, #tpu.memory_space<vmem>>, vector<1x8xf32>,
    %c7_i32_485 = arith.constant 7 : i32
    %995 = arith.addi %0, %c7_i32_485 : i32
    %996 = arith.index_cast %arg0 : i32 to index
    %997 = arith.index_cast %995 : i32 to index
    %998 = memref.load %arg3[%996, %997] : memref<2x32xi32, #tpu.memory_space<smem>>
    %c0_i32_486 = arith.constant 0 : i32
    %999 = arith.addi %c0_i32_486, %998 : i32
    %1000 = arith.index_cast %999 : i32 to index
    %c0_487 = arith.constant 0 : index
    %1001 = vector.load %arg27[%1000, %c0_487] : memref<64x8xf32, #tpu.memory_space<vmem>>, vector<1x8xf32>
    %c0_i32_488 = arith.constant 0 : i32
    %1002 = arith.addi %c0_i32_488, %c7_i32_485 : i32
    %1003 = arith.index_cast %1002 : i32 to index
    %c0_489 = arith.constant 0 : index
    %1004 = vector.load %arg29[%1003, %c0_489] : memref<64x8xf32, #tpu.memory_space<vmem>>, vector<1x8xf32>
    %1005 = arith.addf %1001, %1004 : vector<1x8xf32>
    %1006 = arith.index_cast %999 : i32 to index
    %c0_490 = arith.constant 0 : index
    %1007 = vector.load %arg27[%1006, %c0_490] : memref<64x8xf32, #tpu.memory_space<vmem>>, vector<1x8xf32>
    tpu.vector_store %arg27[%1006, %c0_490], %1005 {strides = array<i32>} : memref<64x8xf32, #tpu.memory_space<vmem>>, vector<1x8xf32>,
    %c16_i32_491 = arith.constant 16 : i32
    %1008 = arith.addi %c16_i32_491, %998 : i32
    %1009 = arith.index_cast %1008 : i32 to index
    %c0_492 = arith.constant 0 : index
    %1010 = vector.load %arg27[%1009, %c0_492] : memref<64x8xf32, #tpu.memory_space<vmem>>, vector<1x8xf32>
    %c16_i32_493 = arith.constant 16 : i32
    %1011 = arith.addi %c16_i32_493, %c7_i32_485 : i32
    %1012 = arith.index_cast %1011 : i32 to index
    %c0_494 = arith.constant 0 : index
    %1013 = vector.load %arg29[%1012, %c0_494] : memref<64x8xf32, #tpu.memory_space<vmem>>, vector<1x8xf32>
    %1014 = arith.addf %1010, %1013 : vector<1x8xf32>
    %1015 = arith.index_cast %1008 : i32 to index
    %c0_495 = arith.constant 0 : index
    %1016 = vector.load %arg27[%1015, %c0_495] : memref<64x8xf32, #tpu.memory_space<vmem>>, vector<1x8xf32>
    tpu.vector_store %arg27[%1015, %c0_495], %1014 {strides = array<i32>} : memref<64x8xf32, #tpu.memory_space<vmem>>, vector<1x8xf32>,
    %c32_i32_496 = arith.constant 32 : i32
    %1017 = arith.addi %c32_i32_496, %998 : i32
    %1018 = arith.index_cast %1017 : i32 to index
    %c0_497 = arith.constant 0 : index
    %1019 = vector.load %arg27[%1018, %c0_497] : memref<64x8xf32, #tpu.memory_space<vmem>>, vector<1x8xf32>
    %c32_i32_498 = arith.constant 32 : i32
    %1020 = arith.addi %c32_i32_498, %c7_i32_485 : i32
    %1021 = arith.index_cast %1020 : i32 to index
    %c0_499 = arith.constant 0 : index
    %1022 = vector.load %arg29[%1021, %c0_499] : memref<64x8xf32, #tpu.memory_space<vmem>>, vector<1x8xf32>
    %1023 = arith.addf %1019, %1022 : vector<1x8xf32>
    %1024 = arith.index_cast %1017 : i32 to index
    %c0_500 = arith.constant 0 : index
    %1025 = vector.load %arg27[%1024, %c0_500] : memref<64x8xf32, #tpu.memory_space<vmem>>, vector<1x8xf32>
    tpu.vector_store %arg27[%1024, %c0_500], %1023 {strides = array<i32>} : memref<64x8xf32, #tpu.memory_space<vmem>>, vector<1x8xf32>,
    %c48_i32_501 = arith.constant 48 : i32
    %1026 = arith.addi %c48_i32_501, %998 : i32
    %1027 = arith.index_cast %1026 : i32 to index
    %c0_502 = arith.constant 0 : index
    %1028 = vector.load %arg27[%1027, %c0_502] : memref<64x8xf32, #tpu.memory_space<vmem>>, vector<1x8xf32>
    %c48_i32_503 = arith.constant 48 : i32
    %1029 = arith.addi %c48_i32_503, %c7_i32_485 : i32
    %1030 = arith.index_cast %1029 : i32 to index
    %c0_504 = arith.constant 0 : index
    %1031 = vector.load %arg29[%1030, %c0_504] : memref<64x8xf32, #tpu.memory_space<vmem>>, vector<1x8xf32>
    %1032 = arith.addf %1028, %1031 : vector<1x8xf32>
    %1033 = arith.index_cast %1026 : i32 to index
    %c0_505 = arith.constant 0 : index
    %1034 = vector.load %arg27[%1033, %c0_505] : memref<64x8xf32, #tpu.memory_space<vmem>>, vector<1x8xf32>
    tpu.vector_store %arg27[%1033, %c0_505], %1032 {strides = array<i32>} : memref<64x8xf32, #tpu.memory_space<vmem>>, vector<1x8xf32>,
    %c8_i32_506 = arith.constant 8 : i32
    %1035 = arith.addi %0, %c8_i32_506 : i32
    %1036 = arith.index_cast %arg0 : i32 to index
    %1037 = arith.index_cast %1035 : i32 to index
    %1038 = memref.load %arg3[%1036, %1037] : memref<2x32xi32, #tpu.memory_space<smem>>
    %c0_i32_507 = arith.constant 0 : i32
    %1039 = arith.addi %c0_i32_507, %1038 : i32
    %1040 = arith.index_cast %1039 : i32 to index
    %c0_508 = arith.constant 0 : index
    %1041 = vector.load %arg27[%1040, %c0_508] : memref<64x8xf32, #tpu.memory_space<vmem>>, vector<1x8xf32>
    %c0_i32_509 = arith.constant 0 : i32
    %1042 = arith.addi %c0_i32_509, %c8_i32_506 : i32
    %1043 = arith.index_cast %1042 : i32 to index
    %c0_510 = arith.constant 0 : index
    %1044 = vector.load %arg29[%1043, %c0_510] : memref<64x8xf32, #tpu.memory_space<vmem>>, vector<1x8xf32>
    %1045 = arith.addf %1041, %1044 : vector<1x8xf32>
    %1046 = arith.index_cast %1039 : i32 to index
    %c0_511 = arith.constant 0 : index
    %1047 = vector.load %arg27[%1046, %c0_511] : memref<64x8xf32, #tpu.memory_space<vmem>>, vector<1x8xf32>
    tpu.vector_store %arg27[%1046, %c0_511], %1045 {strides = array<i32>} : memref<64x8xf32, #tpu.memory_space<vmem>>, vector<1x8xf32>,
    %c16_i32_512 = arith.constant 16 : i32
    %1048 = arith.addi %c16_i32_512, %1038 : i32
    %1049 = arith.index_cast %1048 : i32 to index
    %c0_513 = arith.constant 0 : index
    %1050 = vector.load %arg27[%1049, %c0_513] : memref<64x8xf32, #tpu.memory_space<vmem>>, vector<1x8xf32>
    %c16_i32_514 = arith.constant 16 : i32
    %1051 = arith.addi %c16_i32_514, %c8_i32_506 : i32
    %1052 = arith.index_cast %1051 : i32 to index
    %c0_515 = arith.constant 0 : index
    %1053 = vector.load %arg29[%1052, %c0_515] : memref<64x8xf32, #tpu.memory_space<vmem>>, vector<1x8xf32>
    %1054 = arith.addf %1050, %1053 : vector<1x8xf32>
    %1055 = arith.index_cast %1048 : i32 to index
    %c0_516 = arith.constant 0 : index
    %1056 = vector.load %arg27[%1055, %c0_516] : memref<64x8xf32, #tpu.memory_space<vmem>>, vector<1x8xf32>
    tpu.vector_store %arg27[%1055, %c0_516], %1054 {strides = array<i32>} : memref<64x8xf32, #tpu.memory_space<vmem>>, vector<1x8xf32>,
    %c32_i32_517 = arith.constant 32 : i32
    %1057 = arith.addi %c32_i32_517, %1038 : i32
    %1058 = arith.index_cast %1057 : i32 to index
    %c0_518 = arith.constant 0 : index
    %1059 = vector.load %arg27[%1058, %c0_518] : memref<64x8xf32, #tpu.memory_space<vmem>>, vector<1x8xf32>
    %c32_i32_519 = arith.constant 32 : i32
    %1060 = arith.addi %c32_i32_519, %c8_i32_506 : i32
    %1061 = arith.index_cast %1060 : i32 to index
    %c0_520 = arith.constant 0 : index
    %1062 = vector.load %arg29[%1061, %c0_520] : memref<64x8xf32, #tpu.memory_space<vmem>>, vector<1x8xf32>
    %1063 = arith.addf %1059, %1062 : vector<1x8xf32>
    %1064 = arith.index_cast %1057 : i32 to index
    %c0_521 = arith.constant 0 : index
    %1065 = vector.load %arg27[%1064, %c0_521] : memref<64x8xf32, #tpu.memory_space<vmem>>, vector<1x8xf32>
    tpu.vector_store %arg27[%1064, %c0_521], %1063 {strides = array<i32>} : memref<64x8xf32, #tpu.memory_space<vmem>>, vector<1x8xf32>,
    %c48_i32_522 = arith.constant 48 : i32
    %1066 = arith.addi %c48_i32_522, %1038 : i32
    %1067 = arith.index_cast %1066 : i32 to index
    %c0_523 = arith.constant 0 : index
    %1068 = vector.load %arg27[%1067, %c0_523] : memref<64x8xf32, #tpu.memory_space<vmem>>, vector<1x8xf32>
    %c48_i32_524 = arith.constant 48 : i32
    %1069 = arith.addi %c48_i32_524, %c8_i32_506 : i32
    %1070 = arith.index_cast %1069 : i32 to index
    %c0_525 = arith.constant 0 : index
    %1071 = vector.load %arg29[%1070, %c0_525] : memref<64x8xf32, #tpu.memory_space<vmem>>, vector<1x8xf32>
    %1072 = arith.addf %1068, %1071 : vector<1x8xf32>
    %1073 = arith.index_cast %1066 : i32 to index
    %c0_526 = arith.constant 0 : index
    %1074 = vector.load %arg27[%1073, %c0_526] : memref<64x8xf32, #tpu.memory_space<vmem>>, vector<1x8xf32>
    tpu.vector_store %arg27[%1073, %c0_526], %1072 {strides = array<i32>} : memref<64x8xf32, #tpu.memory_space<vmem>>, vector<1x8xf32>,
    %c9_i32_527 = arith.constant 9 : i32
    %1075 = arith.addi %0, %c9_i32_527 : i32
    %1076 = arith.index_cast %arg0 : i32 to index
    %1077 = arith.index_cast %1075 : i32 to index
    %1078 = memref.load %arg3[%1076, %1077] : memref<2x32xi32, #tpu.memory_space<smem>>
    %c0_i32_528 = arith.constant 0 : i32
    %1079 = arith.addi %c0_i32_528, %1078 : i32
    %1080 = arith.index_cast %1079 : i32 to index
    %c0_529 = arith.constant 0 : index
    %1081 = vector.load %arg27[%1080, %c0_529] : memref<64x8xf32, #tpu.memory_space<vmem>>, vector<1x8xf32>
    %c0_i32_530 = arith.constant 0 : i32
    %1082 = arith.addi %c0_i32_530, %c9_i32_527 : i32
    %1083 = arith.index_cast %1082 : i32 to index
    %c0_531 = arith.constant 0 : index
    %1084 = vector.load %arg29[%1083, %c0_531] : memref<64x8xf32, #tpu.memory_space<vmem>>, vector<1x8xf32>
    %1085 = arith.addf %1081, %1084 : vector<1x8xf32>
    %1086 = arith.index_cast %1079 : i32 to index
    %c0_532 = arith.constant 0 : index
    %1087 = vector.load %arg27[%1086, %c0_532] : memref<64x8xf32, #tpu.memory_space<vmem>>, vector<1x8xf32>
    tpu.vector_store %arg27[%1086, %c0_532], %1085 {strides = array<i32>} : memref<64x8xf32, #tpu.memory_space<vmem>>, vector<1x8xf32>,
    %c16_i32_533 = arith.constant 16 : i32
    %1088 = arith.addi %c16_i32_533, %1078 : i32
    %1089 = arith.index_cast %1088 : i32 to index
    %c0_534 = arith.constant 0 : index
    %1090 = vector.load %arg27[%1089, %c0_534] : memref<64x8xf32, #tpu.memory_space<vmem>>, vector<1x8xf32>
    %c16_i32_535 = arith.constant 16 : i32
    %1091 = arith.addi %c16_i32_535, %c9_i32_527 : i32
    %1092 = arith.index_cast %1091 : i32 to index
    %c0_536 = arith.constant 0 : index
    %1093 = vector.load %arg29[%1092, %c0_536] : memref<64x8xf32, #tpu.memory_space<vmem>>, vector<1x8xf32>
    %1094 = arith.addf %1090, %1093 : vector<1x8xf32>
    %1095 = arith.index_cast %1088 : i32 to index
    %c0_537 = arith.constant 0 : index
    %1096 = vector.load %arg27[%1095, %c0_537] : memref<64x8xf32, #tpu.memory_space<vmem>>, vector<1x8xf32>
    tpu.vector_store %arg27[%1095, %c0_537], %1094 {strides = array<i32>} : memref<64x8xf32, #tpu.memory_space<vmem>>, vector<1x8xf32>,
    %c32_i32_538 = arith.constant 32 : i32
    %1097 = arith.addi %c32_i32_538, %1078 : i32
    %1098 = arith.index_cast %1097 : i32 to index
    %c0_539 = arith.constant 0 : index
    %1099 = vector.load %arg27[%1098, %c0_539] : memref<64x8xf32, #tpu.memory_space<vmem>>, vector<1x8xf32>
    %c32_i32_540 = arith.constant 32 : i32
    %1100 = arith.addi %c32_i32_540, %c9_i32_527 : i32
    %1101 = arith.index_cast %1100 : i32 to index
    %c0_541 = arith.constant 0 : index
    %1102 = vector.load %arg29[%1101, %c0_541] : memref<64x8xf32, #tpu.memory_space<vmem>>, vector<1x8xf32>
    %1103 = arith.addf %1099, %1102 : vector<1x8xf32>
    %1104 = arith.index_cast %1097 : i32 to index
    %c0_542 = arith.constant 0 : index
    %1105 = vector.load %arg27[%1104, %c0_542] : memref<64x8xf32, #tpu.memory_space<vmem>>, vector<1x8xf32>
    tpu.vector_store %arg27[%1104, %c0_542], %1103 {strides = array<i32>} : memref<64x8xf32, #tpu.memory_space<vmem>>, vector<1x8xf32>,
    %c48_i32_543 = arith.constant 48 : i32
    %1106 = arith.addi %c48_i32_543, %1078 : i32
    %1107 = arith.index_cast %1106 : i32 to index
    %c0_544 = arith.constant 0 : index
    %1108 = vector.load %arg27[%1107, %c0_544] : memref<64x8xf32, #tpu.memory_space<vmem>>, vector<1x8xf32>
    %c48_i32_545 = arith.constant 48 : i32
    %1109 = arith.addi %c48_i32_545, %c9_i32_527 : i32
    %1110 = arith.index_cast %1109 : i32 to index
    %c0_546 = arith.constant 0 : index
    %1111 = vector.load %arg29[%1110, %c0_546] : memref<64x8xf32, #tpu.memory_space<vmem>>, vector<1x8xf32>
    %1112 = arith.addf %1108, %1111 : vector<1x8xf32>
    %1113 = arith.index_cast %1106 : i32 to index
    %c0_547 = arith.constant 0 : index
    %1114 = vector.load %arg27[%1113, %c0_547] : memref<64x8xf32, #tpu.memory_space<vmem>>, vector<1x8xf32>
    tpu.vector_store %arg27[%1113, %c0_547], %1112 {strides = array<i32>} : memref<64x8xf32, #tpu.memory_space<vmem>>, vector<1x8xf32>,
    %c10_i32_548 = arith.constant 10 : i32
    %1115 = arith.addi %0, %c10_i32_548 : i32
    %1116 = arith.index_cast %arg0 : i32 to index
    %1117 = arith.index_cast %1115 : i32 to index
    %1118 = memref.load %arg3[%1116, %1117] : memref<2x32xi32, #tpu.memory_space<smem>>
    %c0_i32_549 = arith.constant 0 : i32
    %1119 = arith.addi %c0_i32_549, %1118 : i32
    %1120 = arith.index_cast %1119 : i32 to index
    %c0_550 = arith.constant 0 : index
    %1121 = vector.load %arg27[%1120, %c0_550] : memref<64x8xf32, #tpu.memory_space<vmem>>, vector<1x8xf32>
    %c0_i32_551 = arith.constant 0 : i32
    %1122 = arith.addi %c0_i32_551, %c10_i32_548 : i32
    %1123 = arith.index_cast %1122 : i32 to index
    %c0_552 = arith.constant 0 : index
    %1124 = vector.load %arg29[%1123, %c0_552] : memref<64x8xf32, #tpu.memory_space<vmem>>, vector<1x8xf32>
    %1125 = arith.addf %1121, %1124 : vector<1x8xf32>
    %1126 = arith.index_cast %1119 : i32 to index
    %c0_553 = arith.constant 0 : index
    %1127 = vector.load %arg27[%1126, %c0_553] : memref<64x8xf32, #tpu.memory_space<vmem>>, vector<1x8xf32>
    tpu.vector_store %arg27[%1126, %c0_553], %1125 {strides = array<i32>} : memref<64x8xf32, #tpu.memory_space<vmem>>, vector<1x8xf32>,
    %c16_i32_554 = arith.constant 16 : i32
    %1128 = arith.addi %c16_i32_554, %1118 : i32
    %1129 = arith.index_cast %1128 : i32 to index
    %c0_555 = arith.constant 0 : index
    %1130 = vector.load %arg27[%1129, %c0_555] : memref<64x8xf32, #tpu.memory_space<vmem>>, vector<1x8xf32>
    %c16_i32_556 = arith.constant 16 : i32
    %1131 = arith.addi %c16_i32_556, %c10_i32_548 : i32
    %1132 = arith.index_cast %1131 : i32 to index
    %c0_557 = arith.constant 0 : index
    %1133 = vector.load %arg29[%1132, %c0_557] : memref<64x8xf32, #tpu.memory_space<vmem>>, vector<1x8xf32>
    %1134 = arith.addf %1130, %1133 : vector<1x8xf32>
    %1135 = arith.index_cast %1128 : i32 to index
    %c0_558 = arith.constant 0 : index
    %1136 = vector.load %arg27[%1135, %c0_558] : memref<64x8xf32, #tpu.memory_space<vmem>>, vector<1x8xf32>
    tpu.vector_store %arg27[%1135, %c0_558], %1134 {strides = array<i32>} : memref<64x8xf32, #tpu.memory_space<vmem>>, vector<1x8xf32>,
    %c32_i32_559 = arith.constant 32 : i32
    %1137 = arith.addi %c32_i32_559, %1118 : i32
    %1138 = arith.index_cast %1137 : i32 to index
    %c0_560 = arith.constant 0 : index
    %1139 = vector.load %arg27[%1138, %c0_560] : memref<64x8xf32, #tpu.memory_space<vmem>>, vector<1x8xf32>
    %c32_i32_561 = arith.constant 32 : i32
    %1140 = arith.addi %c32_i32_561, %c10_i32_548 : i32
    %1141 = arith.index_cast %1140 : i32 to index
    %c0_562 = arith.constant 0 : index
    %1142 = vector.load %arg29[%1141, %c0_562] : memref<64x8xf32, #tpu.memory_space<vmem>>, vector<1x8xf32>
    %1143 = arith.addf %1139, %1142 : vector<1x8xf32>
    %1144 = arith.index_cast %1137 : i32 to index
    %c0_563 = arith.constant 0 : index
    %1145 = vector.load %arg27[%1144, %c0_563] : memref<64x8xf32, #tpu.memory_space<vmem>>, vector<1x8xf32>
    tpu.vector_store %arg27[%1144, %c0_563], %1143 {strides = array<i32>} : memref<64x8xf32, #tpu.memory_space<vmem>>, vector<1x8xf32>,
    %c48_i32_564 = arith.constant 48 : i32
    %1146 = arith.addi %c48_i32_564, %1118 : i32
    %1147 = arith.index_cast %1146 : i32 to index
    %c0_565 = arith.constant 0 : index
    %1148 = vector.load %arg27[%1147, %c0_565] : memref<64x8xf32, #tpu.memory_space<vmem>>, vector<1x8xf32>
    %c48_i32_566 = arith.constant 48 : i32
    %1149 = arith.addi %c48_i32_566, %c10_i32_548 : i32
    %1150 = arith.index_cast %1149 : i32 to index
    %c0_567 = arith.constant 0 : index
    %1151 = vector.load %arg29[%1150, %c0_567] : memref<64x8xf32, #tpu.memory_space<vmem>>, vector<1x8xf32>
    %1152 = arith.addf %1148, %1151 : vector<1x8xf32>
    %1153 = arith.index_cast %1146 : i32 to index
    %c0_568 = arith.constant 0 : index
    %1154 = vector.load %arg27[%1153, %c0_568] : memref<64x8xf32, #tpu.memory_space<vmem>>, vector<1x8xf32>
    tpu.vector_store %arg27[%1153, %c0_568], %1152 {strides = array<i32>} : memref<64x8xf32, #tpu.memory_space<vmem>>, vector<1x8xf32>,
    %c11_i32_569 = arith.constant 11 : i32
    %1155 = arith.addi %0, %c11_i32_569 : i32
    %1156 = arith.index_cast %arg0 : i32 to index
    %1157 = arith.index_cast %1155 : i32 to index
    %1158 = memref.load %arg3[%1156, %1157] : memref<2x32xi32, #tpu.memory_space<smem>>
    %c0_i32_570 = arith.constant 0 : i32
    %1159 = arith.addi %c0_i32_570, %1158 : i32
    %1160 = arith.index_cast %1159 : i32 to index
    %c0_571 = arith.constant 0 : index
    %1161 = vector.load %arg27[%1160, %c0_571] : memref<64x8xf32, #tpu.memory_space<vmem>>, vector<1x8xf32>
    %c0_i32_572 = arith.constant 0 : i32
    %1162 = arith.addi %c0_i32_572, %c11_i32_569 : i32
    %1163 = arith.index_cast %1162 : i32 to index
    %c0_573 = arith.constant 0 : index
    %1164 = vector.load %arg29[%1163, %c0_573] : memref<64x8xf32, #tpu.memory_space<vmem>>, vector<1x8xf32>
    %1165 = arith.addf %1161, %1164 : vector<1x8xf32>
    %1166 = arith.index_cast %1159 : i32 to index
    %c0_574 = arith.constant 0 : index
    %1167 = vector.load %arg27[%1166, %c0_574] : memref<64x8xf32, #tpu.memory_space<vmem>>, vector<1x8xf32>
    tpu.vector_store %arg27[%1166, %c0_574], %1165 {strides = array<i32>} : memref<64x8xf32, #tpu.memory_space<vmem>>, vector<1x8xf32>,
    %c16_i32_575 = arith.constant 16 : i32
    %1168 = arith.addi %c16_i32_575, %1158 : i32
    %1169 = arith.index_cast %1168 : i32 to index
    %c0_576 = arith.constant 0 : index
    %1170 = vector.load %arg27[%1169, %c0_576] : memref<64x8xf32, #tpu.memory_space<vmem>>, vector<1x8xf32>
    %c16_i32_577 = arith.constant 16 : i32
    %1171 = arith.addi %c16_i32_577, %c11_i32_569 : i32
    %1172 = arith.index_cast %1171 : i32 to index
    %c0_578 = arith.constant 0 : index
    %1173 = vector.load %arg29[%1172, %c0_578] : memref<64x8xf32, #tpu.memory_space<vmem>>, vector<1x8xf32>
    %1174 = arith.addf %1170, %1173 : vector<1x8xf32>
    %1175 = arith.index_cast %1168 : i32 to index
    %c0_579 = arith.constant 0 : index
    %1176 = vector.load %arg27[%1175, %c0_579] : memref<64x8xf32, #tpu.memory_space<vmem>>, vector<1x8xf32>
    tpu.vector_store %arg27[%1175, %c0_579], %1174 {strides = array<i32>} : memref<64x8xf32, #tpu.memory_space<vmem>>, vector<1x8xf32>,
    %c32_i32_580 = arith.constant 32 : i32
    %1177 = arith.addi %c32_i32_580, %1158 : i32
    %1178 = arith.index_cast %1177 : i32 to index
    %c0_581 = arith.constant 0 : index
    %1179 = vector.load %arg27[%1178, %c0_581] : memref<64x8xf32, #tpu.memory_space<vmem>>, vector<1x8xf32>
    %c32_i32_582 = arith.constant 32 : i32
    %1180 = arith.addi %c32_i32_582, %c11_i32_569 : i32
    %1181 = arith.index_cast %1180 : i32 to index
    %c0_583 = arith.constant 0 : index
    %1182 = vector.load %arg29[%1181, %c0_583] : memref<64x8xf32, #tpu.memory_space<vmem>>, vector<1x8xf32>
    %1183 = arith.addf %1179, %1182 : vector<1x8xf32>
    %1184 = arith.index_cast %1177 : i32 to index
    %c0_584 = arith.constant 0 : index
    %1185 = vector.load %arg27[%1184, %c0_584] : memref<64x8xf32, #tpu.memory_space<vmem>>, vector<1x8xf32>
    tpu.vector_store %arg27[%1184, %c0_584], %1183 {strides = array<i32>} : memref<64x8xf32, #tpu.memory_space<vmem>>, vector<1x8xf32>,
    %c48_i32_585 = arith.constant 48 : i32
    %1186 = arith.addi %c48_i32_585, %1158 : i32
    %1187 = arith.index_cast %1186 : i32 to index
    %c0_586 = arith.constant 0 : index
    %1188 = vector.load %arg27[%1187, %c0_586] : memref<64x8xf32, #tpu.memory_space<vmem>>, vector<1x8xf32>
    %c48_i32_587 = arith.constant 48 : i32
    %1189 = arith.addi %c48_i32_587, %c11_i32_569 : i32
    %1190 = arith.index_cast %1189 : i32 to index
    %c0_588 = arith.constant 0 : index
    %1191 = vector.load %arg29[%1190, %c0_588] : memref<64x8xf32, #tpu.memory_space<vmem>>, vector<1x8xf32>
    %1192 = arith.addf %1188, %1191 : vector<1x8xf32>
    %1193 = arith.index_cast %1186 : i32 to index
    %c0_589 = arith.constant 0 : index
    %1194 = vector.load %arg27[%1193, %c0_589] : memref<64x8xf32, #tpu.memory_space<vmem>>, vector<1x8xf32>
    tpu.vector_store %arg27[%1193, %c0_589], %1192 {strides = array<i32>} : memref<64x8xf32, #tpu.memory_space<vmem>>, vector<1x8xf32>,
    %c12_i32_590 = arith.constant 12 : i32
    %1195 = arith.addi %0, %c12_i32_590 : i32
    %1196 = arith.index_cast %arg0 : i32 to index
    %1197 = arith.index_cast %1195 : i32 to index
    %1198 = memref.load %arg3[%1196, %1197] : memref<2x32xi32, #tpu.memory_space<smem>>
    %c0_i32_591 = arith.constant 0 : i32
    %1199 = arith.addi %c0_i32_591, %1198 : i32
    %1200 = arith.index_cast %1199 : i32 to index
    %c0_592 = arith.constant 0 : index
    %1201 = vector.load %arg27[%1200, %c0_592] : memref<64x8xf32, #tpu.memory_space<vmem>>, vector<1x8xf32>
    %c0_i32_593 = arith.constant 0 : i32
    %1202 = arith.addi %c0_i32_593, %c12_i32_590 : i32
    %1203 = arith.index_cast %1202 : i32 to index
    %c0_594 = arith.constant 0 : index
    %1204 = vector.load %arg29[%1203, %c0_594] : memref<64x8xf32, #tpu.memory_space<vmem>>, vector<1x8xf32>
    %1205 = arith.addf %1201, %1204 : vector<1x8xf32>
    %1206 = arith.index_cast %1199 : i32 to index
    %c0_595 = arith.constant 0 : index
    %1207 = vector.load %arg27[%1206, %c0_595] : memref<64x8xf32, #tpu.memory_space<vmem>>, vector<1x8xf32>
    tpu.vector_store %arg27[%1206, %c0_595], %1205 {strides = array<i32>} : memref<64x8xf32, #tpu.memory_space<vmem>>, vector<1x8xf32>,
    %c16_i32_596 = arith.constant 16 : i32
    %1208 = arith.addi %c16_i32_596, %1198 : i32
    %1209 = arith.index_cast %1208 : i32 to index
    %c0_597 = arith.constant 0 : index
    %1210 = vector.load %arg27[%1209, %c0_597] : memref<64x8xf32, #tpu.memory_space<vmem>>, vector<1x8xf32>
    %c16_i32_598 = arith.constant 16 : i32
    %1211 = arith.addi %c16_i32_598, %c12_i32_590 : i32
    %1212 = arith.index_cast %1211 : i32 to index
    %c0_599 = arith.constant 0 : index
    %1213 = vector.load %arg29[%1212, %c0_599] : memref<64x8xf32, #tpu.memory_space<vmem>>, vector<1x8xf32>
    %1214 = arith.addf %1210, %1213 : vector<1x8xf32>
    %1215 = arith.index_cast %1208 : i32 to index
    %c0_600 = arith.constant 0 : index
    %1216 = vector.load %arg27[%1215, %c0_600] : memref<64x8xf32, #tpu.memory_space<vmem>>, vector<1x8xf32>
    tpu.vector_store %arg27[%1215, %c0_600], %1214 {strides = array<i32>} : memref<64x8xf32, #tpu.memory_space<vmem>>, vector<1x8xf32>,
    %c32_i32_601 = arith.constant 32 : i32
    %1217 = arith.addi %c32_i32_601, %1198 : i32
    %1218 = arith.index_cast %1217 : i32 to index
    %c0_602 = arith.constant 0 : index
    %1219 = vector.load %arg27[%1218, %c0_602] : memref<64x8xf32, #tpu.memory_space<vmem>>, vector<1x8xf32>
    %c32_i32_603 = arith.constant 32 : i32
    %1220 = arith.addi %c32_i32_603, %c12_i32_590 : i32
    %1221 = arith.index_cast %1220 : i32 to index
    %c0_604 = arith.constant 0 : index
    %1222 = vector.load %arg29[%1221, %c0_604] : memref<64x8xf32, #tpu.memory_space<vmem>>, vector<1x8xf32>
    %1223 = arith.addf %1219, %1222 : vector<1x8xf32>
    %1224 = arith.index_cast %1217 : i32 to index
    %c0_605 = arith.constant 0 : index
    %1225 = vector.load %arg27[%1224, %c0_605] : memref<64x8xf32, #tpu.memory_space<vmem>>, vector<1x8xf32>
    tpu.vector_store %arg27[%1224, %c0_605], %1223 {strides = array<i32>} : memref<64x8xf32, #tpu.memory_space<vmem>>, vector<1x8xf32>,
    %c48_i32_606 = arith.constant 48 : i32
    %1226 = arith.addi %c48_i32_606, %1198 : i32
    %1227 = arith.index_cast %1226 : i32 to index
    %c0_607 = arith.constant 0 : index
    %1228 = vector.load %arg27[%1227, %c0_607] : memref<64x8xf32, #tpu.memory_space<vmem>>, vector<1x8xf32>
    %c48_i32_608 = arith.constant 48 : i32
    %1229 = arith.addi %c48_i32_608, %c12_i32_590 : i32
    %1230 = arith.index_cast %1229 : i32 to index
    %c0_609 = arith.constant 0 : index
    %1231 = vector.load %arg29[%1230, %c0_609] : memref<64x8xf32, #tpu.memory_space<vmem>>, vector<1x8xf32>
    %1232 = arith.addf %1228, %1231 : vector<1x8xf32>
    %1233 = arith.index_cast %1226 : i32 to index
    %c0_610 = arith.constant 0 : index
    %1234 = vector.load %arg27[%1233, %c0_610] : memref<64x8xf32, #tpu.memory_space<vmem>>, vector<1x8xf32>
    tpu.vector_store %arg27[%1233, %c0_610], %1232 {strides = array<i32>} : memref<64x8xf32, #tpu.memory_space<vmem>>, vector<1x8xf32>,
    %c13_i32_611 = arith.constant 13 : i32
    %1235 = arith.addi %0, %c13_i32_611 : i32
    %1236 = arith.index_cast %arg0 : i32 to index
    %1237 = arith.index_cast %1235 : i32 to index
    %1238 = memref.load %arg3[%1236, %1237] : memref<2x32xi32, #tpu.memory_space<smem>>
    %c0_i32_612 = arith.constant 0 : i32
    %1239 = arith.addi %c0_i32_612, %1238 : i32
    %1240 = arith.index_cast %1239 : i32 to index
    %c0_613 = arith.constant 0 : index
    %1241 = vector.load %arg27[%1240, %c0_613] : memref<64x8xf32, #tpu.memory_space<vmem>>, vector<1x8xf32>
    %c0_i32_614 = arith.constant 0 : i32
    %1242 = arith.addi %c0_i32_614, %c13_i32_611 : i32
    %1243 = arith.index_cast %1242 : i32 to index
    %c0_615 = arith.constant 0 : index
    %1244 = vector.load %arg29[%1243, %c0_615] : memref<64x8xf32, #tpu.memory_space<vmem>>, vector<1x8xf32>
    %1245 = arith.addf %1241, %1244 : vector<1x8xf32>
    %1246 = arith.index_cast %1239 : i32 to index
    %c0_616 = arith.constant 0 : index
    %1247 = vector.load %arg27[%1246, %c0_616] : memref<64x8xf32, #tpu.memory_space<vmem>>, vector<1x8xf32>
    tpu.vector_store %arg27[%1246, %c0_616], %1245 {strides = array<i32>} : memref<64x8xf32, #tpu.memory_space<vmem>>, vector<1x8xf32>,
    %c16_i32_617 = arith.constant 16 : i32
    %1248 = arith.addi %c16_i32_617, %1238 : i32
    %1249 = arith.index_cast %1248 : i32 to index
    %c0_618 = arith.constant 0 : index
    %1250 = vector.load %arg27[%1249, %c0_618] : memref<64x8xf32, #tpu.memory_space<vmem>>, vector<1x8xf32>
    %c16_i32_619 = arith.constant 16 : i32
    %1251 = arith.addi %c16_i32_619, %c13_i32_611 : i32
    %1252 = arith.index_cast %1251 : i32 to index
    %c0_620 = arith.constant 0 : index
    %1253 = vector.load %arg29[%1252, %c0_620] : memref<64x8xf32, #tpu.memory_space<vmem>>, vector<1x8xf32>
    %1254 = arith.addf %1250, %1253 : vector<1x8xf32>
    %1255 = arith.index_cast %1248 : i32 to index
    %c0_621 = arith.constant 0 : index
    %1256 = vector.load %arg27[%1255, %c0_621] : memref<64x8xf32, #tpu.memory_space<vmem>>, vector<1x8xf32>
    tpu.vector_store %arg27[%1255, %c0_621], %1254 {strides = array<i32>} : memref<64x8xf32, #tpu.memory_space<vmem>>, vector<1x8xf32>,
    %c32_i32_622 = arith.constant 32 : i32
    %1257 = arith.addi %c32_i32_622, %1238 : i32
    %1258 = arith.index_cast %1257 : i32 to index
    %c0_623 = arith.constant 0 : index
    %1259 = vector.load %arg27[%1258, %c0_623] : memref<64x8xf32, #tpu.memory_space<vmem>>, vector<1x8xf32>
    %c32_i32_624 = arith.constant 32 : i32
    %1260 = arith.addi %c32_i32_624, %c13_i32_611 : i32
    %1261 = arith.index_cast %1260 : i32 to index
    %c0_625 = arith.constant 0 : index
    %1262 = vector.load %arg29[%1261, %c0_625] : memref<64x8xf32, #tpu.memory_space<vmem>>, vector<1x8xf32>
    %1263 = arith.addf %1259, %1262 : vector<1x8xf32>
    %1264 = arith.index_cast %1257 : i32 to index
    %c0_626 = arith.constant 0 : index
    %1265 = vector.load %arg27[%1264, %c0_626] : memref<64x8xf32, #tpu.memory_space<vmem>>, vector<1x8xf32>
    tpu.vector_store %arg27[%1264, %c0_626], %1263 {strides = array<i32>} : memref<64x8xf32, #tpu.memory_space<vmem>>, vector<1x8xf32>,
    %c48_i32_627 = arith.constant 48 : i32
    %1266 = arith.addi %c48_i32_627, %1238 : i32
    %1267 = arith.index_cast %1266 : i32 to index
    %c0_628 = arith.constant 0 : index
    %1268 = vector.load %arg27[%1267, %c0_628] : memref<64x8xf32, #tpu.memory_space<vmem>>, vector<1x8xf32>
    %c48_i32_629 = arith.constant 48 : i32
    %1269 = arith.addi %c48_i32_629, %c13_i32_611 : i32
    %1270 = arith.index_cast %1269 : i32 to index
    %c0_630 = arith.constant 0 : index
    %1271 = vector.load %arg29[%1270, %c0_630] : memref<64x8xf32, #tpu.memory_space<vmem>>, vector<1x8xf32>
    %1272 = arith.addf %1268, %1271 : vector<1x8xf32>
    %1273 = arith.index_cast %1266 : i32 to index
    %c0_631 = arith.constant 0 : index
    %1274 = vector.load %arg27[%1273, %c0_631] : memref<64x8xf32, #tpu.memory_space<vmem>>, vector<1x8xf32>
    tpu.vector_store %arg27[%1273, %c0_631], %1272 {strides = array<i32>} : memref<64x8xf32, #tpu.memory_space<vmem>>, vector<1x8xf32>,
    %c14_i32_632 = arith.constant 14 : i32
    %1275 = arith.addi %0, %c14_i32_632 : i32
    %1276 = arith.index_cast %arg0 : i32 to index
    %1277 = arith.index_cast %1275 : i32 to index
    %1278 = memref.load %arg3[%1276, %1277] : memref<2x32xi32, #tpu.memory_space<smem>>
    %c0_i32_633 = arith.constant 0 : i32
    %1279 = arith.addi %c0_i32_633, %1278 : i32
    %1280 = arith.index_cast %1279 : i32 to index
    %c0_634 = arith.constant 0 : index
    %1281 = vector.load %arg27[%1280, %c0_634] : memref<64x8xf32, #tpu.memory_space<vmem>>, vector<1x8xf32>
    %c0_i32_635 = arith.constant 0 : i32
    %1282 = arith.addi %c0_i32_635, %c14_i32_632 : i32
    %1283 = arith.index_cast %1282 : i32 to index
    %c0_636 = arith.constant 0 : index
    %1284 = vector.load %arg29[%1283, %c0_636] : memref<64x8xf32, #tpu.memory_space<vmem>>, vector<1x8xf32>
    %1285 = arith.addf %1281, %1284 : vector<1x8xf32>
    %1286 = arith.index_cast %1279 : i32 to index
    %c0_637 = arith.constant 0 : index
    %1287 = vector.load %arg27[%1286, %c0_637] : memref<64x8xf32, #tpu.memory_space<vmem>>, vector<1x8xf32>
    tpu.vector_store %arg27[%1286, %c0_637], %1285 {strides = array<i32>} : memref<64x8xf32, #tpu.memory_space<vmem>>, vector<1x8xf32>,
    %c16_i32_638 = arith.constant 16 : i32
    %1288 = arith.addi %c16_i32_638, %1278 : i32
    %1289 = arith.index_cast %1288 : i32 to index
    %c0_639 = arith.constant 0 : index
    %1290 = vector.load %arg27[%1289, %c0_639] : memref<64x8xf32, #tpu.memory_space<vmem>>, vector<1x8xf32>
    %c16_i32_640 = arith.constant 16 : i32
    %1291 = arith.addi %c16_i32_640, %c14_i32_632 : i32
    %1292 = arith.index_cast %1291 : i32 to index
    %c0_641 = arith.constant 0 : index
    %1293 = vector.load %arg29[%1292, %c0_641] : memref<64x8xf32, #tpu.memory_space<vmem>>, vector<1x8xf32>
    %1294 = arith.addf %1290, %1293 : vector<1x8xf32>
    %1295 = arith.index_cast %1288 : i32 to index
    %c0_642 = arith.constant 0 : index
    %1296 = vector.load %arg27[%1295, %c0_642] : memref<64x8xf32, #tpu.memory_space<vmem>>, vector<1x8xf32>
    tpu.vector_store %arg27[%1295, %c0_642], %1294 {strides = array<i32>} : memref<64x8xf32, #tpu.memory_space<vmem>>, vector<1x8xf32>,
    %c32_i32_643 = arith.constant 32 : i32
    %1297 = arith.addi %c32_i32_643, %1278 : i32
    %1298 = arith.index_cast %1297 : i32 to index
    %c0_644 = arith.constant 0 : index
    %1299 = vector.load %arg27[%1298, %c0_644] : memref<64x8xf32, #tpu.memory_space<vmem>>, vector<1x8xf32>
    %c32_i32_645 = arith.constant 32 : i32
    %1300 = arith.addi %c32_i32_645, %c14_i32_632 : i32
    %1301 = arith.index_cast %1300 : i32 to index
    %c0_646 = arith.constant 0 : index
    %1302 = vector.load %arg29[%1301, %c0_646] : memref<64x8xf32, #tpu.memory_space<vmem>>, vector<1x8xf32>
    %1303 = arith.addf %1299, %1302 : vector<1x8xf32>
    %1304 = arith.index_cast %1297 : i32 to index
    %c0_647 = arith.constant 0 : index
    %1305 = vector.load %arg27[%1304, %c0_647] : memref<64x8xf32, #tpu.memory_space<vmem>>, vector<1x8xf32>
    tpu.vector_store %arg27[%1304, %c0_647], %1303 {strides = array<i32>} : memref<64x8xf32, #tpu.memory_space<vmem>>, vector<1x8xf32>,
    %c48_i32_648 = arith.constant 48 : i32
    %1306 = arith.addi %c48_i32_648, %1278 : i32
    %1307 = arith.index_cast %1306 : i32 to index
    %c0_649 = arith.constant 0 : index
    %1308 = vector.load %arg27[%1307, %c0_649] : memref<64x8xf32, #tpu.memory_space<vmem>>, vector<1x8xf32>
    %c48_i32_650 = arith.constant 48 : i32
    %1309 = arith.addi %c48_i32_650, %c14_i32_632 : i32
    %1310 = arith.index_cast %1309 : i32 to index
    %c0_651 = arith.constant 0 : index
    %1311 = vector.load %arg29[%1310, %c0_651] : memref<64x8xf32, #tpu.memory_space<vmem>>, vector<1x8xf32>
    %1312 = arith.addf %1308, %1311 : vector<1x8xf32>
    %1313 = arith.index_cast %1306 : i32 to index
    %c0_652 = arith.constant 0 : index
    %1314 = vector.load %arg27[%1313, %c0_652] : memref<64x8xf32, #tpu.memory_space<vmem>>, vector<1x8xf32>
    tpu.vector_store %arg27[%1313, %c0_652], %1312 {strides = array<i32>} : memref<64x8xf32, #tpu.memory_space<vmem>>, vector<1x8xf32>,
    %c15_i32_653 = arith.constant 15 : i32
    %1315 = arith.addi %0, %c15_i32_653 : i32
    %1316 = arith.index_cast %arg0 : i32 to index
    %1317 = arith.index_cast %1315 : i32 to index
    %1318 = memref.load %arg3[%1316, %1317] : memref<2x32xi32, #tpu.memory_space<smem>>
    %c0_i32_654 = arith.constant 0 : i32
    %1319 = arith.addi %c0_i32_654, %1318 : i32
    %1320 = arith.index_cast %1319 : i32 to index
    %c0_655 = arith.constant 0 : index
    %1321 = vector.load %arg27[%1320, %c0_655] : memref<64x8xf32, #tpu.memory_space<vmem>>, vector<1x8xf32>
    %c0_i32_656 = arith.constant 0 : i32
    %1322 = arith.addi %c0_i32_656, %c15_i32_653 : i32
    %1323 = arith.index_cast %1322 : i32 to index
    %c0_657 = arith.constant 0 : index
    %1324 = vector.load %arg29[%1323, %c0_657] : memref<64x8xf32, #tpu.memory_space<vmem>>, vector<1x8xf32>
    %1325 = arith.addf %1321, %1324 : vector<1x8xf32>
    %1326 = arith.index_cast %1319 : i32 to index
    %c0_658 = arith.constant 0 : index
    %1327 = vector.load %arg27[%1326, %c0_658] : memref<64x8xf32, #tpu.memory_space<vmem>>, vector<1x8xf32>
    tpu.vector_store %arg27[%1326, %c0_658], %1325 {strides = array<i32>} : memref<64x8xf32, #tpu.memory_space<vmem>>, vector<1x8xf32>,
    %c16_i32_659 = arith.constant 16 : i32
    %1328 = arith.addi %c16_i32_659, %1318 : i32
    %1329 = arith.index_cast %1328 : i32 to index
    %c0_660 = arith.constant 0 : index
    %1330 = vector.load %arg27[%1329, %c0_660] : memref<64x8xf32, #tpu.memory_space<vmem>>, vector<1x8xf32>
    %c16_i32_661 = arith.constant 16 : i32
    %1331 = arith.addi %c16_i32_661, %c15_i32_653 : i32
    %1332 = arith.index_cast %1331 : i32 to index
    %c0_662 = arith.constant 0 : index
    %1333 = vector.load %arg29[%1332, %c0_662] : memref<64x8xf32, #tpu.memory_space<vmem>>, vector<1x8xf32>
    %1334 = arith.addf %1330, %1333 : vector<1x8xf32>
    %1335 = arith.index_cast %1328 : i32 to index
    %c0_663 = arith.constant 0 : index
    %1336 = vector.load %arg27[%1335, %c0_663] : memref<64x8xf32, #tpu.memory_space<vmem>>, vector<1x8xf32>
    tpu.vector_store %arg27[%1335, %c0_663], %1334 {strides = array<i32>} : memref<64x8xf32, #tpu.memory_space<vmem>>, vector<1x8xf32>,
    %c32_i32_664 = arith.constant 32 : i32
    %1337 = arith.addi %c32_i32_664, %1318 : i32
    %1338 = arith.index_cast %1337 : i32 to index
    %c0_665 = arith.constant 0 : index
    %1339 = vector.load %arg27[%1338, %c0_665] : memref<64x8xf32, #tpu.memory_space<vmem>>, vector<1x8xf32>
    %c32_i32_666 = arith.constant 32 : i32
    %1340 = arith.addi %c32_i32_666, %c15_i32_653 : i32
    %1341 = arith.index_cast %1340 : i32 to index
    %c0_667 = arith.constant 0 : index
    %1342 = vector.load %arg29[%1341, %c0_667] : memref<64x8xf32, #tpu.memory_space<vmem>>, vector<1x8xf32>
    %1343 = arith.addf %1339, %1342 : vector<1x8xf32>
    %1344 = arith.index_cast %1337 : i32 to index
    %c0_668 = arith.constant 0 : index
    %1345 = vector.load %arg27[%1344, %c0_668] : memref<64x8xf32, #tpu.memory_space<vmem>>, vector<1x8xf32>
    tpu.vector_store %arg27[%1344, %c0_668], %1343 {strides = array<i32>} : memref<64x8xf32, #tpu.memory_space<vmem>>, vector<1x8xf32>,
    %c48_i32_669 = arith.constant 48 : i32
    %1346 = arith.addi %c48_i32_669, %1318 : i32
    %1347 = arith.index_cast %1346 : i32 to index
    %c0_670 = arith.constant 0 : index
    %1348 = vector.load %arg27[%1347, %c0_670] : memref<64x8xf32, #tpu.memory_space<vmem>>, vector<1x8xf32>
    %c48_i32_671 = arith.constant 48 : i32
    %1349 = arith.addi %c48_i32_671, %c15_i32_653 : i32
    %1350 = arith.index_cast %1349 : i32 to index
    %c0_672 = arith.constant 0 : index
    %1351 = vector.load %arg29[%1350, %c0_672] : memref<64x8xf32, #tpu.memory_space<vmem>>, vector<1x8xf32>
    %1352 = arith.addf %1348, %1351 : vector<1x8xf32>
    %1353 = arith.index_cast %1346 : i32 to index
    %c0_673 = arith.constant 0 : index
    %1354 = vector.load %arg27[%1353, %c0_673] : memref<64x8xf32, #tpu.memory_space<vmem>>, vector<1x8xf32>
    tpu.vector_store %arg27[%1353, %c0_673], %1352 {strides = array<i32>} : memref<64x8xf32, #tpu.memory_space<vmem>>, vector<1x8xf32>,
    %c16_i32_674 = arith.constant 16 : i32
    %c1_i32_675 = arith.constant 1 : i32
    %1355 = arith.cmpi eq, %arg1, %c1_i32_675 : i32
    %1356 = arith.extui %1355 : i1 to i32
    %c0_i32_676 = arith.constant 0 : i32
    %1357 = arith.cmpi ne, %1356, %c0_i32_676 : i32
    scf.if %1357 {
      %c0_677 = arith.constant 0 : index
      %c0_678 = arith.constant 0 : index
      %1358 = vector.load %arg27[%c0_677, %c0_678] : memref<64x8xf32, #tpu.memory_space<vmem>>, vector<64x8xf32>
      %cst_679 = arith.constant 0.316227764 : f32
      %1359 = vector.broadcast %cst_679 : f32 to vector<64x8xf32>
      %1360 = arith.mulf %1358, %1359 : vector<64x8xf32>
      %1361 = vector.extract_strided_slice %1360 {offsets = [0, 0], sizes = [16, 8], strides = [1, 1]} : vector<64x8xf32> to vector<16x8xf32>
      %1362 = vector.extract_strided_slice %1360 {offsets = [16, 0], sizes = [48, 8], strides = [1, 1]} : vector<64x8xf32> to vector<48x8xf32>
      %c0_680 = arith.constant 0 : index
      %c0_681 = arith.constant 0 : index
      %1363 = vector.load %arg26[%c0_680, %c0_681] : memref<64x8xf32, #tpu.memory_space<vmem>>, vector<64x8xf32>
      %1364 = vector.extract_strided_slice %1363 {offsets = [0, 0], sizes = [16, 8], strides = [1, 1]} : vector<64x8xf32> to vector<16x8xf32>
      %1365 = vector.extract_strided_slice %1363 {offsets = [16, 0], sizes = [48, 8], strides = [1, 1]} : vector<64x8xf32> to vector<48x8xf32>
      %c0_682 = arith.constant 0 : index
      %c0_683 = arith.constant 0 : index
      %1366 = vector.load %arg19[%c0_682, %c0_683] : memref<8x16xf32, #tpu.memory_space<vmem>>, vector<8x16xf32>
      %cst_684 = arith.constant dense<0.000000e+00> : vector<16x16xf32>
      %1367 = tpu.matmul %1361, %1366, %cst_684 {dimension_numbers = #tpu.dot_dimension_numbers<[1], [0], [0], [1], [0, 0, 1, 1], [], []>} : vector<16x8xf32>, vector<8x16xf32>, vector<16x16xf32> -> vector<16x16xf32>
      %cst_685 = arith.constant 0.353553385 : f32
      %1368 = vector.broadcast %cst_685 : f32 to vector<16x16xf32>
      %1369 = arith.mulf %1367, %1368 : vector<16x16xf32>
      %1370 = vector.extract_strided_slice %1369 {offsets = [0, 0], sizes = [16, 8], strides = [1, 1]} : vector<16x16xf32> to vector<16x8xf32>
      %1371 = vector.extract_strided_slice %1369 {offsets = [0, 8], sizes = [16, 8], strides = [1, 1]} : vector<16x16xf32> to vector<16x8xf32>
      %cst_686 = arith.constant 0.000000e+00 : f32
      %1372 = vector.broadcast %cst_686 : f32 to vector<16x8xf32>
      %1373 = arith.subf %1372, %1371 : vector<16x8xf32>
      %1374 = math.exp %1373 : vector<16x8xf32>
      %cst_687 = arith.constant 1.000000e+00 : f32
      %1375 = vector.broadcast %cst_687 : f32 to vector<16x8xf32>
      %1376 = arith.addf %1375, %1374 : vector<16x8xf32>
      %1377 = tpu.reciprocal %1376 {approx = true} : vector<16x8xf32> -> vector<16x8xf32>
      %1378 = arith.mulf %1371, %1377 : vector<16x8xf32>
      %c0_688 = arith.constant 0 : index
      %c0_689 = arith.constant 0 : index
      %1379 = vector.load %arg20[%c0_688, %c0_689] : memref<8x8xf32, #tpu.memory_space<vmem>>, vector<8x8xf32>
      %cst_690 = arith.constant dense<0.000000e+00> : vector<48x8xf32>
      %1380 = tpu.matmul %1362, %1379, %cst_690 {dimension_numbers = #tpu.dot_dimension_numbers<[1], [0], [0], [1], [0, 0, 1, 1], [], []>} : vector<48x8xf32>, vector<8x8xf32>, vector<48x8xf32> -> vector<48x8xf32>
      %cst_691 = arith.constant 0.353553385 : f32
      %1381 = vector.broadcast %cst_691 : f32 to vector<48x8xf32>
      %1382 = arith.mulf %1380, %1381 : vector<48x8xf32>
      %c0_692 = arith.constant 0 : index
      %c0_693 = arith.constant 0 : index
      %1383 = vector.load %arg21[%c0_692, %c0_693] : memref<8x8xf32, #tpu.memory_space<vmem>>, vector<8x8xf32>
      %cst_694 = arith.constant dense<0.000000e+00> : vector<16x8xf32>
      %1384 = tpu.matmul %1364, %1383, %cst_694 {dimension_numbers = #tpu.dot_dimension_numbers<[1], [0], [0], [1], [0, 0, 1, 1], [], []>} : vector<16x8xf32>, vector<8x8xf32>, vector<16x8xf32> -> vector<16x8xf32>
      %cst_695 = arith.constant 0.353553385 : f32
      %1385 = vector.broadcast %cst_695 : f32 to vector<16x8xf32>
      %1386 = arith.mulf %1384, %1385 : vector<16x8xf32>
      %c0_696 = arith.constant 0 : index
      %c0_697 = arith.constant 0 : index
      %1387 = vector.load %arg22[%c0_696, %c0_697] : memref<8x8xf32, #tpu.memory_space<vmem>>, vector<8x8xf32>
      %cst_698 = arith.constant dense<0.000000e+00> : vector<48x8xf32>
      %1388 = tpu.matmul %1365, %1387, %cst_698 {dimension_numbers = #tpu.dot_dimension_numbers<[1], [0], [0], [1], [0, 0, 1, 1], [], []>} : vector<48x8xf32>, vector<8x8xf32>, vector<48x8xf32> -> vector<48x8xf32>
      %cst_699 = arith.constant 0.353553385 : f32
      %1389 = vector.broadcast %cst_699 : f32 to vector<48x8xf32>
      %1390 = arith.mulf %1388, %1389 : vector<48x8xf32>
      %cst_700 = arith.constant 0.000000e+00 : f32
      %1391 = vector.broadcast %cst_700 : f32 to vector<16x8xf32>
      %1392 = arith.subf %1391, %1370 : vector<16x8xf32>
      %1393 = math.exp %1392 : vector<16x8xf32>
      %cst_701 = arith.constant 1.000000e+00 : f32
      %1394 = vector.broadcast %cst_701 : f32 to vector<16x8xf32>
      %1395 = arith.addf %1394, %1393 : vector<16x8xf32>
      %1396 = tpu.reciprocal %1395 {approx = true} : vector<16x8xf32> -> vector<16x8xf32>
      %1397 = arith.mulf %1370, %1396 : vector<16x8xf32>
      %1398 = arith.addf %1397, %1386 : vector<16x8xf32>
      %1399 = tpu.concatenate %1378, %1378, %1378 in 0 : vector<16x8xf32>, vector<16x8xf32>, vector<16x8xf32> -> vector<48x8xf32>
      %1400 = arith.mulf %1382, %1399 : vector<48x8xf32>
      %1401 = arith.addf %1400, %1390 : vector<48x8xf32>
      %c0_702 = arith.constant 0 : index
      %c0_703 = arith.constant 0 : index
      %1402 = vector.load %arg26[%c0_702, %c0_703] : memref<64x8xf32, #tpu.memory_space<vmem>>, vector<16x8xf32>
      tpu.vector_store %arg26[%c0_702, %c0_703], %1398 {strides = array<i32>} : memref<64x8xf32, #tpu.memory_space<vmem>>, vector<16x8xf32>,
      %c16_704 = arith.constant 16 : index
      %c0_705 = arith.constant 0 : index
      %1403 = vector.load %arg26[%c16_704, %c0_705] : memref<64x8xf32, #tpu.memory_space<vmem>>, vector<48x8xf32>
      tpu.vector_store %arg26[%c16_704, %c0_705], %1401 {strides = array<i32>} : memref<64x8xf32, #tpu.memory_space<vmem>>, vector<48x8xf32>,
      %c0_706 = arith.constant 0 : index
      %c0_707 = arith.constant 0 : index
      %1404 = vector.load %arg23[%c0_706, %c0_707] : memref<1x8xf32, #tpu.memory_space<vmem>>, vector<1x8xf32>
      %1405 = vector.broadcast %1404 : vector<1x8xf32> to vector<48x8xf32>
      %1406 = arith.mulf %1401, %1405 : vector<48x8xf32>
      %cst_708 = arith.constant dense<0.000000e+00> : vector<48xf32>
      %1407 = vector.multi_reduction <add>, %1406, %cst_708 [1] : vector<48x8xf32> to vector<48xf32>
      %1408 = vector.shape_cast %1407 : vector<48xf32> to vector<48x1xf32>
      %c0_709 = arith.constant 0 : index
      %c0_710 = arith.constant 0 : index
      %1409 = vector.load %arg24[%c0_709, %c0_710] : memref<1x8xf32, #tpu.memory_space<vmem>>, vector<1x8xf32>
      %1410 = vector.broadcast %1409 : vector<1x8xf32> to vector<48x8xf32>
      %1411 = arith.mulf %1401, %1410 : vector<48x8xf32>
      %cst_711 = arith.constant dense<0.000000e+00> : vector<48xf32>
      %1412 = vector.multi_reduction <add>, %1411, %cst_711 [1] : vector<48x8xf32> to vector<48xf32>
      %1413 = vector.shape_cast %1412 : vector<48xf32> to vector<48x1xf32>
      %cst_712 = arith.constant 5.000000e-01 : f32
      %1414 = vector.broadcast %cst_712 : f32 to vector<48x1xf32>
      %1415 = arith.mulf %1408, %1414 : vector<48x1xf32>
      %cst_713 = arith.constant 0.000000e+00 : f32
      %1416 = vector.broadcast %cst_713 : f32 to vector<48x1xf32>
      %1417 = arith.addf %1415, %1416 : vector<48x1xf32>
      %cst_714 = arith.constant 2.000000e-01 : f32
      %1418 = vector.broadcast %cst_714 : f32 to vector<48x1xf32>
      %1419 = arith.mulf %1413, %1418 : vector<48x1xf32>
      %cst_715 = arith.constant 0.000000e+00 : f32
      %1420 = vector.broadcast %cst_715 : f32 to vector<48x1xf32>
      %1421 = arith.addf %1419, %1420 : vector<48x1xf32>
      %1422 = vector.extract_strided_slice %1417 {offsets = [0, 0], sizes = [16, 1], strides = [1, 1]} : vector<48x1xf32> to vector<16x1xf32>
      %1423 = vector.extract_strided_slice %1417 {offsets = [16, 0], sizes = [16, 1], strides = [1, 1]} : vector<48x1xf32> to vector<16x1xf32>
      %1424 = vector.extract_strided_slice %1417 {offsets = [32, 0], sizes = [16, 1], strides = [1, 1]} : vector<48x1xf32> to vector<16x1xf32>
      %1425 = tpu.concatenate %1422, %1423, %1424 in 1 : vector<16x1xf32>, vector<16x1xf32>, vector<16x1xf32> -> vector<16x3xf32>
      %1426 = vector.extract_strided_slice %1421 {offsets = [0, 0], sizes = [16, 1], strides = [1, 1]} : vector<48x1xf32> to vector<16x1xf32>
      %1427 = vector.extract_strided_slice %1421 {offsets = [16, 0], sizes = [16, 1], strides = [1, 1]} : vector<48x1xf32> to vector<16x1xf32>
      %1428 = vector.extract_strided_slice %1421 {offsets = [32, 0], sizes = [16, 1], strides = [1, 1]} : vector<48x1xf32> to vector<16x1xf32>
      %1429 = tpu.concatenate %1426, %1427, %1428 in 1 : vector<16x1xf32>, vector<16x1xf32>, vector<16x1xf32> -> vector<16x3xf32>
      %cst_716 = arith.constant dense<0.000000e+00> : vector<3xf32>
      %1430 = vector.multi_reduction <add>, %1425, %cst_716 [0] : vector<16x3xf32> to vector<3xf32>
      %1431 = vector.shape_cast %1430 : vector<3xf32> to vector<1x3xf32>
      %cst_717 = arith.constant 6.250000e-02 : f32
      %1432 = vector.broadcast %cst_717 : f32 to vector<1x3xf32>
      %1433 = arith.mulf %1431, %1432 : vector<1x3xf32>
      %1434 = vector.broadcast %1433 : vector<1x3xf32> to vector<16x3xf32>
      %1435 = arith.subf %1425, %1434 : vector<16x3xf32>
      %cst_718 = arith.constant dense<0.000000e+00> : vector<3xf32>
      %1436 = vector.multi_reduction <add>, %1429, %cst_718 [0] : vector<16x3xf32> to vector<3xf32>
      %1437 = vector.shape_cast %1436 : vector<3xf32> to vector<1x3xf32>
      %cst_719 = arith.constant 6.250000e-02 : f32
      %1438 = vector.broadcast %cst_719 : f32 to vector<1x3xf32>
      %1439 = arith.mulf %1437, %1438 : vector<1x3xf32>
      %1440 = vector.broadcast %1439 : vector<1x3xf32> to vector<16x3xf32>
      %1441 = arith.subf %1429, %1440 : vector<16x3xf32>
      %1442 = tpu.concatenate %1435, %1441 in 1 : vector<16x3xf32>, vector<16x3xf32> -> vector<16x6xf32>
      %c0_720 = arith.constant 0 : index
      %c0_721 = arith.constant 0 : index
      %c0_722 = arith.constant 0 : index
      %1443 = vector.load %arg25[%c0_720, %c0_721, %c0_722] : memref<1x16x6xf32, #tpu.memory_space<vmem>>, vector<1x16x6xf32>
      %1444 = vector.shape_cast %1443 : vector<1x16x6xf32> to vector<16x6xf32>
      %1445 = vector.shape_cast %1442 : vector<16x6xf32> to vector<1x16x6xf32>
      tpu.vector_store %arg25[%c0_720, %c0_721, %c0_722], %1445 {strides = array<i32>} : memref<1x16x6xf32, #tpu.memory_space<vmem>>, vector<1x16x6xf32>,
    } else {
    }
    return
  }
  func.func @transform_0(%arg0: i32, %arg1: i32, %arg2: memref<2x32xi32, #tpu.memory_space<smem>>, %arg3: memref<2x32xi32, #tpu.memory_space<smem>>) -> (i32, i32, i32) {
    %c0_i32 = arith.constant 0 : i32
    %c0_i32_0 = arith.constant 0 : i32
    %c0_i32_1 = arith.constant 0 : i32
    return %arg0, %c0_i32, %c0_i32_0 : i32, i32, i32
  }
  func.func @transform_1(%arg0: i32, %arg1: i32, %arg2: memref<2x32xi32, #tpu.memory_space<smem>>, %arg3: memref<2x32xi32, #tpu.memory_space<smem>>) -> (i32, i32, i32) {
    %c0_i32 = arith.constant 0 : i32
    %c0_i32_0 = arith.constant 0 : i32
    %c0_i32_1 = arith.constant 0 : i32
    return %arg0, %c0_i32, %c0_i32_0 : i32, i32, i32
  }
  func.func @transform_2(%arg0: i32, %arg1: i32, %arg2: memref<2x32xi32, #tpu.memory_space<smem>>, %arg3: memref<2x32xi32, #tpu.memory_space<smem>>) -> (i32, i32, i32) {
    %c0_i32 = arith.constant 0 : i32
    %c0_i32_0 = arith.constant 0 : i32
    %c0_i32_1 = arith.constant 0 : i32
    return %arg0, %c0_i32, %c0_i32_0 : i32, i32, i32
  }
  func.func @transform_3(%arg0: i32, %arg1: i32, %arg2: memref<2x32xi32, #tpu.memory_space<smem>>, %arg3: memref<2x32xi32, #tpu.memory_space<smem>>) -> (i32, i32, i32) {
    %c0_i32 = arith.constant 0 : i32
    %c0_i32_0 = arith.constant 0 : i32
    %c0_i32_1 = arith.constant 0 : i32
    return %arg0, %c0_i32, %c0_i32_0 : i32, i32, i32
  }
  func.func @transform_4(%arg0: i32, %arg1: i32, %arg2: memref<2x32xi32, #tpu.memory_space<smem>>, %arg3: memref<2x32xi32, #tpu.memory_space<smem>>) -> (i32, i32) {
    %c0_i32 = arith.constant 0 : i32
    %c0_i32_0 = arith.constant 0 : i32
    %c0_i32_1 = arith.constant 0 : i32
    return %c0_i32, %c0_i32_0 : i32, i32
  }
  func.func @transform_5(%arg0: i32, %arg1: i32, %arg2: memref<2x32xi32, #tpu.memory_space<smem>>, %arg3: memref<2x32xi32, #tpu.memory_space<smem>>) -> (i32, i32) {
    %c0_i32 = arith.constant 0 : i32
    %c0_i32_0 = arith.constant 0 : i32
    %c0_i32_1 = arith.constant 0 : i32
    return %c0_i32, %c0_i32_0 : i32, i32
  }
  func.func @transform_6(%arg0: i32, %arg1: i32, %arg2: memref<2x32xi32, #tpu.memory_space<smem>>, %arg3: memref<2x32xi32, #tpu.memory_space<smem>>) -> (i32, i32) {
    %c0_i32 = arith.constant 0 : i32
    %c0_i32_0 = arith.constant 0 : i32
    %c0_i32_1 = arith.constant 0 : i32
    return %c0_i32, %c0_i32_0 : i32, i32
  }
  func.func @transform_7(%arg0: i32, %arg1: i32, %arg2: memref<2x32xi32, #tpu.memory_space<smem>>, %arg3: memref<2x32xi32, #tpu.memory_space<smem>>) -> (i32, i32) {
    %c0_i32 = arith.constant 0 : i32
    %c0_i32_0 = arith.constant 0 : i32
    %c0_i32_1 = arith.constant 0 : i32
    return %c0_i32, %c0_i32_0 : i32, i32
  }
  func.func @transform_8(%arg0: i32, %arg1: i32, %arg2: memref<2x32xi32, #tpu.memory_space<smem>>, %arg3: memref<2x32xi32, #tpu.memory_space<smem>>) -> (i32, i32) {
    %c0_i32 = arith.constant 0 : i32
    %c0_i32_0 = arith.constant 0 : i32
    %c0_i32_1 = arith.constant 0 : i32
    return %c0_i32, %c0_i32_0 : i32, i32
  }
  func.func @transform_9(%arg0: i32, %arg1: i32, %arg2: memref<2x32xi32, #tpu.memory_space<smem>>, %arg3: memref<2x32xi32, #tpu.memory_space<smem>>) -> (i32, i32) {
    %c0_i32 = arith.constant 0 : i32
    %c0_i32_0 = arith.constant 0 : i32
    %c0_i32_1 = arith.constant 0 : i32
    return %c0_i32, %c0_i32_0 : i32, i32
  }
  func.func @transform_10(%arg0: i32, %arg1: i32, %arg2: memref<2x32xi32, #tpu.memory_space<smem>>, %arg3: memref<2x32xi32, #tpu.memory_space<smem>>) -> (i32, i32) {
    %c0_i32 = arith.constant 0 : i32
    %c0_i32_0 = arith.constant 0 : i32
    %c0_i32_1 = arith.constant 0 : i32
    return %c0_i32, %c0_i32_0 : i32, i32
  }
  func.func @transform_11(%arg0: i32, %arg1: i32, %arg2: memref<2x32xi32, #tpu.memory_space<smem>>, %arg3: memref<2x32xi32, #tpu.memory_space<smem>>) -> (i32, i32) {
    %c0_i32 = arith.constant 0 : i32
    %c0_i32_0 = arith.constant 0 : i32
    %c0_i32_1 = arith.constant 0 : i32
    return %c0_i32, %c0_i32_0 : i32, i32
  }
  func.func @transform_12(%arg0: i32, %arg1: i32, %arg2: memref<2x32xi32, #tpu.memory_space<smem>>, %arg3: memref<2x32xi32, #tpu.memory_space<smem>>) -> (i32, i32) {
    %c0_i32 = arith.constant 0 : i32
    %c0_i32_0 = arith.constant 0 : i32
    %c0_i32_1 = arith.constant 0 : i32
    return %c0_i32, %c0_i32_0 : i32, i32
  }
  func.func @transform_13(%arg0: i32, %arg1: i32, %arg2: memref<2x32xi32, #tpu.memory_space<smem>>, %arg3: memref<2x32xi32, #tpu.memory_space<smem>>) -> (i32, i32) {
    %c0_i32 = arith.constant 0 : i32
    %c0_i32_0 = arith.constant 0 : i32
    %c0_i32_1 = arith.constant 0 : i32
    return %c0_i32, %c0_i32_0 : i32, i32
  }
  func.func @transform_14(%arg0: i32, %arg1: i32, %arg2: memref<2x32xi32, #tpu.memory_space<smem>>, %arg3: memref<2x32xi32, #tpu.memory_space<smem>>) -> (i32, i32) {
    %c0_i32 = arith.constant 0 : i32
    %c0_i32_0 = arith.constant 0 : i32
    %c0_i32_1 = arith.constant 0 : i32
    return %c0_i32, %c0_i32_0 : i32, i32
  }
  func.func @transform_15(%arg0: i32, %arg1: i32, %arg2: memref<2x32xi32, #tpu.memory_space<smem>>, %arg3: memref<2x32xi32, #tpu.memory_space<smem>>) -> (i32, i32) {
    %c0_i32 = arith.constant 0 : i32
    %c0_i32_0 = arith.constant 0 : i32
    %c0_i32_1 = arith.constant 0 : i32
    return %c0_i32, %c0_i32_0 : i32, i32
  }
  func.func @transform_16(%arg0: i32, %arg1: i32, %arg2: memref<2x32xi32, #tpu.memory_space<smem>>, %arg3: memref<2x32xi32, #tpu.memory_space<smem>>) -> (i32, i32) {
    %c0_i32 = arith.constant 0 : i32
    %c0_i32_0 = arith.constant 0 : i32
    %c0_i32_1 = arith.constant 0 : i32
    return %c0_i32, %c0_i32_0 : i32, i32
  }
  func.func @transform_17(%arg0: i32, %arg1: i32, %arg2: memref<2x32xi32, #tpu.memory_space<smem>>, %arg3: memref<2x32xi32, #tpu.memory_space<smem>>) -> (i32, i32) {
    %c0_i32 = arith.constant 0 : i32
    %c0_i32_0 = arith.constant 0 : i32
    %c0_i32_1 = arith.constant 0 : i32
    return %c0_i32, %c0_i32_0 : i32, i32
  }
  func.func @transform_18(%arg0: i32, %arg1: i32, %arg2: memref<2x32xi32, #tpu.memory_space<smem>>, %arg3: memref<2x32xi32, #tpu.memory_space<smem>>) -> (i32, i32) {
    %c0_i32 = arith.constant 0 : i32
    %c0_i32_0 = arith.constant 0 : i32
    %c0_i32_1 = arith.constant 0 : i32
    return %c0_i32, %c0_i32_0 : i32, i32
  }
  func.func @transform_19(%arg0: i32, %arg1: i32, %arg2: memref<2x32xi32, #tpu.memory_space<smem>>, %arg3: memref<2x32xi32, #tpu.memory_space<smem>>) -> (i32, i32) {
    %c0_i32 = arith.constant 0 : i32
    %c0_i32_0 = arith.constant 0 : i32
    %c0_i32_1 = arith.constant 0 : i32
    return %c0_i32, %c0_i32_0 : i32, i32
  }
  func.func @transform_20(%arg0: i32, %arg1: i32, %arg2: memref<2x32xi32, #tpu.memory_space<smem>>, %arg3: memref<2x32xi32, #tpu.memory_space<smem>>) -> (i32, i32) {
    %c0_i32 = arith.constant 0 : i32
    %c0_i32_0 = arith.constant 0 : i32
    %c0_i32_1 = arith.constant 0 : i32
    return %c0_i32, %c0_i32_0 : i32, i32
  }
  func.func @transform_21(%arg0: i32, %arg1: i32, %arg2: memref<2x32xi32, #tpu.memory_space<smem>>, %arg3: memref<2x32xi32, #tpu.memory_space<smem>>) -> (i32, i32, i32) {
    %c0_i32 = arith.constant 0 : i32
    %c0_i32_0 = arith.constant 0 : i32
    %c0_i32_1 = arith.constant 0 : i32
    return %arg0, %c0_i32, %c0_i32_0 : i32, i32, i32
  }
}

</mosaic_0001>

<llo_original>
// kernel: efficient_trajcast_forward.1
$region0: #{efficient_trajcast_forward.1}
  #allocation0 [shape = 'u32[]', space=smem, size = 0x4, offset = 0x4, fixed_abs, tag = 'smem constant byte address 0x4 - core index']
  #allocation1 [shape = 'u32[72,128]{1,0:T(1,128)}', space=vmem, size = 0x9000, scoped, tag = 'internal scratch']
  #allocation2 [shape = 'f32[64,8]{1,0:T(8,128)}', space=vmem, size = 0x8000, scoped, tag = 'scratch operand']
  #allocation3 [shape = 'f32[64,8]{1,0:T(8,128)}', space=vmem, size = 0x8000, scoped, tag = 'scratch operand']
  #allocation4 [shape = 'f32[64,8]{1,0:T(8,128)}', space=vmem, size = 0x8000, scoped, tag = 'scratch operand']
  #allocation5 [shape = 'f32[64,8]{1,0:T(8,128)}', space=vmem, size = 0x8000, scoped, tag = 'scratch operand']
  #allocation6 [shape = 'f32[16,3]{1,0:T(8,128)}', space=vmem, size = 0x2000, scoped, tag = 'scratch operand']
  #allocation7 [shape = 's32[1]{0}', space=sflag, size = 0x4, scoped, tag = 'scoped memory for efficient_trajcast_forward.1']
  #allocation8 [shape = 'u8[1024]{0}', space=smem, size = 0x400, scoped, tag = 'prefetched SMEM operand 0']
  #allocation9 [shape = 'u8[1024]{0}', space=smem, size = 0x400, scoped, tag = 'prefetched SMEM operand 1']
  %s0 = inlined_call_operand.vmem [shape: s32[2,32], index: 0, kind: input, shape index: {}]
  %s1 = inlined_call_operand.vmem [shape: s32[2,32], index: 1, kind: input, shape index: {}]
  %s2 = inlined_call_operand.vmem [shape: f32[2,16,3], index: 2, kind: input, shape index: {}]
  %s3 = inlined_call_operand.vmem [shape: f32[2,16,3], index: 3, kind: input, shape index: {}]
  %s4 = inlined_call_operand.vmem [shape: f32[2,16,4], index: 4, kind: input, shape index: {}]
  %s5 = inlined_call_operand.vmem [shape: f32[2,16,32], index: 5, kind: input, shape index: {}]
  %s6 = inlined_call_operand.vmem [shape: f32[1,8], index: 6, kind: input, shape index: {}]
  %s7 = inlined_call_operand.vmem [shape: f32[1,8], index: 7, kind: input, shape index: {}]
  %s8 = inlined_call_operand.vmem [shape: f32[8,32], index: 8, kind: input, shape index: {}]
  %s9 = inlined_call_operand.vmem [shape: f32[32,8], index: 9, kind: input, shape index: {}]
  %s10 = inlined_call_operand.vmem [shape: f32[4,8], index: 10, kind: input, shape index: {}]
  %s11 = inlined_call_operand.vmem [shape: f32[8,8], index: 11, kind: input, shape index: {}]
  %s12 = inlined_call_operand.vmem [shape: f32[1,8], index: 12, kind: input, shape index: {}]
  %s13 = inlined_call_operand.vmem [shape: f32[8,16], index: 13, kind: input, shape index: {}]
  %s14 = inlined_call_operand.vmem [shape: f32[1,16], index: 14, kind: input, shape index: {}]
  %s15 = inlined_call_operand.vmem [shape: f32[16,32], index: 15, kind: input, shape index: {}]
  %s16 = inlined_call_operand.vmem [shape: f32[1,32], index: 16, kind: input, shape index: {}]
  %s17 = inlined_call_operand.vmem [shape: f32[8,16], index: 17, kind: input, shape index: {}]
  %s18 = inlined_call_operand.vmem [shape: f32[8,8], index: 18, kind: input, shape index: {}]
  %s19 = inlined_call_operand.vmem [shape: f32[8,8], index: 19, kind: input, shape index: {}]
  %s20 = inlined_call_operand.vmem [shape: f32[8,8], index: 20, kind: input, shape index: {}]
  %s21 = inlined_call_operand.vmem [shape: f32[1,8], index: 21, kind: input, shape index: {}]
  %s22 = inlined_call_operand.vmem [shape: f32[1,8], index: 22, kind: input, shape index: {}]
  %s23 = inlined_call_operand.vmem [shape: f32[2,16,6], index: 23, kind: output, shape index: {}]
  %s24 = sld [smem:[#allocation0]]
  $region125: #{efficient_trajcast_forward.1} parent=0
    _
  %s26 = ssub.s32 1, %s24
  %s27 = scalar_select 0, %s26, %s24
  %s29 = sshll.u32 %s0, 4
  %s30 = int_to_ptr.vmem [resolvable:$true] %s29
  %32 = dma.vmem_to_smem %s30, 32, [#allocation8], [#allocation7]
  %s34 = sshll.u32 %s1, 4
  %s35 = int_to_ptr.vmem [resolvable:$true] %s34
  %37 = dma.vmem_to_smem %s35, 32, [#allocation9], [#allocation7]
  %39 = dma.done [#allocation7], 64
  %40 = sfence
  loop: start=0, step=1, limit=6
  $region2: #{efficient_trajcast_forward.1} parent=0 // loop_pre_header
    _
  $region3: #{efficient_trajcast_forward.1} parent=0 // loop_header
    %s42 = sphi 0, %s46
    %p43 = scmp.ge.s32.totalorder %s42, 6
    %s49 = sphi 0, %s61
    %s50 = sphi 0, %s57
    %s51 = sphi 0, %s49
    %s52 = sphi 0, %s50
    %s53 = sphi 0, %s51
    %s54 = sphi 0, %s52
    %s64 = sphi 0, %s66
    %s67 = sphi 0, %s64
    %s68 = sphi 0, %s67
    %s84 = sphi 0, %s68
    %s90 = sphi 0, %s92
    %s93 = sphi 0, %s90
    %s94 = sphi 0, %s93
    %s110 = sphi 0, %s94
    %s116 = sphi 0, %s118
    %s119 = sphi 0, %s116
    %s120 = sphi 0, %s119
    %s136 = sphi 0, %s120
    %s142 = sphi 0, %s144
    %s145 = sphi 0, %s142
    %s146 = sphi 0, %s145
    %s162 = sphi 0, %s146
    %s166 = sphi 0, %s166
    %s168 = sphi 0, %s166
    %s169 = sphi 0, %s168
    %s183 = sphi 0, %s169
    %s187 = sphi 0, %s187
    %s189 = sphi 0, %s187
    %s190 = sphi 0, %s189
    %s204 = sphi 0, %s190
    %s208 = sphi 0, %s208
    %s210 = sphi 0, %s208
    %s211 = sphi 0, %s210
    %s225 = sphi 0, %s211
    %s229 = sphi 0, %s229
    %s231 = sphi 0, %s229
    %s232 = sphi 0, %s231
    %s246 = sphi 0, %s232
    %s250 = sphi 0, %s250
    %s252 = sphi 0, %s250
    %s253 = sphi 0, %s252
    %s267 = sphi 0, %s253
    %s271 = sphi 0, %s271
    %s273 = sphi 0, %s271
    %s274 = sphi 0, %s273
    %s288 = sphi 0, %s274
    %s292 = sphi 0, %s292
    %s294 = sphi 0, %s292
    %s295 = sphi 0, %s294
    %s309 = sphi 0, %s295
    %s313 = sphi 0, %s313
    %s315 = sphi 0, %s313
    %s316 = sphi 0, %s315
    %s330 = sphi 0, %s316
    %s334 = sphi 0, %s334
    %s336 = sphi 0, %s334
    %s337 = sphi 0, %s336
    %s351 = sphi 0, %s337
    %s355 = sphi 0, %s355
    %s357 = sphi 0, %s355
    %s358 = sphi 0, %s357
    %s372 = sphi 0, %s358
    %s376 = sphi 0, %s376
    %s378 = sphi 0, %s376
    %s379 = sphi 0, %s378
    %s393 = sphi 0, %s379
    %s397 = sphi 0, %s397
    %s399 = sphi 0, %s397
    %s400 = sphi 0, %s399
    %s414 = sphi 0, %s400
    %s418 = sphi 0, %s418
    %s420 = sphi 0, %s418
    %s421 = sphi 0, %s420
    %s435 = sphi 0, %s421
    %s439 = sphi 0, %s439
    %s441 = sphi 0, %s439
    %s442 = sphi 0, %s441
    %s456 = sphi 0, %s442
    %s460 = sphi 0, %s460
    %s462 = sphi 0, %s460
    %s463 = sphi 0, %s462
    %s477 = sphi 0, %s463
    %s481 = sphi 0, %s481
    %s483 = sphi 0, %s481
    %s484 = sphi 0, %s483
    %s498 = sphi 0, %s484
    %s502 = sphi 0, %s502
    %s504 = sphi 0, %s502
    %s505 = sphi 0, %s504
    %s519 = sphi 0, %s505
    %s525 = sphi 0, %s527
    %s528 = sphi 0, %s525
    %s529 = sphi 0, %s528
    %s545 = sphi 0, %s529
  $region4: #{efficient_trajcast_forward.1} parent=0 // loop_header_branch
    %45 = sbr.rel (%p43) target = $region8
  $region5: #{efficient_trajcast_forward.1} parent=0 // loop_body
    %s47 = ssub.s32 %s42, 1
    %s48 = ssub.s32 %s42, 2
    %s55 = sadd.s32 1, %s50
    %p56 = scmp.ge.s32.totalorder %s55, 2
    %s57 = scalar_select %p56, 0, %s55
    %s58 = sadd.s32 1, %s49
    %s59 = scalar_select %p56, %s58, %s49
    %p60 = scmp.ge.s32.totalorder %s59, 2
    %s61 = scalar_select %p60, 0, %s59
    %s62 = ssub.s32 %s49, %s61
    %p63 = scmp.eq.s32.totalorder %s62, 0
    %s65 = sadd.s32 %s64, 1
    %s66 = scalar_select %p63, %s64, %s65
    %p69 = pneg %p63
    %p70 = scmp.eq.s32.totalorder %s42, 3
    %p71 = por %p69, %p70
    %p72 = scmp.ne.s32.totalorder %s64, %s67
    %p73 = scmp.eq.s32.totalorder %s42, 0
    %p74 = por %p72, %p73
    %p75 = scmp.ne.s32.totalorder %s64, %s67
    %p76 = scmp.eq.s32.totalorder %s47, 3
    %p77 = por %p75, %p76
    %p78 = scmp.ne.s32.totalorder %s67, %s68
    %p79 = scmp.eq.s32.totalorder %s47, 0
    %p80 = por %p78, %p79
    %p81 = scmp.ne.s32.totalorder %s67, %s68
    %p82 = scmp.eq.s32.totalorder %s48, 3
    %p83 = por %p81, %p82
    %p85 = scmp.ne.s32.totalorder %s68, %s84
    %p86 = scmp.eq.s32.totalorder %s48, 0
    %p87 = por %p85, %p86
    %s88 = ssub.s32 %s49, %s61
    %p89 = scmp.eq.s32.totalorder %s88, 0
    %s91 = sadd.s32 %s90, 1
    %s92 = scalar_select %p89, %s90, %s91
    %p95 = pneg %p89
    %p96 = scmp.eq.s32.totalorder %s42, 3
    %p97 = por %p95, %p96
    %p98 = scmp.ne.s32.totalorder %s90, %s93
    %p99 = scmp.eq.s32.totalorder %s42, 0
    %p100 = por %p98, %p99
    %p101 = scmp.ne.s32.totalorder %s90, %s93
    %p102 = scmp.eq.s32.totalorder %s47, 3
    %p103 = por %p101, %p102
    %p104 = scmp.ne.s32.totalorder %s93, %s94
    %p105 = scmp.eq.s32.totalorder %s47, 0
    %p106 = por %p104, %p105
    %p107 = scmp.ne.s32.totalorder %s93, %s94
    %p108 = scmp.eq.s32.totalorder %s48, 3
    %p109 = por %p107, %p108
    %p111 = scmp.ne.s32.totalorder %s94, %s110
    %p112 = scmp.eq.s32.totalorder %s48, 0
    %p113 = por %p111, %p112
    %s114 = ssub.s32 %s49, %s61
    %p115 = scmp.eq.s32.totalorder %s114, 0
    %s117 = sadd.s32 %s116, 1
    %s118 = scalar_select %p115, %s116, %s117
    %p121 = pneg %p115
    %p122 = scmp.eq.s32.totalorder %s42, 3
    %p123 = por %p121, %p122
    %p124 = scmp.ne.s32.totalorder %s116, %s119
    %p125 = scmp.eq.s32.totalorder %s42, 0
    %p126 = por %p124, %p125
    %p127 = scmp.ne.s32.totalorder %s116, %s119
    %p128 = scmp.eq.s32.totalorder %s47, 3
    %p129 = por %p127, %p128
    %p130 = scmp.ne.s32.totalorder %s119, %s120
    %p131 = scmp.eq.s32.totalorder %s47, 0
    %p132 = por %p130, %p131
    %p133 = scmp.ne.s32.totalorder %s119, %s120
    %p134 = scmp.eq.s32.totalorder %s48, 3
    %p135 = por %p133, %p134
    %p137 = scmp.ne.s32.totalorder %s120, %s136
    %p138 = scmp.eq.s32.totalorder %s48, 0
    %p139 = por %p137, %p138
    %s140 = ssub.s32 %s49, %s61
    %p141 = scmp.eq.s32.totalorder %s140, 0
    %s143 = sadd.s32 %s142, 1
    %s144 = scalar_select %p141, %s142, %s143
    %p147 = pneg %p141
    %p148 = scmp.eq.s32.totalorder %s42, 3
    %p149 = por %p147, %p148
    %p150 = scmp.ne.s32.totalorder %s142, %s145
    %p151 = scmp.eq.s32.totalorder %s42, 0
    %p152 = por %p150, %p151
    %p153 = scmp.ne.s32.totalorder %s142, %s145
    %p154 = scmp.eq.s32.totalorder %s47, 3
    %p155 = por %p153, %p154
    %p156 = scmp.ne.s32.totalorder %s145, %s146
    %p157 = scmp.eq.s32.totalorder %s47, 0
    %p158 = por %p156, %p157
    %p159 = scmp.ne.s32.totalorder %s145, %s146
    %p160 = scmp.eq.s32.totalorder %s48, 3
    %p161 = por %p159, %p160
    %p163 = scmp.ne.s32.totalorder %s146, %s162
    %p164 = scmp.eq.s32.totalorder %s48, 0
    %p165 = por %p163, %p164
    %s167 = sadd.s32 %s166, 1
    %p170 = scmp.eq.s32.totalorder %s42, 3
    %p171 = scmp.ne.s32.totalorder %s166, %s168
    %p172 = scmp.eq.s32.totalorder %s42, 0
    %p173 = por %p171, %p172
    %p174 = scmp.ne.s32.totalorder %s166, %s168
    %p175 = scmp.eq.s32.totalorder %s47, 3
    %p176 = por %p174, %p175
    %p177 = scmp.ne.s32.totalorder %s168, %s169
    %p178 = scmp.eq.s32.totalorder %s47, 0
    %p179 = por %p177, %p178
    %p180 = scmp.ne.s32.totalorder %s168, %s169
    %p181 = scmp.eq.s32.totalorder %s48, 3
    %p182 = por %p180, %p181
    %p184 = scmp.ne.s32.totalorder %s169, %s183
    %p185 = scmp.eq.s32.totalorder %s48, 0
    %p186 = por %p184, %p185
    %s188 = sadd.s32 %s187, 1
    %p191 = scmp.eq.s32.totalorder %s42, 3
    %p192 = scmp.ne.s32.totalorder %s187, %s189
    %p193 = scmp.eq.s32.totalorder %s42, 0
    %p194 = por %p192, %p193
    %p195 = scmp.ne.s32.totalorder %s187, %s189
    %p196 = scmp.eq.s32.totalorder %s47, 3
    %p197 = por %p195, %p196
    %p198 = scmp.ne.s32.totalorder %s189, %s190
    %p199 = scmp.eq.s32.totalorder %s47, 0
    %p200 = por %p198, %p199
    %p201 = scmp.ne.s32.totalorder %s189, %s190
    %p202 = scmp.eq.s32.totalorder %s48, 3
    %p203 = por %p201, %p202
    %p205 = scmp.ne.s32.totalorder %s190, %s204
    %p206 = scmp.eq.s32.totalorder %s48, 0
    %p207 = por %p205, %p206
    %s209 = sadd.s32 %s208, 1
    %p212 = scmp.eq.s32.totalorder %s42, 3
    %p213 = scmp.ne.s32.totalorder %s208, %s210
    %p214 = scmp.eq.s32.totalorder %s42, 0
    %p215 = por %p213, %p214
    %p216 = scmp.ne.s32.totalorder %s208, %s210
    %p217 = scmp.eq.s32.totalorder %s47, 3
    %p218 = por %p216, %p217
    %p219 = scmp.ne.s32.totalorder %s210, %s211
    %p220 = scmp.eq.s32.totalorder %s47, 0
    %p221 = por %p219, %p220
    %p222 = scmp.ne.s32.totalorder %s210, %s211
    %p223 = scmp.eq.s32.totalorder %s48, 3
    %p224 = por %p222, %p223
    %p226 = scmp.ne.s32.totalorder %s211, %s225
    %p227 = scmp.eq.s32.totalorder %s48, 0
    %p228 = por %p226, %p227
    %s230 = sadd.s32 %s229, 1
    %p233 = scmp.eq.s32.totalorder %s42, 3
    %p234 = scmp.ne.s32.totalorder %s229, %s231
    %p235 = scmp.eq.s32.totalorder %s42, 0
    %p236 = por %p234, %p235
    %p237 = scmp.ne.s32.totalorder %s229, %s231
    %p238 = scmp.eq.s32.totalorder %s47, 3
    %p239 = por %p237, %p238
    %p240 = scmp.ne.s32.totalorder %s231, %s232
    %p241 = scmp.eq.s32.totalorder %s47, 0
    %p242 = por %p240, %p241
    %p243 = scmp.ne.s32.totalorder %s231, %s232
    %p244 = scmp.eq.s32.totalorder %s48, 3
    %p245 = por %p243, %p244
    %p247 = scmp.ne.s32.totalorder %s232, %s246
    %p248 = scmp.eq.s32.totalorder %s48, 0
    %p249 = por %p247, %p248
    %s251 = sadd.s32 %s250, 1
    %p254 = scmp.eq.s32.totalorder %s42, 3
    %p255 = scmp.ne.s32.totalorder %s250, %s252
    %p256 = scmp.eq.s32.totalorder %s42, 0
    %p257 = por %p255, %p256
    %p258 = scmp.ne.s32.totalorder %s250, %s252
    %p259 = scmp.eq.s32.totalorder %s47, 3
    %p260 = por %p258, %p259
    %p261 = scmp.ne.s32.totalorder %s252, %s253
    %p262 = scmp.eq.s32.totalorder %s47, 0
    %p263 = por %p261, %p262
    %p264 = scmp.ne.s32.totalorder %s252, %s253
    %p265 = scmp.eq.s32.totalorder %s48, 3
    %p266 = por %p264, %p265
    %p268 = scmp.ne.s32.totalorder %s253, %s267
    %p269 = scmp.eq.s32.totalorder %s48, 0
    %p270 = por %p268, %p269
    %s272 = sadd.s32 %s271, 1
    %p275 = scmp.eq.s32.totalorder %s42, 3
    %p276 = scmp.ne.s32.totalorder %s271, %s273
    %p277 = scmp.eq.s32.totalorder %s42, 0
    %p278 = por %p276, %p277
    %p279 = scmp.ne.s32.totalorder %s271, %s273
    %p280 = scmp.eq.s32.totalorder %s47, 3
    %p281 = por %p279, %p280
    %p282 = scmp.ne.s32.totalorder %s273, %s274
    %p283 = scmp.eq.s32.totalorder %s47, 0
    %p284 = por %p282, %p283
    %p285 = scmp.ne.s32.totalorder %s273, %s274
    %p286 = scmp.eq.s32.totalorder %s48, 3
    %p287 = por %p285, %p286
    %p289 = scmp.ne.s32.totalorder %s274, %s288
    %p290 = scmp.eq.s32.totalorder %s48, 0
    %p291 = por %p289, %p290
    %s293 = sadd.s32 %s292, 1
    %p296 = scmp.eq.s32.totalorder %s42, 3
    %p297 = scmp.ne.s32.totalorder %s292, %s294
    %p298 = scmp.eq.s32.totalorder %s42, 0
    %p299 = por %p297, %p298
    %p300 = scmp.ne.s32.totalorder %s292, %s294
    %p301 = scmp.eq.s32.totalorder %s47, 3
    %p302 = por %p300, %p301
    %p303 = scmp.ne.s32.totalorder %s294, %s295
    %p304 = scmp.eq.s32.totalorder %s47, 0
    %p305 = por %p303, %p304
    %p306 = scmp.ne.s32.totalorder %s294, %s295
    %p307 = scmp.eq.s32.totalorder %s48, 3
    %p308 = por %p306, %p307
    %p310 = scmp.ne.s32.totalorder %s295, %s309
    %p311 = scmp.eq.s32.totalorder %s48, 0
    %p312 = por %p310, %p311
    %s314 = sadd.s32 %s313, 1
    %p317 = scmp.eq.s32.totalorder %s42, 3
    %p318 = scmp.ne.s32.totalorder %s313, %s315
    %p319 = scmp.eq.s32.totalorder %s42, 0
    %p320 = por %p318, %p319
    %p321 = scmp.ne.s32.totalorder %s313, %s315
    %p322 = scmp.eq.s32.totalorder %s47, 3
    %p323 = por %p321, %p322
    %p324 = scmp.ne.s32.totalorder %s315, %s316
    %p325 = scmp.eq.s32.totalorder %s47, 0
    %p326 = por %p324, %p325
    %p327 = scmp.ne.s32.totalorder %s315, %s316
    %p328 = scmp.eq.s32.totalorder %s48, 3
    %p329 = por %p327, %p328
    %p331 = scmp.ne.s32.totalorder %s316, %s330
    %p332 = scmp.eq.s32.totalorder %s48, 0
    %p333 = por %p331, %p332
    %s335 = sadd.s32 %s334, 1
    %p338 = scmp.eq.s32.totalorder %s42, 3
    %p339 = scmp.ne.s32.totalorder %s334, %s336
    %p340 = scmp.eq.s32.totalorder %s42, 0
    %p341 = por %p339, %p340
    %p342 = scmp.ne.s32.totalorder %s334, %s336
    %p343 = scmp.eq.s32.totalorder %s47, 3
    %p344 = por %p342, %p343
    %p345 = scmp.ne.s32.totalorder %s336, %s337
    %p346 = scmp.eq.s32.totalorder %s47, 0
    %p347 = por %p345, %p346
    %p348 = scmp.ne.s32.totalorder %s336, %s337
    %p349 = scmp.eq.s32.totalorder %s48, 3
    %p350 = por %p348, %p349
    %p352 = scmp.ne.s32.totalorder %s337, %s351
    %p353 = scmp.eq.s32.totalorder %s48, 0
    %p354 = por %p352, %p353
    %s356 = sadd.s32 %s355, 1
    %p359 = scmp.eq.s32.totalorder %s42, 3
    %p360 = scmp.ne.s32.totalorder %s355, %s357
    %p361 = scmp.eq.s32.totalorder %s42, 0
    %p362 = por %p360, %p361
    %p363 = scmp.ne.s32.totalorder %s355, %s357
    %p364 = scmp.eq.s32.totalorder %s47, 3
    %p365 = por %p363, %p364
    %p366 = scmp.ne.s32.totalorder %s357, %s358
    %p367 = scmp.eq.s32.totalorder %s47, 0
    %p368 = por %p366, %p367
    %p369 = scmp.ne.s32.totalorder %s357, %s358
    %p370 = scmp.eq.s32.totalorder %s48, 3
    %p371 = por %p369, %p370
    %p373 = scmp.ne.s32.totalorder %s358, %s372
    %p374 = scmp.eq.s32.totalorder %s48, 0
    %p375 = por %p373, %p374
    %s377 = sadd.s32 %s376, 1
    %p380 = scmp.eq.s32.totalorder %s42, 3
    %p381 = scmp.ne.s32.totalorder %s376, %s378
    %p382 = scmp.eq.s32.totalorder %s42, 0
    %p383 = por %p381, %p382
    %p384 = scmp.ne.s32.totalorder %s376, %s378
    %p385 = scmp.eq.s32.totalorder %s47, 3
    %p386 = por %p384, %p385
    %p387 = scmp.ne.s32.totalorder %s378, %s379
    %p388 = scmp.eq.s32.totalorder %s47, 0
    %p389 = por %p387, %p388
    %p390 = scmp.ne.s32.totalorder %s378, %s379
    %p391 = scmp.eq.s32.totalorder %s48, 3
    %p392 = por %p390, %p391
    %p394 = scmp.ne.s32.totalorder %s379, %s393
    %p395 = scmp.eq.s32.totalorder %s48, 0
    %p396 = por %p394, %p395
    %s398 = sadd.s32 %s397, 1
    %p401 = scmp.eq.s32.totalorder %s42, 3
    %p402 = scmp.ne.s32.totalorder %s397, %s399
    %p403 = scmp.eq.s32.totalorder %s42, 0
    %p404 = por %p402, %p403
    %p405 = scmp.ne.s32.totalorder %s397, %s399
    %p406 = scmp.eq.s32.totalorder %s47, 3
    %p407 = por %p405, %p406
    %p408 = scmp.ne.s32.totalorder %s399, %s400
    %p409 = scmp.eq.s32.totalorder %s47, 0
    %p410 = por %p408, %p409
    %p411 = scmp.ne.s32.totalorder %s399, %s400
    %p412 = scmp.eq.s32.totalorder %s48, 3
    %p413 = por %p411, %p412
    %p415 = scmp.ne.s32.totalorder %s400, %s414
    %p416 = scmp.eq.s32.totalorder %s48, 0
    %p417 = por %p415, %p416
    %s419 = sadd.s32 %s418, 1
    %p422 = scmp.eq.s32.totalorder %s42, 3
    %p423 = scmp.ne.s32.totalorder %s418, %s420
    %p424 = scmp.eq.s32.totalorder %s42, 0
    %p425 = por %p423, %p424
    %p426 = scmp.ne.s32.totalorder %s418, %s420
    %p427 = scmp.eq.s32.totalorder %s47, 3
    %p428 = por %p426, %p427
    %p429 = scmp.ne.s32.totalorder %s420, %s421
    %p430 = scmp.eq.s32.totalorder %s47, 0
    %p431 = por %p429, %p430
    %p432 = scmp.ne.s32.totalorder %s420, %s421
    %p433 = scmp.eq.s32.totalorder %s48, 3
    %p434 = por %p432, %p433
    %p436 = scmp.ne.s32.totalorder %s421, %s435
    %p437 = scmp.eq.s32.totalorder %s48, 0
    %p438 = por %p436, %p437
    %s440 = sadd.s32 %s439, 1
    %p443 = scmp.eq.s32.totalorder %s42, 3
    %p444 = scmp.ne.s32.totalorder %s439, %s441
    %p445 = scmp.eq.s32.totalorder %s42, 0
    %p446 = por %p444, %p445
    %p447 = scmp.ne.s32.totalorder %s439, %s441
    %p448 = scmp.eq.s32.totalorder %s47, 3
    %p449 = por %p447, %p448
    %p450 = scmp.ne.s32.totalorder %s441, %s442
    %p451 = scmp.eq.s32.totalorder %s47, 0
    %p452 = por %p450, %p451
    %p453 = scmp.ne.s32.totalorder %s441, %s442
    %p454 = scmp.eq.s32.totalorder %s48, 3
    %p455 = por %p453, %p454
    %p457 = scmp.ne.s32.totalorder %s442, %s456
    %p458 = scmp.eq.s32.totalorder %s48, 0
    %p459 = por %p457, %p458
    %s461 = sadd.s32 %s460, 1
    %p464 = scmp.eq.s32.totalorder %s42, 3
    %p465 = scmp.ne.s32.totalorder %s460, %s462
    %p466 = scmp.eq.s32.totalorder %s42, 0
    %p467 = por %p465, %p466
    %p468 = scmp.ne.s32.totalorder %s460, %s462
    %p469 = scmp.eq.s32.totalorder %s47, 3
    %p470 = por %p468, %p469
    %p471 = scmp.ne.s32.totalorder %s462, %s463
    %p472 = scmp.eq.s32.totalorder %s47, 0
    %p473 = por %p471, %p472
    %p474 = scmp.ne.s32.totalorder %s462, %s463
    %p475 = scmp.eq.s32.totalorder %s48, 3
    %p476 = por %p474, %p475
    %p478 = scmp.ne.s32.totalorder %s463, %s477
    %p479 = scmp.eq.s32.totalorder %s48, 0
    %p480 = por %p478, %p479
    %s482 = sadd.s32 %s481, 1
    %p485 = scmp.eq.s32.totalorder %s42, 3
    %p486 = scmp.ne.s32.totalorder %s481, %s483
    %p487 = scmp.eq.s32.totalorder %s42, 0
    %p488 = por %p486, %p487
    %p489 = scmp.ne.s32.totalorder %s481, %s483
    %p490 = scmp.eq.s32.totalorder %s47, 3
    %p491 = por %p489, %p490
    %p492 = scmp.ne.s32.totalorder %s483, %s484
    %p493 = scmp.eq.s32.totalorder %s47, 0
    %p494 = por %p492, %p493
    %p495 = scmp.ne.s32.totalorder %s483, %s484
    %p496 = scmp.eq.s32.totalorder %s48, 3
    %p497 = por %p495, %p496
    %p499 = scmp.ne.s32.totalorder %s484, %s498
    %p500 = scmp.eq.s32.totalorder %s48, 0
    %p501 = por %p499, %p500
    %s503 = sadd.s32 %s502, 1
    %p506 = scmp.eq.s32.totalorder %s42, 3
    %p507 = scmp.ne.s32.totalorder %s502, %s504
    %p508 = scmp.eq.s32.totalorder %s42, 0
    %p509 = por %p507, %p508
    %p510 = scmp.ne.s32.totalorder %s502, %s504
    %p511 = scmp.eq.s32.totalorder %s47, 3
    %p512 = por %p510, %p511
    %p513 = scmp.ne.s32.totalorder %s504, %s505
    %p514 = scmp.eq.s32.totalorder %s47, 0
    %p515 = por %p513, %p514
    %p516 = scmp.ne.s32.totalorder %s504, %s505
    %p517 = scmp.eq.s32.totalorder %s48, 3
    %p518 = por %p516, %p517
    %p520 = scmp.ne.s32.totalorder %s505, %s519
    %p521 = scmp.eq.s32.totalorder %s48, 0
    %p522 = por %p520, %p521
    %s523 = ssub.s32 %s49, %s61
    %p524 = scmp.eq.s32.totalorder %s523, 0
    %s526 = sadd.s32 %s525, 1
    %s527 = scalar_select %p524, %s525, %s526
    %p530 = pneg %p524
    %p531 = scmp.eq.s32.totalorder %s42, 3
    %p532 = por %p530, %p531
    %p533 = scmp.ne.s32.totalorder %s525, %s528
    %p534 = scmp.eq.s32.totalorder %s42, 0
    %p535 = por %p533, %p534
    %p536 = scmp.ne.s32.totalorder %s525, %s528
    %p537 = scmp.eq.s32.totalorder %s47, 3
    %p538 = por %p536, %p537
    %p539 = scmp.ne.s32.totalorder %s528, %s529
    %p540 = scmp.eq.s32.totalorder %s47, 0
    %p541 = por %p539, %p540
    %p542 = scmp.ne.s32.totalorder %s528, %s529
    %p543 = scmp.eq.s32.totalorder %s48, 3
    %p544 = por %p542, %p543
    %p546 = scmp.ne.s32.totalorder %s529, %s545
    %p547 = scmp.eq.s32.totalorder %s48, 0
    %p548 = por %p546, %p547
    %p549 = scmp.le.s32.totalorder 1, %s42
    %p550 = scmp.lt.s32.totalorder %s42, 5
    %p551 = pnand %p549, %p550
    %p552 = pneg %p551
    // Predicated region
    $region9: #{efficient_trajcast_forward.1} parent=5 // pred_check
      _
    $region10: #{efficient_trajcast_forward.1} parent=5 // pred_check_branch
      %554 = sbr.rel (%p551) target = $region12
    $region11: #{efficient_trajcast_forward.1} parent=5 // pred_region
      %s555 = ssub.s32 %s42, 1
      // Predicated region
      $region13: #{efficient_trajcast_forward.1} parent=11 // pred_check
        %p556 = pneg %p179
      $region14: #{efficient_trajcast_forward.1} parent=11 // pred_check_branch
        %558 = sbr.rel (%p556) target = $region16
      $region15: #{efficient_trajcast_forward.1} parent=11 // pred_region
        _
      $region16: #{efficient_trajcast_forward.1} parent=11 // pred_fallthru
        _
      // Predicated region
      $region17: #{efficient_trajcast_forward.1} parent=11 // pred_check
        %p559 = pneg %p200
      $region18: #{efficient_trajcast_forward.1} parent=11 // pred_check_branch
        %561 = sbr.rel (%p559) target = $region20
      $region19: #{efficient_trajcast_forward.1} parent=11 // pred_region
        _
      $region20: #{efficient_trajcast_forward.1} parent=11 // pred_fallthru
        _
      // Predicated region
      $region21: #{efficient_trajcast_forward.1} parent=11 // pred_check
        %p562 = pneg %p221
      $region22: #{efficient_trajcast_forward.1} parent=11 // pred_check_branch
        %564 = sbr.rel (%p562) target = $region24
      $region23: #{efficient_trajcast_forward.1} parent=11 // pred_region
        _
      $region24: #{efficient_trajcast_forward.1} parent=11 // pred_fallthru
        _
      // Predicated region
      $region25: #{efficient_trajcast_forward.1} parent=11 // pred_check
        %p565 = pneg %p242
      $region26: #{efficient_trajcast_forward.1} parent=11 // pred_check_branch
        %567 = sbr.rel (%p565) target = $region28
      $region27: #{efficient_trajcast_forward.1} parent=11 // pred_region
        _
      $region28: #{efficient_trajcast_forward.1} parent=11 // pred_fallthru
        _
      // Predicated region
      $region29: #{efficient_trajcast_forward.1} parent=11 // pred_check
        %p568 = pneg %p263
      $region30: #{efficient_trajcast_forward.1} parent=11 // pred_check_branch
        %570 = sbr.rel (%p568) target = $region32
      $region31: #{efficient_trajcast_forward.1} parent=11 // pred_region
        _
      $region32: #{efficient_trajcast_forward.1} parent=11 // pred_fallthru
        _
      // Predicated region
      $region33: #{efficient_trajcast_forward.1} parent=11 // pred_check
        %p571 = pneg %p284
      $region34: #{efficient_trajcast_forward.1} parent=11 // pred_check_branch
        %573 = sbr.rel (%p571) target = $region36
      $region35: #{efficient_trajcast_forward.1} parent=11 // pred_region
        _
      $region36: #{efficient_trajcast_forward.1} parent=11 // pred_fallthru
        _
      // Predicated region
      $region37: #{efficient_trajcast_forward.1} parent=11 // pred_check
        %p574 = pneg %p305
      $region38: #{efficient_trajcast_forward.1} parent=11 // pred_check_branch
        %576 = sbr.rel (%p574) target = $region40
      $region39: #{efficient_trajcast_forward.1} parent=11 // pred_region
        _
      $region40: #{efficient_trajcast_forward.1} parent=11 // pred_fallthru
        _
      // Predicated region
      $region41: #{efficient_trajcast_forward.1} parent=11 // pred_check
        %p577 = pneg %p326
      $region42: #{efficient_trajcast_forward.1} parent=11 // pred_check_branch
        %579 = sbr.rel (%p577) target = $region44
      $region43: #{efficient_trajcast_forward.1} parent=11 // pred_region
        _
      $region44: #{efficient_trajcast_forward.1} parent=11 // pred_fallthru
        _
      // Predicated region
      $region45: #{efficient_trajcast_forward.1} parent=11 // pred_check
        %p580 = pneg %p347
      $region46: #{efficient_trajcast_forward.1} parent=11 // pred_check_branch
        %582 = sbr.rel (%p580) target = $region48
      $region47: #{efficient_trajcast_forward.1} parent=11 // pred_region
        _
      $region48: #{efficient_trajcast_forward.1} parent=11 // pred_fallthru
        _
      // Predicated region
      $region49: #{efficient_trajcast_forward.1} parent=11 // pred_check
        %p583 = pneg %p368
      $region50: #{efficient_trajcast_forward.1} parent=11 // pred_check_branch
        %585 = sbr.rel (%p583) target = $region52
      $region51: #{efficient_trajcast_forward.1} parent=11 // pred_region
        _
      $region52: #{efficient_trajcast_forward.1} parent=11 // pred_fallthru
        _
      // Predicated region
      $region53: #{efficient_trajcast_forward.1} parent=11 // pred_check
        %p586 = pneg %p389
      $region54: #{efficient_trajcast_forward.1} parent=11 // pred_check_branch
        %588 = sbr.rel (%p586) target = $region56
      $region55: #{efficient_trajcast_forward.1} parent=11 // pred_region
        _
      $region56: #{efficient_trajcast_forward.1} parent=11 // pred_fallthru
        _
      // Predicated region
      $region57: #{efficient_trajcast_forward.1} parent=11 // pred_check
        %p589 = pneg %p410
      $region58: #{efficient_trajcast_forward.1} parent=11 // pred_check_branch
        %591 = sbr.rel (%p589) target = $region60
      $region59: #{efficient_trajcast_forward.1} parent=11 // pred_region
        _
      $region60: #{efficient_trajcast_forward.1} parent=11 // pred_fallthru
        _
      // Predicated region
      $region61: #{efficient_trajcast_forward.1} parent=11 // pred_check
        %p592 = pneg %p431
      $region62: #{efficient_trajcast_forward.1} parent=11 // pred_check_branch
        %594 = sbr.rel (%p592) target = $region64
      $region63: #{efficient_trajcast_forward.1} parent=11 // pred_region
        _
      $region64: #{efficient_trajcast_forward.1} parent=11 // pred_fallthru
        _
      // Predicated region
      $region65: #{efficient_trajcast_forward.1} parent=11 // pred_check
        %p595 = pneg %p452
      $region66: #{efficient_trajcast_forward.1} parent=11 // pred_check_branch
        %597 = sbr.rel (%p595) target = $region68
      $region67: #{efficient_trajcast_forward.1} parent=11 // pred_region
        _
      $region68: #{efficient_trajcast_forward.1} parent=11 // pred_fallthru
        _
      // Predicated region
      $region69: #{efficient_trajcast_forward.1} parent=11 // pred_check
        %p598 = pneg %p473
      $region70: #{efficient_trajcast_forward.1} parent=11 // pred_check_branch
        %600 = sbr.rel (%p598) target = $region72
      $region71: #{efficient_trajcast_forward.1} parent=11 // pred_region
        _
      $region72: #{efficient_trajcast_forward.1} parent=11 // pred_fallthru
        _
      // Predicated region
      $region73: #{efficient_trajcast_forward.1} parent=11 // pred_check
        %p601 = pneg %p494
      $region74: #{efficient_trajcast_forward.1} parent=11 // pred_check_branch
        %603 = sbr.rel (%p601) target = $region76
      $region75: #{efficient_trajcast_forward.1} parent=11 // pred_region
        _
      $region76: #{efficient_trajcast_forward.1} parent=11 // pred_fallthru
        _
      // Predicated region
      $region77: #{efficient_trajcast_forward.1} parent=11 // pred_check
        %p604 = pneg %p515
      $region78: #{efficient_trajcast_forward.1} parent=11 // pred_check_branch
        %606 = sbr.rel (%p604) target = $region80
      $region79: #{efficient_trajcast_forward.1} parent=11 // pred_region
        _
      $region80: #{efficient_trajcast_forward.1} parent=11 // pred_fallthru
        _
    $region12: #{efficient_trajcast_forward.1} parent=5 // pred_fallthru
      _
    %p607 = scmp.lt.s32.totalorder %s42, 4
    // Predicated region
    $region81: #{efficient_trajcast_forward.1} parent=5 // pred_check
      %p608 = pneg %p607
    $region82: #{efficient_trajcast_forward.1} parent=5 // pred_check_branch
      %610 = sbr.rel (%p608) target = $region84
    $region83: #{efficient_trajcast_forward.1} parent=5 // pred_region
      // Predicated region
      $region85: #{efficient_trajcast_forward.1} parent=83 // pred_check
        %p611 = pneg %p74
      $region86: #{efficient_trajcast_forward.1} parent=83 // pred_check_branch
        %613 = sbr.rel (%p611) target = $region88
      $region87: #{efficient_trajcast_forward.1} parent=83 // pred_region
        %p614 = scmp.lt.s32.totalorder %s49, 1
        %s615 = scalar_select %p614, %s49, 1
        %s616 = smul.addr %s615, 2
        %s617 = smul.addr %s616, 8
        %s618 = scalar_lea.vmem %s2, %s617
      $region88: #{efficient_trajcast_forward.1} parent=83 // pred_fallthru
        _
      // Predicated region
      $region89: #{efficient_trajcast_forward.1} parent=83 // pred_check
        %p619 = pneg %p100
      $region90: #{efficient_trajcast_forward.1} parent=83 // pred_check_branch
        %621 = sbr.rel (%p619) target = $region92
      $region91: #{efficient_trajcast_forward.1} parent=83 // pred_region
        %p622 = scmp.lt.s32.totalorder %s49, 1
        %s623 = scalar_select %p622, %s49, 1
        %s624 = smul.addr %s623, 2
        %s625 = smul.addr %s624, 8
        %s626 = scalar_lea.vmem %s3, %s625
      $region92: #{efficient_trajcast_forward.1} parent=83 // pred_fallthru
        _
      // Predicated region
      $region93: #{efficient_trajcast_forward.1} parent=83 // pred_check
        %p627 = pneg %p126
      $region94: #{efficient_trajcast_forward.1} parent=83 // pred_check_branch
        %629 = sbr.rel (%p627) target = $region96
      $region95: #{efficient_trajcast_forward.1} parent=83 // pred_region
        %p630 = scmp.lt.s32.totalorder %s49, 1
        %s631 = scalar_select %p630, %s49, 1
        %s632 = smul.addr %s631, 2
        %s633 = smul.addr %s632, 8
        %s634 = scalar_lea.vmem %s4, %s633
      $region96: #{efficient_trajcast_forward.1} parent=83 // pred_fallthru
        _
      // Predicated region
      $region97: #{efficient_trajcast_forward.1} parent=83 // pred_check
        %p635 = pneg %p152
      $region98: #{efficient_trajcast_forward.1} parent=83 // pred_check_branch
        %637 = sbr.rel (%p635) target = $region100
      $region99: #{efficient_trajcast_forward.1} parent=83 // pred_region
        %p638 = scmp.lt.s32.totalorder %s49, 1
        %s639 = scalar_select %p638, %s49, 1
        %s640 = smul.addr %s639, 2
        %s641 = smul.addr %s640, 8
        %s642 = scalar_lea.vmem %s5, %s641
      $region100: #{efficient_trajcast_forward.1} parent=83 // pred_fallthru
        _
    $region84: #{efficient_trajcast_forward.1} parent=5 // pred_fallthru
      _
    %p643 = scmp.le.s32.totalorder 1, %s42
    %p644 = scmp.lt.s32.totalorder %s42, 5
    %p645 = pnand %p643, %p644
    %p646 = pneg %p645
    // Predicated region
    $region101: #{efficient_trajcast_forward.1} parent=5 // pred_check
      _
    $region102: #{efficient_trajcast_forward.1} parent=5 // pred_check_branch
      %648 = sbr.rel (%p645) target = $region104
    $region103: #{efficient_trajcast_forward.1} parent=5 // pred_region
      %s649 = ssub.s32 %s42, 1
      %p650 = scmp.lt.s32.totalorder %s51, 1
      %s651 = scalar_select %p650, %s51, 1
      %s652 = smul.addr %s651, 2
      %s653 = smul.addr %s652, 8
      %s654 = scalar_lea.vmem %s2, %s653
      %p655 = pneg %p80
      %p656 = pneg %p77
      %p657 = scmp.lt.s32.totalorder %s51, 1
      %s658 = scalar_select %p657, %s51, 1
      %s659 = smul.addr %s658, 2
      %s660 = smul.addr %s659, 8
      %s661 = scalar_lea.vmem %s3, %s660
      %p662 = pneg %p106
      %p663 = pneg %p103
      %p664 = scmp.lt.s32.totalorder %s51, 1
      %s665 = scalar_select %p664, %s51, 1
      %s666 = smul.addr %s665, 2
      %s667 = smul.addr %s666, 8
      %s668 = scalar_lea.vmem %s4, %s667
      %p669 = pneg %p132
      %p670 = pneg %p129
      %p671 = scmp.lt.s32.totalorder %s51, 1
      %s672 = scalar_select %p671, %s51, 1
      %s673 = smul.addr %s672, 2
      %s674 = smul.addr %s673, 8
      %s675 = scalar_lea.vmem %s5, %s674
      %p676 = pneg %p158
      %p677 = pneg %p155
      %p678 = pneg %p179
      %p679 = pneg %p176
      %p680 = pneg %p200
      %p681 = pneg %p197
      %p682 = pneg %p221
      %p683 = pneg %p218
      %p684 = pneg %p242
      %p685 = pneg %p239
      %p686 = pneg %p263
      %p687 = pneg %p260
      %p688 = pneg %p284
      %p689 = pneg %p281
      %p690 = pneg %p305
      %p691 = pneg %p302
      %p692 = pneg %p326
      %p693 = pneg %p323
      %p694 = pneg %p347
      %p695 = pneg %p344
      %p696 = pneg %p368
      %p697 = pneg %p365
      %p698 = pneg %p389
      %p699 = pneg %p386
      %p700 = pneg %p410
      %p701 = pneg %p407
      %p702 = pneg %p431
      %p703 = pneg %p428
      %p704 = pneg %p452
      %p705 = pneg %p449
      %p706 = pneg %p473
      %p707 = pneg %p470
      %p708 = pneg %p494
      %p709 = pneg %p491
      %p710 = pneg %p515
      %p711 = pneg %p512
      %p712 = pneg %p541
      %p713 = pneg %p538
      %p714 = scmp.lt.s32.totalorder %s51, 1
      %s715 = scalar_select %p714, %s51, 1
      %s716 = smul.addr %s715, 2
      %s717 = smul.addr %s716, 8
      %s718 = scalar_lea.vmem %s23, %s717
      %p719 = scmp.lt.s32.totalorder %s51, 1
      %s720 = scalar_select %p719, %s51, 1
      %s721 = smul.addr %s720, 2
      %s722 = smul.addr %s721, 8
      %s723 = scalar_lea.vmem %s2, %s722
      %p724 = scmp.lt.s32.totalorder %s51, 1
      %s725 = scalar_select %p724, %s51, 1
      %s726 = smul.addr %s725, 2
      %s727 = smul.addr %s726, 8
      %s728 = scalar_lea.vmem %s3, %s727
      %p729 = scmp.lt.s32.totalorder %s51, 1
      %s730 = scalar_select %p729, %s51, 1
      %s731 = smul.addr %s730, 2
      %s732 = smul.addr %s731, 8
      %s733 = scalar_lea.vmem %s4, %s732
      %p734 = scmp.lt.s32.totalorder %s51, 1
      %s735 = scalar_select %p734, %s51, 1
      %s736 = smul.addr %s735, 2
      %s737 = smul.addr %s736, 8
      %s738 = scalar_lea.vmem %s5, %s737
      %p739 = scmp.lt.s32.totalorder %s51, 1
      %s740 = scalar_select %p739, %s51, 1
      %s741 = smul.addr %s740, 2
      %s742 = smul.addr %s741, 8
      %s743 = scalar_lea.vmem %s23, %s742
      %s744 = smul.u32 %s52, 16
      %p745 = scmp.eq.s32.totalorder %s52, 0
      // Predicated region
      $region105: #{efficient_trajcast_forward.1} parent=103 // pred_check
        %p746 = pneg %p745
      $region106: #{efficient_trajcast_forward.1} parent=103 // pred_check_branch
        %748 = sbr.rel (%p746) target = $region108
      $region107: #{efficient_trajcast_forward.1} parent=103 // pred_region
        %vm749 = vcmask 64512
        %750 = vst.msk [vmem:[#allocation3] sm:$0xff] %vm749, 0.0
        %751 = vst.msk [vmem:[#allocation3 + $0x8] sm:$0xff] %vm749, 0.0
        %752 = vst.msk [vmem:[#allocation3 + $0x10] sm:$0xff] %vm749, 0.0
        %753 = vst.msk [vmem:[#allocation3 + $0x18] sm:$0xff] %vm749, 0.0
        %754 = vst.msk [vmem:[#allocation3 + $0x20] sm:$0xff] %vm749, 0.0
        %755 = vst.msk [vmem:[#allocation3 + $0x28] sm:$0xff] %vm749, 0.0
        %756 = vst.msk [vmem:[#allocation3 + $0x30] sm:$0xff] %vm749, 0.0
        %757 = vst.msk [vmem:[#allocation3 + $0x38] sm:$0xff] %vm749, 0.0
        %v758 = vld [vmem:[%s728] sm:$0xff]
        %v759 = vld [vmem:[%s728 + $0x8] sm:$0xff]
        %v760 = vld [vmem:[%s733] sm:$0xff]
        %v761 = vld [vmem:[%s733 + $0x8] sm:$0xff]
        %v762 = vmul.f32 %v758, %v758
        %v763 = vmul.f32 %v759, %v759
        %vm764 = vcmask 23552
        %v765 = vsel %vm764, %v762, 0.0
        %766 = vadd.xlane.f32.xlu0 %v765
        %v767 = vpop.xlane.xlu0 %766
        %v768 = vsel %vm764, %v763, 0.0
        %769 = vadd.xlane.f32.xlu0 %v768
        %v770 = vpop.xlane.xlu0 %769
        %v771 = vadd.f32 %v767, 1e-09
        %v772 = vadd.f32 %v770, 1e-09
        %v773 = vrsqrt.pop %v771
        %v774 = vmul.f32 %v773, %v771
        %v775 = vmul.f32 %v774, %v773
        %v776 = vmul.f32 0.5, %v775
        %v777 = vsub.f32 1.5, %v776
        %v778 = vmul.f32 %v773, %v777
        %vm779 = vweird.f32 %v771
        %vm780 = vweird.f32 %v773
        %vm781 = vmor %vm779, %vm780
        %v782 = vsel %vm781, %v773, %v778
        %v783 = vrsqrt.pop %v772
        %v784 = vmul.f32 %v783, %v772
        %v785 = vmul.f32 %v784, %v783
        %v786 = vmul.f32 0.5, %v785
        %v787 = vsub.f32 1.5, %v786
        %v788 = vmul.f32 %v783, %v787
        %vm789 = vweird.f32 %v772
        %vm790 = vweird.f32 %v783
        %vm791 = vmor %vm789, %vm790
        %v792 = vsel %vm791, %v783, %v788
        %v793 = vmul.f32 %v771, %v782
        %v794 = vmul.f32 %v772, %v792
        %v795 = vld [vmem:[%s7] sm:$0x1]
        %v797 = vperm.slane %v795, 0
        %v799 = vsub.f32 %v793, %v797
        %v800 = vsub.f32 %v794, %v797
        %v801 = vmul.f32 %v799, 7.0
        %v802 = vmul.f32 %v800, 7.0
        %v803 = vmul.f32 %v801, -0.5
        %v804 = vmul.f32 %v802, -0.5
        %v805 = vmul.f32 %v803, %v801
        %v806 = vmul.f32 %v804, %v802
        %v807 = vmul.f32 %v805, 1.442695
        %v808 = vpow.pop %v807
        %v809 = vmul.f32 %v806, 1.442695
        %v810 = vpow.pop %v809
        %v811 = vld [vmem:[%s8] sm:$0xff]
        %v813 = vsel %vm749, %v808, 0
        %v816 = vsel %vm749, %v810, 0
        %818 = vmatpush.msra.mxu0 0.0
        %819 = vmatpush.msra.mxu0 0.0
        %820 = vmatpush.msra.mxu0 0.0
        %821 = vmatpush.msra.mxu0 0.0
        %822 = vmatpush.msra.mxu0 0.0
        %823 = vmatpush.msra.mxu0 0.0
        %824 = vmatpush.msra.mxu0 0.0
        %825 = vmatpush.msra.mxu0 0.0
        %826 = vmatpush.msra.mxu0 0.0
        %827 = vmatpush.msra.mxu0 0.0
        %828 = vmatpush.msra.mxu0 0.0
        %829 = vmatpush.msra.mxu0 0.0
        %830 = vmatpush.msra.mxu0 0.0
        %831 = vmatpush.msra.mxu0 0.0
        %832 = vmatpush.msra.mxu0 0.0
        %833 = vmatpush.msra.mxu0 %v811
        %834 = vmatmul.f32.gmra.mxu0 %v813
        %v835 = vpop.f32.mrf.mxu0
        %v836 = vadd.f32 0.0, %v835
        %837 = vmatmul.f32.gmra.mxu0 %v816
        %v838 = vpop.f32.mrf.mxu0
        %v839 = vadd.f32 0.0, %v838
        %840 = vdwg.mxu0
        %v841 = vld [vmem:[%s738] sm:$0xff]
        %v842 = vld [vmem:[%s738 + $0x8] sm:$0xff]
        %v843 = vmul.f32 %v841, %v836
        %v844 = vmul.f32 %v842, %v839
        %v845 = vld [vmem:[%s9] sm:$0xff]
        %v846 = vld [vmem:[%s9 + $0x8] sm:$0xff]
        %v847 = vld [vmem:[%s9 + $0x10] sm:$0xff]
        %v848 = vld [vmem:[%s9 + $0x18] sm:$0xff]
        %vm849 = vcmask 261120
        %v851 = vsel %vm849, %v843, 0
        %v854 = vsel %vm849, %v844, 0
        %856 = vmatpush.msra.mxu0 0.0
        %857 = vmatpush.msra.mxu0 0.0
        %858 = vmatpush.msra.mxu0 0.0
        %859 = vmatpush.msra.mxu0 0.0
        %860 = vmatpush.msra.mxu0 0.0
        %861 = vmatpush.msra.mxu0 0.0
        %862 = vmatpush.msra.mxu0 0.0
        %863 = vmatpush.msra.mxu0 0.0
        %864 = vmatpush.msra.mxu0 0.0
        %865 = vmatpush.msra.mxu0 0.0
        %866 = vmatpush.msra.mxu0 0.0
        %867 = vmatpush.msra.mxu0 0.0
        %868 = vmatpush.msra.mxu0 %v848
        %869 = vmatpush.msra.mxu0 %v847
        %870 = vmatpush.msra.mxu0 %v846
        %871 = vmatpush.msra.mxu0 %v845
        %872 = vmatmul.f32.gmra.mxu0 %v851
        %v873 = vpop.f32.mrf.mxu0
        %v874 = vadd.f32 0.0, %v873
        %875 = vmatmul.f32.gmra.mxu0 %v854
        %v876 = vpop.f32.mrf.mxu0
        %v877 = vadd.f32 0.0, %v876
        %878 = vdwg.mxu0
        %v879 = vld [vmem:[%s10] sm:$0xf]
        %v880 = vld [vmem:[%s11] sm:$0xff]
        %v882 = vsel %vm749, %v874, 0
        %v885 = vsel %vm749, %v877, 0
        %887 = vmatpush.msra.mxu0 0.0
        %888 = vmatpush.msra.mxu0 0.0
        %889 = vmatpush.msra.mxu0 0.0
        %890 = vmatpush.msra.mxu0 0.0
        %891 = vmatpush.msra.mxu0 0.0
        %892 = vmatpush.msra.mxu0 0.0
        %893 = vmatpush.msra.mxu0 0.0
        %894 = vmatpush.msra.mxu0 0.0
        %895 = vmatpush.msra.mxu0 0.0
        %896 = vmatpush.msra.mxu0 0.0
        %897 = vmatpush.msra.mxu0 0.0
        %898 = vmatpush.msra.mxu0 0.0
        %899 = vmatpush.msra.mxu0 0.0
        %900 = vmatpush.msra.mxu0 0.0
        %901 = vmatpush.msra.mxu0 0.0
        %902 = vmatpush.msra.mxu0 %v880
        %903 = vmatmul.f32.gmra.mxu0 %v882
        %v904 = vpop.f32.mrf.mxu0
        %v905 = vadd.f32 0.0, %v904
        %906 = vmatmul.f32.gmra.mxu0 %v885
        %v907 = vpop.f32.mrf.mxu0
        %v908 = vadd.f32 0.0, %v907
        %909 = vdwg.mxu0
        %vm910 = vcmask 31744
        %v912 = vsel %vm910, %v760, 0
        %v915 = vsel %vm910, %v761, 0
        %vm917 = vcmask 1043456
        %v919 = vsel %vm917, %v879, 0
        %921 = vmatpush.msra.mxu0 0.0
        %922 = vmatpush.msra.mxu0 0.0
        %923 = vmatpush.msra.mxu0 0.0
        %924 = vmatpush.msra.mxu0 0.0
        %925 = vmatpush.msra.mxu0 0.0
        %926 = vmatpush.msra.mxu0 0.0
        %927 = vmatpush.msra.mxu0 0.0
        %928 = vmatpush.msra.mxu0 0.0
        %929 = vmatpush.msra.mxu0 0.0
        %930 = vmatpush.msra.mxu0 0.0
        %931 = vmatpush.msra.mxu0 0.0
        %932 = vmatpush.msra.mxu0 0.0
        %933 = vmatpush.msra.mxu0 0.0
        %934 = vmatpush.msra.mxu0 0.0
        %935 = vmatpush.msra.mxu0 0.0
        %936 = vmatpush.msra.mxu0 %v919
        %937 = vmatmul.f32.gmra.mxu0 %v912
        %v938 = vpop.f32.mrf.mxu0
        %v939 = vadd.f32 %v905, %v938
        %940 = vmatmul.f32.gmra.mxu0 %v915
        %v941 = vpop.f32.mrf.mxu0
        %v942 = vadd.f32 %v908, %v941
        %943 = vdwg.mxu0
        %v944 = vmul.f32 %v939, 0.28867513
        %v945 = vmul.f32 %v942, 0.28867513
        %v946 = vmul.f32 %v758, 1.7320508
        %v947 = vmul.f32 %v759, 1.7320508
        %v948 = vmul.f32 %v946, %v782
        %v949 = vmul.f32 %v947, %v792
        %v950 = vld [vmem:[%s12] sm:$0x1]
        %951 = vst.msk [vmem:[#allocation2] sm:$0xff] %vm749, %v944
        %952 = vst.msk [vmem:[#allocation2 + $0x8] sm:$0xff] %vm749, %v945
        %954 = vset.pattern.permute.xlu0 0
        %955 = vperm.xlu0 %954, %v948
        %v956 = vpop.permute.xlu0 %955
        %959 = vset.pattern.permute.xlu0 0
        %960 = vperm.xlu0 %959, %v949
        %v961 = vpop.permute.xlu0 %960
        %v964 = vperm.slane %v950, 0
        %v966 = vmul.f32 %v956, %v964
        %v967 = vmul.f32 %v961, %v964
        %968 = vst.msk [vmem:[#allocation2 + $0x10] sm:$0xff] %vm749, %v966
        %969 = vst.msk [vmem:[#allocation2 + $0x18] sm:$0xff] %vm749, %v967
        %970 = vset.pattern.permute.xlu0 1
        %971 = vperm.xlu0 %970, %v948
        %v972 = vpop.permute.xlu0 %971
        %974 = vset.pattern.permute.xlu0 1
        %975 = vperm.xlu0 %974, %v949
        %v976 = vpop.permute.xlu0 %975
        %v978 = vmul.f32 %v972, %v964
        %v979 = vmul.f32 %v976, %v964
        %980 = vst.msk [vmem:[#allocation2 + $0x20] sm:$0xff] %vm749, %v978
        %981 = vst.msk [vmem:[#allocation2 + $0x28] sm:$0xff] %vm749, %v979
        %982 = vset.pattern.permute.xlu0 2
        %983 = vperm.xlu0 %982, %v948
        %v984 = vpop.permute.xlu0 %983
        %986 = vset.pattern.permute.xlu0 2
        %987 = vperm.xlu0 %986, %v949
        %v988 = vpop.permute.xlu0 %987
        %v990 = vmul.f32 %v984, %v964
        %v991 = vmul.f32 %v988, %v964
        %992 = vst.msk [vmem:[#allocation2 + $0x30] sm:$0xff] %vm749, %v990
        %993 = vst.msk [vmem:[#allocation2 + $0x38] sm:$0xff] %vm749, %v991
      $region108: #{efficient_trajcast_forward.1} parent=103 // pred_fallthru
        _
      %s994 = sshra.s32 %s744, 7
      %s995 = sand.u32 %s744, 127
      %s996 = sadd.s32 %s994, %s51
      %s997 = smul.u32 %s996, 128
      %s998 = sshra.s32 %s744, 7
      %s999 = sand.u32 %s744, 127
      %s1000 = sadd.s32 %s997, %s999
      %s1001 = sld [smem:[#allocation8 + %s1000]]
      %s1002 = sld [smem:[#allocation9 + %s1000]]
      %s1003 = scalar_lea.vmem %s723, %s1002
      %v1004 = vld [vmem:[%s1003] sm:$0x1]
      %s1005 = scalar_lea.vmem %s723, %s1001
      %v1006 = vld [vmem:[%s1005] sm:$0x1]
      %v1007 = vsub.f32 %v1004, %v1006
      %vm1008 = vcmask 16384
      %1009 = vst.msk [vmem:[#allocation6] sm:$0x1] %vm1008, %v1007
      %s1010 = scalar_lea.vmem [#allocation2], %s1001
      %v1011 = vld [vmem:[%s1010] sm:$0x1]
      %vm1012 = vcmask 57344
      %1013 = vst.msk [vmem:[#allocation4] sm:$0x1] %vm1012, %v1011
      %s1014 = sadd.s32 %s1001, 16
      %s1015 = scalar_lea.vmem [#allocation2], %s1014
      %v1016 = vld [vmem:[%s1015] sm:$0x1]
      %1017 = vst.msk [vmem:[#allocation4 + $0x10] sm:$0x1] %vm1012, %v1016
      %s1018 = sadd.s32 %s1001, 32
      %s1019 = scalar_lea.vmem [#allocation2], %s1018
      %v1020 = vld [vmem:[%s1019] sm:$0x1]
      %1021 = vst.msk [vmem:[#allocation4 + $0x20] sm:$0x1] %vm1012, %v1020
      %s1022 = sadd.s32 %s1001, 48
      %s1023 = scalar_lea.vmem [#allocation2], %s1022
      %v1024 = vld [vmem:[%s1023] sm:$0x1]
      %1025 = vst.msk [vmem:[#allocation4 + $0x30] sm:$0x1] %vm1012, %v1024
      %s1026 = sadd.s32 %s744, 1
      %s1027 = sshra.s32 %s1026, 7
      %s1028 = sand.u32 %s1026, 127
      %s1029 = sadd.s32 %s1027, %s51
      %s1030 = smul.u32 %s1029, 128
      %s1031 = sshra.s32 %s1026, 7
      %s1032 = sand.u32 %s1026, 127
      %s1033 = sadd.s32 %s1030, %s1032
      %s1034 = sld [smem:[#allocation8 + %s1033]]
      %s1035 = sld [smem:[#allocation9 + %s1033]]
      %s1036 = scalar_lea.vmem %s723, %s1035
      %v1037 = vld [vmem:[%s1036] sm:$0x1]
      %s1038 = scalar_lea.vmem %s723, %s1034
      %v1039 = vld [vmem:[%s1038] sm:$0x1]
      %v1040 = vsub.f32 %v1037, %v1039
      %1041 = vst.msk [vmem:[#allocation6 + $0x1] sm:$0x1] %vm1008, %v1040
      %s1042 = scalar_lea.vmem [#allocation2], %s1034
      %v1043 = vld [vmem:[%s1042] sm:$0x1]
      %1044 = vst.msk [vmem:[#allocation4 + $0x1] sm:$0x1] %vm1012, %v1043
      %s1045 = sadd.s32 %s1034, 16
      %s1046 = scalar_lea.vmem [#allocation2], %s1045
      %v1047 = vld [vmem:[%s1046] sm:$0x1]
      %1048 = vst.msk [vmem:[#allocation4 + $0x11] sm:$0x1] %vm1012, %v1047
      %s1049 = sadd.s32 %s1034, 32
      %s1050 = scalar_lea.vmem [#allocation2], %s1049
      %v1051 = vld [vmem:[%s1050] sm:$0x1]
      %1052 = vst.msk [vmem:[#allocation4 + $0x21] sm:$0x1] %vm1012, %v1051
      %s1053 = sadd.s32 %s1034, 48
      %s1054 = scalar_lea.vmem [#allocation2], %s1053
      %v1055 = vld [vmem:[%s1054] sm:$0x1]
      %1056 = vst.msk [vmem:[#allocation4 + $0x31] sm:$0x1] %vm1012, %v1055
      %s1057 = sadd.s32 %s744, 2
      %s1058 = sshra.s32 %s1057, 7
      %s1059 = sand.u32 %s1057, 127
      %s1060 = sadd.s32 %s1058, %s51
      %s1061 = smul.u32 %s1060, 128
      %s1062 = sshra.s32 %s1057, 7
      %s1063 = sand.u32 %s1057, 127
      %s1064 = sadd.s32 %s1061, %s1063
      %s1065 = sld [smem:[#allocation8 + %s1064]]
      %s1066 = sld [smem:[#allocation9 + %s1064]]
      %s1067 = scalar_lea.vmem %s723, %s1066
      %v1068 = vld [vmem:[%s1067] sm:$0x1]
      %s1069 = scalar_lea.vmem %s723, %s1065
      %v1070 = vld [vmem:[%s1069] sm:$0x1]
      %v1071 = vsub.f32 %v1068, %v1070
      %1072 = vst.msk [vmem:[#allocation6 + $0x2] sm:$0x1] %vm1008, %v1071
      %s1073 = scalar_lea.vmem [#allocation2], %s1065
      %v1074 = vld [vmem:[%s1073] sm:$0x1]
      %1075 = vst.msk [vmem:[#allocation4 + $0x2] sm:$0x1] %vm1012, %v1074
      %s1076 = sadd.s32 %s1065, 16
      %s1077 = scalar_lea.vmem [#allocation2], %s1076
      %v1078 = vld [vmem:[%s1077] sm:$0x1]
      %1079 = vst.msk [vmem:[#allocation4 + $0x12] sm:$0x1] %vm1012, %v1078
      %s1080 = sadd.s32 %s1065, 32
      %s1081 = scalar_lea.vmem [#allocation2], %s1080
      %v1082 = vld [vmem:[%s1081] sm:$0x1]
      %1083 = vst.msk [vmem:[#allocation4 + $0x22] sm:$0x1] %vm1012, %v1082
      %s1084 = sadd.s32 %s1065, 48
      %s1085 = scalar_lea.vmem [#allocation2], %s1084
      %v1086 = vld [vmem:[%s1085] sm:$0x1]
      %1087 = vst.msk [vmem:[#allocation4 + $0x32] sm:$0x1] %vm1012, %v1086
      %s1088 = sadd.s32 %s744, 3
      %s1089 = sshra.s32 %s1088, 7
      %s1090 = sand.u32 %s1088, 127
      %s1091 = sadd.s32 %s1089, %s51
      %s1092 = smul.u32 %s1091, 128
      %s1093 = sshra.s32 %s1088, 7
      %s1094 = sand.u32 %s1088, 127
      %s1095 = sadd.s32 %s1092, %s1094
      %s1096 = sld [smem:[#allocation8 + %s1095]]
      %s1097 = sld [smem:[#allocation9 + %s1095]]
      %s1098 = scalar_lea.vmem %s723, %s1097
      %v1099 = vld [vmem:[%s1098] sm:$0x1]
      %s1100 = scalar_lea.vmem %s723, %s1096
      %v1101 = vld [vmem:[%s1100] sm:$0x1]
      %v1102 = vsub.f32 %v1099, %v1101
      %1103 = vst.msk [vmem:[#allocation6 + $0x3] sm:$0x1] %vm1008, %v1102
      %s1104 = scalar_lea.vmem [#allocation2], %s1096
      %v1105 = vld [vmem:[%s1104] sm:$0x1]
      %1106 = vst.msk [vmem:[#allocation4 + $0x3] sm:$0x1] %vm1012, %v1105
      %s1107 = sadd.s32 %s1096, 16
      %s1108 = scalar_lea.vmem [#allocation2], %s1107
      %v1109 = vld [vmem:[%s1108] sm:$0x1]
      %1110 = vst.msk [vmem:[#allocation4 + $0x13] sm:$0x1] %vm1012, %v1109
      %s1111 = sadd.s32 %s1096, 32
      %s1112 = scalar_lea.vmem [#allocation2], %s1111
      %v1113 = vld [vmem:[%s1112] sm:$0x1]
      %1114 = vst.msk [vmem:[#allocation4 + $0x23] sm:$0x1] %vm1012, %v1113
      %s1115 = sadd.s32 %s1096, 48
      %s1116 = scalar_lea.vmem [#allocation2], %s1115
      %v1117 = vld [vmem:[%s1116] sm:$0x1]
      %1118 = vst.msk [vmem:[#allocation4 + $0x33] sm:$0x1] %vm1012, %v1117
      %s1119 = sadd.s32 %s744, 4
      %s1120 = sshra.s32 %s1119, 7
      %s1121 = sand.u32 %s1119, 127
      %s1122 = sadd.s32 %s1120, %s51
      %s1123 = smul.u32 %s1122, 128
      %s1124 = sshra.s32 %s1119, 7
      %s1125 = sand.u32 %s1119, 127
      %s1126 = sadd.s32 %s1123, %s1125
      %s1127 = sld [smem:[#allocation8 + %s1126]]
      %s1128 = sld [smem:[#allocation9 + %s1126]]
      %s1129 = scalar_lea.vmem %s723, %s1128
      %v1130 = vld [vmem:[%s1129] sm:$0x1]
      %s1131 = scalar_lea.vmem %s723, %s1127
      %v1132 = vld [vmem:[%s1131] sm:$0x1]
      %v1133 = vsub.f32 %v1130, %v1132
      %1134 = vst.msk [vmem:[#allocation6 + $0x4] sm:$0x1] %vm1008, %v1133
      %s1135 = scalar_lea.vmem [#allocation2], %s1127
      %v1136 = vld [vmem:[%s1135] sm:$0x1]
      %1137 = vst.msk [vmem:[#allocation4 + $0x4] sm:$0x1] %vm1012, %v1136
      %s1138 = sadd.s32 %s1127, 16
      %s1139 = scalar_lea.vmem [#allocation2], %s1138
      %v1140 = vld [vmem:[%s1139] sm:$0x1]
      %1141 = vst.msk [vmem:[#allocation4 + $0x14] sm:$0x1] %vm1012, %v1140
      %s1142 = sadd.s32 %s1127, 32
      %s1143 = scalar_lea.vmem [#allocation2], %s1142
      %v1144 = vld [vmem:[%s1143] sm:$0x1]
      %1145 = vst.msk [vmem:[#allocation4 + $0x24] sm:$0x1] %vm1012, %v1144
      %s1146 = sadd.s32 %s1127, 48
      %s1147 = scalar_lea.vmem [#allocation2], %s1146
      %v1148 = vld [vmem:[%s1147] sm:$0x1]
      %1149 = vst.msk [vmem:[#allocation4 + $0x34] sm:$0x1] %vm1012, %v1148
      %s1150 = sadd.s32 %s744, 5
      %s1151 = sshra.s32 %s1150, 7
      %s1152 = sand.u32 %s1150, 127
      %s1153 = sadd.s32 %s1151, %s51
      %s1154 = smul.u32 %s1153, 128
      %s1155 = sshra.s32 %s1150, 7
      %s1156 = sand.u32 %s1150, 127
      %s1157 = sadd.s32 %s1154, %s1156
      %s1158 = sld [smem:[#allocation8 + %s1157]]
      %s1159 = sld [smem:[#allocation9 + %s1157]]
      %s1160 = scalar_lea.vmem %s723, %s1159
      %v1161 = vld [vmem:[%s1160] sm:$0x1]
      %s1162 = scalar_lea.vmem %s723, %s1158
      %v1163 = vld [vmem:[%s1162] sm:$0x1]
      %v1164 = vsub.f32 %v1161, %v1163
      %1165 = vst.msk [vmem:[#allocation6 + $0x5] sm:$0x1] %vm1008, %v1164
      %s1166 = scalar_lea.vmem [#allocation2], %s1158
      %v1167 = vld [vmem:[%s1166] sm:$0x1]
      %1168 = vst.msk [vmem:[#allocation4 + $0x5] sm:$0x1] %vm1012, %v1167
      %s1169 = sadd.s32 %s1158, 16
      %s1170 = scalar_lea.vmem [#allocation2], %s1169
      %v1171 = vld [vmem:[%s1170] sm:$0x1]
      %1172 = vst.msk [vmem:[#allocation4 + $0x15] sm:$0x1] %vm1012, %v1171
      %s1173 = sadd.s32 %s1158, 32
      %s1174 = scalar_lea.vmem [#allocation2], %s1173
      %v1175 = vld [vmem:[%s1174] sm:$0x1]
      %1176 = vst.msk [vmem:[#allocation4 + $0x25] sm:$0x1] %vm1012, %v1175
      %s1177 = sadd.s32 %s1158, 48
      %s1178 = scalar_lea.vmem [#allocation2], %s1177
      %v1179 = vld [vmem:[%s1178] sm:$0x1]
      %1180 = vst.msk [vmem:[#allocation4 + $0x35] sm:$0x1] %vm1012, %v1179
      %s1181 = sadd.s32 %s744, 6
      %s1182 = sshra.s32 %s1181, 7
      %s1183 = sand.u32 %s1181, 127
      %s1184 = sadd.s32 %s1182, %s51
      %s1185 = smul.u32 %s1184, 128
      %s1186 = sshra.s32 %s1181, 7
      %s1187 = sand.u32 %s1181, 127
      %s1188 = sadd.s32 %s1185, %s1187
      %s1189 = sld [smem:[#allocation8 + %s1188]]
      %s1190 = sld [smem:[#allocation9 + %s1188]]
      %s1191 = scalar_lea.vmem %s723, %s1190
      %v1192 = vld [vmem:[%s1191] sm:$0x1]
      %s1193 = scalar_lea.vmem %s723, %s1189
      %v1194 = vld [vmem:[%s1193] sm:$0x1]
      %v1195 = vsub.f32 %v1192, %v1194
      %1196 = vst.msk [vmem:[#allocation6 + $0x6] sm:$0x1] %vm1008, %v1195
      %s1197 = scalar_lea.vmem [#allocation2], %s1189
      %v1198 = vld [vmem:[%s1197] sm:$0x1]
      %1199 = vst.msk [vmem:[#allocation4 + $0x6] sm:$0x1] %vm1012, %v1198
      %s1200 = sadd.s32 %s1189, 16
      %s1201 = scalar_lea.vmem [#allocation2], %s1200
      %v1202 = vld [vmem:[%s1201] sm:$0x1]
      %1203 = vst.msk [vmem:[#allocation4 + $0x16] sm:$0x1] %vm1012, %v1202
      %s1204 = sadd.s32 %s1189, 32
      %s1205 = scalar_lea.vmem [#allocation2], %s1204
      %v1206 = vld [vmem:[%s1205] sm:$0x1]
      %1207 = vst.msk [vmem:[#allocation4 + $0x26] sm:$0x1] %vm1012, %v1206
      %s1208 = sadd.s32 %s1189, 48
      %s1209 = scalar_lea.vmem [#allocation2], %s1208
      %v1210 = vld [vmem:[%s1209] sm:$0x1]
      %1211 = vst.msk [vmem:[#allocation4 + $0x36] sm:$0x1] %vm1012, %v1210
      %s1212 = sadd.s32 %s744, 7
      %s1213 = sshra.s32 %s1212, 7
      %s1214 = sand.u32 %s1212, 127
      %s1215 = sadd.s32 %s1213, %s51
      %s1216 = smul.u32 %s1215, 128
      %s1217 = sshra.s32 %s1212, 7
      %s1218 = sand.u32 %s1212, 127
      %s1219 = sadd.s32 %s1216, %s1218
      %s1220 = sld [smem:[#allocation8 + %s1219]]
      %s1221 = sld [smem:[#allocation9 + %s1219]]
      %s1222 = scalar_lea.vmem %s723, %s1221
      %v1223 = vld [vmem:[%s1222] sm:$0x1]
      %s1224 = scalar_lea.vmem %s723, %s1220
      %v1225 = vld [vmem:[%s1224] sm:$0x1]
      %v1226 = vsub.f32 %v1223, %v1225
      %1227 = vst.msk [vmem:[#allocation6 + $0x7] sm:$0x1] %vm1008, %v1226
      %s1228 = scalar_lea.vmem [#allocation2], %s1220
      %v1229 = vld [vmem:[%s1228] sm:$0x1]
      %1230 = vst.msk [vmem:[#allocation4 + $0x7] sm:$0x1] %vm1012, %v1229
      %s1231 = sadd.s32 %s1220, 16
      %s1232 = scalar_lea.vmem [#allocation2], %s1231
      %v1233 = vld [vmem:[%s1232] sm:$0x1]
      %1234 = vst.msk [vmem:[#allocation4 + $0x17] sm:$0x1] %vm1012, %v1233
      %s1235 = sadd.s32 %s1220, 32
      %s1236 = scalar_lea.vmem [#allocation2], %s1235
      %v1237 = vld [vmem:[%s1236] sm:$0x1]
      %1238 = vst.msk [vmem:[#allocation4 + $0x27] sm:$0x1] %vm1012, %v1237
      %s1239 = sadd.s32 %s1220, 48
      %s1240 = scalar_lea.vmem [#allocation2], %s1239
      %v1241 = vld [vmem:[%s1240] sm:$0x1]
      %1242 = vst.msk [vmem:[#allocation4 + $0x37] sm:$0x1] %vm1012, %v1241
      %s1243 = sadd.s32 %s744, 8
      %s1244 = sshra.s32 %s1243, 7
      %s1245 = sand.u32 %s1243, 127
      %s1246 = sadd.s32 %s1244, %s51
      %s1247 = smul.u32 %s1246, 128
      %s1248 = sshra.s32 %s1243, 7
      %s1249 = sand.u32 %s1243, 127
      %s1250 = sadd.s32 %s1247, %s1249
      %s1251 = sld [smem:[#allocation8 + %s1250]]
      %s1252 = sld [smem:[#allocation9 + %s1250]]
      %s1253 = scalar_lea.vmem %s723, %s1252
      %v1254 = vld [vmem:[%s1253] sm:$0x1]
      %s1255 = scalar_lea.vmem %s723, %s1251
      %v1256 = vld [vmem:[%s1255] sm:$0x1]
      %v1257 = vsub.f32 %v1254, %v1256
      %1258 = vst.msk [vmem:[#allocation6 + $0x8] sm:$0x1] %vm1008, %v1257
      %s1259 = scalar_lea.vmem [#allocation2], %s1251
      %v1260 = vld [vmem:[%s1259] sm:$0x1]
      %1261 = vst.msk [vmem:[#allocation4 + $0x8] sm:$0x1] %vm1012, %v1260
      %s1262 = sadd.s32 %s1251, 16
      %s1263 = scalar_lea.vmem [#allocation2], %s1262
      %v1264 = vld [vmem:[%s1263] sm:$0x1]
      %1265 = vst.msk [vmem:[#allocation4 + $0x18] sm:$0x1] %vm1012, %v1264
      %s1266 = sadd.s32 %s1251, 32
      %s1267 = scalar_lea.vmem [#allocation2], %s1266
      %v1268 = vld [vmem:[%s1267] sm:$0x1]
      %1269 = vst.msk [vmem:[#allocation4 + $0x28] sm:$0x1] %vm1012, %v1268
      %s1270 = sadd.s32 %s1251, 48
      %s1271 = scalar_lea.vmem [#allocation2], %s1270
      %v1272 = vld [vmem:[%s1271] sm:$0x1]
      %1273 = vst.msk [vmem:[#allocation4 + $0x38] sm:$0x1] %vm1012, %v1272
      %s1274 = sadd.s32 %s744, 9
      %s1275 = sshra.s32 %s1274, 7
      %s1276 = sand.u32 %s1274, 127
      %s1277 = sadd.s32 %s1275, %s51
      %s1278 = smul.u32 %s1277, 128
      %s1279 = sshra.s32 %s1274, 7
      %s1280 = sand.u32 %s1274, 127
      %s1281 = sadd.s32 %s1278, %s1280
      %s1282 = sld [smem:[#allocation8 + %s1281]]
      %s1283 = sld [smem:[#allocation9 + %s1281]]
      %s1284 = scalar_lea.vmem %s723, %s1283
      %v1285 = vld [vmem:[%s1284] sm:$0x1]
      %s1286 = scalar_lea.vmem %s723, %s1282
      %v1287 = vld [vmem:[%s1286] sm:$0x1]
      %v1288 = vsub.f32 %v1285, %v1287
      %1289 = vst.msk [vmem:[#allocation6 + $0x9] sm:$0x1] %vm1008, %v1288
      %s1290 = scalar_lea.vmem [#allocation2], %s1282
      %v1291 = vld [vmem:[%s1290] sm:$0x1]
      %1292 = vst.msk [vmem:[#allocation4 + $0x9] sm:$0x1] %vm1012, %v1291
      %s1293 = sadd.s32 %s1282, 16
      %s1294 = scalar_lea.vmem [#allocation2], %s1293
      %v1295 = vld [vmem:[%s1294] sm:$0x1]
      %1296 = vst.msk [vmem:[#allocation4 + $0x19] sm:$0x1] %vm1012, %v1295
      %s1297 = sadd.s32 %s1282, 32
      %s1298 = scalar_lea.vmem [#allocation2], %s1297
      %v1299 = vld [vmem:[%s1298] sm:$0x1]
      %1300 = vst.msk [vmem:[#allocation4 + $0x29] sm:$0x1] %vm1012, %v1299
      %s1301 = sadd.s32 %s1282, 48
      %s1302 = scalar_lea.vmem [#allocation2], %s1301
      %v1303 = vld [vmem:[%s1302] sm:$0x1]
      %1304 = vst.msk [vmem:[#allocation4 + $0x39] sm:$0x1] %vm1012, %v1303
      %s1305 = sadd.s32 %s744, 10
      %s1306 = sshra.s32 %s1305, 7
      %s1307 = sand.u32 %s1305, 127
      %s1308 = sadd.s32 %s1306, %s51
      %s1309 = smul.u32 %s1308, 128
      %s1310 = sshra.s32 %s1305, 7
      %s1311 = sand.u32 %s1305, 127
      %s1312 = sadd.s32 %s1309, %s1311
      %s1313 = sld [smem:[#allocation8 + %s1312]]
      %s1314 = sld [smem:[#allocation9 + %s1312]]
      %s1315 = scalar_lea.vmem %s723, %s1314
      %v1316 = vld [vmem:[%s1315] sm:$0x1]
      %s1317 = scalar_lea.vmem %s723, %s1313
      %v1318 = vld [vmem:[%s1317] sm:$0x1]
      %v1319 = vsub.f32 %v1316, %v1318
      %1320 = vst.msk [vmem:[#allocation6 + $0xa] sm:$0x1] %vm1008, %v1319
      %s1321 = scalar_lea.vmem [#allocation2], %s1313
      %v1322 = vld [vmem:[%s1321] sm:$0x1]
      %1323 = vst.msk [vmem:[#allocation4 + $0xa] sm:$0x1] %vm1012, %v1322
      %s1324 = sadd.s32 %s1313, 16
      %s1325 = scalar_lea.vmem [#allocation2], %s1324
      %v1326 = vld [vmem:[%s1325] sm:$0x1]
      %1327 = vst.msk [vmem:[#allocation4 + $0x1a] sm:$0x1] %vm1012, %v1326
      %s1328 = sadd.s32 %s1313, 32
      %s1329 = scalar_lea.vmem [#allocation2], %s1328
      %v1330 = vld [vmem:[%s1329] sm:$0x1]
      %1331 = vst.msk [vmem:[#allocation4 + $0x2a] sm:$0x1] %vm1012, %v1330
      %s1332 = sadd.s32 %s1313, 48
      %s1333 = scalar_lea.vmem [#allocation2], %s1332
      %v1334 = vld [vmem:[%s1333] sm:$0x1]
      %1335 = vst.msk [vmem:[#allocation4 + $0x3a] sm:$0x1] %vm1012, %v1334
      %s1336 = sadd.s32 %s744, 11
      %s1337 = sshra.s32 %s1336, 7
      %s1338 = sand.u32 %s1336, 127
      %s1339 = sadd.s32 %s1337, %s51
      %s1340 = smul.u32 %s1339, 128
      %s1341 = sshra.s32 %s1336, 7
      %s1342 = sand.u32 %s1336, 127
      %s1343 = sadd.s32 %s1340, %s1342
      %s1344 = sld [smem:[#allocation8 + %s1343]]
      %s1345 = sld [smem:[#allocation9 + %s1343]]
      %s1346 = scalar_lea.vmem %s723, %s1345
      %v1347 = vld [vmem:[%s1346] sm:$0x1]
      %s1348 = scalar_lea.vmem %s723, %s1344
      %v1349 = vld [vmem:[%s1348] sm:$0x1]
      %v1350 = vsub.f32 %v1347, %v1349
      %1351 = vst.msk [vmem:[#allocation6 + $0xb] sm:$0x1] %vm1008, %v1350
      %s1352 = scalar_lea.vmem [#allocation2], %s1344
      %v1353 = vld [vmem:[%s1352] sm:$0x1]
      %1354 = vst.msk [vmem:[#allocation4 + $0xb] sm:$0x1] %vm1012, %v1353
      %s1355 = sadd.s32 %s1344, 16
      %s1356 = scalar_lea.vmem [#allocation2], %s1355
      %v1357 = vld [vmem:[%s1356] sm:$0x1]
      %1358 = vst.msk [vmem:[#allocation4 + $0x1b] sm:$0x1] %vm1012, %v1357
      %s1359 = sadd.s32 %s1344, 32
      %s1360 = scalar_lea.vmem [#allocation2], %s1359
      %v1361 = vld [vmem:[%s1360] sm:$0x1]
      %1362 = vst.msk [vmem:[#allocation4 + $0x2b] sm:$0x1] %vm1012, %v1361
      %s1363 = sadd.s32 %s1344, 48
      %s1364 = scalar_lea.vmem [#allocation2], %s1363
      %v1365 = vld [vmem:[%s1364] sm:$0x1]
      %1366 = vst.msk [vmem:[#allocation4 + $0x3b] sm:$0x1] %vm1012, %v1365
      %s1367 = sadd.s32 %s744, 12
      %s1368 = sshra.s32 %s1367, 7
      %s1369 = sand.u32 %s1367, 127
      %s1370 = sadd.s32 %s1368, %s51
      %s1371 = smul.u32 %s1370, 128
      %s1372 = sshra.s32 %s1367, 7
      %s1373 = sand.u32 %s1367, 127
      %s1374 = sadd.s32 %s1371, %s1373
      %s1375 = sld [smem:[#allocation8 + %s1374]]
      %s1376 = sld [smem:[#allocation9 + %s1374]]
      %s1377 = scalar_lea.vmem %s723, %s1376
      %v1378 = vld [vmem:[%s1377] sm:$0x1]
      %s1379 = scalar_lea.vmem %s723, %s1375
      %v1380 = vld [vmem:[%s1379] sm:$0x1]
      %v1381 = vsub.f32 %v1378, %v1380
      %1382 = vst.msk [vmem:[#allocation6 + $0xc] sm:$0x1] %vm1008, %v1381
      %s1383 = scalar_lea.vmem [#allocation2], %s1375
      %v1384 = vld [vmem:[%s1383] sm:$0x1]
      %1385 = vst.msk [vmem:[#allocation4 + $0xc] sm:$0x1] %vm1012, %v1384
      %s1386 = sadd.s32 %s1375, 16
      %s1387 = scalar_lea.vmem [#allocation2], %s1386
      %v1388 = vld [vmem:[%s1387] sm:$0x1]
      %1389 = vst.msk [vmem:[#allocation4 + $0x1c] sm:$0x1] %vm1012, %v1388
      %s1390 = sadd.s32 %s1375, 32
      %s1391 = scalar_lea.vmem [#allocation2], %s1390
      %v1392 = vld [vmem:[%s1391] sm:$0x1]
      %1393 = vst.msk [vmem:[#allocation4 + $0x2c] sm:$0x1] %vm1012, %v1392
      %s1394 = sadd.s32 %s1375, 48
      %s1395 = scalar_lea.vmem [#allocation2], %s1394
      %v1396 = vld [vmem:[%s1395] sm:$0x1]
      %1397 = vst.msk [vmem:[#allocation4 + $0x3c] sm:$0x1] %vm1012, %v1396
      %s1398 = sadd.s32 %s744, 13
      %s1399 = sshra.s32 %s1398, 7
      %s1400 = sand.u32 %s1398, 127
      %s1401 = sadd.s32 %s1399, %s51
      %s1402 = smul.u32 %s1401, 128
      %s1403 = sshra.s32 %s1398, 7
      %s1404 = sand.u32 %s1398, 127
      %s1405 = sadd.s32 %s1402, %s1404
      %s1406 = sld [smem:[#allocation8 + %s1405]]
      %s1407 = sld [smem:[#allocation9 + %s1405]]
      %s1408 = scalar_lea.vmem %s723, %s1407
      %v1409 = vld [vmem:[%s1408] sm:$0x1]
      %s1410 = scalar_lea.vmem %s723, %s1406
      %v1411 = vld [vmem:[%s1410] sm:$0x1]
      %v1412 = vsub.f32 %v1409, %v1411
      %1413 = vst.msk [vmem:[#allocation6 + $0xd] sm:$0x1] %vm1008, %v1412
      %s1414 = scalar_lea.vmem [#allocation2], %s1406
      %v1415 = vld [vmem:[%s1414] sm:$0x1]
      %1416 = vst.msk [vmem:[#allocation4 + $0xd] sm:$0x1] %vm1012, %v1415
      %s1417 = sadd.s32 %s1406, 16
      %s1418 = scalar_lea.vmem [#allocation2], %s1417
      %v1419 = vld [vmem:[%s1418] sm:$0x1]
      %1420 = vst.msk [vmem:[#allocation4 + $0x1d] sm:$0x1] %vm1012, %v1419
      %s1421 = sadd.s32 %s1406, 32
      %s1422 = scalar_lea.vmem [#allocation2], %s1421
      %v1423 = vld [vmem:[%s1422] sm:$0x1]
      %1424 = vst.msk [vmem:[#allocation4 + $0x2d] sm:$0x1] %vm1012, %v1423
      %s1425 = sadd.s32 %s1406, 48
      %s1426 = scalar_lea.vmem [#allocation2], %s1425
      %v1427 = vld [vmem:[%s1426] sm:$0x1]
      %1428 = vst.msk [vmem:[#allocation4 + $0x3d] sm:$0x1] %vm1012, %v1427
      %s1429 = sadd.s32 %s744, 14
      %s1430 = sshra.s32 %s1429, 7
      %s1431 = sand.u32 %s1429, 127
      %s1432 = sadd.s32 %s1430, %s51
      %s1433 = smul.u32 %s1432, 128
      %s1434 = sshra.s32 %s1429, 7
      %s1435 = sand.u32 %s1429, 127
      %s1436 = sadd.s32 %s1433, %s1435
      %s1437 = sld [smem:[#allocation8 + %s1436]]
      %s1438 = sld [smem:[#allocation9 + %s1436]]
      %s1439 = scalar_lea.vmem %s723, %s1438
      %v1440 = vld [vmem:[%s1439] sm:$0x1]
      %s1441 = scalar_lea.vmem %s723, %s1437
      %v1442 = vld [vmem:[%s1441] sm:$0x1]
      %v1443 = vsub.f32 %v1440, %v1442
      %1444 = vst.msk [vmem:[#allocation6 + $0xe] sm:$0x1] %vm1008, %v1443
      %s1445 = scalar_lea.vmem [#allocation2], %s1437
      %v1446 = vld [vmem:[%s1445] sm:$0x1]
      %1447 = vst.msk [vmem:[#allocation4 + $0xe] sm:$0x1] %vm1012, %v1446
      %s1448 = sadd.s32 %s1437, 16
      %s1449 = scalar_lea.vmem [#allocation2], %s1448
      %v1450 = vld [vmem:[%s1449] sm:$0x1]
      %1451 = vst.msk [vmem:[#allocation4 + $0x1e] sm:$0x1] %vm1012, %v1450
      %s1452 = sadd.s32 %s1437, 32
      %s1453 = scalar_lea.vmem [#allocation2], %s1452
      %v1454 = vld [vmem:[%s1453] sm:$0x1]
      %1455 = vst.msk [vmem:[#allocation4 + $0x2e] sm:$0x1] %vm1012, %v1454
      %s1456 = sadd.s32 %s1437, 48
      %s1457 = scalar_lea.vmem [#allocation2], %s1456
      %v1458 = vld [vmem:[%s1457] sm:$0x1]
      %1459 = vst.msk [vmem:[#allocation4 + $0x3e] sm:$0x1] %vm1012, %v1458
      %s1460 = sadd.s32 %s744, 15
      %s1461 = sshra.s32 %s1460, 7
      %s1462 = sand.u32 %s1460, 127
      %s1463 = sadd.s32 %s1461, %s51
      %s1464 = smul.u32 %s1463, 128
      %s1465 = sshra.s32 %s1460, 7
      %s1466 = sand.u32 %s1460, 127
      %s1467 = sadd.s32 %s1464, %s1466
      %s1468 = sld [smem:[#allocation8 + %s1467]]
      %s1469 = sld [smem:[#allocation9 + %s1467]]
      %s1470 = scalar_lea.vmem %s723, %s1469
      %v1471 = vld [vmem:[%s1470] sm:$0x1]
      %s1472 = scalar_lea.vmem %s723, %s1468
      %v1473 = vld [vmem:[%s1472] sm:$0x1]
      %v1474 = vsub.f32 %v1471, %v1473
      %1475 = vst.msk [vmem:[#allocation6 + $0xf] sm:$0x1] %vm1008, %v1474
      %s1476 = scalar_lea.vmem [#allocation2], %s1468
      %v1477 = vld [vmem:[%s1476] sm:$0x1]
      %1478 = vst.msk [vmem:[#allocation4 + $0xf] sm:$0x1] %vm1012, %v1477
      %s1479 = sadd.s32 %s1468, 16
      %s1480 = scalar_lea.vmem [#allocation2], %s1479
      %v1481 = vld [vmem:[%s1480] sm:$0x1]
      %1482 = vst.msk [vmem:[#allocation4 + $0x1f] sm:$0x1] %vm1012, %v1481
      %s1483 = sadd.s32 %s1468, 32
      %s1484 = scalar_lea.vmem [#allocation2], %s1483
      %v1485 = vld [vmem:[%s1484] sm:$0x1]
      %1486 = vst.msk [vmem:[#allocation4 + $0x2f] sm:$0x1] %vm1012, %v1485
      %s1487 = sadd.s32 %s1468, 48
      %s1488 = scalar_lea.vmem [#allocation2], %s1487
      %v1489 = vld [vmem:[%s1488] sm:$0x1]
      %1490 = vst.msk [vmem:[#allocation4 + $0x3f] sm:$0x1] %vm1012, %v1489
      %v1491 = vld [vmem:[#allocation6] sm:$0xff]
      %v1492 = vld [vmem:[#allocation6 + $0x8] sm:$0xff]
      %v1493 = vmul.f32 %v1491, %v1491
      %v1494 = vmul.f32 %v1492, %v1492
      %vm1495 = vcmask 23552
      %v1496 = vsel %vm1495, %v1493, 0.0
      %1497 = vadd.xlane.f32.xlu0 %v1496
      %v1498 = vpop.xlane.xlu0 %1497
      %v1499 = vsel %vm1495, %v1494, 0.0
      %1500 = vadd.xlane.f32.xlu0 %v1499
      %v1501 = vpop.xlane.xlu0 %1500
      %v1502 = vadd.f32 %v1498, 1e-09
      %v1503 = vadd.f32 %v1501, 1e-09
      %v1504 = vrsqrt.pop %v1502
      %v1505 = vmul.f32 %v1504, %v1502
      %v1506 = vmul.f32 %v1505, %v1504
      %v1507 = vmul.f32 0.5, %v1506
      %v1508 = vsub.f32 1.5, %v1507
      %v1509 = vmul.f32 %v1504, %v1508
      %vm1510 = vweird.f32 %v1502
      %vm1511 = vweird.f32 %v1504
      %vm1512 = vmor %vm1510, %vm1511
      %v1513 = vsel %vm1512, %v1504, %v1509
      %v1514 = vrsqrt.pop %v1503
      %v1515 = vmul.f32 %v1514, %v1503
      %v1516 = vmul.f32 %v1515, %v1514
      %v1517 = vmul.f32 0.5, %v1516
      %v1518 = vsub.f32 1.5, %v1517
      %v1519 = vmul.f32 %v1514, %v1518
      %vm1520 = vweird.f32 %v1503
      %vm1521 = vweird.f32 %v1514
      %vm1522 = vmor %vm1520, %vm1521
      %v1523 = vsel %vm1522, %v1514, %v1519
      %v1524 = vmul.f32 %v1502, %v1513
      %v1525 = vmul.f32 %v1503, %v1523
      %v1526 = vmul.f32 %v1524, 0.2
      %v1527 = vmul.f32 %v1525, 0.2
      %v1528 = vld [vmem:[%s6] sm:$0x1]
      %v1530 = vperm.slane %v1528, 0
      %v1532 = vmul.f32 %v1530, %v1526
      %v1533 = vmul.f32 %v1530, %v1527
      %v1534 = vand.u32 2147483647, %v1532
      %vm1535 = vcmp.le.f32.partialorder %v1534, 0.7853982
      %vm1536 = vcmp.lt.s32.totalorder %v1532, 0
      %v1537 = vand.u32 %v1532, 2139095040
      %v1538 = vshrl.u32 %v1537, 23
      %v1539 = vsub.s32 %v1538, 127
      %v1540 = vand.u32 2147483647, %v1532
      %v1541 = vand.u32 %v1540, 8388607
      %v1542 = vor.u32 %v1541, 8388608
      %v1543 = vsub.s32 0, %v1542
      %v1544 = vadd.s32 %v1539, 1
      %vm1545 = vcmp.gt.s32.totalorder %v1544, 0
      %v1546 = vsel %vm1545, %v1544, 0
      %v1547 = vshrl.u32 %v1546, 5
      %v1548 = vand.u32 %v1546, 31
      %v1549 = vsub.s32 32, %v1548
      %v1550 = vshrl.u32 683565275, %v1549
      %v1551 = vshll.u32 683565275, %v1548
      %v1552 = vshrl.u32 2475754826, %v1549
      %v1553 = vor.u32 %v1551, %v1552
      %v1554 = vshll.u32 2475754826, %v1548
      %v1555 = vshrl.u32 2131351028, %v1549
      %v1556 = vor.u32 %v1554, %v1555
      %v1557 = vshll.u32 2131351028, %v1548
      %v1558 = vshrl.u32 2102212464, %v1549
      %v1559 = vor.u32 %v1557, %v1558
      %v1560 = vshll.u32 2102212464, %v1548
      %v1561 = vshrl.u32 920167782, %v1549
      %v1562 = vor.u32 %v1560, %v1561
      %v1563 = vshll.u32 920167782, %v1548
      %v1564 = vshrl.u32 1326507024, %v1549
      %v1565 = vor.u32 %v1563, %v1564
      %vm1566 = vcmp.lt.s32.totalorder %v1547, 1
      %vm1567 = vcmp.lt.s32.totalorder %v1547, 2
      %vm1568 = vcmp.lt.s32.totalorder %v1547, 3
      %vm1569 = vcmp.lt.s32.totalorder %v1547, 4
      %v1570 = vsel %vm1566, %v1550, %v1553
      %v1571 = vsel %vm1569, %v1559, 2102212464
      %v1572 = vsel %vm1568, %v1556, %v1571
      %v1573 = vsel %vm1567, %v1570, %v1572
      %v1574 = vsel %vm1566, %v1553, %v1556
      %v1575 = vsel %vm1569, %v1562, 920167782
      %v1576 = vsel %vm1568, %v1559, %v1575
      %v1577 = vsel %vm1567, %v1574, %v1576
      %v1578 = vsel %vm1566, %v1556, %v1559
      %v1579 = vsel %vm1569, %v1565, 1326507024
      %v1580 = vsel %vm1568, %v1562, %v1579
      %v1581 = vsel %vm1567, %v1578, %v1580
      %v1582 = vshll.u32 %v1542, 8
      %v1583 = vand.u32 %v1582, 65535
      %v1584 = vshrl.u32 %v1582, 16
      %v1585 = vand.u32 %v1581, 65535
      %v1586 = vshrl.u32 %v1581, 16
      %v1587 = vmul.u32 %v1583, %v1585
      %v1588 = vmul.u32 %v1583, %v1586
      %v1589 = vmul.u32 %v1584, %v1585
      %v1590 = vmul.u32 %v1584, %v1586
      %v1591 = vshll.u32 %v1588, 16
      %v1592 = vshrl.u32 %v1588, 16
      %v1593 = vshll.u32 %v1589, 16
      %v1594 = vshrl.u32 %v1589, 16
      %vm1595 = vc.u32 %v1587, %v1591
      %v1596 = vsel %vm1595, 1, 0
      %v1597 = vadd.s32 %v1587, %v1591
      %v1598 = vadd.s32 %v1590, %v1596
      %vm1599 = vc.u32 %v1597, %v1593
      %v1600 = vsel %vm1599, 1, 0
      %v1601 = vadd.s32 %v1597, %v1593
      %v1602 = vadd.s32 %v1598, %v1600
      %v1603 = vadd.s32 %v1602, %v1592
      %v1604 = vadd.s32 %v1603, %v1594
      %v1605 = vand.u32 %v1582, 65535
      %v1606 = vshrl.u32 %v1582, 16
      %v1607 = vand.u32 %v1577, 65535
      %v1608 = vshrl.u32 %v1577, 16
      %v1609 = vmul.u32 %v1605, %v1607
      %v1610 = vmul.u32 %v1605, %v1608
      %v1611 = vmul.u32 %v1606, %v1607
      %v1612 = vmul.u32 %v1606, %v1608
      %v1613 = vshll.u32 %v1610, 16
      %v1614 = vshrl.u32 %v1610, 16
      %v1615 = vshll.u32 %v1611, 16
      %v1616 = vshrl.u32 %v1611, 16
      %vm1617 = vc.u32 %v1609, %v1613
      %v1618 = vsel %vm1617, 1, 0
      %v1619 = vadd.s32 %v1609, %v1613
      %v1620 = vadd.s32 %v1612, %v1618
      %vm1621 = vc.u32 %v1619, %v1615
      %v1622 = vsel %vm1621, 1, 0
      %v1623 = vadd.s32 %v1619, %v1615
      %v1624 = vadd.s32 %v1620, %v1622
      %v1625 = vadd.s32 %v1624, %v1614
      %v1626 = vadd.s32 %v1625, %v1616
      %v1627 = vmul.u32 %v1582, %v1573
      %v1628 = vadd.s32 %v1604, %v1623
      %vm1629 = vc.u32 %v1604, %v1623
      %v1630 = vadd.s32 %v1626, 1
      %v1631 = vsel %vm1629, %v1630, %v1626
      %v1632 = vadd.s32 %v1627, %v1631
      %v1633 = vadd.s32 %v1632, 536870912
      %v1634 = vshrl.u32 %v1633, 30
      %v1635 = vshll.u32 %v1634, 30
      %v1636 = vsub.s32 %v1632, %v1635
      %vm1637 = vcmp.lt.s32.totalorder %v1636, 0
      %v1638 = vsub.s32 0, %v1636
      %v1639 = vsel %vm1637, %v1638, %v1636
      %v1640 = vclz %v1639
      %v1641 = vsub.s32 %v1640, 2
      %vm1642 = vcmp.gt.s32.totalorder 0, %v1641
      %v1643 = vsel %vm1642, 0, %v1641
      %v1644 = vsub.s32 32, %v1643
      %v1645 = vshll.u32 %v1636, %v1643
      %v1646 = vshrl.u32 %v1628, %v1644
      %v1647 = vor.u32 %v1645, %v1646
      %v1648 = vsub.s32 4294967266, %v1643
      %v1649 = vadd.s32 %v1648, 127
      %v1650 = vshll.u32 %v1649, 23
      %v1651 = vor.u32 4788187, %v1650
      %v1652 = vand.u32 2147483647, %v1651
      %v1654 = vcvt.s32.f32 %v1647
      %v1655 = vmul.f32 %v1654, %v1652
      %v1656 = vxor.u32 %v1655, 2147483648
      %v1657 = vsel %vm1536, %v1656, %v1655
      %v1658 = vsub.s32 4, %v1634
      %v1659 = vsel %vm1536, %v1658, %v1634
      %v1660 = vsel %vm1535, %v1532, %v1657
      %v1661 = vsel %vm1535, 0, %v1659
      %v1662 = vmul.f32 %v1660, %v1660
      %v1663 = vmul.f32 %v1662, -0.001358992
      %v1664 = vadd.f32 %v1663, 0.041655596
      %v1665 = vmul.f32 %v1662, %v1664
      %v1666 = vadd.f32 %v1665, -0.4999988
      %v1667 = vmul.f32 %v1662, %v1666
      %v1668 = vadd.f32 1.0, %v1667
      %v1669 = vmul.f32 %v1660, %v1660
      %v1670 = vmul.f32 %v1669, -0.00019511016
      %v1671 = vadd.f32 %v1670, 0.008332121
      %v1672 = vmul.f32 %v1669, %v1671
      %v1673 = vadd.f32 %v1672, -0.16666654
      %v1674 = vmul.f32 %v1669, %v1673
      %v1675 = vadd.f32 %v1674, 1.0
      %v1676 = vmul.f32 %v1675, %v1660
      %vm1677 = vweird.f32 %v1532
      %v1678 = vadd.s32 %v1661, 3
      %v1679 = vand.u32 %v1678, 3
      %vm1680 = vcmp.lt.s32.totalorder %v1679, 2
      %vm1681 = vcmp.eq.s32.totalorder %v1679, 0
      %v1682 = vxor.u32 %v1676, 2147483648
      %v1683 = vsel %vm1681, %v1668, %v1682
      %vm1684 = vcmp.eq.s32.totalorder %v1679, 2
      %v1685 = vxor.u32 %v1668, 2147483648
      %v1686 = vsel %vm1684, %v1685, %v1676
      %v1687 = vsel %vm1680, %v1683, %v1686
      %v1688 = vsel %vm1677, nan, %v1687
      %v1689 = vand.u32 2147483647, %v1533
      %vm1690 = vcmp.le.f32.partialorder %v1689, 0.7853982
      %vm1691 = vcmp.lt.s32.totalorder %v1533, 0
      %v1692 = vand.u32 %v1533, 2139095040
      %v1693 = vshrl.u32 %v1692, 23
      %v1694 = vsub.s32 %v1693, 127
      %v1695 = vand.u32 2147483647, %v1533
      %v1696 = vand.u32 %v1695, 8388607
      %v1697 = vor.u32 %v1696, 8388608
      %v1698 = vsub.s32 0, %v1697
      %v1699 = vadd.s32 %v1694, 1
      %vm1700 = vcmp.gt.s32.totalorder %v1699, 0
      %v1701 = vsel %vm1700, %v1699, 0
      %v1702 = vshrl.u32 %v1701, 5
      %v1703 = vand.u32 %v1701, 31
      %v1704 = vsub.s32 32, %v1703
      %v1705 = vshrl.u32 683565275, %v1704
      %v1706 = vshll.u32 683565275, %v1703
      %v1707 = vshrl.u32 2475754826, %v1704
      %v1708 = vor.u32 %v1706, %v1707
      %v1709 = vshll.u32 2475754826, %v1703
      %v1710 = vshrl.u32 2131351028, %v1704
      %v1711 = vor.u32 %v1709, %v1710
      %v1712 = vshll.u32 2131351028, %v1703
      %v1713 = vshrl.u32 2102212464, %v1704
      %v1714 = vor.u32 %v1712, %v1713
      %v1715 = vshll.u32 2102212464, %v1703
      %v1716 = vshrl.u32 920167782, %v1704
      %v1717 = vor.u32 %v1715, %v1716
      %v1718 = vshll.u32 920167782, %v1703
      %v1719 = vshrl.u32 1326507024, %v1704
      %v1720 = vor.u32 %v1718, %v1719
      %vm1721 = vcmp.lt.s32.totalorder %v1702, 1
      %vm1722 = vcmp.lt.s32.totalorder %v1702, 2
      %vm1723 = vcmp.lt.s32.totalorder %v1702, 3
      %vm1724 = vcmp.lt.s32.totalorder %v1702, 4
      %v1725 = vsel %vm1721, %v1705, %v1708
      %v1726 = vsel %vm1724, %v1714, 2102212464
      %v1727 = vsel %vm1723, %v1711, %v1726
      %v1728 = vsel %vm1722, %v1725, %v1727
      %v1729 = vsel %vm1721, %v1708, %v1711
      %v1730 = vsel %vm1724, %v1717, 920167782
      %v1731 = vsel %vm1723, %v1714, %v1730
      %v1732 = vsel %vm1722, %v1729, %v1731
      %v1733 = vsel %vm1721, %v1711, %v1714
      %v1734 = vsel %vm1724, %v1720, 1326507024
      %v1735 = vsel %vm1723, %v1717, %v1734
      %v1736 = vsel %vm1722, %v1733, %v1735
      %v1737 = vshll.u32 %v1697, 8
      %v1738 = vand.u32 %v1737, 65535
      %v1739 = vshrl.u32 %v1737, 16
      %v1740 = vand.u32 %v1736, 65535
      %v1741 = vshrl.u32 %v1736, 16
      %v1742 = vmul.u32 %v1738, %v1740
      %v1743 = vmul.u32 %v1738, %v1741
      %v1744 = vmul.u32 %v1739, %v1740
      %v1745 = vmul.u32 %v1739, %v1741
      %v1746 = vshll.u32 %v1743, 16
      %v1747 = vshrl.u32 %v1743, 16
      %v1748 = vshll.u32 %v1744, 16
      %v1749 = vshrl.u32 %v1744, 16
      %vm1750 = vc.u32 %v1742, %v1746
      %v1751 = vsel %vm1750, 1, 0
      %v1752 = vadd.s32 %v1742, %v1746
      %v1753 = vadd.s32 %v1745, %v1751
      %vm1754 = vc.u32 %v1752, %v1748
      %v1755 = vsel %vm1754, 1, 0
      %v1756 = vadd.s32 %v1752, %v1748
      %v1757 = vadd.s32 %v1753, %v1755
      %v1758 = vadd.s32 %v1757, %v1747
      %v1759 = vadd.s32 %v1758, %v1749
      %v1760 = vand.u32 %v1737, 65535
      %v1761 = vshrl.u32 %v1737, 16
      %v1762 = vand.u32 %v1732, 65535
      %v1763 = vshrl.u32 %v1732, 16
      %v1764 = vmul.u32 %v1760, %v1762
      %v1765 = vmul.u32 %v1760, %v1763
      %v1766 = vmul.u32 %v1761, %v1762
      %v1767 = vmul.u32 %v1761, %v1763
      %v1768 = vshll.u32 %v1765, 16
      %v1769 = vshrl.u32 %v1765, 16
      %v1770 = vshll.u32 %v1766, 16
      %v1771 = vshrl.u32 %v1766, 16
      %vm1772 = vc.u32 %v1764, %v1768
      %v1773 = vsel %vm1772, 1, 0
      %v1774 = vadd.s32 %v1764, %v1768
      %v1775 = vadd.s32 %v1767, %v1773
      %vm1776 = vc.u32 %v1774, %v1770
      %v1777 = vsel %vm1776, 1, 0
      %v1778 = vadd.s32 %v1774, %v1770
      %v1779 = vadd.s32 %v1775, %v1777
      %v1780 = vadd.s32 %v1779, %v1769
      %v1781 = vadd.s32 %v1780, %v1771
      %v1782 = vmul.u32 %v1737, %v1728
      %v1783 = vadd.s32 %v1759, %v1778
      %vm1784 = vc.u32 %v1759, %v1778
      %v1785 = vadd.s32 %v1781, 1
      %v1786 = vsel %vm1784, %v1785, %v1781
      %v1787 = vadd.s32 %v1782, %v1786
      %v1788 = vadd.s32 %v1787, 536870912
      %v1789 = vshrl.u32 %v1788, 30
      %v1790 = vshll.u32 %v1789, 30
      %v1791 = vsub.s32 %v1787, %v1790
      %vm1792 = vcmp.lt.s32.totalorder %v1791, 0
      %v1793 = vsub.s32 0, %v1791
      %v1794 = vsel %vm1792, %v1793, %v1791
      %v1795 = vclz %v1794
      %v1796 = vsub.s32 %v1795, 2
      %vm1797 = vcmp.gt.s32.totalorder 0, %v1796
      %v1798 = vsel %vm1797, 0, %v1796
      %v1799 = vsub.s32 32, %v1798
      %v1800 = vshll.u32 %v1791, %v1798
      %v1801 = vshrl.u32 %v1783, %v1799
      %v1802 = vor.u32 %v1800, %v1801
      %v1803 = vsub.s32 4294967266, %v1798
      %v1804 = vadd.s32 %v1803, 127
      %v1805 = vshll.u32 %v1804, 23
      %v1806 = vor.u32 4788187, %v1805
      %v1807 = vand.u32 2147483647, %v1806
      %v1809 = vcvt.s32.f32 %v1802
      %v1810 = vmul.f32 %v1809, %v1807
      %v1811 = vxor.u32 %v1810, 2147483648
      %v1812 = vsel %vm1691, %v1811, %v1810
      %v1813 = vsub.s32 4, %v1789
      %v1814 = vsel %vm1691, %v1813, %v1789
      %v1815 = vsel %vm1690, %v1533, %v1812
      %v1816 = vsel %vm1690, 0, %v1814
      %v1817 = vmul.f32 %v1815, %v1815
      %v1818 = vmul.f32 %v1817, -0.001358992
      %v1819 = vadd.f32 %v1818, 0.041655596
      %v1820 = vmul.f32 %v1817, %v1819
      %v1821 = vadd.f32 %v1820, -0.4999988
      %v1822 = vmul.f32 %v1817, %v1821
      %v1823 = vadd.f32 1.0, %v1822
      %v1824 = vmul.f32 %v1815, %v1815
      %v1825 = vmul.f32 %v1824, -0.00019511016
      %v1826 = vadd.f32 %v1825, 0.008332121
      %v1827 = vmul.f32 %v1824, %v1826
      %v1828 = vadd.f32 %v1827, -0.16666654
      %v1829 = vmul.f32 %v1824, %v1828
      %v1830 = vadd.f32 %v1829, 1.0
      %v1831 = vmul.f32 %v1830, %v1815
      %vm1832 = vweird.f32 %v1533
      %v1833 = vadd.s32 %v1816, 3
      %v1834 = vand.u32 %v1833, 3
      %vm1835 = vcmp.lt.s32.totalorder %v1834, 2
      %vm1836 = vcmp.eq.s32.totalorder %v1834, 0
      %v1837 = vxor.u32 %v1831, 2147483648
      %v1838 = vsel %vm1836, %v1823, %v1837
      %vm1839 = vcmp.eq.s32.totalorder %v1834, 2
      %v1840 = vxor.u32 %v1823, 2147483648
      %v1841 = vsel %vm1839, %v1840, %v1831
      %v1842 = vsel %vm1835, %v1838, %v1841
      %v1843 = vsel %vm1832, nan, %v1842
      %v1844 = vmul.f32 %v1688, 0.6324555
      %v1845 = vmul.f32 %v1843, 0.6324555
      %v1846 = vmul.f32 %v1844, %v1513
      %v1847 = vmul.f32 %v1845, %v1523
      %v1848 = vmul.f32 %v1526, %v1526
      %v1849 = vmul.f32 %v1527, %v1527
      %v1850 = vmul.f32 %v1848, %v1526
      %v1851 = vmul.f32 %v1849, %v1527
      %v1852 = vmul.f32 %v1850, %v1850
      %v1853 = vmul.f32 %v1851, %v1851
      %v1854 = vmul.f32 %v1852, %v1526
      %v1855 = vmul.f32 %v1853, %v1527
      %v1856 = vmul.f32 %v1854, %v1526
      %v1857 = vmul.f32 %v1855, %v1527
      %v1858 = vmul.f32 %v1852, 28.0
      %v1859 = vmul.f32 %v1853, 28.0
      %v1860 = vsub.f32 1.0, %v1858
      %v1861 = vsub.f32 1.0, %v1859
      %v1862 = vmul.f32 %v1854, 48.0
      %v1863 = vmul.f32 %v1855, 48.0
      %v1864 = vadd.f32 %v1860, %v1862
      %v1865 = vadd.f32 %v1861, %v1863
      %v1866 = vmul.f32 %v1856, 21.0
      %v1867 = vmul.f32 %v1857, 21.0
      %v1868 = vsub.f32 %v1864, %v1866
      %v1869 = vsub.f32 %v1865, %v1867
      %vm1870 = vcmp.lt.f32.partialorder %v1526, 1.0
      %vm1871 = vcmp.lt.f32.partialorder %v1527, 1.0
      %v1872 = vsel %vm1870, %v1868, 0.0
      %v1873 = vsel %vm1871, %v1869, 0.0
      %v1874 = vmul.f32 %v1846, %v1872
      %v1875 = vmul.f32 %v1847, %v1873
      %v1876 = vld [vmem:[%s13] sm:$0xff]
      %v1877 = vld [vmem:[%s14] sm:$0x1]
      %v1879 = vperm.slane %v1877, 0
      %vm1881 = vcmask 64512
      %v1883 = vsel %vm1881, %v1874, 0
      %v1886 = vsel %vm1881, %v1875, 0
      %1888 = vmatpush.msra.mxu0 0.0
      %1889 = vmatpush.msra.mxu0 0.0
      %1890 = vmatpush.msra.mxu0 0.0
      %1891 = vmatpush.msra.mxu0 0.0
      %1892 = vmatpush.msra.mxu0 0.0
      %1893 = vmatpush.msra.mxu0 0.0
      %1894 = vmatpush.msra.mxu0 0.0
      %1895 = vmatpush.msra.mxu0 0.0
      %1896 = vmatpush.msra.mxu0 0.0
      %1897 = vmatpush.msra.mxu0 0.0
      %1898 = vmatpush.msra.mxu0 0.0
      %1899 = vmatpush.msra.mxu0 0.0
      %1900 = vmatpush.msra.mxu0 0.0
      %1901 = vmatpush.msra.mxu0 0.0
      %1902 = vmatpush.msra.mxu0 0.0
      %1903 = vmatpush.msra.mxu0 %v1876
      %1904 = vmatmul.f32.gmra.mxu0 %v1883
      %v1905 = vpop.f32.mrf.mxu0
      %v1906 = vadd.f32 %v1879, %v1905
      %1907 = vmatmul.f32.gmra.mxu0 %v1886
      %v1908 = vpop.f32.mrf.mxu0
      %v1909 = vadd.f32 %v1879, %v1908
      %1910 = vdwg.mxu0
      %v1911 = vsub.f32 0.0, %v1906
      %v1912 = vsub.f32 0.0, %v1909
      %v1913 = vmul.f32 %v1911, 1.442695
      %v1914 = vpow.pop %v1913
      %v1915 = vmul.f32 %v1912, 1.442695
      %v1916 = vpow.pop %v1915
      %v1917 = vadd.f32 %v1914, 1.0
      %v1918 = vadd.f32 %v1916, 1.0
      %v1919 = vrcp.pop %v1917
      %v1920 = vrcp.pop %v1918
      %v1921 = vmul.f32 %v1906, %v1919
      %v1922 = vmul.f32 %v1909, %v1920
      %v1923 = vld [vmem:[%s15] sm:$0xff]
      %v1924 = vld [vmem:[%s15 + $0x8] sm:$0xff]
      %v1925 = vld [vmem:[%s16] sm:$0x1]
      %v1927 = vperm.slane %v1925, 0
      %vm1929 = vcmask 130048
      %v1931 = vsel %vm1929, %v1921, 0
      %v1934 = vsel %vm1929, %v1922, 0
      %1936 = vmatpush.msra.mxu0 0.0
      %1937 = vmatpush.msra.mxu0 0.0
      %1938 = vmatpush.msra.mxu0 0.0
      %1939 = vmatpush.msra.mxu0 0.0
      %1940 = vmatpush.msra.mxu0 0.0
      %1941 = vmatpush.msra.mxu0 0.0
      %1942 = vmatpush.msra.mxu0 0.0
      %1943 = vmatpush.msra.mxu0 0.0
      %1944 = vmatpush.msra.mxu0 0.0
      %1945 = vmatpush.msra.mxu0 0.0
      %1946 = vmatpush.msra.mxu0 0.0
      %1947 = vmatpush.msra.mxu0 0.0
      %1948 = vmatpush.msra.mxu0 0.0
      %1949 = vmatpush.msra.mxu0 0.0
      %1950 = vmatpush.msra.mxu0 %v1924
      %1951 = vmatpush.msra.mxu0 %v1923
      %1952 = vmatmul.f32.gmra.mxu0 %v1931
      %v1953 = vpop.f32.mrf.mxu0
      %v1954 = vadd.f32 %v1927, %v1953
      %1955 = vmatmul.f32.gmra.mxu0 %v1934
      %v1956 = vpop.f32.mrf.mxu0
      %v1957 = vadd.f32 %v1927, %v1956
      %1958 = vdwg.mxu0
      %v1959 = vmul.f32 %v1491, 1.7320508
      %v1960 = vmul.f32 %v1492, 1.7320508
      %v1961 = vmul.f32 %v1959, %v1513
      %v1962 = vmul.f32 %v1960, %v1523
      %v1963 = vld [vmem:[#allocation4] sm:$0xff]
      %v1964 = vld [vmem:[#allocation4 + $0x8] sm:$0xff]
      %v1965 = vld [vmem:[#allocation4 + $0x10] sm:$0xff]
      %v1966 = vld [vmem:[#allocation4 + $0x18] sm:$0xff]
      %v1967 = vld [vmem:[#allocation4 + $0x20] sm:$0xff]
      %v1968 = vld [vmem:[#allocation4 + $0x28] sm:$0xff]
      %v1969 = vld [vmem:[#allocation4 + $0x30] sm:$0xff]
      %v1970 = vld [vmem:[#allocation4 + $0x38] sm:$0xff]
      %1973 = vrot.lane.b32.xlu0 %v1963, 8
      %v1974 = vpop.permute.xlu0 %1973
      %1975 = vrot.lane.b32.xlu0 %v1964, 8
      %v1976 = vpop.permute.xlu0 %1975
      %v1979 = vmul.f32 %v1954, %v1974
      %v1980 = vmul.f32 %v1957, %v1976
      %v1981 = vmul.f32 %v1954, %v1963
      %v1982 = vmul.f32 %v1957, %v1964
      %v1983 = vmul.f32 %v1954, 0.57735026
      %v1984 = vmul.f32 %v1957, 0.57735026
      %1986 = vset.pattern.permute.xlu0 0
      %1987 = vperm.xlu0 %1986, %v1961
      %v1988 = vpop.permute.xlu0 %1987
      %1991 = vset.pattern.permute.xlu0 0
      %1992 = vperm.xlu0 %1991, %v1962
      %v1993 = vpop.permute.xlu0 %1992
      %v1995 = vmul.f32 %v1965, %v1988
      %v1996 = vmul.f32 %v1966, %v1993
      %1997 = vset.pattern.permute.xlu0 1
      %1998 = vperm.xlu0 %1997, %v1961
      %v1999 = vpop.permute.xlu0 %1998
      %2001 = vset.pattern.permute.xlu0 1
      %2002 = vperm.xlu0 %2001, %v1962
      %v2003 = vpop.permute.xlu0 %2002
      %v2005 = vmul.f32 %v1967, %v1999
      %v2006 = vmul.f32 %v1968, %v2003
      %v2007 = vadd.f32 %v1995, %v2005
      %v2008 = vadd.f32 %v1996, %v2006
      %2009 = vset.pattern.permute.xlu0 2
      %2010 = vperm.xlu0 %2009, %v1961
      %v2011 = vpop.permute.xlu0 %2010
      %2013 = vset.pattern.permute.xlu0 2
      %2014 = vperm.xlu0 %2013, %v1962
      %v2015 = vpop.permute.xlu0 %2014
      %v2017 = vmul.f32 %v1969, %v2011
      %v2018 = vmul.f32 %v1970, %v2015
      %v2019 = vadd.f32 %v2007, %v2017
      %v2020 = vadd.f32 %v2008, %v2018
      %2023 = vrot.lane.b32.xlu0 %v2019, 24
      %v2024 = vpop.permute.xlu0 %2023
      %2025 = vrot.lane.b32.xlu0 %v2020, 24
      %v2026 = vpop.permute.xlu0 %2025
      %v2029 = vmul.f32 %v1983, %v2024
      %v2030 = vmul.f32 %v1984, %v2026
      %2033 = vrot.lane.b32.xlu0 %v2029, 104
      %v2034 = vpop.permute.xlu0 %2033
      %2035 = vrot.lane.b32.xlu0 %v2030, 104
      %v2036 = vpop.permute.xlu0 %2035
      %v2039 = vadd.f32 %v1981, %v2034
      %v2040 = vadd.f32 %v1982, %v2036
      %2041 = vst.msk [vmem:[#allocation5] sm:$0xff] %vm1881, %v2039
      %2042 = vst.msk [vmem:[#allocation5 + $0x8] sm:$0xff] %vm1881, %v2040
      %2045 = vrot.lane.b32.xlu0 %v1965, 16
      %v2046 = vpop.permute.xlu0 %2045
      %2047 = vrot.lane.b32.xlu0 %v1966, 16
      %v2048 = vpop.permute.xlu0 %2047
      %v2051 = vmul.f32 %v1954, %v2046
      %v2052 = vmul.f32 %v1957, %v2048
      %v2053 = vmul.f32 %v1979, %v1988
      %v2054 = vmul.f32 %v1980, %v1993
      %2057 = vrot.lane.b32.xlu0 %v2053, 8
      %v2058 = vpop.permute.xlu0 %2057
      %2059 = vrot.lane.b32.xlu0 %v2054, 8
      %v2060 = vpop.permute.xlu0 %2059
      %v2063 = vadd.f32 %v2051, %v2058
      %v2064 = vadd.f32 %v2052, %v2060
      %2067 = vrot.lane.b32.xlu0 %v2063, 112
      %v2068 = vpop.permute.xlu0 %2067
      %2069 = vrot.lane.b32.xlu0 %v2064, 112
      %v2070 = vpop.permute.xlu0 %2069
      %2073 = vst.msk [vmem:[#allocation5 + $0x10] sm:$0xff] %vm1881, %v2068
      %2074 = vst.msk [vmem:[#allocation5 + $0x18] sm:$0xff] %vm1881, %v2070
      %2077 = vrot.lane.b32.xlu0 %v1967, 16
      %v2078 = vpop.permute.xlu0 %2077
      %2079 = vrot.lane.b32.xlu0 %v1968, 16
      %v2080 = vpop.permute.xlu0 %2079
      %v2083 = vmul.f32 %v1954, %v2078
      %v2084 = vmul.f32 %v1957, %v2080
      %v2085 = vmul.f32 %v1979, %v1999
      %v2086 = vmul.f32 %v1980, %v2003
      %2089 = vrot.lane.b32.xlu0 %v2085, 8
      %v2090 = vpop.permute.xlu0 %2089
      %2091 = vrot.lane.b32.xlu0 %v2086, 8
      %v2092 = vpop.permute.xlu0 %2091
      %v2095 = vadd.f32 %v2083, %v2090
      %v2096 = vadd.f32 %v2084, %v2092
      %2099 = vrot.lane.b32.xlu0 %v2095, 112
      %v2100 = vpop.permute.xlu0 %2099
      %2101 = vrot.lane.b32.xlu0 %v2096, 112
      %v2102 = vpop.permute.xlu0 %2101
      %2105 = vst.msk [vmem:[#allocation5 + $0x20] sm:$0xff] %vm1881, %v2100
      %2106 = vst.msk [vmem:[#allocation5 + $0x28] sm:$0xff] %vm1881, %v2102
      %2109 = vrot.lane.b32.xlu0 %v1969, 16
      %v2110 = vpop.permute.xlu0 %2109
      %2111 = vrot.lane.b32.xlu0 %v1970, 16
      %v2112 = vpop.permute.xlu0 %2111
      %v2115 = vmul.f32 %v1954, %v2110
      %v2116 = vmul.f32 %v1957, %v2112
      %v2117 = vmul.f32 %v1979, %v2011
      %v2118 = vmul.f32 %v1980, %v2015
      %2121 = vrot.lane.b32.xlu0 %v2117, 8
      %v2122 = vpop.permute.xlu0 %2121
      %2123 = vrot.lane.b32.xlu0 %v2118, 8
      %v2124 = vpop.permute.xlu0 %2123
      %v2127 = vadd.f32 %v2115, %v2122
      %v2128 = vadd.f32 %v2116, %v2124
      %2131 = vrot.lane.b32.xlu0 %v2127, 112
      %v2132 = vpop.permute.xlu0 %2131
      %2133 = vrot.lane.b32.xlu0 %v2128, 112
      %v2134 = vpop.permute.xlu0 %2133
      %2137 = vst.msk [vmem:[#allocation5 + $0x30] sm:$0xff] %vm1881, %v2132
      %2138 = vst.msk [vmem:[#allocation5 + $0x38] sm:$0xff] %vm1881, %v2134
      %s2139 = sld [smem:[#allocation9 + %s1000]]
      %s2140 = scalar_lea.vmem [#allocation3], %s2139
      %v2141 = vld [vmem:[%s2140] sm:$0x1]
      %v2142 = vld [vmem:[#allocation5] sm:$0x1]
      %v2143 = vadd.f32 %v2141, %v2142
      %2144 = vst.msk [vmem:[%s2140] sm:$0x1] %vm1012, %v2143
      %s2145 = sadd.s32 %s2139, 16
      %s2146 = scalar_lea.vmem [#allocation3], %s2145
      %v2147 = vld [vmem:[%s2146] sm:$0x1]
      %v2148 = vld [vmem:[#allocation5 + $0x10] sm:$0x1]
      %v2149 = vadd.f32 %v2147, %v2148
      %2150 = vst.msk [vmem:[%s2146] sm:$0x1] %vm1012, %v2149
      %s2151 = sadd.s32 %s2139, 32
      %s2152 = scalar_lea.vmem [#allocation3], %s2151
      %v2153 = vld [vmem:[%s2152] sm:$0x1]
      %v2154 = vld [vmem:[#allocation5 + $0x20] sm:$0x1]
      %v2155 = vadd.f32 %v2153, %v2154
      %2156 = vst.msk [vmem:[%s2152] sm:$0x1] %vm1012, %v2155
      %s2157 = sadd.s32 %s2139, 48
      %s2158 = scalar_lea.vmem [#allocation3], %s2157
      %v2159 = vld [vmem:[%s2158] sm:$0x1]
      %v2160 = vld [vmem:[#allocation5 + $0x30] sm:$0x1]
      %v2161 = vadd.f32 %v2159, %v2160
      %2162 = vst.msk [vmem:[%s2158] sm:$0x1] %vm1012, %v2161
      %s2163 = sld [smem:[#allocation9 + %s1033]]
      %s2164 = scalar_lea.vmem [#allocation3], %s2163
      %v2165 = vld [vmem:[%s2164] sm:$0x1]
      %v2166 = vld [vmem:[#allocation5 + $0x1] sm:$0x1]
      %v2167 = vadd.f32 %v2165, %v2166
      %2168 = vst.msk [vmem:[%s2164] sm:$0x1] %vm1012, %v2167
      %s2169 = sadd.s32 %s2163, 16
      %s2170 = scalar_lea.vmem [#allocation3], %s2169
      %v2171 = vld [vmem:[%s2170] sm:$0x1]
      %v2172 = vld [vmem:[#allocation5 + $0x11] sm:$0x1]
      %v2173 = vadd.f32 %v2171, %v2172
      %2174 = vst.msk [vmem:[%s2170] sm:$0x1] %vm1012, %v2173
      %s2175 = sadd.s32 %s2163, 32
      %s2176 = scalar_lea.vmem [#allocation3], %s2175
      %v2177 = vld [vmem:[%s2176] sm:$0x1]
      %v2178 = vld [vmem:[#allocation5 + $0x21] sm:$0x1]
      %v2179 = vadd.f32 %v2177, %v2178
      %2180 = vst.msk [vmem:[%s2176] sm:$0x1] %vm1012, %v2179
      %s2181 = sadd.s32 %s2163, 48
      %s2182 = scalar_lea.vmem [#allocation3], %s2181
      %v2183 = vld [vmem:[%s2182] sm:$0x1]
      %v2184 = vld [vmem:[#allocation5 + $0x31] sm:$0x1]
      %v2185 = vadd.f32 %v2183, %v2184
      %2186 = vst.msk [vmem:[%s2182] sm:$0x1] %vm1012, %v2185
      %s2187 = sld [smem:[#allocation9 + %s1064]]
      %s2188 = scalar_lea.vmem [#allocation3], %s2187
      %v2189 = vld [vmem:[%s2188] sm:$0x1]
      %v2190 = vld [vmem:[#allocation5 + $0x2] sm:$0x1]
      %v2191 = vadd.f32 %v2189, %v2190
      %2192 = vst.msk [vmem:[%s2188] sm:$0x1] %vm1012, %v2191
      %s2193 = sadd.s32 %s2187, 16
      %s2194 = scalar_lea.vmem [#allocation3], %s2193
      %v2195 = vld [vmem:[%s2194] sm:$0x1]
      %v2196 = vld [vmem:[#allocation5 + $0x12] sm:$0x1]
      %v2197 = vadd.f32 %v2195, %v2196
      %2198 = vst.msk [vmem:[%s2194] sm:$0x1] %vm1012, %v2197
      %s2199 = sadd.s32 %s2187, 32
      %s2200 = scalar_lea.vmem [#allocation3], %s2199
      %v2201 = vld [vmem:[%s2200] sm:$0x1]
      %v2202 = vld [vmem:[#allocation5 + $0x22] sm:$0x1]
      %v2203 = vadd.f32 %v2201, %v2202
      %2204 = vst.msk [vmem:[%s2200] sm:$0x1] %vm1012, %v2203
      %s2205 = sadd.s32 %s2187, 48
      %s2206 = scalar_lea.vmem [#allocation3], %s2205
      %v2207 = vld [vmem:[%s2206] sm:$0x1]
      %v2208 = vld [vmem:[#allocation5 + $0x32] sm:$0x1]
      %v2209 = vadd.f32 %v2207, %v2208
      %2210 = vst.msk [vmem:[%s2206] sm:$0x1] %vm1012, %v2209
      %s2211 = sld [smem:[#allocation9 + %s1095]]
      %s2212 = scalar_lea.vmem [#allocation3], %s2211
      %v2213 = vld [vmem:[%s2212] sm:$0x1]
      %v2214 = vld [vmem:[#allocation5 + $0x3] sm:$0x1]
      %v2215 = vadd.f32 %v2213, %v2214
      %2216 = vst.msk [vmem:[%s2212] sm:$0x1] %vm1012, %v2215
      %s2217 = sadd.s32 %s2211, 16
      %s2218 = scalar_lea.vmem [#allocation3], %s2217
      %v2219 = vld [vmem:[%s2218] sm:$0x1]
      %v2220 = vld [vmem:[#allocation5 + $0x13] sm:$0x1]
      %v2221 = vadd.f32 %v2219, %v2220
      %2222 = vst.msk [vmem:[%s2218] sm:$0x1] %vm1012, %v2221
      %s2223 = sadd.s32 %s2211, 32
      %s2224 = scalar_lea.vmem [#allocation3], %s2223
      %v2225 = vld [vmem:[%s2224] sm:$0x1]
      %v2226 = vld [vmem:[#allocation5 + $0x23] sm:$0x1]
      %v2227 = vadd.f32 %v2225, %v2226
      %2228 = vst.msk [vmem:[%s2224] sm:$0x1] %vm1012, %v2227
      %s2229 = sadd.s32 %s2211, 48
      %s2230 = scalar_lea.vmem [#allocation3], %s2229
      %v2231 = vld [vmem:[%s2230] sm:$0x1]
      %v2232 = vld [vmem:[#allocation5 + $0x33] sm:$0x1]
      %v2233 = vadd.f32 %v2231, %v2232
      %2234 = vst.msk [vmem:[%s2230] sm:$0x1] %vm1012, %v2233
      %s2235 = sld [smem:[#allocation9 + %s1126]]
      %s2236 = scalar_lea.vmem [#allocation3], %s2235
      %v2237 = vld [vmem:[%s2236] sm:$0x1]
      %v2238 = vld [vmem:[#allocation5 + $0x4] sm:$0x1]
      %v2239 = vadd.f32 %v2237, %v2238
      %2240 = vst.msk [vmem:[%s2236] sm:$0x1] %vm1012, %v2239
      %s2241 = sadd.s32 %s2235, 16
      %s2242 = scalar_lea.vmem [#allocation3], %s2241
      %v2243 = vld [vmem:[%s2242] sm:$0x1]
      %v2244 = vld [vmem:[#allocation5 + $0x14] sm:$0x1]
      %v2245 = vadd.f32 %v2243, %v2244
      %2246 = vst.msk [vmem:[%s2242] sm:$0x1] %vm1012, %v2245
      %s2247 = sadd.s32 %s2235, 32
      %s2248 = scalar_lea.vmem [#allocation3], %s2247
      %v2249 = vld [vmem:[%s2248] sm:$0x1]
      %v2250 = vld [vmem:[#allocation5 + $0x24] sm:$0x1]
      %v2251 = vadd.f32 %v2249, %v2250
      %2252 = vst.msk [vmem:[%s2248] sm:$0x1] %vm1012, %v2251
      %s2253 = sadd.s32 %s2235, 48
      %s2254 = scalar_lea.vmem [#allocation3], %s2253
      %v2255 = vld [vmem:[%s2254] sm:$0x1]
      %v2256 = vld [vmem:[#allocation5 + $0x34] sm:$0x1]
      %v2257 = vadd.f32 %v2255, %v2256
      %2258 = vst.msk [vmem:[%s2254] sm:$0x1] %vm1012, %v2257
      %s2259 = sld [smem:[#allocation9 + %s1157]]
      %s2260 = scalar_lea.vmem [#allocation3], %s2259
      %v2261 = vld [vmem:[%s2260] sm:$0x1]
      %v2262 = vld [vmem:[#allocation5 + $0x5] sm:$0x1]
      %v2263 = vadd.f32 %v2261, %v2262
      %2264 = vst.msk [vmem:[%s2260] sm:$0x1] %vm1012, %v2263
      %s2265 = sadd.s32 %s2259, 16
      %s2266 = scalar_lea.vmem [#allocation3], %s2265
      %v2267 = vld [vmem:[%s2266] sm:$0x1]
      %v2268 = vld [vmem:[#allocation5 + $0x15] sm:$0x1]
      %v2269 = vadd.f32 %v2267, %v2268
      %2270 = vst.msk [vmem:[%s2266] sm:$0x1] %vm1012, %v2269
      %s2271 = sadd.s32 %s2259, 32
      %s2272 = scalar_lea.vmem [#allocation3], %s2271
      %v2273 = vld [vmem:[%s2272] sm:$0x1]
      %v2274 = vld [vmem:[#allocation5 + $0x25] sm:$0x1]
      %v2275 = vadd.f32 %v2273, %v2274
      %2276 = vst.msk [vmem:[%s2272] sm:$0x1] %vm1012, %v2275
      %s2277 = sadd.s32 %s2259, 48
      %s2278 = scalar_lea.vmem [#allocation3], %s2277
      %v2279 = vld [vmem:[%s2278] sm:$0x1]
      %v2280 = vld [vmem:[#allocation5 + $0x35] sm:$0x1]
      %v2281 = vadd.f32 %v2279, %v2280
      %2282 = vst.msk [vmem:[%s2278] sm:$0x1] %vm1012, %v2281
      %s2283 = sld [smem:[#allocation9 + %s1188]]
      %s2284 = scalar_lea.vmem [#allocation3], %s2283
      %v2285 = vld [vmem:[%s2284] sm:$0x1]
      %v2286 = vld [vmem:[#allocation5 + $0x6] sm:$0x1]
      %v2287 = vadd.f32 %v2285, %v2286
      %2288 = vst.msk [vmem:[%s2284] sm:$0x1] %vm1012, %v2287
      %s2289 = sadd.s32 %s2283, 16
      %s2290 = scalar_lea.vmem [#allocation3], %s2289
      %v2291 = vld [vmem:[%s2290] sm:$0x1]
      %v2292 = vld [vmem:[#allocation5 + $0x16] sm:$0x1]
      %v2293 = vadd.f32 %v2291, %v2292
      %2294 = vst.msk [vmem:[%s2290] sm:$0x1] %vm1012, %v2293
      %s2295 = sadd.s32 %s2283, 32
      %s2296 = scalar_lea.vmem [#allocation3], %s2295
      %v2297 = vld [vmem:[%s2296] sm:$0x1]
      %v2298 = vld [vmem:[#allocation5 + $0x26] sm:$0x1]
      %v2299 = vadd.f32 %v2297, %v2298
      %2300 = vst.msk [vmem:[%s2296] sm:$0x1] %vm1012, %v2299
      %s2301 = sadd.s32 %s2283, 48
      %s2302 = scalar_lea.vmem [#allocation3], %s2301
      %v2303 = vld [vmem:[%s2302] sm:$0x1]
      %v2304 = vld [vmem:[#allocation5 + $0x36] sm:$0x1]
      %v2305 = vadd.f32 %v2303, %v2304
      %2306 = vst.msk [vmem:[%s2302] sm:$0x1] %vm1012, %v2305
      %s2307 = sld [smem:[#allocation9 + %s1219]]
      %s2308 = scalar_lea.vmem [#allocation3], %s2307
      %v2309 = vld [vmem:[%s2308] sm:$0x1]
      %v2310 = vld [vmem:[#allocation5 + $0x7] sm:$0x1]
      %v2311 = vadd.f32 %v2309, %v2310
      %2312 = vst.msk [vmem:[%s2308] sm:$0x1] %vm1012, %v2311
      %s2313 = sadd.s32 %s2307, 16
      %s2314 = scalar_lea.vmem [#allocation3], %s2313
      %v2315 = vld [vmem:[%s2314] sm:$0x1]
      %v2316 = vld [vmem:[#allocation5 + $0x17] sm:$0x1]
      %v2317 = vadd.f32 %v2315, %v2316
      %2318 = vst.msk [vmem:[%s2314] sm:$0x1] %vm1012, %v2317
      %s2319 = sadd.s32 %s2307, 32
      %s2320 = scalar_lea.vmem [#allocation3], %s2319
      %v2321 = vld [vmem:[%s2320] sm:$0x1]
      %v2322 = vld [vmem:[#allocation5 + $0x27] sm:$0x1]
      %v2323 = vadd.f32 %v2321, %v2322
      %2324 = vst.msk [vmem:[%s2320] sm:$0x1] %vm1012, %v2323
      %s2325 = sadd.s32 %s2307, 48
      %s2326 = scalar_lea.vmem [#allocation3], %s2325
      %v2327 = vld [vmem:[%s2326] sm:$0x1]
      %v2328 = vld [vmem:[#allocation5 + $0x37] sm:$0x1]
      %v2329 = vadd.f32 %v2327, %v2328
      %2330 = vst.msk [vmem:[%s2326] sm:$0x1] %vm1012, %v2329
      %s2331 = sld [smem:[#allocation9 + %s1250]]
      %s2332 = scalar_lea.vmem [#allocation3], %s2331
      %v2333 = vld [vmem:[%s2332] sm:$0x1]
      %v2334 = vld [vmem:[#allocation5 + $0x8] sm:$0x1]
      %v2335 = vadd.f32 %v2333, %v2334
      %2336 = vst.msk [vmem:[%s2332] sm:$0x1] %vm1012, %v2335
      %s2337 = sadd.s32 %s2331, 16
      %s2338 = scalar_lea.vmem [#allocation3], %s2337
      %v2339 = vld [vmem:[%s2338] sm:$0x1]
      %v2340 = vld [vmem:[#allocation5 + $0x18] sm:$0x1]
      %v2341 = vadd.f32 %v2339, %v2340
      %2342 = vst.msk [vmem:[%s2338] sm:$0x1] %vm1012, %v2341
      %s2343 = sadd.s32 %s2331, 32
      %s2344 = scalar_lea.vmem [#allocation3], %s2343
      %v2345 = vld [vmem:[%s2344] sm:$0x1]
      %v2346 = vld [vmem:[#allocation5 + $0x28] sm:$0x1]
      %v2347 = vadd.f32 %v2345, %v2346
      %2348 = vst.msk [vmem:[%s2344] sm:$0x1] %vm1012, %v2347
      %s2349 = sadd.s32 %s2331, 48
      %s2350 = scalar_lea.vmem [#allocation3], %s2349
      %v2351 = vld [vmem:[%s2350] sm:$0x1]
      %v2352 = vld [vmem:[#allocation5 + $0x38] sm:$0x1]
      %v2353 = vadd.f32 %v2351, %v2352
      %2354 = vst.msk [vmem:[%s2350] sm:$0x1] %vm1012, %v2353
      %s2355 = sld [smem:[#allocation9 + %s1281]]
      %s2356 = scalar_lea.vmem [#allocation3], %s2355
      %v2357 = vld [vmem:[%s2356] sm:$0x1]
      %v2358 = vld [vmem:[#allocation5 + $0x9] sm:$0x1]
      %v2359 = vadd.f32 %v2357, %v2358
      %2360 = vst.msk [vmem:[%s2356] sm:$0x1] %vm1012, %v2359
      %s2361 = sadd.s32 %s2355, 16
      %s2362 = scalar_lea.vmem [#allocation3], %s2361
      %v2363 = vld [vmem:[%s2362] sm:$0x1]
      %v2364 = vld [vmem:[#allocation5 + $0x19] sm:$0x1]
      %v2365 = vadd.f32 %v2363, %v2364
      %2366 = vst.msk [vmem:[%s2362] sm:$0x1] %vm1012, %v2365
      %s2367 = sadd.s32 %s2355, 32
      %s2368 = scalar_lea.vmem [#allocation3], %s2367
      %v2369 = vld [vmem:[%s2368] sm:$0x1]
      %v2370 = vld [vmem:[#allocation5 + $0x29] sm:$0x1]
      %v2371 = vadd.f32 %v2369, %v2370
      %2372 = vst.msk [vmem:[%s2368] sm:$0x1] %vm1012, %v2371
      %s2373 = sadd.s32 %s2355, 48
      %s2374 = scalar_lea.vmem [#allocation3], %s2373
      %v2375 = vld [vmem:[%s2374] sm:$0x1]
      %v2376 = vld [vmem:[#allocation5 + $0x39] sm:$0x1]
      %v2377 = vadd.f32 %v2375, %v2376
      %2378 = vst.msk [vmem:[%s2374] sm:$0x1] %vm1012, %v2377
      %s2379 = sld [smem:[#allocation9 + %s1312]]
      %s2380 = scalar_lea.vmem [#allocation3], %s2379
      %v2381 = vld [vmem:[%s2380] sm:$0x1]
      %v2382 = vld [vmem:[#allocation5 + $0xa] sm:$0x1]
      %v2383 = vadd.f32 %v2381, %v2382
      %2384 = vst.msk [vmem:[%s2380] sm:$0x1] %vm1012, %v2383
      %s2385 = sadd.s32 %s2379, 16
      %s2386 = scalar_lea.vmem [#allocation3], %s2385
      %v2387 = vld [vmem:[%s2386] sm:$0x1]
      %v2388 = vld [vmem:[#allocation5 + $0x1a] sm:$0x1]
      %v2389 = vadd.f32 %v2387, %v2388
      %2390 = vst.msk [vmem:[%s2386] sm:$0x1] %vm1012, %v2389
      %s2391 = sadd.s32 %s2379, 32
      %s2392 = scalar_lea.vmem [#allocation3], %s2391
      %v2393 = vld [vmem:[%s2392] sm:$0x1]
      %v2394 = vld [vmem:[#allocation5 + $0x2a] sm:$0x1]
      %v2395 = vadd.f32 %v2393, %v2394
      %2396 = vst.msk [vmem:[%s2392] sm:$0x1] %vm1012, %v2395
      %s2397 = sadd.s32 %s2379, 48
      %s2398 = scalar_lea.vmem [#allocation3], %s2397
      %v2399 = vld [vmem:[%s2398] sm:$0x1]
      %v2400 = vld [vmem:[#allocation5 + $0x3a] sm:$0x1]
      %v2401 = vadd.f32 %v2399, %v2400
      %2402 = vst.msk [vmem:[%s2398] sm:$0x1] %vm1012, %v2401
      %s2403 = sld [smem:[#allocation9 + %s1343]]
      %s2404 = scalar_lea.vmem [#allocation3], %s2403
      %v2405 = vld [vmem:[%s2404] sm:$0x1]
      %v2406 = vld [vmem:[#allocation5 + $0xb] sm:$0x1]
      %v2407 = vadd.f32 %v2405, %v2406
      %2408 = vst.msk [vmem:[%s2404] sm:$0x1] %vm1012, %v2407
      %s2409 = sadd.s32 %s2403, 16
      %s2410 = scalar_lea.vmem [#allocation3], %s2409
      %v2411 = vld [vmem:[%s2410] sm:$0x1]
      %v2412 = vld [vmem:[#allocation5 + $0x1b] sm:$0x1]
      %v2413 = vadd.f32 %v2411, %v2412
      %2414 = vst.msk [vmem:[%s2410] sm:$0x1] %vm1012, %v2413
      %s2415 = sadd.s32 %s2403, 32
      %s2416 = scalar_lea.vmem [#allocation3], %s2415
      %v2417 = vld [vmem:[%s2416] sm:$0x1]
      %v2418 = vld [vmem:[#allocation5 + $0x2b] sm:$0x1]
      %v2419 = vadd.f32 %v2417, %v2418
      %2420 = vst.msk [vmem:[%s2416] sm:$0x1] %vm1012, %v2419
      %s2421 = sadd.s32 %s2403, 48
      %s2422 = scalar_lea.vmem [#allocation3], %s2421
      %v2423 = vld [vmem:[%s2422] sm:$0x1]
      %v2424 = vld [vmem:[#allocation5 + $0x3b] sm:$0x1]
      %v2425 = vadd.f32 %v2423, %v2424
      %2426 = vst.msk [vmem:[%s2422] sm:$0x1] %vm1012, %v2425
      %s2427 = sld [smem:[#allocation9 + %s1374]]
      %s2428 = scalar_lea.vmem [#allocation3], %s2427
      %v2429 = vld [vmem:[%s2428] sm:$0x1]
      %v2430 = vld [vmem:[#allocation5 + $0xc] sm:$0x1]
      %v2431 = vadd.f32 %v2429, %v2430
      %2432 = vst.msk [vmem:[%s2428] sm:$0x1] %vm1012, %v2431
      %s2433 = sadd.s32 %s2427, 16
      %s2434 = scalar_lea.vmem [#allocation3], %s2433
      %v2435 = vld [vmem:[%s2434] sm:$0x1]
      %v2436 = vld [vmem:[#allocation5 + $0x1c] sm:$0x1]
      %v2437 = vadd.f32 %v2435, %v2436
      %2438 = vst.msk [vmem:[%s2434] sm:$0x1] %vm1012, %v2437
      %s2439 = sadd.s32 %s2427, 32
      %s2440 = scalar_lea.vmem [#allocation3], %s2439
      %v2441 = vld [vmem:[%s2440] sm:$0x1]
      %v2442 = vld [vmem:[#allocation5 + $0x2c] sm:$0x1]
      %v2443 = vadd.f32 %v2441, %v2442
      %2444 = vst.msk [vmem:[%s2440] sm:$0x1] %vm1012, %v2443
      %s2445 = sadd.s32 %s2427, 48
      %s2446 = scalar_lea.vmem [#allocation3], %s2445
      %v2447 = vld [vmem:[%s2446] sm:$0x1]
      %v2448 = vld [vmem:[#allocation5 + $0x3c] sm:$0x1]
      %v2449 = vadd.f32 %v2447, %v2448
      %2450 = vst.msk [vmem:[%s2446] sm:$0x1] %vm1012, %v2449
      %s2451 = sld [smem:[#allocation9 + %s1405]]
      %s2452 = scalar_lea.vmem [#allocation3], %s2451
      %v2453 = vld [vmem:[%s2452] sm:$0x1]
      %v2454 = vld [vmem:[#allocation5 + $0xd] sm:$0x1]
      %v2455 = vadd.f32 %v2453, %v2454
      %2456 = vst.msk [vmem:[%s2452] sm:$0x1] %vm1012, %v2455
      %s2457 = sadd.s32 %s2451, 16
      %s2458 = scalar_lea.vmem [#allocation3], %s2457
      %v2459 = vld [vmem:[%s2458] sm:$0x1]
      %v2460 = vld [vmem:[#allocation5 + $0x1d] sm:$0x1]
      %v2461 = vadd.f32 %v2459, %v2460
      %2462 = vst.msk [vmem:[%s2458] sm:$0x1] %vm1012, %v2461
      %s2463 = sadd.s32 %s2451, 32
      %s2464 = scalar_lea.vmem [#allocation3], %s2463
      %v2465 = vld [vmem:[%s2464] sm:$0x1]
      %v2466 = vld [vmem:[#allocation5 + $0x2d] sm:$0x1]
      %v2467 = vadd.f32 %v2465, %v2466
      %2468 = vst.msk [vmem:[%s2464] sm:$0x1] %vm1012, %v2467
      %s2469 = sadd.s32 %s2451, 48
      %s2470 = scalar_lea.vmem [#allocation3], %s2469
      %v2471 = vld [vmem:[%s2470] sm:$0x1]
      %v2472 = vld [vmem:[#allocation5 + $0x3d] sm:$0x1]
      %v2473 = vadd.f32 %v2471, %v2472
      %2474 = vst.msk [vmem:[%s2470] sm:$0x1] %vm1012, %v2473
      %s2475 = sld [smem:[#allocation9 + %s1436]]
      %s2476 = scalar_lea.vmem [#allocation3], %s2475
      %v2477 = vld [vmem:[%s2476] sm:$0x1]
      %v2478 = vld [vmem:[#allocation5 + $0xe] sm:$0x1]
      %v2479 = vadd.f32 %v2477, %v2478
      %2480 = vst.msk [vmem:[%s2476] sm:$0x1] %vm1012, %v2479
      %s2481 = sadd.s32 %s2475, 16
      %s2482 = scalar_lea.vmem [#allocation3], %s2481
      %v2483 = vld [vmem:[%s2482] sm:$0x1]
      %v2484 = vld [vmem:[#allocation5 + $0x1e] sm:$0x1]
      %v2485 = vadd.f32 %v2483, %v2484
      %2486 = vst.msk [vmem:[%s2482] sm:$0x1] %vm1012, %v2485
      %s2487 = sadd.s32 %s2475, 32
      %s2488 = scalar_lea.vmem [#allocation3], %s2487
      %v2489 = vld [vmem:[%s2488] sm:$0x1]
      %v2490 = vld [vmem:[#allocation5 + $0x2e] sm:$0x1]
      %v2491 = vadd.f32 %v2489, %v2490
      %2492 = vst.msk [vmem:[%s2488] sm:$0x1] %vm1012, %v2491
      %s2493 = sadd.s32 %s2475, 48
      %s2494 = scalar_lea.vmem [#allocation3], %s2493
      %v2495 = vld [vmem:[%s2494] sm:$0x1]
      %v2496 = vld [vmem:[#allocation5 + $0x3e] sm:$0x1]
      %v2497 = vadd.f32 %v2495, %v2496
      %2498 = vst.msk [vmem:[%s2494] sm:$0x1] %vm1012, %v2497
      %s2499 = sld [smem:[#allocation9 + %s1467]]
      %s2500 = scalar_lea.vmem [#allocation3], %s2499
      %v2501 = vld [vmem:[%s2500] sm:$0x1]
      %v2502 = vld [vmem:[#allocation5 + $0xf] sm:$0x1]
      %v2503 = vadd.f32 %v2501, %v2502
      %2504 = vst.msk [vmem:[%s2500] sm:$0x1] %vm1012, %v2503
      %s2505 = sadd.s32 %s2499, 16
      %s2506 = scalar_lea.vmem [#allocation3], %s2505
      %v2507 = vld [vmem:[%s2506] sm:$0x1]
      %v2508 = vld [vmem:[#allocation5 + $0x1f] sm:$0x1]
      %v2509 = vadd.f32 %v2507, %v2508
      %2510 = vst.msk [vmem:[%s2506] sm:$0x1] %vm1012, %v2509
      %s2511 = sadd.s32 %s2499, 32
      %s2512 = scalar_lea.vmem [#allocation3], %s2511
      %v2513 = vld [vmem:[%s2512] sm:$0x1]
      %v2514 = vld [vmem:[#allocation5 + $0x2f] sm:$0x1]
      %v2515 = vadd.f32 %v2513, %v2514
      %2516 = vst.msk [vmem:[%s2512] sm:$0x1] %vm1012, %v2515
      %s2517 = sadd.s32 %s2499, 48
      %s2518 = scalar_lea.vmem [#allocation3], %s2517
      %v2519 = vld [vmem:[%s2518] sm:$0x1]
      %v2520 = vld [vmem:[#allocation5 + $0x3f] sm:$0x1]
      %v2521 = vadd.f32 %v2519, %v2520
      %2522 = vst.msk [vmem:[%s2518] sm:$0x1] %vm1012, %v2521
      %p2523 = scmp.eq.s32.totalorder %s52, 1
      // Predicated region
      $region109: #{efficient_trajcast_forward.1} parent=103 // pred_check
        %p2524 = pneg %p2523
      $region110: #{efficient_trajcast_forward.1} parent=103 // pred_check_branch
        %2526 = sbr.rel (%p2524) target = $region112
      $region111: #{efficient_trajcast_forward.1} parent=103 // pred_region
        %v2527 = vld [vmem:[#allocation3] sm:$0xff]
        %v2528 = vld [vmem:[#allocation3 + $0x8] sm:$0xff]
        %v2529 = vld [vmem:[#allocation3 + $0x10] sm:$0xff]
        %v2530 = vld [vmem:[#allocation3 + $0x18] sm:$0xff]
        %v2531 = vld [vmem:[#allocation3 + $0x20] sm:$0xff]
        %v2532 = vld [vmem:[#allocation3 + $0x28] sm:$0xff]
        %v2533 = vld [vmem:[#allocation3 + $0x30] sm:$0xff]
        %v2534 = vld [vmem:[#allocation3 + $0x38] sm:$0xff]
        %v2535 = vmul.f32 %v2527, 0.31622776
        %v2536 = vmul.f32 %v2528, 0.31622776
        %v2537 = vmul.f32 %v2529, 0.31622776
        %v2538 = vmul.f32 %v2530, 0.31622776
        %v2539 = vmul.f32 %v2531, 0.31622776
        %v2540 = vmul.f32 %v2532, 0.31622776
        %v2541 = vmul.f32 %v2533, 0.31622776
        %v2542 = vmul.f32 %v2534, 0.31622776
        %v2543 = vld [vmem:[#allocation2] sm:$0xff]
        %v2544 = vld [vmem:[#allocation2 + $0x8] sm:$0xff]
        %v2545 = vld [vmem:[#allocation2 + $0x10] sm:$0xff]
        %v2546 = vld [vmem:[#allocation2 + $0x18] sm:$0xff]
        %v2547 = vld [vmem:[#allocation2 + $0x20] sm:$0xff]
        %v2548 = vld [vmem:[#allocation2 + $0x28] sm:$0xff]
        %v2549 = vld [vmem:[#allocation2 + $0x30] sm:$0xff]
        %v2550 = vld [vmem:[#allocation2 + $0x38] sm:$0xff]
        %v2551 = vld [vmem:[%s17] sm:$0xff]
        %v2553 = vsel %vm1881, %v2535, 0
        %v2556 = vsel %vm1881, %v2536, 0
        %2558 = vmatpush.msra.mxu0 0.0
        %2559 = vmatpush.msra.mxu0 0.0
        %2560 = vmatpush.msra.mxu0 0.0
        %2561 = vmatpush.msra.mxu0 0.0
        %2562 = vmatpush.msra.mxu0 0.0
        %2563 = vmatpush.msra.mxu0 0.0
        %2564 = vmatpush.msra.mxu0 0.0
        %2565 = vmatpush.msra.mxu0 0.0
        %2566 = vmatpush.msra.mxu0 0.0
        %2567 = vmatpush.msra.mxu0 0.0
        %2568 = vmatpush.msra.mxu0 0.0
        %2569 = vmatpush.msra.mxu0 0.0
        %2570 = vmatpush.msra.mxu0 0.0
        %2571 = vmatpush.msra.mxu0 0.0
        %2572 = vmatpush.msra.mxu0 0.0
        %2573 = vmatpush.msra.mxu0 %v2551
        %2574 = vmatmul.f32.gmra.mxu0 %v2553
        %v2575 = vpop.f32.mrf.mxu0
        %v2576 = vadd.f32 0.0, %v2575
        %2577 = vmatmul.f32.gmra.mxu0 %v2556
        %v2578 = vpop.f32.mrf.mxu0
        %v2579 = vadd.f32 0.0, %v2578
        %2580 = vdwg.mxu0
        %v2581 = vmul.f32 %v2576, 0.35355338
        %v2582 = vmul.f32 %v2579, 0.35355338
        %v2583 = vsub.f32 0.0, %v2581
        %v2584 = vsub.f32 0.0, %v2582
        %v2585 = vmul.f32 %v2583, 1.442695
        %v2586 = vpow.pop %v2585
        %v2587 = vmul.f32 %v2584, 1.442695
        %v2588 = vpow.pop %v2587
        %v2589 = vadd.f32 %v2586, 1.0
        %v2590 = vadd.f32 %v2588, 1.0
        %v2591 = vrcp.pop %v2589
        %v2592 = vrcp.pop %v2590
        %v2593 = vmul.f32 %v2581, %v2591
        %v2594 = vmul.f32 %v2582, %v2592
        %v2595 = vld [vmem:[%s18] sm:$0xff]
        %v2597 = vsel %vm1881, %v2537, 0
        %v2600 = vsel %vm1881, %v2538, 0
        %v2603 = vsel %vm1881, %v2539, 0
        %v2606 = vsel %vm1881, %v2540, 0
        %v2609 = vsel %vm1881, %v2541, 0
        %v2612 = vsel %vm1881, %v2542, 0
        %2614 = vmatpush.msra.mxu0 0.0
        %2615 = vmatpush.msra.mxu0 0.0
        %2616 = vmatpush.msra.mxu0 0.0
        %2617 = vmatpush.msra.mxu0 0.0
        %2618 = vmatpush.msra.mxu0 0.0
        %2619 = vmatpush.msra.mxu0 0.0
        %2620 = vmatpush.msra.mxu0 0.0
        %2621 = vmatpush.msra.mxu0 0.0
        %2622 = vmatpush.msra.mxu0 0.0
        %2623 = vmatpush.msra.mxu0 0.0
        %2624 = vmatpush.msra.mxu0 0.0
        %2625 = vmatpush.msra.mxu0 0.0
        %2626 = vmatpush.msra.mxu0 0.0
        %2627 = vmatpush.msra.mxu0 0.0
        %2628 = vmatpush.msra.mxu0 0.0
        %2629 = vmatpush.msra.mxu0 %v2595
        %2630 = vmatmul.f32.gmra.mxu0 %v2597
        %v2631 = vpop.f32.mrf.mxu0
        %v2632 = vadd.f32 0.0, %v2631
        %2633 = vmatmul.f32.gmra.mxu0 %v2600
        %v2634 = vpop.f32.mrf.mxu0
        %v2635 = vadd.f32 0.0, %v2634
        %2636 = vmatmul.f32.gmra.mxu0 %v2603
        %v2637 = vpop.f32.mrf.mxu0
        %v2638 = vadd.f32 0.0, %v2637
        %2639 = vmatmul.f32.gmra.mxu0 %v2606
        %v2640 = vpop.f32.mrf.mxu0
        %v2641 = vadd.f32 0.0, %v2640
        %2642 = vmatmul.f32.gmra.mxu0 %v2609
        %v2643 = vpop.f32.mrf.mxu0
        %v2644 = vadd.f32 0.0, %v2643
        %2645 = vmatmul.f32.gmra.mxu0 %v2612
        %v2646 = vpop.f32.mrf.mxu0
        %v2647 = vadd.f32 0.0, %v2646
        %2648 = vdwg.mxu0
        %v2649 = vmul.f32 %v2632, 0.35355338
        %v2650 = vmul.f32 %v2635, 0.35355338
        %v2651 = vmul.f32 %v2638, 0.35355338
        %v2652 = vmul.f32 %v2641, 0.35355338
        %v2653 = vmul.f32 %v2644, 0.35355338
        %v2654 = vmul.f32 %v2647, 0.35355338
        %v2655 = vld [vmem:[%s19] sm:$0xff]
        %v2657 = vsel %vm1881, %v2543, 0
        %v2660 = vsel %vm1881, %v2544, 0
        %2662 = vmatpush.msra.mxu0 0.0
        %2663 = vmatpush.msra.mxu0 0.0
        %2664 = vmatpush.msra.mxu0 0.0
        %2665 = vmatpush.msra.mxu0 0.0
        %2666 = vmatpush.msra.mxu0 0.0
        %2667 = vmatpush.msra.mxu0 0.0
        %2668 = vmatpush.msra.mxu0 0.0
        %2669 = vmatpush.msra.mxu0 0.0
        %2670 = vmatpush.msra.mxu0 0.0
        %2671 = vmatpush.msra.mxu0 0.0
        %2672 = vmatpush.msra.mxu0 0.0
        %2673 = vmatpush.msra.mxu0 0.0
        %2674 = vmatpush.msra.mxu0 0.0
        %2675 = vmatpush.msra.mxu0 0.0
        %2676 = vmatpush.msra.mxu0 0.0
        %2677 = vmatpush.msra.mxu0 %v2655
        %2678 = vmatmul.f32.gmra.mxu0 %v2657
        %v2679 = vpop.f32.mrf.mxu0
        %v2680 = vadd.f32 0.0, %v2679
        %2681 = vmatmul.f32.gmra.mxu0 %v2660
        %v2682 = vpop.f32.mrf.mxu0
        %v2683 = vadd.f32 0.0, %v2682
        %2684 = vdwg.mxu0
        %v2685 = vmul.f32 %v2680, 0.35355338
        %v2686 = vmul.f32 %v2683, 0.35355338
        %v2687 = vld [vmem:[%s20] sm:$0xff]
        %v2689 = vsel %vm1881, %v2545, 0
        %v2692 = vsel %vm1881, %v2546, 0
        %v2695 = vsel %vm1881, %v2547, 0
        %v2698 = vsel %vm1881, %v2548, 0
        %v2701 = vsel %vm1881, %v2549, 0
        %v2704 = vsel %vm1881, %v2550, 0
        %2706 = vmatpush.msra.mxu0 0.0
        %2707 = vmatpush.msra.mxu0 0.0
        %2708 = vmatpush.msra.mxu0 0.0
        %2709 = vmatpush.msra.mxu0 0.0
        %2710 = vmatpush.msra.mxu0 0.0
        %2711 = vmatpush.msra.mxu0 0.0
        %2712 = vmatpush.msra.mxu0 0.0
        %2713 = vmatpush.msra.mxu0 0.0
        %2714 = vmatpush.msra.mxu0 0.0
        %2715 = vmatpush.msra.mxu0 0.0
        %2716 = vmatpush.msra.mxu0 0.0
        %2717 = vmatpush.msra.mxu0 0.0
        %2718 = vmatpush.msra.mxu0 0.0
        %2719 = vmatpush.msra.mxu0 0.0
        %2720 = vmatpush.msra.mxu0 0.0
        %2721 = vmatpush.msra.mxu0 %v2687
        %2722 = vmatmul.f32.gmra.mxu0 %v2689
        %v2723 = vpop.f32.mrf.mxu0
        %v2724 = vadd.f32 0.0, %v2723
        %2725 = vmatmul.f32.gmra.mxu0 %v2692
        %v2726 = vpop.f32.mrf.mxu0
        %v2727 = vadd.f32 0.0, %v2726
        %2728 = vmatmul.f32.gmra.mxu0 %v2695
        %v2729 = vpop.f32.mrf.mxu0
        %v2730 = vadd.f32 0.0, %v2729
        %2731 = vmatmul.f32.gmra.mxu0 %v2698
        %v2732 = vpop.f32.mrf.mxu0
        %v2733 = vadd.f32 0.0, %v2732
        %2734 = vmatmul.f32.gmra.mxu0 %v2701
        %v2735 = vpop.f32.mrf.mxu0
        %v2736 = vadd.f32 0.0, %v2735
        %2737 = vmatmul.f32.gmra.mxu0 %v2704
        %v2738 = vpop.f32.mrf.mxu0
        %v2739 = vadd.f32 0.0, %v2738
        %2740 = vdwg.mxu0
        %v2741 = vmul.f32 %v2724, 0.35355338
        %v2742 = vmul.f32 %v2727, 0.35355338
        %v2743 = vmul.f32 %v2730, 0.35355338
        %v2744 = vmul.f32 %v2733, 0.35355338
        %v2745 = vmul.f32 %v2736, 0.35355338
        %v2746 = vmul.f32 %v2739, 0.35355338
        %v2747 = vadd.f32 %v2593, %v2685
        %v2748 = vadd.f32 %v2594, %v2686
        %2751 = vrot.lane.b32.xlu0 %v2593, 120
        %v2752 = vpop.permute.xlu0 %2751
        %2753 = vrot.lane.b32.xlu0 %v2594, 120
        %v2754 = vpop.permute.xlu0 %2753
        %v2757 = vmul.f32 %v2649, %v2752
        %v2758 = vmul.f32 %v2650, %v2754
        %v2759 = vmul.f32 %v2651, %v2752
        %v2760 = vmul.f32 %v2652, %v2754
        %v2761 = vmul.f32 %v2653, %v2752
        %v2762 = vmul.f32 %v2654, %v2754
        %v2763 = vadd.f32 %v2757, %v2741
        %v2764 = vadd.f32 %v2758, %v2742
        %v2765 = vadd.f32 %v2759, %v2743
        %v2766 = vadd.f32 %v2760, %v2744
        %v2767 = vadd.f32 %v2761, %v2745
        %v2768 = vadd.f32 %v2762, %v2746
        %2769 = vst.msk [vmem:[#allocation2] sm:$0xff] %vm1881, %v2747
        %2770 = vst.msk [vmem:[#allocation2 + $0x8] sm:$0xff] %vm1881, %v2748
        %2771 = vst.msk [vmem:[#allocation2 + $0x10] sm:$0xff] %vm1881, %v2763
        %2772 = vst.msk [vmem:[#allocation2 + $0x18] sm:$0xff] %vm1881, %v2764
        %2773 = vst.msk [vmem:[#allocation2 + $0x20] sm:$0xff] %vm1881, %v2765
        %2774 = vst.msk [vmem:[#allocation2 + $0x28] sm:$0xff] %vm1881, %v2766
        %2775 = vst.msk [vmem:[#allocation2 + $0x30] sm:$0xff] %vm1881, %v2767
        %2776 = vst.msk [vmem:[#allocation2 + $0x38] sm:$0xff] %vm1881, %v2768
        %v2777 = vld [vmem:[%s21] sm:$0x1]
        %v2779 = vperm.slane %v2777, 0
        %v2781 = vmul.f32 %v2763, %v2779
        %v2782 = vmul.f32 %v2764, %v2779
        %v2783 = vmul.f32 %v2765, %v2779
        %v2784 = vmul.f32 %v2766, %v2779
        %v2785 = vmul.f32 %v2767, %v2779
        %v2786 = vmul.f32 %v2768, %v2779
        %v2787 = vsel %vm1881, %v2781, 0.0
        %2788 = vadd.xlane.f32.xlu0 %v2787
        %v2789 = vpop.xlane.xlu0 %2788
        %v2790 = vsel %vm1881, %v2782, 0.0
        %2791 = vadd.xlane.f32.xlu0 %v2790
        %v2792 = vpop.xlane.xlu0 %2791
        %v2793 = vsel %vm1881, %v2783, 0.0
        %2794 = vadd.xlane.f32.xlu0 %v2793
        %v2795 = vpop.xlane.xlu0 %2794
        %v2796 = vsel %vm1881, %v2784, 0.0
        %2797 = vadd.xlane.f32.xlu0 %v2796
        %v2798 = vpop.xlane.xlu0 %2797
        %v2799 = vsel %vm1881, %v2785, 0.0
        %2800 = vadd.xlane.f32.xlu0 %v2799
        %v2801 = vpop.xlane.xlu0 %2800
        %v2802 = vsel %vm1881, %v2786, 0.0
        %2803 = vadd.xlane.f32.xlu0 %v2802
        %v2804 = vpop.xlane.xlu0 %2803
        %v2805 = vld [vmem:[%s22] sm:$0x1]
        %v2807 = vperm.slane %v2805, 0
        %v2809 = vmul.f32 %v2763, %v2807
        %v2810 = vmul.f32 %v2764, %v2807
        %v2811 = vmul.f32 %v2765, %v2807
        %v2812 = vmul.f32 %v2766, %v2807
        %v2813 = vmul.f32 %v2767, %v2807
        %v2814 = vmul.f32 %v2768, %v2807
        %v2815 = vsel %vm1881, %v2809, 0.0
        %2816 = vadd.xlane.f32.xlu0 %v2815
        %v2817 = vpop.xlane.xlu0 %2816
        %v2818 = vsel %vm1881, %v2810, 0.0
        %2819 = vadd.xlane.f32.xlu0 %v2818
        %v2820 = vpop.xlane.xlu0 %2819
        %v2821 = vsel %vm1881, %v2811, 0.0
        %2822 = vadd.xlane.f32.xlu0 %v2821
        %v2823 = vpop.xlane.xlu0 %2822
        %v2824 = vsel %vm1881, %v2812, 0.0
        %2825 = vadd.xlane.f32.xlu0 %v2824
        %v2826 = vpop.xlane.xlu0 %2825
        %v2827 = vsel %vm1881, %v2813, 0.0
        %2828 = vadd.xlane.f32.xlu0 %v2827
        %v2829 = vpop.xlane.xlu0 %2828
        %v2830 = vsel %vm1881, %v2814, 0.0
        %2831 = vadd.xlane.f32.xlu0 %v2830
        %v2832 = vpop.xlane.xlu0 %2831
        %v2833 = vmul.f32 %v2789, 0.5
        %v2834 = vmul.f32 %v2792, 0.5
        %v2835 = vmul.f32 %v2795, 0.5
        %v2836 = vmul.f32 %v2798, 0.5
        %v2837 = vmul.f32 %v2801, 0.5
        %v2838 = vmul.f32 %v2804, 0.5
        %v2839 = vadd.f32 %v2833, 0.0
        %v2840 = vadd.f32 %v2834, 0.0
        %v2841 = vadd.f32 %v2835, 0.0
        %v2842 = vadd.f32 %v2836, 0.0
        %v2843 = vadd.f32 %v2837, 0.0
        %v2844 = vadd.f32 %v2838, 0.0
        %v2845 = vmul.f32 %v2817, 0.2
        %v2846 = vmul.f32 %v2820, 0.2
        %v2847 = vmul.f32 %v2823, 0.2
        %v2848 = vmul.f32 %v2826, 0.2
        %v2849 = vmul.f32 %v2829, 0.2
        %v2850 = vmul.f32 %v2832, 0.2
        %v2851 = vadd.f32 %v2845, 0.0
        %v2852 = vadd.f32 %v2846, 0.0
        %v2853 = vadd.f32 %v2847, 0.0
        %v2854 = vadd.f32 %v2848, 0.0
        %v2855 = vadd.f32 %v2849, 0.0
        %v2856 = vadd.f32 %v2850, 0.0
        %vm2857 = vcmask 7168
        %v2858 = vsel %vm2857, %v2839, %v2841
        %v2859 = vsel %vm2857, %v2840, %v2842
        %vm2860 = vcmask 15360
        %v2861 = vsel %vm2860, %v2858, %v2843
        %v2862 = vsel %vm2860, %v2859, %v2844
        %v2863 = vsel %vm2857, %v2851, %v2853
        %v2864 = vsel %vm2857, %v2852, %v2854
        %v2865 = vsel %vm2860, %v2863, %v2855
        %v2866 = vsel %vm2860, %v2864, %v2856
        %v2867 = vsel %vm1495, %v2861, 0.0
        %v2868 = vsel %vm1495, %v2862, 0.0
        %v2869 = vadd.f32 %v2867, %v2868
        %v2870 = vrot.slane %v2869, 4
        %v2871 = vadd.f32 %v2869, %v2870
        %v2872 = vrot.slane %v2871, 2
        %v2873 = vadd.f32 %v2871, %v2872
        %v2874 = vrot.slane %v2873, 1
        %v2875 = vadd.f32 %v2873, %v2874
        %v2876 = vmul.f32 %v2875, 0.0625
        %v2877 = vsub.f32 %v2861, %v2876
        %v2878 = vsub.f32 %v2862, %v2876
        %v2879 = vsel %vm1495, %v2865, 0.0
        %v2880 = vsel %vm1495, %v2866, 0.0
        %v2881 = vadd.f32 %v2879, %v2880
        %v2882 = vrot.slane %v2881, 4
        %v2883 = vadd.f32 %v2881, %v2882
        %v2884 = vrot.slane %v2883, 2
        %v2885 = vadd.f32 %v2883, %v2884
        %v2886 = vrot.slane %v2885, 1
        %v2887 = vadd.f32 %v2885, %v2886
        %v2888 = vmul.f32 %v2887, 0.0625
        %v2889 = vsub.f32 %v2865, %v2888
        %v2890 = vsub.f32 %v2866, %v2888
        %2893 = vrot.lane.b32.xlu0 %v2889, 3
        %v2894 = vpop.permute.xlu0 %2893
        %2895 = vrot.lane.b32.xlu0 %v2890, 3
        %v2896 = vpop.permute.xlu0 %2895
        %v2899 = vsel %vm1495, %v2877, %v2894
        %v2900 = vsel %vm1495, %v2878, %v2896
        %vm2901 = vcmask 48128
        %2902 = vst.msk [vmem:[%s743] sm:$0xff] %vm2901, %v2899
        %2903 = vst.msk [vmem:[%s743 + $0x8] sm:$0xff] %vm2901, %v2900
      $region112: #{efficient_trajcast_forward.1} parent=103 // pred_fallthru
        _
      %p2904 = scmp.lt.s32.totalorder %s51, 1
      %s2905 = scalar_select %p2904, %s51, 1
      %s2906 = smul.addr %s2905, 2
      %s2907 = smul.addr %s2906, 8
      %s2908 = scalar_lea.vmem %s23, %s2907
      // Predicated region
      $region113: #{efficient_trajcast_forward.1} parent=103 // pred_check
        %p2909 = pneg %p538
      $region114: #{efficient_trajcast_forward.1} parent=103 // pred_check_branch
        %2911 = sbr.rel (%p2909) target = $region116
      $region115: #{efficient_trajcast_forward.1} parent=103 // pred_region
        _
      $region116: #{efficient_trajcast_forward.1} parent=103 // pred_fallthru
        _
    $region104: #{efficient_trajcast_forward.1} parent=5 // pred_fallthru
      _
    %p2912 = scmp.le.s32.totalorder 2, %s42
    // Predicated region
    $region117: #{efficient_trajcast_forward.1} parent=5 // pred_check
      %p2913 = pneg %p2912
    $region118: #{efficient_trajcast_forward.1} parent=5 // pred_check_branch
      %2915 = sbr.rel (%p2913) target = $region120
    $region119: #{efficient_trajcast_forward.1} parent=5 // pred_region
      %s2916 = ssub.s32 %s42, 2
      // Predicated region
      $region121: #{efficient_trajcast_forward.1} parent=119 // pred_check
        %p2917 = pneg %p544
      $region122: #{efficient_trajcast_forward.1} parent=119 // pred_check_branch
        %2919 = sbr.rel (%p2917) target = $region124
      $region123: #{efficient_trajcast_forward.1} parent=119 // pred_region
        %p2920 = scmp.lt.s32.totalorder %s53, 1
        %s2921 = scalar_select %p2920, %s53, 1
        %s2922 = smul.addr %s2921, 2
        %s2923 = smul.addr %s2922, 8
        %s2924 = scalar_lea.vmem %s23, %s2923
      $region124: #{efficient_trajcast_forward.1} parent=119 // pred_fallthru
        _
    $region120: #{efficient_trajcast_forward.1} parent=5 // pred_fallthru
      _
  $region6: #{efficient_trajcast_forward.1} parent=0 // loop_footer
    %s46 = sadd.s32 1, %s42
  $region7: #{efficient_trajcast_forward.1} parent=0 // loop_footer_branch
    %41 = sbr.rel target = $region3
  $region8: #{efficient_trajcast_forward.1} parent=0 // loop_exit
    _

</llo_original>
